<compile_context>
chip_gen: v6e
topology: v6e:2x2x1
jax: 0.10.0
libtpu: 0.0.40
codegen_flags: <defaults>
</compile_context>

<pallas_src>
import functools
import math

import jax
import jax.numpy as jnp
from jax.experimental import pallas as pl
from jax.experimental.pallas import tpu as pltpu

EPS = 1e-5      # nn.BatchNorm2d default eps
LANE = 128      # TPU lane width


def _round_up(x, m):
    return (x + m - 1) // m * m


def _pick_batch_tile(n, bytes_per_image, budget_bytes=8 * 1024 * 1024):
    """Largest divisor of n whose per-step payload stays under a conservative VMEM budget
    (binding constraint is v7x: 64 MiB physical / 32 MiB scoped)."""
    bt = max(1, min(n, budget_bytes // max(bytes_per_image, 1)))
    while n % bt:
        bt -= 1
    return bt


# ------------------------------ kernels ------------------------------

def pool_conv_stats_kernel(x_ref, w_ref, y_ref, stats_ref, pad_ref, *, bt, hp, wp, cin):
    """Fused 2x2 max-pool -> conv3x3 (9 accumulated MXU dots) -> BN statistics.

    Grid: one step per batch tile (stats reduction -> "arbitrary").
      x_ref:     (bt, hp, 2, wp, 2*cin) f32   pooling windows exposed by a free reshape
      w_ref:     (9, cin, cmid_p)       bf16  conv1 weights, one (cin, N) slab per tap
      y_ref:     (bt*hp*wp, cmid_p)     bf16  pre-BN conv1 output (lane-dense)
      stats_ref: (2, cmid_p)            f32   [sum; sum_sq] accumulated over ALL tiles
      pad_ref:   (bt, hp+2, wp+3, cin)  bf16  zero-bordered pooled image; interior at
                                              rows 1..hp, cols 2..wp+1 (aligned store)
    """
    @pl.when(pl.program_id(0) == 0)
    def _init():
        pad_ref[...] = jnp.zeros_like(pad_ref)      # zero border persists across steps
        stats_ref[...] = jnp.zeros_like(stats_ref)  # resident accumulator

    # ---- fused 2x2 max pool (pooled tensor never round-trips HBM) ----
    top = x_ref[:, :, 0, :, :]                                  # (bt, hp, wp, 2*cin)
    bot = x_ref[:, :, 1, :, :]
    vmax = jnp.maximum(top, bot)                                # vertical pair max
    pooled = jnp.maximum(vmax[..., :cin], vmax[..., cin:])      # horizontal pair max

    # single block store of the interior; column offset 2 keeps bf16 sublane words whole
    pad_ref[:, 1:hp + 1, 2:wp + 2, :] = pooled.astype(pad_ref.dtype)

    # ---- conv3x3 as 9 accumulated MXU matmuls contracting over cin ----
    m = bt * hp * wp
    y = None
    for t, (di, dj) in enumerate([(i, j) for i in range(3) for j in range(3)]):
        tap = pad_ref[:, di:di + hp, dj + 1:dj + 1 + wp, :].reshape(m, cin)
        part = jnp.dot(tap, w_ref[t], preferred_element_type=jnp.float32)
        y = part if y is None else y + part                     # (m, cmid_p) f32

    y_ref[...] = y.astype(y_ref.dtype)
    # one-pass BN stats, coalesced into a single (2, C) RMW (conv bias dropped: cancels in BN)
    stats_ref[...] += jnp.concatenate(
        [jnp.sum(y, axis=0, keepdims=True),
         jnp.sum(y * y, axis=0, keepdims=True)], axis=0)


def bn_relu_conv_stats_kernel(y1_ref, stats1_ref, g_ref, b_ref, w_ref,
                              y2_ref, stats2_ref, pad_ref, *, bt, hp, wp, cmid_p, inv_m):
    """BN1 + ReLU (from accumulated stats) fused with conv3x3 #2 and BN2 statistics.

    The normalized activation never leaves VMEM: one block store into the zero-bordered
    scratch, then consumed by 9 accumulated MXU dots.
    """
    @pl.when(pl.program_id(0) == 0)
    def _init():
        pad_ref[...] = jnp.zeros_like(pad_ref)
        stats2_ref[...] = jnp.zeros_like(stats2_ref)

    # training-mode BN: batch mean / biased variance from one-pass sums (f32)
    mean = stats1_ref[0:1, :] * inv_m
    var = stats1_ref[1:2, :] * inv_m - mean * mean
    scale = g_ref[...] * jax.lax.rsqrt(var + EPS)
    shift = b_ref[...] - mean * scale
    act = jnp.maximum(y1_ref[...].astype(jnp.float32) * scale + shift, 0.0)   # (m, cmid_p)

    # single block store (replaces the old per-row scatter loop)
    pad_ref[:, 1:hp + 1, 2:wp + 2, :] = act.reshape(bt, hp, wp, cmid_p).astype(pad_ref.dtype)

    m = bt * hp * wp
    y2 = None
    for t, (di, dj) in enumerate([(i, j) for i in range(3) for j in range(3)]):
        tap = pad_ref[:, di:di + hp, dj + 1:dj + 1 + wp, :].reshape(m, cmid_p)
        part = jnp.dot(tap, w_ref[t], preferred_element_type=jnp.float32)
        y2 = part if y2 is None else y2 + part                  # (m, cout_p) f32

    y2_ref[...] = y2.astype(y2_ref.dtype)
    stats2_ref[...] += jnp.concatenate(
        [jnp.sum(y2, axis=0, keepdims=True),
         jnp.sum(y2 * y2, axis=0, keepdims=True)], axis=0)


def bn_relu_kernel(y_ref, stats_ref, g_ref, b_ref, o_ref, *, inv_m):
    """Final BN2 + ReLU normalize pass (independent row blocks -> 'parallel')."""
    mean = stats_ref[0:1, :] * inv_m
    var = stats_ref[1:2, :] * inv_m - mean * mean
    scale = g_ref[...] * jax.lax.rsqrt(var + EPS)
    shift = b_ref[...] - mean * scale
    o_ref[...] = jnp.maximum(y_ref[...].astype(jnp.float32) * scale + shift, 0.0)


# ------------------------------ wrapper ------------------------------

def down_forward(params, x_nchw):
    """Forward of Down(in_ch, out_ch): MaxPool2d(2) -> DoubleConv (training-mode BN)."""
    x = jnp.transpose(x_nchw, (0, 2, 3, 1)).astype(jnp.float32)   # NCHW -> NHWC
    n, h, w, cin = x.shape
    hp, wp = h // 2, w // 2
    cmid = params["w1"].shape[-1]
    cout = params["w2"].shape[-1]
    cmid_p = _round_up(cmid, LANE)      # lane-dense / MXU-N-filling channel padding
    cout_p = _round_up(cout, LANE)
    m_img = hp * wp
    m_tot = n * m_img
    inv_m = 1.0 / m_tot

    # batch tile: several images per grid step (amortize per-step overhead, fill MXU M)
    per_img = (h * w * cin * 4                              # x block (f32)
               + 2 * m_img * (cmid_p + cout_p) * 2          # double-buffered y blocks (bf16)
               + (hp + 2) * (wp + 3) * (cin + cmid_p) * 2)  # padded-image scratches (bf16)
    bt = _pick_batch_tile(n, per_img)
    mb = bt * m_img
    grid = (n // bt,)

    # Free (metadata-only) reshape exposing the 2x2 pooling structure; the last axis
    # packs the horizontal pixel pair as [even-col channels | odd-col channels].
    x5 = x.reshape(n, hp, 2, wp, 2 * cin)

    # weights: (3,3,ci,co) -> (9, ci, co_padded) bf16, taps kh-major; zero padding keeps
    # padded channels identically zero through both convs and both BNs.
    w1 = jnp.zeros((3, 3, cin, cmid_p), jnp.float32).at[..., :cmid].set(params["w1"])
    w1 = w1.reshape(9, cin, cmid_p).astype(jnp.bfloat16)
    w2 = jnp.zeros((3, 3, cmid_p, cout_p), jnp.float32).at[:, :, :cmid, :cout].set(params["w2"])
    w2 = w2.reshape(9, cmid_p, cout_p).astype(jnp.bfloat16)

    def pad_vec(v, cp):
        return jnp.zeros((1, cp), jnp.float32).at[:, :v.shape[0]].set(v)

    g1 = pad_vec(params["g1"], cmid_p)
    b1 = pad_vec(params["b1"], cmid_p)
    g2 = pad_vec(params["g2"], cout_p)
    b2 = pad_vec(params["b2"], cout_p)

    vmem_cap = 32 * 1024 * 1024   # explicit budget (v7x scoped VMEM is the tightest)
    cp_reduce = pltpu.CompilerParams(dimension_semantics=("arbitrary",),
                                     vmem_limit_bytes=vmem_cap)
    cp_parallel = pltpu.CompilerParams(dimension_semantics=("parallel",),
                                       vmem_limit_bytes=vmem_cap)

    # ---- pass 1: maxpool + conv1 + BN1 statistics ----
    y1, stats1 = pl.pallas_call(
        functools.partial(pool_conv_stats_kernel, bt=bt, hp=hp, wp=wp, cin=cin),
        grid=grid,
        in_specs=[
            pl.BlockSpec((bt, hp, 2, wp, 2 * cin), lambda i: (i, 0, 0, 0, 0)),
            pl.BlockSpec((9, cin, cmid_p), lambda i: (0, 0, 0)),
        ],
        out_specs=[
            pl.BlockSpec((mb, cmid_p), lambda i: (i, 0)),
            pl.BlockSpec((2, cmid_p), lambda i: (0, 0)),
        ],
        out_shape=[
            jax.ShapeDtypeStruct((m_tot, cmid_p), jnp.bfloat16),
            jax.ShapeDtypeStruct((2, cmid_p), jnp.float32),
        ],
        scratch_shapes=[pltpu.VMEM((bt, hp + 2, wp + 3, cin), jnp.bfloat16)],
        compiler_params=cp_reduce,
    )(x5, w1)

    # ---- pass 2: BN1 + ReLU -> conv2 + BN2 statistics (activation stays in VMEM) ----
    y2, stats2 = pl.pallas_call(
        functools.partial(bn_relu_conv_stats_kernel,
                          bt=bt, hp=hp, wp=wp, cmid_p=cmid_p, inv_m=inv_m),
        grid=grid,
        in_specs=[
            pl.BlockSpec((mb, cmid_p), lambda i: (i, 0)),
            pl.BlockSpec((2, cmid_p), lambda i: (0, 0)),
            pl.BlockSpec((1, cmid_p), lambda i: (0, 0)),
            pl.BlockSpec((1, cmid_p), lambda i: (0, 0)),
            pl.BlockSpec((9, cmid_p, cout_p), lambda i: (0, 0, 0)),
        ],
        out_specs=[
            pl.BlockSpec((mb, cout_p), lambda i: (i, 0)),
            pl.BlockSpec((2, cout_p), lambda i: (0, 0)),
        ],
        out_shape=[
            jax.ShapeDtypeStruct((m_tot, cout_p), jnp.bfloat16),
            jax.ShapeDtypeStruct((2, cout_p), jnp.float32),
        ],
        scratch_shapes=[pltpu.VMEM((bt, hp + 2, wp + 3, cmid_p), jnp.bfloat16)],
        compiler_params=cp_reduce,
    )(y1, stats1, g1, b1, w2)

    # ---- pass 3: final BN2 + ReLU (lane-dense f32 output) ----
    out = pl.pallas_call(
        functools.partial(bn_relu_kernel, inv_m=inv_m),
        grid=grid,
        in_specs=[
            pl.BlockSpec((mb, cout_p), lambda i: (i, 0)),
            pl.BlockSpec((2, cout_p), lambda i: (0, 0)),
            pl.BlockSpec((1, cout_p), lambda i: (0, 0)),
            pl.BlockSpec((1, cout_p), lambda i: (0, 0)),
        ],
        out_specs=pl.BlockSpec((mb, cout_p), lambda i: (i, 0)),
        out_shape=jax.ShapeDtypeStruct((m_tot, cout_p), jnp.float32),
        compiler_params=cp_parallel,
    )(y2, stats2, g2, b2)

    out = out.reshape(n, hp, wp, cout_p)[..., :cout]   # strip channel padding
    return jnp.transpose(out, (0, 3, 1, 2))            # NHWC -> NCHW


# ------------------------------ params ------------------------------

def init_params(key, in_channels, out_channels):
    cmid = out_channels   # DoubleConv default: mid_channels = out_channels
    k1, k2, k3, k4, k5, k6 = jax.random.split(key, 6)
    w1 = jax.random.normal(k1, (3, 3, in_channels, cmid), jnp.float32) / math.sqrt(9 * in_channels)
    w2 = jax.random.normal(k2, (3, 3, cmid, out_channels), jnp.float32) / math.sqrt(9 * cmid)
    return dict(
        # conv weights in (kh, kw, cin, cout); Conv2d biases omitted: they cancel exactly
        # under training-mode BatchNorm.
        w1=w1,
        w2=w2,
        g1=1.0 + 0.1 * jax.random.normal(k3, (cmid,), jnp.float32),
        b1=0.1 * jax.random.normal(k4, (cmid,), jnp.float32),
        g2=1.0 + 0.1 * jax.random.normal(k5, (out_channels,), jnp.float32),
        b2=0.1 * jax.random.normal(k6, (out_channels,), jnp.float32),
    )


if __name__ == "__main__":
    key = jax.random.PRNGKey(0)
    kx, kp = jax.random.split(key)
    IN_C, OUT_C = 4, 32
    x = jax.random.normal(kx, (2, IN_C, 16, 16), jnp.float32)   # NCHW, like the PyTorch module
    params = init_params(kp, IN_C, OUT_C)

    out = jax.block_until_ready(jax.jit(down_forward)(params, x))
    assert out.shape == (2, OUT_C, 8, 8), out.shape
    assert bool(jnp.all(jnp.isfinite(out)))
    print("KERNEL_OK")
</pallas_src>

<mosaic_0001>
module attributes {stable_mosaic.version = 11 : i64} {
  func.func @pool_conv_stats_kernel(%arg0: i32, %arg1: memref<2x8x2x8x8xf32, #tpu.memory_space<vmem>>, %arg2: memref<9x4x128xbf16, #tpu.memory_space<vmem>>, %arg3: memref<128x128xbf16, #tpu.memory_space<vmem>>, %arg4: memref<2x128xf32, #tpu.memory_space<vmem>>, %arg5: memref<2x10x11x4xbf16, #tpu.memory_space<vmem>>) attributes {dimension_semantics = [#tpu.dimension_semantics<arbitrary>], iteration_bounds = array<i64: 1>, scalar_prefetch = 0 : i64, scratch_operands = 1 : i64, tpu.core_type = #tpu.core_type<tc>, window_params = [{transform_indices = @transform_0, window_bounds = array<i64: 2, 8, 2, 8, 8>}, {pipeline_mode = #tpu.pipeline_mode<synchronous>, transform_indices = @transform_1, window_bounds = array<i64: 9, 4, 128>}, {transform_indices = @transform_2, window_bounds = array<i64: 128, 128>}, {pipeline_mode = #tpu.pipeline_mode<synchronous>, transform_indices = @transform_3, window_bounds = array<i64: 2, 128>}]} {
    %c0_i32 = arith.constant 0 : i32
    %0 = arith.cmpi eq, %arg0, %c0_i32 : i32
    %1 = arith.extui %0 : i1 to i32
    %c0_i32_0 = arith.constant 0 : i32
    %2 = arith.cmpi ne, %1, %c0_i32_0 : i32
    scf.if %2 {
      %cst_85 = arith.constant 0.000000e+00 : bf16
      %77 = vector.broadcast %cst_85 : bf16 to vector<2x10x11x4xbf16>
      %c0_86 = arith.constant 0 : index
      %c0_87 = arith.constant 0 : index
      %c0_88 = arith.constant 0 : index
      %c0_89 = arith.constant 0 : index
      %78 = vector.load %arg5[%c0_86, %c0_87, %c0_88, %c0_89] : memref<2x10x11x4xbf16, #tpu.memory_space<vmem>>, vector<2x10x11x4xbf16>
      tpu.vector_store %arg5[%c0_86, %c0_87, %c0_88, %c0_89], %77 {strides = array<i32>} : memref<2x10x11x4xbf16, #tpu.memory_space<vmem>>, vector<2x10x11x4xbf16>,
      %cst_90 = arith.constant 0.000000e+00 : f32
      %79 = vector.broadcast %cst_90 : f32 to vector<2x128xf32>
      %c0_91 = arith.constant 0 : index
      %c0_92 = arith.constant 0 : index
      %80 = vector.load %arg4[%c0_91, %c0_92] : memref<2x128xf32, #tpu.memory_space<vmem>>, vector<2x128xf32>
      tpu.vector_store %arg4[%c0_91, %c0_92], %79 {strides = array<i32>} : memref<2x128xf32, #tpu.memory_space<vmem>>, vector<2x128xf32>,
    } else {
    }
    %c0 = arith.constant 0 : index
    %c0_1 = arith.constant 0 : index
    %c0_2 = arith.constant 0 : index
    %c0_3 = arith.constant 0 : index
    %c0_4 = arith.constant 0 : index
    %3 = vector.load %arg1[%c0, %c0_1, %c0_2, %c0_3, %c0_4] : memref<2x8x2x8x8xf32, #tpu.memory_space<vmem>>, vector<2x8x1x8x8xf32>
    %4 = vector.shape_cast %3 : vector<2x8x1x8x8xf32> to vector<2x8x8x8xf32>
    %c0_5 = arith.constant 0 : index
    %c0_6 = arith.constant 0 : index
    %c1 = arith.constant 1 : index
    %c0_7 = arith.constant 0 : index
    %c0_8 = arith.constant 0 : index
    %5 = vector.load %arg1[%c0_5, %c0_6, %c1, %c0_7, %c0_8] : memref<2x8x2x8x8xf32, #tpu.memory_space<vmem>>, vector<2x8x1x8x8xf32>
    %6 = vector.shape_cast %5 : vector<2x8x1x8x8xf32> to vector<2x8x8x8xf32>
    %7 = arith.maximumf %4, %6 : vector<2x8x8x8xf32>
    %8 = vector.extract_strided_slice %7 {offsets = [0, 0, 0, 0], sizes = [2, 8, 8, 4], strides = [1, 1, 1, 1]} : vector<2x8x8x8xf32> to vector<2x8x8x4xf32>
    %9 = vector.extract_strided_slice %7 {offsets = [0, 0, 0, 4], sizes = [2, 8, 8, 4], strides = [1, 1, 1, 1]} : vector<2x8x8x8xf32> to vector<2x8x8x4xf32>
    %10 = arith.maximumf %8, %9 : vector<2x8x8x4xf32>
    %11 = arith.truncf %10 : vector<2x8x8x4xf32> to vector<2x8x8x4xbf16>
    %c0_9 = arith.constant 0 : index
    %c1_10 = arith.constant 1 : index
    %c2 = arith.constant 2 : index
    %c0_11 = arith.constant 0 : index
    %12 = vector.load %arg5[%c0_9, %c1_10, %c2, %c0_11] : memref<2x10x11x4xbf16, #tpu.memory_space<vmem>>, vector<2x8x8x4xbf16>
    tpu.vector_store %arg5[%c0_9, %c1_10, %c2, %c0_11], %11 {strides = array<i32>} : memref<2x10x11x4xbf16, #tpu.memory_space<vmem>>, vector<2x8x8x4xbf16>,
    %c0_12 = arith.constant 0 : index
    %c0_13 = arith.constant 0 : index
    %c1_14 = arith.constant 1 : index
    %c0_15 = arith.constant 0 : index
    %13 = vector.load %arg5[%c0_12, %c0_13, %c1_14, %c0_15] : memref<2x10x11x4xbf16, #tpu.memory_space<vmem>>, vector<2x8x8x4xbf16>
    %14 = vector.shape_cast %13 : vector<2x8x8x4xbf16> to vector<128x4xbf16>
    %c0_16 = arith.constant 0 : index
    %c0_17 = arith.constant 0 : index
    %c0_18 = arith.constant 0 : index
    %15 = vector.load %arg2[%c0_16, %c0_17, %c0_18] : memref<9x4x128xbf16, #tpu.memory_space<vmem>>, vector<1x4x128xbf16>
    %16 = vector.shape_cast %15 : vector<1x4x128xbf16> to vector<4x128xbf16>
    %cst = arith.constant dense<0.000000e+00> : vector<128x128xf32>
    %17 = tpu.matmul %14, %16, %cst {dimension_numbers = #tpu.dot_dimension_numbers<[1], [0], [0], [1], [0, 0, 1, 1], [], []>} : vector<128x4xbf16>, vector<4x128xbf16>, vector<128x128xf32> -> vector<128x128xf32>
    %c0_19 = arith.constant 0 : index
    %c0_20 = arith.constant 0 : index
    %c2_21 = arith.constant 2 : index
    %c0_22 = arith.constant 0 : index
    %18 = vector.load %arg5[%c0_19, %c0_20, %c2_21, %c0_22] : memref<2x10x11x4xbf16, #tpu.memory_space<vmem>>, vector<2x8x8x4xbf16>
    %19 = vector.shape_cast %18 : vector<2x8x8x4xbf16> to vector<128x4xbf16>
    %c1_23 = arith.constant 1 : index
    %c0_24 = arith.constant 0 : index
    %c0_25 = arith.constant 0 : index
    %20 = vector.load %arg2[%c1_23, %c0_24, %c0_25] : memref<9x4x128xbf16, #tpu.memory_space<vmem>>, vector<1x4x128xbf16>
    %21 = vector.shape_cast %20 : vector<1x4x128xbf16> to vector<4x128xbf16>
    %cst_26 = arith.constant dense<0.000000e+00> : vector<128x128xf32>
    %22 = tpu.matmul %19, %21, %cst_26 {dimension_numbers = #tpu.dot_dimension_numbers<[1], [0], [0], [1], [0, 0, 1, 1], [], []>} : vector<128x4xbf16>, vector<4x128xbf16>, vector<128x128xf32> -> vector<128x128xf32>
    %23 = arith.addf %17, %22 : vector<128x128xf32>
    %c0_27 = arith.constant 0 : index
    %c0_28 = arith.constant 0 : index
    %c3 = arith.constant 3 : index
    %c0_29 = arith.constant 0 : index
    %24 = vector.load %arg5[%c0_27, %c0_28, %c3, %c0_29] : memref<2x10x11x4xbf16, #tpu.memory_space<vmem>>, vector<2x8x8x4xbf16>
    %25 = vector.shape_cast %24 : vector<2x8x8x4xbf16> to vector<128x4xbf16>
    %c2_30 = arith.constant 2 : index
    %c0_31 = arith.constant 0 : index
    %c0_32 = arith.constant 0 : index
    %26 = vector.load %arg2[%c2_30, %c0_31, %c0_32] : memref<9x4x128xbf16, #tpu.memory_space<vmem>>, vector<1x4x128xbf16>
    %27 = vector.shape_cast %26 : vector<1x4x128xbf16> to vector<4x128xbf16>
    %cst_33 = arith.constant dense<0.000000e+00> : vector<128x128xf32>
    %28 = tpu.matmul %25, %27, %cst_33 {dimension_numbers = #tpu.dot_dimension_numbers<[1], [0], [0], [1], [0, 0, 1, 1], [], []>} : vector<128x4xbf16>, vector<4x128xbf16>, vector<128x128xf32> -> vector<128x128xf32>
    %29 = arith.addf %23, %28 : vector<128x128xf32>
    %c0_34 = arith.constant 0 : index
    %c1_35 = arith.constant 1 : index
    %c1_36 = arith.constant 1 : index
    %c0_37 = arith.constant 0 : index
    %30 = vector.load %arg5[%c0_34, %c1_35, %c1_36, %c0_37] : memref<2x10x11x4xbf16, #tpu.memory_space<vmem>>, vector<2x8x8x4xbf16>
    %31 = vector.shape_cast %30 : vector<2x8x8x4xbf16> to vector<128x4xbf16>
    %c3_38 = arith.constant 3 : index
    %c0_39 = arith.constant 0 : index
    %c0_40 = arith.constant 0 : index
    %32 = vector.load %arg2[%c3_38, %c0_39, %c0_40] : memref<9x4x128xbf16, #tpu.memory_space<vmem>>, vector<1x4x128xbf16>
    %33 = vector.shape_cast %32 : vector<1x4x128xbf16> to vector<4x128xbf16>
    %cst_41 = arith.constant dense<0.000000e+00> : vector<128x128xf32>
    %34 = tpu.matmul %31, %33, %cst_41 {dimension_numbers = #tpu.dot_dimension_numbers<[1], [0], [0], [1], [0, 0, 1, 1], [], []>} : vector<128x4xbf16>, vector<4x128xbf16>, vector<128x128xf32> -> vector<128x128xf32>
    %35 = arith.addf %29, %34 : vector<128x128xf32>
    %c0_42 = arith.constant 0 : index
    %c1_43 = arith.constant 1 : index
    %c2_44 = arith.constant 2 : index
    %c0_45 = arith.constant 0 : index
    %36 = vector.load %arg5[%c0_42, %c1_43, %c2_44, %c0_45] : memref<2x10x11x4xbf16, #tpu.memory_space<vmem>>, vector<2x8x8x4xbf16>
    %37 = vector.shape_cast %36 : vector<2x8x8x4xbf16> to vector<128x4xbf16>
    %c4 = arith.constant 4 : index
    %c0_46 = arith.constant 0 : index
    %c0_47 = arith.constant 0 : index
    %38 = vector.load %arg2[%c4, %c0_46, %c0_47] : memref<9x4x128xbf16, #tpu.memory_space<vmem>>, vector<1x4x128xbf16>
    %39 = vector.shape_cast %38 : vector<1x4x128xbf16> to vector<4x128xbf16>
    %cst_48 = arith.constant dense<0.000000e+00> : vector<128x128xf32>
    %40 = tpu.matmul %37, %39, %cst_48 {dimension_numbers = #tpu.dot_dimension_numbers<[1], [0], [0], [1], [0, 0, 1, 1], [], []>} : vector<128x4xbf16>, vector<4x128xbf16>, vector<128x128xf32> -> vector<128x128xf32>
    %41 = arith.addf %35, %40 : vector<128x128xf32>
    %c0_49 = arith.constant 0 : index
    %c1_50 = arith.constant 1 : index
    %c3_51 = arith.constant 3 : index
    %c0_52 = arith.constant 0 : index
    %42 = vector.load %arg5[%c0_49, %c1_50, %c3_51, %c0_52] : memref<2x10x11x4xbf16, #tpu.memory_space<vmem>>, vector<2x8x8x4xbf16>
    %43 = vector.shape_cast %42 : vector<2x8x8x4xbf16> to vector<128x4xbf16>
    %c5 = arith.constant 5 : index
    %c0_53 = arith.constant 0 : index
    %c0_54 = arith.constant 0 : index
    %44 = vector.load %arg2[%c5, %c0_53, %c0_54] : memref<9x4x128xbf16, #tpu.memory_space<vmem>>, vector<1x4x128xbf16>
    %45 = vector.shape_cast %44 : vector<1x4x128xbf16> to vector<4x128xbf16>
    %cst_55 = arith.constant dense<0.000000e+00> : vector<128x128xf32>
    %46 = tpu.matmul %43, %45, %cst_55 {dimension_numbers = #tpu.dot_dimension_numbers<[1], [0], [0], [1], [0, 0, 1, 1], [], []>} : vector<128x4xbf16>, vector<4x128xbf16>, vector<128x128xf32> -> vector<128x128xf32>
    %47 = arith.addf %41, %46 : vector<128x128xf32>
    %c0_56 = arith.constant 0 : index
    %c2_57 = arith.constant 2 : index
    %c1_58 = arith.constant 1 : index
    %c0_59 = arith.constant 0 : index
    %48 = vector.load %arg5[%c0_56, %c2_57, %c1_58, %c0_59] : memref<2x10x11x4xbf16, #tpu.memory_space<vmem>>, vector<2x8x8x4xbf16>
    %49 = vector.shape_cast %48 : vector<2x8x8x4xbf16> to vector<128x4xbf16>
    %c6 = arith.constant 6 : index
    %c0_60 = arith.constant 0 : index
    %c0_61 = arith.constant 0 : index
    %50 = vector.load %arg2[%c6, %c0_60, %c0_61] : memref<9x4x128xbf16, #tpu.memory_space<vmem>>, vector<1x4x128xbf16>
    %51 = vector.shape_cast %50 : vector<1x4x128xbf16> to vector<4x128xbf16>
    %cst_62 = arith.constant dense<0.000000e+00> : vector<128x128xf32>
    %52 = tpu.matmul %49, %51, %cst_62 {dimension_numbers = #tpu.dot_dimension_numbers<[1], [0], [0], [1], [0, 0, 1, 1], [], []>} : vector<128x4xbf16>, vector<4x128xbf16>, vector<128x128xf32> -> vector<128x128xf32>
    %53 = arith.addf %47, %52 : vector<128x128xf32>
    %c0_63 = arith.constant 0 : index
    %c2_64 = arith.constant 2 : index
    %c2_65 = arith.constant 2 : index
    %c0_66 = arith.constant 0 : index
    %54 = vector.load %arg5[%c0_63, %c2_64, %c2_65, %c0_66] : memref<2x10x11x4xbf16, #tpu.memory_space<vmem>>, vector<2x8x8x4xbf16>
    %55 = vector.shape_cast %54 : vector<2x8x8x4xbf16> to vector<128x4xbf16>
    %c7 = arith.constant 7 : index
    %c0_67 = arith.constant 0 : index
    %c0_68 = arith.constant 0 : index
    %56 = vector.load %arg2[%c7, %c0_67, %c0_68] : memref<9x4x128xbf16, #tpu.memory_space<vmem>>, vector<1x4x128xbf16>
    %57 = vector.shape_cast %56 : vector<1x4x128xbf16> to vector<4x128xbf16>
    %cst_69 = arith.constant dense<0.000000e+00> : vector<128x128xf32>
    %58 = tpu.matmul %55, %57, %cst_69 {dimension_numbers = #tpu.dot_dimension_numbers<[1], [0], [0], [1], [0, 0, 1, 1], [], []>} : vector<128x4xbf16>, vector<4x128xbf16>, vector<128x128xf32> -> vector<128x128xf32>
    %59 = arith.addf %53, %58 : vector<128x128xf32>
    %c0_70 = arith.constant 0 : index
    %c2_71 = arith.constant 2 : index
    %c3_72 = arith.constant 3 : index
    %c0_73 = arith.constant 0 : index
    %60 = vector.load %arg5[%c0_70, %c2_71, %c3_72, %c0_73] : memref<2x10x11x4xbf16, #tpu.memory_space<vmem>>, vector<2x8x8x4xbf16>
    %61 = vector.shape_cast %60 : vector<2x8x8x4xbf16> to vector<128x4xbf16>
    %c8 = arith.constant 8 : index
    %c0_74 = arith.constant 0 : index
    %c0_75 = arith.constant 0 : index
    %62 = vector.load %arg2[%c8, %c0_74, %c0_75] : memref<9x4x128xbf16, #tpu.memory_space<vmem>>, vector<1x4x128xbf16>
    %63 = vector.shape_cast %62 : vector<1x4x128xbf16> to vector<4x128xbf16>
    %cst_76 = arith.constant dense<0.000000e+00> : vector<128x128xf32>
    %64 = tpu.matmul %61, %63, %cst_76 {dimension_numbers = #tpu.dot_dimension_numbers<[1], [0], [0], [1], [0, 0, 1, 1], [], []>} : vector<128x4xbf16>, vector<4x128xbf16>, vector<128x128xf32> -> vector<128x128xf32>
    %65 = arith.addf %59, %64 : vector<128x128xf32>
    %66 = arith.truncf %65 : vector<128x128xf32> to vector<128x128xbf16>
    %c0_77 = arith.constant 0 : index
    %c0_78 = arith.constant 0 : index
    %67 = vector.load %arg3[%c0_77, %c0_78] : memref<128x128xbf16, #tpu.memory_space<vmem>>, vector<128x128xbf16>
    tpu.vector_store %arg3[%c0_77, %c0_78], %66 {strides = array<i32>} : memref<128x128xbf16, #tpu.memory_space<vmem>>, vector<128x128xbf16>,
    %c0_79 = arith.constant 0 : index
    %c0_80 = arith.constant 0 : index
    %68 = vector.load %arg4[%c0_79, %c0_80] : memref<2x128xf32, #tpu.memory_space<vmem>>, vector<2x128xf32>
    %cst_81 = arith.constant dense<0.000000e+00> : vector<128xf32>
    %69 = vector.multi_reduction <add>, %65, %cst_81 [0] : vector<128x128xf32> to vector<128xf32>
    %70 = vector.shape_cast %69 : vector<128xf32> to vector<1x128xf32>
    %71 = arith.mulf %65, %65 : vector<128x128xf32>
    %cst_82 = arith.constant dense<0.000000e+00> : vector<128xf32>
    %72 = vector.multi_reduction <add>, %71, %cst_82 [0] : vector<128x128xf32> to vector<128xf32>
    %73 = vector.shape_cast %72 : vector<128xf32> to vector<1x128xf32>
    %74 = tpu.concatenate %70, %73 in 0 : vector<1x128xf32>, vector<1x128xf32> -> vector<2x128xf32>
    %75 = arith.addf %68, %74 : vector<2x128xf32>
    %c0_83 = arith.constant 0 : index
    %c0_84 = arith.constant 0 : index
    %76 = vector.load %arg4[%c0_83, %c0_84] : memref<2x128xf32, #tpu.memory_space<vmem>>, vector<2x128xf32>
    tpu.vector_store %arg4[%c0_83, %c0_84], %75 {strides = array<i32>} : memref<2x128xf32, #tpu.memory_space<vmem>>, vector<2x128xf32>,
    return
  }
  func.func @transform_0(%arg0: i32) -> (i32, i32, i32, i32, i32) {
    %c0_i32 = arith.constant 0 : i32
    %c0_i32_0 = arith.constant 0 : i32
    %c0_i32_1 = arith.constant 0 : i32
    %c0_i32_2 = arith.constant 0 : i32
    %c0_i32_3 = arith.constant 0 : i32
    return %arg0, %c0_i32, %c0_i32_0, %c0_i32_1, %c0_i32_2 : i32, i32, i32, i32, i32
  }
  func.func @transform_1(%arg0: i32) -> (i32, i32, i32) {
    %c0_i32 = arith.constant 0 : i32
    %c0_i32_0 = arith.constant 0 : i32
    %c0_i32_1 = arith.constant 0 : i32
    %c0_i32_2 = arith.constant 0 : i32
    return %c0_i32, %c0_i32_0, %c0_i32_1 : i32, i32, i32
  }
  func.func @transform_2(%arg0: i32) -> (i32, i32) {
    %c0_i32 = arith.constant 0 : i32
    %c0_i32_0 = arith.constant 0 : i32
    return %arg0, %c0_i32 : i32, i32
  }
  func.func @transform_3(%arg0: i32) -> (i32, i32) {
    %c0_i32 = arith.constant 0 : i32
    %c0_i32_0 = arith.constant 0 : i32
    %c0_i32_1 = arith.constant 0 : i32
    return %c0_i32, %c0_i32_0 : i32, i32
  }
}

module attributes {stable_mosaic.version = 11 : i64} {
  func.func @bn_relu_kernel(%arg0: i32, %arg1: memref<128x128xbf16, #tpu.memory_space<vmem>>, %arg2: memref<2x128xf32, #tpu.memory_space<vmem>>, %arg3: memref<1x128xf32, #tpu.memory_space<vmem>>, %arg4: memref<1x128xf32, #tpu.memory_space<vmem>>, %arg5: memref<128x128xf32, #tpu.memory_space<vmem>>) attributes {dimension_semantics = [#tpu.dimension_semantics<parallel>], iteration_bounds = array<i64: 1>, scalar_prefetch = 0 : i64, scratch_operands = 0 : i64, tpu.core_type = #tpu.core_type<tc>, window_params = [{transform_indices = @transform_0, window_bounds = array<i64: 128, 128>}, {pipeline_mode = #tpu.pipeline_mode<synchronous>, transform_indices = @transform_1, window_bounds = array<i64: 2, 128>}, {pipeline_mode = #tpu.pipeline_mode<synchronous>, transform_indices = @transform_2, window_bounds = array<i64: 1, 128>}, {pipeline_mode = #tpu.pipeline_mode<synchronous>, transform_indices = @transform_3, window_bounds = array<i64: 1, 128>}, {transform_indices = @transform_4, window_bounds = array<i64: 128, 128>}]} {
    %c0 = arith.constant 0 : index
    %c0_0 = arith.constant 0 : index
    %0 = vector.load %arg2[%c0, %c0_0] : memref<2x128xf32, #tpu.memory_space<vmem>>, vector<1x128xf32>
    %cst = arith.constant 7.812500e-03 : f32
    %1 = vector.broadcast %cst : f32 to vector<1x128xf32>
    %2 = arith.mulf %0, %1 : vector<1x128xf32>
    %c1 = arith.constant 1 : index
    %c0_1 = arith.constant 0 : index
    %3 = vector.load %arg2[%c1, %c0_1] : memref<2x128xf32, #tpu.memory_space<vmem>>, vector<1x128xf32>
    %cst_2 = arith.constant 7.812500e-03 : f32
    %4 = vector.broadcast %cst_2 : f32 to vector<1x128xf32>
    %5 = arith.mulf %3, %4 : vector<1x128xf32>
    %6 = arith.mulf %2, %2 : vector<1x128xf32>
    %7 = arith.subf %5, %6 : vector<1x128xf32>
    %c0_3 = arith.constant 0 : index
    %c0_4 = arith.constant 0 : index
    %8 = vector.load %arg3[%c0_3, %c0_4] : memref<1x128xf32, #tpu.memory_space<vmem>>, vector<1x128xf32>
    %cst_5 = arith.constant 9.99999974E-6 : f32
    %9 = vector.broadcast %cst_5 : f32 to vector<1x128xf32>
    %10 = arith.addf %7, %9 : vector<1x128xf32>
    %11 = math.rsqrt %10 : vector<1x128xf32>
    %12 = arith.mulf %8, %11 : vector<1x128xf32>
    %c0_6 = arith.constant 0 : index
    %c0_7 = arith.constant 0 : index
    %13 = vector.load %arg4[%c0_6, %c0_7] : memref<1x128xf32, #tpu.memory_space<vmem>>, vector<1x128xf32>
    %14 = arith.mulf %2, %12 : vector<1x128xf32>
    %15 = arith.subf %13, %14 : vector<1x128xf32>
    %c0_8 = arith.constant 0 : index
    %c0_9 = arith.constant 0 : index
    %16 = vector.load %arg1[%c0_8, %c0_9] : memref<128x128xbf16, #tpu.memory_space<vmem>>, vector<128x128xbf16>
    %17 = arith.extf %16 : vector<128x128xbf16> to vector<128x128xf32>
    %18 = vector.broadcast %12 : vector<1x128xf32> to vector<128x128xf32>
    %19 = arith.mulf %17, %18 : vector<128x128xf32>
    %20 = vector.broadcast %15 : vector<1x128xf32> to vector<128x128xf32>
    %21 = arith.addf %19, %20 : vector<128x128xf32>
    %cst_10 = arith.constant 0.000000e+00 : f32
    %22 = vector.broadcast %cst_10 : f32 to vector<128x128xf32>
    %23 = arith.maximumf %21, %22 : vector<128x128xf32>
    %c0_11 = arith.constant 0 : index
    %c0_12 = arith.constant 0 : index
    %24 = vector.load %arg5[%c0_11, %c0_12] : memref<128x128xf32, #tpu.memory_space<vmem>>, vector<128x128xf32>
    tpu.vector_store %arg5[%c0_11, %c0_12], %23 {strides = array<i32>} : memref<128x128xf32, #tpu.memory_space<vmem>>, vector<128x128xf32>,
    return
  }
  func.func @transform_0(%arg0: i32) -> (i32, i32) {
    %c0_i32 = arith.constant 0 : i32
    %c0_i32_0 = arith.constant 0 : i32
    return %arg0, %c0_i32 : i32, i32
  }
  func.func @transform_1(%arg0: i32) -> (i32, i32) {
    %c0_i32 = arith.constant 0 : i32
    %c0_i32_0 = arith.constant 0 : i32
    %c0_i32_1 = arith.constant 0 : i32
    return %c0_i32, %c0_i32_0 : i32, i32
  }
  func.func @transform_2(%arg0: i32) -> (i32, i32) {
    %c0_i32 = arith.constant 0 : i32
    %c0_i32_0 = arith.constant 0 : i32
    %c0_i32_1 = arith.constant 0 : i32
    return %c0_i32, %c0_i32_0 : i32, i32
  }
  func.func @transform_3(%arg0: i32) -> (i32, i32) {
    %c0_i32 = arith.constant 0 : i32
    %c0_i32_0 = arith.constant 0 : i32
    %c0_i32_1 = arith.constant 0 : i32
    return %c0_i32, %c0_i32_0 : i32, i32
  }
  func.func @transform_4(%arg0: i32) -> (i32, i32) {
    %c0_i32 = arith.constant 0 : i32
    %c0_i32_0 = arith.constant 0 : i32
    return %arg0, %c0_i32 : i32, i32
  }
}

module attributes {stable_mosaic.version = 11 : i64} {
  func.func @bn_relu_conv_stats_kernel(%arg0: i32, %arg1: memref<128x128xbf16, #tpu.memory_space<vmem>>, %arg2: memref<2x128xf32, #tpu.memory_space<vmem>>, %arg3: memref<1x128xf32, #tpu.memory_space<vmem>>, %arg4: memref<1x128xf32, #tpu.memory_space<vmem>>, %arg5: memref<9x128x128xbf16, #tpu.memory_space<vmem>>, %arg6: memref<128x128xbf16, #tpu.memory_space<vmem>>, %arg7: memref<2x128xf32, #tpu.memory_space<vmem>>, %arg8: memref<2x10x11x128xbf16, #tpu.memory_space<vmem>>) attributes {dimension_semantics = [#tpu.dimension_semantics<arbitrary>], iteration_bounds = array<i64: 1>, scalar_prefetch = 0 : i64, scratch_operands = 1 : i64, tpu.core_type = #tpu.core_type<tc>, window_params = [{transform_indices = @transform_0, window_bounds = array<i64: 128, 128>}, {pipeline_mode = #tpu.pipeline_mode<synchronous>, transform_indices = @transform_1, window_bounds = array<i64: 2, 128>}, {pipeline_mode = #tpu.pipeline_mode<synchronous>, transform_indices = @transform_2, window_bounds = array<i64: 1, 128>}, {pipeline_mode = #tpu.pipeline_mode<synchronous>, transform_indices = @transform_3, window_bounds = array<i64: 1, 128>}, {pipeline_mode = #tpu.pipeline_mode<synchronous>, transform_indices = @transform_4, window_bounds = array<i64: 9, 128, 128>}, {transform_indices = @transform_5, window_bounds = array<i64: 128, 128>}, {pipeline_mode = #tpu.pipeline_mode<synchronous>, transform_indices = @transform_6, window_bounds = array<i64: 2, 128>}]} {
    %c0_i32 = arith.constant 0 : i32
    %0 = arith.cmpi eq, %arg0, %c0_i32 : i32
    %1 = arith.extui %0 : i1 to i32
    %c0_i32_0 = arith.constant 0 : i32
    %2 = arith.cmpi ne, %1, %c0_i32_0 : i32
    scf.if %2 {
      %cst_89 = arith.constant 0.000000e+00 : bf16
      %94 = vector.broadcast %cst_89 : bf16 to vector<2x10x11x128xbf16>
      %c0_90 = arith.constant 0 : index
      %c0_91 = arith.constant 0 : index
      %c0_92 = arith.constant 0 : index
      %c0_93 = arith.constant 0 : index
      %95 = vector.load %arg8[%c0_90, %c0_91, %c0_92, %c0_93] : memref<2x10x11x128xbf16, #tpu.memory_space<vmem>>, vector<2x10x11x128xbf16>
      tpu.vector_store %arg8[%c0_90, %c0_91, %c0_92, %c0_93], %94 {strides = array<i32>} : memref<2x10x11x128xbf16, #tpu.memory_space<vmem>>, vector<2x10x11x128xbf16>,
      %cst_94 = arith.constant 0.000000e+00 : f32
      %96 = vector.broadcast %cst_94 : f32 to vector<2x128xf32>
      %c0_95 = arith.constant 0 : index
      %c0_96 = arith.constant 0 : index
      %97 = vector.load %arg7[%c0_95, %c0_96] : memref<2x128xf32, #tpu.memory_space<vmem>>, vector<2x128xf32>
      tpu.vector_store %arg7[%c0_95, %c0_96], %96 {strides = array<i32>} : memref<2x128xf32, #tpu.memory_space<vmem>>, vector<2x128xf32>,
    } else {
    }
    %c0 = arith.constant 0 : index
    %c0_1 = arith.constant 0 : index
    %3 = vector.load %arg2[%c0, %c0_1] : memref<2x128xf32, #tpu.memory_space<vmem>>, vector<1x128xf32>
    %cst = arith.constant 7.812500e-03 : f32
    %4 = vector.broadcast %cst : f32 to vector<1x128xf32>
    %5 = arith.mulf %3, %4 : vector<1x128xf32>
    %c1 = arith.constant 1 : index
    %c0_2 = arith.constant 0 : index
    %6 = vector.load %arg2[%c1, %c0_2] : memref<2x128xf32, #tpu.memory_space<vmem>>, vector<1x128xf32>
    %cst_3 = arith.constant 7.812500e-03 : f32
    %7 = vector.broadcast %cst_3 : f32 to vector<1x128xf32>
    %8 = arith.mulf %6, %7 : vector<1x128xf32>
    %9 = arith.mulf %5, %5 : vector<1x128xf32>
    %10 = arith.subf %8, %9 : vector<1x128xf32>
    %c0_4 = arith.constant 0 : index
    %c0_5 = arith.constant 0 : index
    %11 = vector.load %arg3[%c0_4, %c0_5] : memref<1x128xf32, #tpu.memory_space<vmem>>, vector<1x128xf32>
    %cst_6 = arith.constant 9.99999974E-6 : f32
    %12 = vector.broadcast %cst_6 : f32 to vector<1x128xf32>
    %13 = arith.addf %10, %12 : vector<1x128xf32>
    %14 = math.rsqrt %13 : vector<1x128xf32>
    %15 = arith.mulf %11, %14 : vector<1x128xf32>
    %c0_7 = arith.constant 0 : index
    %c0_8 = arith.constant 0 : index
    %16 = vector.load %arg4[%c0_7, %c0_8] : memref<1x128xf32, #tpu.memory_space<vmem>>, vector<1x128xf32>
    %17 = arith.mulf %5, %15 : vector<1x128xf32>
    %18 = arith.subf %16, %17 : vector<1x128xf32>
    %c0_9 = arith.constant 0 : index
    %c0_10 = arith.constant 0 : index
    %19 = vector.load %arg1[%c0_9, %c0_10] : memref<128x128xbf16, #tpu.memory_space<vmem>>, vector<128x128xbf16>
    %20 = arith.extf %19 : vector<128x128xbf16> to vector<128x128xf32>
    %21 = vector.broadcast %15 : vector<1x128xf32> to vector<128x128xf32>
    %22 = arith.mulf %20, %21 : vector<128x128xf32>
    %23 = vector.broadcast %18 : vector<1x128xf32> to vector<128x128xf32>
    %24 = arith.addf %22, %23 : vector<128x128xf32>
    %cst_11 = arith.constant 0.000000e+00 : f32
    %25 = vector.broadcast %cst_11 : f32 to vector<128x128xf32>
    %26 = arith.maximumf %24, %25 : vector<128x128xf32>
    %27 = vector.shape_cast %26 : vector<128x128xf32> to vector<2x8x8x128xf32>
    %28 = arith.truncf %27 : vector<2x8x8x128xf32> to vector<2x8x8x128xbf16>
    %c0_12 = arith.constant 0 : index
    %c1_13 = arith.constant 1 : index
    %c2 = arith.constant 2 : index
    %c0_14 = arith.constant 0 : index
    %29 = vector.load %arg8[%c0_12, %c1_13, %c2, %c0_14] : memref<2x10x11x128xbf16, #tpu.memory_space<vmem>>, vector<2x8x8x128xbf16>
    tpu.vector_store %arg8[%c0_12, %c1_13, %c2, %c0_14], %28 {strides = array<i32>} : memref<2x10x11x128xbf16, #tpu.memory_space<vmem>>, vector<2x8x8x128xbf16>,
    %c0_15 = arith.constant 0 : index
    %c0_16 = arith.constant 0 : index
    %c1_17 = arith.constant 1 : index
    %c0_18 = arith.constant 0 : index
    %30 = vector.load %arg8[%c0_15, %c0_16, %c1_17, %c0_18] : memref<2x10x11x128xbf16, #tpu.memory_space<vmem>>, vector<2x8x8x128xbf16>
    %31 = vector.shape_cast %30 : vector<2x8x8x128xbf16> to vector<128x128xbf16>
    %c0_19 = arith.constant 0 : index
    %c0_20 = arith.constant 0 : index
    %c0_21 = arith.constant 0 : index
    %32 = vector.load %arg5[%c0_19, %c0_20, %c0_21] : memref<9x128x128xbf16, #tpu.memory_space<vmem>>, vector<1x128x128xbf16>
    %33 = vector.shape_cast %32 : vector<1x128x128xbf16> to vector<128x128xbf16>
    %cst_22 = arith.constant dense<0.000000e+00> : vector<128x128xf32>
    %34 = tpu.matmul %31, %33, %cst_22 {dimension_numbers = #tpu.dot_dimension_numbers<[1], [0], [0], [1], [0, 0, 1, 1], [], []>} : vector<128x128xbf16>, vector<128x128xbf16>, vector<128x128xf32> -> vector<128x128xf32>
    %c0_23 = arith.constant 0 : index
    %c0_24 = arith.constant 0 : index
    %c2_25 = arith.constant 2 : index
    %c0_26 = arith.constant 0 : index
    %35 = vector.load %arg8[%c0_23, %c0_24, %c2_25, %c0_26] : memref<2x10x11x128xbf16, #tpu.memory_space<vmem>>, vector<2x8x8x128xbf16>
    %36 = vector.shape_cast %35 : vector<2x8x8x128xbf16> to vector<128x128xbf16>
    %c1_27 = arith.constant 1 : index
    %c0_28 = arith.constant 0 : index
    %c0_29 = arith.constant 0 : index
    %37 = vector.load %arg5[%c1_27, %c0_28, %c0_29] : memref<9x128x128xbf16, #tpu.memory_space<vmem>>, vector<1x128x128xbf16>
    %38 = vector.shape_cast %37 : vector<1x128x128xbf16> to vector<128x128xbf16>
    %cst_30 = arith.constant dense<0.000000e+00> : vector<128x128xf32>
    %39 = tpu.matmul %36, %38, %cst_30 {dimension_numbers = #tpu.dot_dimension_numbers<[1], [0], [0], [1], [0, 0, 1, 1], [], []>} : vector<128x128xbf16>, vector<128x128xbf16>, vector<128x128xf32> -> vector<128x128xf32>
    %40 = arith.addf %34, %39 : vector<128x128xf32>
    %c0_31 = arith.constant 0 : index
    %c0_32 = arith.constant 0 : index
    %c3 = arith.constant 3 : index
    %c0_33 = arith.constant 0 : index
    %41 = vector.load %arg8[%c0_31, %c0_32, %c3, %c0_33] : memref<2x10x11x128xbf16, #tpu.memory_space<vmem>>, vector<2x8x8x128xbf16>
    %42 = vector.shape_cast %41 : vector<2x8x8x128xbf16> to vector<128x128xbf16>
    %c2_34 = arith.constant 2 : index
    %c0_35 = arith.constant 0 : index
    %c0_36 = arith.constant 0 : index
    %43 = vector.load %arg5[%c2_34, %c0_35, %c0_36] : memref<9x128x128xbf16, #tpu.memory_space<vmem>>, vector<1x128x128xbf16>
    %44 = vector.shape_cast %43 : vector<1x128x128xbf16> to vector<128x128xbf16>
    %cst_37 = arith.constant dense<0.000000e+00> : vector<128x128xf32>
    %45 = tpu.matmul %42, %44, %cst_37 {dimension_numbers = #tpu.dot_dimension_numbers<[1], [0], [0], [1], [0, 0, 1, 1], [], []>} : vector<128x128xbf16>, vector<128x128xbf16>, vector<128x128xf32> -> vector<128x128xf32>
    %46 = arith.addf %40, %45 : vector<128x128xf32>
    %c0_38 = arith.constant 0 : index
    %c1_39 = arith.constant 1 : index
    %c1_40 = arith.constant 1 : index
    %c0_41 = arith.constant 0 : index
    %47 = vector.load %arg8[%c0_38, %c1_39, %c1_40, %c0_41] : memref<2x10x11x128xbf16, #tpu.memory_space<vmem>>, vector<2x8x8x128xbf16>
    %48 = vector.shape_cast %47 : vector<2x8x8x128xbf16> to vector<128x128xbf16>
    %c3_42 = arith.constant 3 : index
    %c0_43 = arith.constant 0 : index
    %c0_44 = arith.constant 0 : index
    %49 = vector.load %arg5[%c3_42, %c0_43, %c0_44] : memref<9x128x128xbf16, #tpu.memory_space<vmem>>, vector<1x128x128xbf16>
    %50 = vector.shape_cast %49 : vector<1x128x128xbf16> to vector<128x128xbf16>
    %cst_45 = arith.constant dense<0.000000e+00> : vector<128x128xf32>
    %51 = tpu.matmul %48, %50, %cst_45 {dimension_numbers = #tpu.dot_dimension_numbers<[1], [0], [0], [1], [0, 0, 1, 1], [], []>} : vector<128x128xbf16>, vector<128x128xbf16>, vector<128x128xf32> -> vector<128x128xf32>
    %52 = arith.addf %46, %51 : vector<128x128xf32>
    %c0_46 = arith.constant 0 : index
    %c1_47 = arith.constant 1 : index
    %c2_48 = arith.constant 2 : index
    %c0_49 = arith.constant 0 : index
    %53 = vector.load %arg8[%c0_46, %c1_47, %c2_48, %c0_49] : memref<2x10x11x128xbf16, #tpu.memory_space<vmem>>, vector<2x8x8x128xbf16>
    %54 = vector.shape_cast %53 : vector<2x8x8x128xbf16> to vector<128x128xbf16>
    %c4 = arith.constant 4 : index
    %c0_50 = arith.constant 0 : index
    %c0_51 = arith.constant 0 : index
    %55 = vector.load %arg5[%c4, %c0_50, %c0_51] : memref<9x128x128xbf16, #tpu.memory_space<vmem>>, vector<1x128x128xbf16>
    %56 = vector.shape_cast %55 : vector<1x128x128xbf16> to vector<128x128xbf16>
    %cst_52 = arith.constant dense<0.000000e+00> : vector<128x128xf32>
    %57 = tpu.matmul %54, %56, %cst_52 {dimension_numbers = #tpu.dot_dimension_numbers<[1], [0], [0], [1], [0, 0, 1, 1], [], []>} : vector<128x128xbf16>, vector<128x128xbf16>, vector<128x128xf32> -> vector<128x128xf32>
    %58 = arith.addf %52, %57 : vector<128x128xf32>
    %c0_53 = arith.constant 0 : index
    %c1_54 = arith.constant 1 : index
    %c3_55 = arith.constant 3 : index
    %c0_56 = arith.constant 0 : index
    %59 = vector.load %arg8[%c0_53, %c1_54, %c3_55, %c0_56] : memref<2x10x11x128xbf16, #tpu.memory_space<vmem>>, vector<2x8x8x128xbf16>
    %60 = vector.shape_cast %59 : vector<2x8x8x128xbf16> to vector<128x128xbf16>
    %c5 = arith.constant 5 : index
    %c0_57 = arith.constant 0 : index
    %c0_58 = arith.constant 0 : index
    %61 = vector.load %arg5[%c5, %c0_57, %c0_58] : memref<9x128x128xbf16, #tpu.memory_space<vmem>>, vector<1x128x128xbf16>
    %62 = vector.shape_cast %61 : vector<1x128x128xbf16> to vector<128x128xbf16>
    %cst_59 = arith.constant dense<0.000000e+00> : vector<128x128xf32>
    %63 = tpu.matmul %60, %62, %cst_59 {dimension_numbers = #tpu.dot_dimension_numbers<[1], [0], [0], [1], [0, 0, 1, 1], [], []>} : vector<128x128xbf16>, vector<128x128xbf16>, vector<128x128xf32> -> vector<128x128xf32>
    %64 = arith.addf %58, %63 : vector<128x128xf32>
    %c0_60 = arith.constant 0 : index
    %c2_61 = arith.constant 2 : index
    %c1_62 = arith.constant 1 : index
    %c0_63 = arith.constant 0 : index
    %65 = vector.load %arg8[%c0_60, %c2_61, %c1_62, %c0_63] : memref<2x10x11x128xbf16, #tpu.memory_space<vmem>>, vector<2x8x8x128xbf16>
    %66 = vector.shape_cast %65 : vector<2x8x8x128xbf16> to vector<128x128xbf16>
    %c6 = arith.constant 6 : index
    %c0_64 = arith.constant 0 : index
    %c0_65 = arith.constant 0 : index
    %67 = vector.load %arg5[%c6, %c0_64, %c0_65] : memref<9x128x128xbf16, #tpu.memory_space<vmem>>, vector<1x128x128xbf16>
    %68 = vector.shape_cast %67 : vector<1x128x128xbf16> to vector<128x128xbf16>
    %cst_66 = arith.constant dense<0.000000e+00> : vector<128x128xf32>
    %69 = tpu.matmul %66, %68, %cst_66 {dimension_numbers = #tpu.dot_dimension_numbers<[1], [0], [0], [1], [0, 0, 1, 1], [], []>} : vector<128x128xbf16>, vector<128x128xbf16>, vector<128x128xf32> -> vector<128x128xf32>
    %70 = arith.addf %64, %69 : vector<128x128xf32>
    %c0_67 = arith.constant 0 : index
    %c2_68 = arith.constant 2 : index
    %c2_69 = arith.constant 2 : index
    %c0_70 = arith.constant 0 : index
    %71 = vector.load %arg8[%c0_67, %c2_68, %c2_69, %c0_70] : memref<2x10x11x128xbf16, #tpu.memory_space<vmem>>, vector<2x8x8x128xbf16>
    %72 = vector.shape_cast %71 : vector<2x8x8x128xbf16> to vector<128x128xbf16>
    %c7 = arith.constant 7 : index
    %c0_71 = arith.constant 0 : index
    %c0_72 = arith.constant 0 : index
    %73 = vector.load %arg5[%c7, %c0_71, %c0_72] : memref<9x128x128xbf16, #tpu.memory_space<vmem>>, vector<1x128x128xbf16>
    %74 = vector.shape_cast %73 : vector<1x128x128xbf16> to vector<128x128xbf16>
    %cst_73 = arith.constant dense<0.000000e+00> : vector<128x128xf32>
    %75 = tpu.matmul %72, %74, %cst_73 {dimension_numbers = #tpu.dot_dimension_numbers<[1], [0], [0], [1], [0, 0, 1, 1], [], []>} : vector<128x128xbf16>, vector<128x128xbf16>, vector<128x128xf32> -> vector<128x128xf32>
    %76 = arith.addf %70, %75 : vector<128x128xf32>
    %c0_74 = arith.constant 0 : index
    %c2_75 = arith.constant 2 : index
    %c3_76 = arith.constant 3 : index
    %c0_77 = arith.constant 0 : index
    %77 = vector.load %arg8[%c0_74, %c2_75, %c3_76, %c0_77] : memref<2x10x11x128xbf16, #tpu.memory_space<vmem>>, vector<2x8x8x128xbf16>
    %78 = vector.shape_cast %77 : vector<2x8x8x128xbf16> to vector<128x128xbf16>
    %c8 = arith.constant 8 : index
    %c0_78 = arith.constant 0 : index
    %c0_79 = arith.constant 0 : index
    %79 = vector.load %arg5[%c8, %c0_78, %c0_79] : memref<9x128x128xbf16, #tpu.memory_space<vmem>>, vector<1x128x128xbf16>
    %80 = vector.shape_cast %79 : vector<1x128x128xbf16> to vector<128x128xbf16>
    %cst_80 = arith.constant dense<0.000000e+00> : vector<128x128xf32>
    %81 = tpu.matmul %78, %80, %cst_80 {dimension_numbers = #tpu.dot_dimension_numbers<[1], [0], [0], [1], [0, 0, 1, 1], [], []>} : vector<128x128xbf16>, vector<128x128xbf16>, vector<128x128xf32> -> vector<128x128xf32>
    %82 = arith.addf %76, %81 : vector<128x128xf32>
    %83 = arith.truncf %82 : vector<128x128xf32> to vector<128x128xbf16>
    %c0_81 = arith.constant 0 : index
    %c0_82 = arith.constant 0 : index
    %84 = vector.load %arg6[%c0_81, %c0_82] : memref<128x128xbf16, #tpu.memory_space<vmem>>, vector<128x128xbf16>
    tpu.vector_store %arg6[%c0_81, %c0_82], %83 {strides = array<i32>} : memref<128x128xbf16, #tpu.memory_space<vmem>>, vector<128x128xbf16>,
    %c0_83 = arith.constant 0 : index
    %c0_84 = arith.constant 0 : index
    %85 = vector.load %arg7[%c0_83, %c0_84] : memref<2x128xf32, #tpu.memory_space<vmem>>, vector<2x128xf32>
    %cst_85 = arith.constant dense<0.000000e+00> : vector<128xf32>
    %86 = vector.multi_reduction <add>, %82, %cst_85 [0] : vector<128x128xf32> to vector<128xf32>
    %87 = vector.shape_cast %86 : vector<128xf32> to vector<1x128xf32>
    %88 = arith.mulf %82, %82 : vector<128x128xf32>
    %cst_86 = arith.constant dense<0.000000e+00> : vector<128xf32>
    %89 = vector.multi_reduction <add>, %88, %cst_86 [0] : vector<128x128xf32> to vector<128xf32>
    %90 = vector.shape_cast %89 : vector<128xf32> to vector<1x128xf32>
    %91 = tpu.concatenate %87, %90 in 0 : vector<1x128xf32>, vector<1x128xf32> -> vector<2x128xf32>
    %92 = arith.addf %85, %91 : vector<2x128xf32>
    %c0_87 = arith.constant 0 : index
    %c0_88 = arith.constant 0 : index
    %93 = vector.load %arg7[%c0_87, %c0_88] : memref<2x128xf32, #tpu.memory_space<vmem>>, vector<2x128xf32>
    tpu.vector_store %arg7[%c0_87, %c0_88], %92 {strides = array<i32>} : memref<2x128xf32, #tpu.memory_space<vmem>>, vector<2x128xf32>,
    return
  }
  func.func @transform_0(%arg0: i32) -> (i32, i32) {
    %c0_i32 = arith.constant 0 : i32
    %c0_i32_0 = arith.constant 0 : i32
    return %arg0, %c0_i32 : i32, i32
  }
  func.func @transform_1(%arg0: i32) -> (i32, i32) {
    %c0_i32 = arith.constant 0 : i32
    %c0_i32_0 = arith.constant 0 : i32
    %c0_i32_1 = arith.constant 0 : i32
    return %c0_i32, %c0_i32_0 : i32, i32
  }
  func.func @transform_2(%arg0: i32) -> (i32, i32) {
    %c0_i32 = arith.constant 0 : i32
    %c0_i32_0 = arith.constant 0 : i32
    %c0_i32_1 = arith.constant 0 : i32
    return %c0_i32, %c0_i32_0 : i32, i32
  }
  func.func @transform_3(%arg0: i32) -> (i32, i32) {
    %c0_i32 = arith.constant 0 : i32
    %c0_i32_0 = arith.constant 0 : i32
    %c0_i32_1 = arith.constant 0 : i32
    return %c0_i32, %c0_i32_0 : i32, i32
  }
  func.func @transform_4(%arg0: i32) -> (i32, i32, i32) {
    %c0_i32 = arith.constant 0 : i32
    %c0_i32_0 = arith.constant 0 : i32
    %c0_i32_1 = arith.constant 0 : i32
    %c0_i32_2 = arith.constant 0 : i32
    return %c0_i32, %c0_i32_0, %c0_i32_1 : i32, i32, i32
  }
  func.func @transform_5(%arg0: i32) -> (i32, i32) {
    %c0_i32 = arith.constant 0 : i32
    %c0_i32_0 = arith.constant 0 : i32
    return %arg0, %c0_i32 : i32, i32
  }
  func.func @transform_6(%arg0: i32) -> (i32, i32) {
    %c0_i32 = arith.constant 0 : i32
    %c0_i32_0 = arith.constant 0 : i32
    %c0_i32_1 = arith.constant 0 : i32
    return %c0_i32, %c0_i32_0 : i32, i32
  }
}

</mosaic_0001>

<llo_original>
// kernel: down_forward.5
$region0: #{down_forward.5}
  #allocation0 [shape = 'u32[]', space=smem, size = 0x4, offset = 0x4, fixed_abs, tag = 'smem constant byte address 0x4 - core index']
  #allocation1 [shape = 'u32[144,128]{1,0:T(1,128)}', space=vmem, size = 0x12000, scoped, tag = 'internal scratch']
  %s0 = inlined_call_operand.vmem [shape: bf16[128,128], index: 0, kind: input, shape index: {}]
  %s1 = inlined_call_operand.vmem [shape: f32[2,128], index: 1, kind: input, shape index: {}]
  %s2 = inlined_call_operand.vmem [shape: f32[1,128], index: 2, kind: input, shape index: {}]
  %s3 = inlined_call_operand.vmem [shape: f32[1,128], index: 3, kind: input, shape index: {}]
  %s4 = inlined_call_operand.vmem [shape: f32[128,128], index: 4, kind: output, shape index: {}]
  %s5 = sld [smem:[#allocation0]]
  $region26: #{down_forward.5} parent=0
    _
  %s7 = ssub.s32 1, %s5
  %s8 = scalar_select 0, %s7, %s5
  // Predicated region
  $region2: #{down_forward.5} parent=0 // pred_check
    _
  $region3: #{down_forward.5} parent=0 // pred_check_branch
    %10 = sbr.rel (0) target = $region5
  $region4: #{down_forward.5} parent=0 // pred_region
    _
  $region5: #{down_forward.5} parent=0 // pred_fallthru
    _
  // Predicated region
  $region6: #{down_forward.5} parent=0 // pred_check
    _
  $region7: #{down_forward.5} parent=0 // pred_check_branch
    %12 = sbr.rel (0) target = $region9
  $region8: #{down_forward.5} parent=0 // pred_region
    _
  $region9: #{down_forward.5} parent=0 // pred_fallthru
    _
  // Predicated region
  $region10: #{down_forward.5} parent=0 // pred_check
    _
  $region11: #{down_forward.5} parent=0 // pred_check_branch
    %14 = sbr.rel (0) target = $region13
  $region12: #{down_forward.5} parent=0 // pred_region
    _
  $region13: #{down_forward.5} parent=0 // pred_fallthru
    _
  // Predicated region
  $region14: #{down_forward.5} parent=0 // pred_check
    _
  $region15: #{down_forward.5} parent=0 // pred_check_branch
    %16 = sbr.rel (0) target = $region17
  $region16: #{down_forward.5} parent=0 // pred_region
    _
  $region17: #{down_forward.5} parent=0 // pred_fallthru
    _
  %v17 = vld [vmem:[%s1] sm:$0x1]
  %v18 = vmul.f32 %v17, 0.0078125
  %v19 = vld [vmem:[%s1 + $0x1] sm:$0x1]
  %v20 = vmul.f32 %v19, 0.0078125
  %v21 = vmul.f32 %v18, %v18
  %v22 = vsub.f32 %v20, %v21
  %v23 = vld [vmem:[%s2] sm:$0x1]
  %v24 = vadd.f32 %v22, 1e-05
  %v25 = vrsqrt.pop %v24
  %v26 = vmul.f32 %v23, %v25
  %v27 = vld [vmem:[%s3] sm:$0x1]
  %v28 = vmul.f32 %v18, %v26
  %v29 = vsub.f32 %v27, %v28
  %v30 = vld [vmem:[%s0] sm:$0xf]
  %v31 = vld [vmem:[%s0 + $0x4] sm:$0xf]
  %v32 = vld [vmem:[%s0 + $0x8] sm:$0xf]
  %v33 = vld [vmem:[%s0 + $0xc] sm:$0xf]
  %v34 = vld [vmem:[%s0 + $0x10] sm:$0xf]
  %v35 = vld [vmem:[%s0 + $0x14] sm:$0xf]
  %v36 = vld [vmem:[%s0 + $0x18] sm:$0xf]
  %v37 = vld [vmem:[%s0 + $0x1c] sm:$0xf]
  %v38 = vld [vmem:[%s0 + $0x20] sm:$0xf]
  %v39 = vld [vmem:[%s0 + $0x24] sm:$0xf]
  %v40 = vld [vmem:[%s0 + $0x28] sm:$0xf]
  %v41 = vld [vmem:[%s0 + $0x2c] sm:$0xf]
  %v42 = vld [vmem:[%s0 + $0x30] sm:$0xf]
  %v43 = vld [vmem:[%s0 + $0x34] sm:$0xf]
  %v44 = vld [vmem:[%s0 + $0x38] sm:$0xf]
  %v45 = vld [vmem:[%s0 + $0x3c] sm:$0xf]
  %v46 = vunpack.c.l.bf16 %v30
  %v47 = vunpack.c.l.bf16 %v31
  %v48 = vunpack.c.l.bf16 %v32
  %v49 = vunpack.c.l.bf16 %v33
  %v50 = vunpack.c.l.bf16 %v34
  %v51 = vunpack.c.l.bf16 %v35
  %v52 = vunpack.c.l.bf16 %v36
  %v53 = vunpack.c.l.bf16 %v37
  %v54 = vunpack.c.l.bf16 %v38
  %v55 = vunpack.c.l.bf16 %v39
  %v56 = vunpack.c.l.bf16 %v40
  %v57 = vunpack.c.l.bf16 %v41
  %v58 = vunpack.c.l.bf16 %v42
  %v59 = vunpack.c.l.bf16 %v43
  %v60 = vunpack.c.l.bf16 %v44
  %v61 = vunpack.c.l.bf16 %v45
  %v63 = vlaneseq
  %v64 = vshrl.u32 %v63, 7
  %v65 = vsub.s32 0, %v64
  %v66 = vrot.slane %v26, %v65
  %v68 = vmul.f32 %v46, %v66
  %v69 = vmul.f32 %v47, %v66
  %v70 = vmul.f32 %v48, %v66
  %v71 = vmul.f32 %v49, %v66
  %v72 = vmul.f32 %v50, %v66
  %v73 = vmul.f32 %v51, %v66
  %v74 = vmul.f32 %v52, %v66
  %v75 = vmul.f32 %v53, %v66
  %v76 = vmul.f32 %v54, %v66
  %v77 = vmul.f32 %v55, %v66
  %v78 = vmul.f32 %v56, %v66
  %v79 = vmul.f32 %v57, %v66
  %v80 = vmul.f32 %v58, %v66
  %v81 = vmul.f32 %v59, %v66
  %v82 = vmul.f32 %v60, %v66
  %v83 = vmul.f32 %v61, %v66
  %v85 = vlaneseq
  %v86 = vshrl.u32 %v85, 7
  %v87 = vsub.s32 0, %v86
  %v88 = vrot.slane %v29, %v87
  %v90 = vadd.f32 %v68, %v88
  %v91 = vadd.f32 %v69, %v88
  %v92 = vadd.f32 %v70, %v88
  %v93 = vadd.f32 %v71, %v88
  %v94 = vadd.f32 %v72, %v88
  %v95 = vadd.f32 %v73, %v88
  %v96 = vadd.f32 %v74, %v88
  %v97 = vadd.f32 %v75, %v88
  %v98 = vadd.f32 %v76, %v88
  %v99 = vadd.f32 %v77, %v88
  %v100 = vadd.f32 %v78, %v88
  %v101 = vadd.f32 %v79, %v88
  %v102 = vadd.f32 %v80, %v88
  %v103 = vadd.f32 %v81, %v88
  %v104 = vadd.f32 %v82, %v88
  %v105 = vadd.f32 %v83, %v88
  %v106 = vmax.f32 %v90, 0.0
  %v107 = vmax.f32 %v91, 0.0
  %v108 = vmax.f32 %v92, 0.0
  %v109 = vmax.f32 %v93, 0.0
  %v110 = vmax.f32 %v94, 0.0
  %v111 = vmax.f32 %v95, 0.0
  %v112 = vmax.f32 %v96, 0.0
  %v113 = vmax.f32 %v97, 0.0
  %v114 = vmax.f32 %v98, 0.0
  %v115 = vmax.f32 %v99, 0.0
  %v116 = vmax.f32 %v100, 0.0
  %v117 = vmax.f32 %v101, 0.0
  %v118 = vmax.f32 %v102, 0.0
  %v119 = vmax.f32 %v103, 0.0
  %v120 = vmax.f32 %v104, 0.0
  %v121 = vmax.f32 %v105, 0.0
  %122 = vst [vmem:[%s4] sm:$0xff] %v106
  %123 = vst [vmem:[%s4 + $0x8] sm:$0xff] %v107
  %124 = vst [vmem:[%s4 + $0x10] sm:$0xff] %v108
  %125 = vst [vmem:[%s4 + $0x18] sm:$0xff] %v109
  %126 = vst [vmem:[%s4 + $0x20] sm:$0xff] %v110
  %127 = vst [vmem:[%s4 + $0x28] sm:$0xff] %v111
  %128 = vst [vmem:[%s4 + $0x30] sm:$0xff] %v112
  %129 = vst [vmem:[%s4 + $0x38] sm:$0xff] %v113
  %130 = vst [vmem:[%s4 + $0x40] sm:$0xff] %v114
  %131 = vst [vmem:[%s4 + $0x48] sm:$0xff] %v115
  %132 = vst [vmem:[%s4 + $0x50] sm:$0xff] %v116
  %133 = vst [vmem:[%s4 + $0x58] sm:$0xff] %v117
  %134 = vst [vmem:[%s4 + $0x60] sm:$0xff] %v118
  %135 = vst [vmem:[%s4 + $0x68] sm:$0xff] %v119
  %136 = vst [vmem:[%s4 + $0x70] sm:$0xff] %v120
  %137 = vst [vmem:[%s4 + $0x78] sm:$0xff] %v121
  // Predicated region
  $region18: #{down_forward.5} parent=0 // pred_check
    _
  $region19: #{down_forward.5} parent=0 // pred_check_branch
    %139 = sbr.rel (0) target = $region21
  $region20: #{down_forward.5} parent=0 // pred_region
    _
  $region21: #{down_forward.5} parent=0 // pred_fallthru
    _
  // Predicated region
  $region22: #{down_forward.5} parent=0 // pred_check
    _
  $region23: #{down_forward.5} parent=0 // pred_check_branch
    %141 = sbr.rel (0) target = $region25
  $region24: #{down_forward.5} parent=0 // pred_region
    _
  $region25: #{down_forward.5} parent=0 // pred_fallthru
    _

// kernel: down_forward.3
$region0: #{down_forward.3}
  #allocation0 [shape = 'u32[]', space=smem, size = 0x4, offset = 0x4, fixed_abs, tag = 'smem constant byte address 0x4 - core index']
  #allocation1 [shape = 'u32[144,128]{1,0:T(1,128)}', space=vmem, size = 0x12000, scoped, tag = 'internal scratch']
  #allocation2 [shape = 'bf16[2,10,11,4]{3,2,1,0:T(8,128)(2,1)}', space=vmem, size = 0x14000, scoped, tag = 'scratch operand']
  %s0 = inlined_call_operand.vmem [shape: f32[2,8,2,8,8], index: 0, kind: input, shape index: {}]
  %s1 = inlined_call_operand.vmem [shape: bf16[9,4,128], index: 1, kind: input, shape index: {}]
  %s2 = inlined_call_operand.vmem [shape: bf16[128,128], index: 2, kind: output, shape index: {0}]
  %s3 = inlined_call_operand.vmem [shape: f32[2,128], index: 3, kind: output, shape index: {1}]
  %4 = xla_tuple %s2, %s3
  %s5 = sld [smem:[#allocation0]]
  $region30: #{down_forward.3} parent=0
    _
  %s7 = ssub.s32 1, %s5
  %s8 = scalar_select 0, %s7, %s5
  // Predicated region
  $region2: #{down_forward.3} parent=0 // pred_check
    _
  $region3: #{down_forward.3} parent=0 // pred_check_branch
    %10 = sbr.rel (0) target = $region5
  $region4: #{down_forward.3} parent=0 // pred_region
    _
  $region5: #{down_forward.3} parent=0 // pred_fallthru
    _
  // Predicated region
  $region6: #{down_forward.3} parent=0 // pred_check
    _
  $region7: #{down_forward.3} parent=0 // pred_check_branch
    %12 = sbr.rel (0) target = $region9
  $region8: #{down_forward.3} parent=0 // pred_region
    _
  $region9: #{down_forward.3} parent=0 // pred_fallthru
    _
  %p14 = scmp.eq.s32.totalorder 0, 0
  // Predicated region
  $region10: #{down_forward.3} parent=0 // pred_check
    %p15 = pneg %p14
  $region11: #{down_forward.3} parent=0 // pred_check_branch
    %17 = sbr.rel (%p15) target = $region13
  $region12: #{down_forward.3} parent=0 // pred_region
    %vm18 = vcmask 27648
    %19 = vst.msk [vmem:[#allocation2] sm:$0xf] %vm18, 0
    %vm20 = vcmask 25600
    %vm21 = vsmask.f32 1280
    %vm22 = vmand %vm20, %vm21
    %v23 = vld [vmem:[#allocation2 + $0x4] sm:$0x3]
    %v24 = vsel %vm22, 0, %v23
    %25 = vst [vmem:[#allocation2 + $0x4] sm:$0x3] %v24
    %26 = vst.msk [vmem:[#allocation2 + $0x8] sm:$0xf] %vm18, 0
    %v27 = vld [vmem:[#allocation2 + $0xc] sm:$0x3]
    %v28 = vsel %vm22, 0, %v27
    %29 = vst [vmem:[#allocation2 + $0xc] sm:$0x3] %v28
    %30 = vst.msk [vmem:[#allocation2 + $0x10] sm:$0xf] %vm18, 0
    %v31 = vld [vmem:[#allocation2 + $0x14] sm:$0x3]
    %v32 = vsel %vm22, 0, %v31
    %33 = vst [vmem:[#allocation2 + $0x14] sm:$0x3] %v32
    %34 = vst.msk [vmem:[#allocation2 + $0x18] sm:$0xf] %vm18, 0
    %v35 = vld [vmem:[#allocation2 + $0x1c] sm:$0x3]
    %v36 = vsel %vm22, 0, %v35
    %37 = vst [vmem:[#allocation2 + $0x1c] sm:$0x3] %v36
    %38 = vst.msk [vmem:[#allocation2 + $0x20] sm:$0xf] %vm18, 0
    %v39 = vld [vmem:[#allocation2 + $0x24] sm:$0x3]
    %v40 = vsel %vm22, 0, %v39
    %41 = vst [vmem:[#allocation2 + $0x24] sm:$0x3] %v40
    %42 = vst.msk [vmem:[#allocation2 + $0x28] sm:$0xf] %vm18, 0
    %v43 = vld [vmem:[#allocation2 + $0x2c] sm:$0x3]
    %v44 = vsel %vm22, 0, %v43
    %45 = vst [vmem:[#allocation2 + $0x2c] sm:$0x3] %v44
    %46 = vst.msk [vmem:[#allocation2 + $0x30] sm:$0xf] %vm18, 0
    %v47 = vld [vmem:[#allocation2 + $0x34] sm:$0x3]
    %v48 = vsel %vm22, 0, %v47
    %49 = vst [vmem:[#allocation2 + $0x34] sm:$0x3] %v48
    %50 = vst.msk [vmem:[#allocation2 + $0x38] sm:$0xf] %vm18, 0
    %v51 = vld [vmem:[#allocation2 + $0x3c] sm:$0x3]
    %v52 = vsel %vm22, 0, %v51
    %53 = vst [vmem:[#allocation2 + $0x3c] sm:$0x3] %v52
    %54 = vst.msk [vmem:[#allocation2 + $0x40] sm:$0xf] %vm18, 0
    %v55 = vld [vmem:[#allocation2 + $0x44] sm:$0x3]
    %v56 = vsel %vm22, 0, %v55
    %57 = vst [vmem:[#allocation2 + $0x44] sm:$0x3] %v56
    %58 = vst.msk [vmem:[#allocation2 + $0x48] sm:$0xf] %vm18, 0
    %v59 = vld [vmem:[#allocation2 + $0x4c] sm:$0x3]
    %v60 = vsel %vm22, 0, %v59
    %61 = vst [vmem:[#allocation2 + $0x4c] sm:$0x3] %v60
    %62 = vst.msk [vmem:[#allocation2 + $0x50] sm:$0xf] %vm18, 0
    %v63 = vld [vmem:[#allocation2 + $0x54] sm:$0x3]
    %v64 = vsel %vm22, 0, %v63
    %65 = vst [vmem:[#allocation2 + $0x54] sm:$0x3] %v64
    %66 = vst.msk [vmem:[#allocation2 + $0x58] sm:$0xf] %vm18, 0
    %v67 = vld [vmem:[#allocation2 + $0x5c] sm:$0x3]
    %v68 = vsel %vm22, 0, %v67
    %69 = vst [vmem:[#allocation2 + $0x5c] sm:$0x3] %v68
    %70 = vst.msk [vmem:[#allocation2 + $0x60] sm:$0xf] %vm18, 0
    %v71 = vld [vmem:[#allocation2 + $0x64] sm:$0x3]
    %v72 = vsel %vm22, 0, %v71
    %73 = vst [vmem:[#allocation2 + $0x64] sm:$0x3] %v72
    %74 = vst.msk [vmem:[#allocation2 + $0x68] sm:$0xf] %vm18, 0
    %v75 = vld [vmem:[#allocation2 + $0x6c] sm:$0x3]
    %v76 = vsel %vm22, 0, %v75
    %77 = vst [vmem:[#allocation2 + $0x6c] sm:$0x3] %v76
    %78 = vst.msk [vmem:[#allocation2 + $0x70] sm:$0xf] %vm18, 0
    %v79 = vld [vmem:[#allocation2 + $0x74] sm:$0x3]
    %v80 = vsel %vm22, 0, %v79
    %81 = vst [vmem:[#allocation2 + $0x74] sm:$0x3] %v80
    %82 = vst.msk [vmem:[#allocation2 + $0x78] sm:$0xf] %vm18, 0
    %v83 = vld [vmem:[#allocation2 + $0x7c] sm:$0x3]
    %v84 = vsel %vm22, 0, %v83
    %85 = vst [vmem:[#allocation2 + $0x7c] sm:$0x3] %v84
    %86 = vst.msk [vmem:[#allocation2 + $0x80] sm:$0xf] %vm18, 0
    %v87 = vld [vmem:[#allocation2 + $0x84] sm:$0x3]
    %v88 = vsel %vm22, 0, %v87
    %89 = vst [vmem:[#allocation2 + $0x84] sm:$0x3] %v88
    %90 = vst.msk [vmem:[#allocation2 + $0x88] sm:$0xf] %vm18, 0
    %v91 = vld [vmem:[#allocation2 + $0x8c] sm:$0x3]
    %v92 = vsel %vm22, 0, %v91
    %93 = vst [vmem:[#allocation2 + $0x8c] sm:$0x3] %v92
    %94 = vst.msk [vmem:[#allocation2 + $0x90] sm:$0xf] %vm18, 0
    %v95 = vld [vmem:[#allocation2 + $0x94] sm:$0x3]
    %v96 = vsel %vm22, 0, %v95
    %97 = vst [vmem:[#allocation2 + $0x94] sm:$0x3] %v96
    %98 = vst.msk [vmem:[#allocation2 + $0x98] sm:$0xf] %vm18, 0
    %v99 = vld [vmem:[#allocation2 + $0x9c] sm:$0x3]
    %v100 = vsel %vm22, 0, %v99
    %101 = vst [vmem:[#allocation2 + $0x9c] sm:$0x3] %v100
    %102 = vst [vmem:[%s3] sm:$0x3] 0.0
  $region13: #{down_forward.3} parent=0 // pred_fallthru
    _
  %v103 = vld [vmem:[%s0] sm:$0xff]
  %v104 = vld [vmem:[%s0 + $0x10] sm:$0xff]
  %v105 = vld [vmem:[%s0 + $0x20] sm:$0xff]
  %v106 = vld [vmem:[%s0 + $0x30] sm:$0xff]
  %v107 = vld [vmem:[%s0 + $0x40] sm:$0xff]
  %v108 = vld [vmem:[%s0 + $0x50] sm:$0xff]
  %v109 = vld [vmem:[%s0 + $0x60] sm:$0xff]
  %v110 = vld [vmem:[%s0 + $0x70] sm:$0xff]
  %v111 = vld [vmem:[%s0 + $0x80] sm:$0xff]
  %v112 = vld [vmem:[%s0 + $0x90] sm:$0xff]
  %v113 = vld [vmem:[%s0 + $0xa0] sm:$0xff]
  %v114 = vld [vmem:[%s0 + $0xb0] sm:$0xff]
  %v115 = vld [vmem:[%s0 + $0xc0] sm:$0xff]
  %v116 = vld [vmem:[%s0 + $0xd0] sm:$0xff]
  %v117 = vld [vmem:[%s0 + $0xe0] sm:$0xff]
  %v118 = vld [vmem:[%s0 + $0xf0] sm:$0xff]
  %s119 = scalar_lea.vmem %s0, 8
  %v120 = vld [vmem:[%s119] sm:$0xff]
  %v121 = vld [vmem:[%s119 + $0x10] sm:$0xff]
  %v122 = vld [vmem:[%s119 + $0x20] sm:$0xff]
  %v123 = vld [vmem:[%s119 + $0x30] sm:$0xff]
  %v124 = vld [vmem:[%s119 + $0x40] sm:$0xff]
  %v125 = vld [vmem:[%s119 + $0x50] sm:$0xff]
  %v126 = vld [vmem:[%s119 + $0x60] sm:$0xff]
  %v127 = vld [vmem:[%s119 + $0x70] sm:$0xff]
  %v128 = vld [vmem:[%s119 + $0x80] sm:$0xff]
  %v129 = vld [vmem:[%s119 + $0x90] sm:$0xff]
  %v130 = vld [vmem:[%s119 + $0xa0] sm:$0xff]
  %v131 = vld [vmem:[%s119 + $0xb0] sm:$0xff]
  %v132 = vld [vmem:[%s119 + $0xc0] sm:$0xff]
  %v133 = vld [vmem:[%s119 + $0xd0] sm:$0xff]
  %v134 = vld [vmem:[%s119 + $0xe0] sm:$0xff]
  %v135 = vld [vmem:[%s119 + $0xf0] sm:$0xff]
  %v136 = vmax.f32 %v103, %v120
  %v137 = vmax.f32 %v104, %v121
  %v138 = vmax.f32 %v105, %v122
  %v139 = vmax.f32 %v106, %v123
  %v140 = vmax.f32 %v107, %v124
  %v141 = vmax.f32 %v108, %v125
  %v142 = vmax.f32 %v109, %v126
  %v143 = vmax.f32 %v110, %v127
  %v144 = vmax.f32 %v111, %v128
  %v145 = vmax.f32 %v112, %v129
  %v146 = vmax.f32 %v113, %v130
  %v147 = vmax.f32 %v114, %v131
  %v148 = vmax.f32 %v115, %v132
  %v149 = vmax.f32 %v116, %v133
  %v150 = vmax.f32 %v117, %v134
  %v151 = vmax.f32 %v118, %v135
  %168 = vrot.lane.b32.xlu0 %v136, 124
  %v169 = vpop.permute.xlu0 %168
  %170 = vrot.lane.b32.xlu0 %v137, 124
  %v171 = vpop.permute.xlu0 %170
  %172 = vrot.lane.b32.xlu0 %v138, 124
  %v173 = vpop.permute.xlu0 %172
  %174 = vrot.lane.b32.xlu0 %v139, 124
  %v175 = vpop.permute.xlu0 %174
  %176 = vrot.lane.b32.xlu0 %v140, 124
  %v177 = vpop.permute.xlu0 %176
  %178 = vrot.lane.b32.xlu0 %v141, 124
  %v179 = vpop.permute.xlu0 %178
  %180 = vrot.lane.b32.xlu0 %v142, 124
  %v181 = vpop.permute.xlu0 %180
  %182 = vrot.lane.b32.xlu0 %v143, 124
  %v183 = vpop.permute.xlu0 %182
  %184 = vrot.lane.b32.xlu0 %v144, 124
  %v185 = vpop.permute.xlu0 %184
  %186 = vrot.lane.b32.xlu0 %v145, 124
  %v187 = vpop.permute.xlu0 %186
  %188 = vrot.lane.b32.xlu0 %v146, 124
  %v189 = vpop.permute.xlu0 %188
  %190 = vrot.lane.b32.xlu0 %v147, 124
  %v191 = vpop.permute.xlu0 %190
  %192 = vrot.lane.b32.xlu0 %v148, 124
  %v193 = vpop.permute.xlu0 %192
  %194 = vrot.lane.b32.xlu0 %v149, 124
  %v195 = vpop.permute.xlu0 %194
  %196 = vrot.lane.b32.xlu0 %v150, 124
  %v197 = vpop.permute.xlu0 %196
  %198 = vrot.lane.b32.xlu0 %v151, 124
  %v199 = vpop.permute.xlu0 %198
  %v216 = vmax.f32 %v136, %v169
  %v217 = vmax.f32 %v137, %v171
  %v218 = vmax.f32 %v138, %v173
  %v219 = vmax.f32 %v139, %v175
  %v220 = vmax.f32 %v140, %v177
  %v221 = vmax.f32 %v141, %v179
  %v222 = vmax.f32 %v142, %v181
  %v223 = vmax.f32 %v143, %v183
  %v224 = vmax.f32 %v144, %v185
  %v225 = vmax.f32 %v145, %v187
  %v226 = vmax.f32 %v146, %v189
  %v227 = vmax.f32 %v147, %v191
  %v228 = vmax.f32 %v148, %v193
  %v229 = vmax.f32 %v149, %v195
  %v230 = vmax.f32 %v150, %v197
  %v231 = vmax.f32 %v151, %v199
  %v232 = vpack.c.bf16 %v216, %v216
  %v233 = vpack.c.bf16 %v217, %v217
  %v234 = vpack.c.bf16 %v218, %v218
  %v235 = vpack.c.bf16 %v219, %v219
  %v236 = vpack.c.bf16 %v220, %v220
  %v237 = vpack.c.bf16 %v221, %v221
  %v238 = vpack.c.bf16 %v222, %v222
  %v239 = vpack.c.bf16 %v223, %v223
  %v240 = vpack.c.bf16 %v224, %v224
  %v241 = vpack.c.bf16 %v225, %v225
  %v242 = vpack.c.bf16 %v226, %v226
  %v243 = vpack.c.bf16 %v227, %v227
  %v244 = vpack.c.bf16 %v228, %v228
  %v245 = vpack.c.bf16 %v229, %v229
  %v246 = vpack.c.bf16 %v230, %v230
  %v247 = vpack.c.bf16 %v231, %v231
  %v264 = vunpack.c.l.b16 %v232
  %v265 = vunpack.c.l.b16 %v233
  %v266 = vunpack.c.l.b16 %v234
  %v267 = vunpack.c.l.b16 %v235
  %v268 = vunpack.c.l.b16 %v236
  %v269 = vunpack.c.l.b16 %v237
  %v270 = vunpack.c.l.b16 %v238
  %v271 = vunpack.c.l.b16 %v239
  %v272 = vunpack.c.l.b16 %v240
  %v273 = vunpack.c.l.b16 %v241
  %v274 = vunpack.c.l.b16 %v242
  %v275 = vunpack.c.l.b16 %v243
  %v276 = vunpack.c.l.b16 %v244
  %v277 = vunpack.c.l.b16 %v245
  %v278 = vunpack.c.l.b16 %v246
  %v279 = vunpack.c.l.b16 %v247
  %v280 = vpack.c.b16 %v264, %v264
  %v281 = vpack.c.b16 %v265, %v265
  %v282 = vpack.c.b16 %v266, %v266
  %v283 = vpack.c.b16 %v267, %v267
  %v284 = vpack.c.b16 %v268, %v268
  %v285 = vpack.c.b16 %v269, %v269
  %v286 = vpack.c.b16 %v270, %v270
  %v287 = vpack.c.b16 %v271, %v271
  %v288 = vpack.c.b16 %v272, %v272
  %v289 = vpack.c.b16 %v273, %v273
  %v290 = vpack.c.b16 %v274, %v274
  %v291 = vpack.c.b16 %v275, %v275
  %v292 = vpack.c.b16 %v276, %v276
  %v293 = vpack.c.b16 %v277, %v277
  %v294 = vpack.c.b16 %v278, %v278
  %v295 = vpack.c.b16 %v279, %v279
  %v296 = vrot.slane %v280, 7
  %v297 = vrot.slane %v296, 4
  %v298 = vrot.slane %v281, 7
  %v299 = vrot.slane %v298, 4
  %v300 = vrot.slane %v282, 7
  %v301 = vrot.slane %v300, 4
  %v302 = vrot.slane %v283, 7
  %v303 = vrot.slane %v302, 4
  %v304 = vrot.slane %v284, 7
  %v305 = vrot.slane %v304, 4
  %v306 = vrot.slane %v285, 7
  %v307 = vrot.slane %v306, 4
  %v308 = vrot.slane %v286, 7
  %v309 = vrot.slane %v308, 4
  %v310 = vrot.slane %v287, 7
  %v311 = vrot.slane %v310, 4
  %v312 = vrot.slane %v288, 7
  %v313 = vrot.slane %v312, 4
  %v314 = vrot.slane %v289, 7
  %v315 = vrot.slane %v314, 4
  %v316 = vrot.slane %v290, 7
  %v317 = vrot.slane %v316, 4
  %v318 = vrot.slane %v291, 7
  %v319 = vrot.slane %v318, 4
  %v320 = vrot.slane %v292, 7
  %v321 = vrot.slane %v320, 4
  %v322 = vrot.slane %v293, 7
  %v323 = vrot.slane %v322, 4
  %v324 = vrot.slane %v294, 7
  %v325 = vrot.slane %v324, 4
  %v326 = vrot.slane %v295, 7
  %v327 = vrot.slane %v326, 4
  %s360 = scalar_lea.vmem [#allocation2], 8
  %vm361 = vcmask 27649
  %362 = vst.msk [vmem:[%s360] sm:$0xe] %vm361, %v296
  %vm363 = vcmask 24576
  %364 = vst.msk [vmem:[%s360 + $0x4] sm:$0x1] %vm363, %v297
  %365 = vst.msk [vmem:[%s360 + $0x8] sm:$0xe] %vm361, %v298
  %366 = vst.msk [vmem:[%s360 + $0xc] sm:$0x1] %vm363, %v299
  %367 = vst.msk [vmem:[%s360 + $0x10] sm:$0xe] %vm361, %v300
  %368 = vst.msk [vmem:[%s360 + $0x14] sm:$0x1] %vm363, %v301
  %369 = vst.msk [vmem:[%s360 + $0x18] sm:$0xe] %vm361, %v302
  %370 = vst.msk [vmem:[%s360 + $0x1c] sm:$0x1] %vm363, %v303
  %371 = vst.msk [vmem:[%s360 + $0x20] sm:$0xe] %vm361, %v304
  %372 = vst.msk [vmem:[%s360 + $0x24] sm:$0x1] %vm363, %v305
  %373 = vst.msk [vmem:[%s360 + $0x28] sm:$0xe] %vm361, %v306
  %374 = vst.msk [vmem:[%s360 + $0x2c] sm:$0x1] %vm363, %v307
  %375 = vst.msk [vmem:[%s360 + $0x30] sm:$0xe] %vm361, %v308
  %376 = vst.msk [vmem:[%s360 + $0x34] sm:$0x1] %vm363, %v309
  %377 = vst.msk [vmem:[%s360 + $0x38] sm:$0xe] %vm361, %v310
  %378 = vst.msk [vmem:[%s360 + $0x3c] sm:$0x1] %vm363, %v311
  %379 = vst.msk [vmem:[%s360 + $0x50] sm:$0xe] %vm361, %v312
  %380 = vst.msk [vmem:[%s360 + $0x54] sm:$0x1] %vm363, %v313
  %381 = vst.msk [vmem:[%s360 + $0x58] sm:$0xe] %vm361, %v314
  %382 = vst.msk [vmem:[%s360 + $0x5c] sm:$0x1] %vm363, %v315
  %383 = vst.msk [vmem:[%s360 + $0x60] sm:$0xe] %vm361, %v316
  %384 = vst.msk [vmem:[%s360 + $0x64] sm:$0x1] %vm363, %v317
  %385 = vst.msk [vmem:[%s360 + $0x68] sm:$0xe] %vm361, %v318
  %386 = vst.msk [vmem:[%s360 + $0x6c] sm:$0x1] %vm363, %v319
  %387 = vst.msk [vmem:[%s360 + $0x70] sm:$0xe] %vm361, %v320
  %388 = vst.msk [vmem:[%s360 + $0x74] sm:$0x1] %vm363, %v321
  %389 = vst.msk [vmem:[%s360 + $0x78] sm:$0xe] %vm361, %v322
  %390 = vst.msk [vmem:[%s360 + $0x7c] sm:$0x1] %vm363, %v323
  %391 = vst.msk [vmem:[%s360 + $0x80] sm:$0xe] %vm361, %v324
  %392 = vst.msk [vmem:[%s360 + $0x84] sm:$0x1] %vm363, %v325
  %393 = vst.msk [vmem:[%s360 + $0x88] sm:$0xe] %vm361, %v326
  %394 = vst.msk [vmem:[%s360 + $0x8c] sm:$0x1] %vm363, %v327
  %v395 = vld [vmem:[#allocation2] sm:$0xf]
  %v396 = vld [vmem:[#allocation2 + $0x4] sm:$0x1]
  %v397 = vld [vmem:[#allocation2 + $0x8] sm:$0xf]
  %v398 = vld [vmem:[#allocation2 + $0xc] sm:$0x1]
  %v399 = vld [vmem:[#allocation2 + $0x10] sm:$0xf]
  %v400 = vld [vmem:[#allocation2 + $0x14] sm:$0x1]
  %v401 = vld [vmem:[#allocation2 + $0x18] sm:$0xf]
  %v402 = vld [vmem:[#allocation2 + $0x1c] sm:$0x1]
  %v403 = vld [vmem:[#allocation2 + $0x20] sm:$0xf]
  %v404 = vld [vmem:[#allocation2 + $0x24] sm:$0x1]
  %v405 = vld [vmem:[#allocation2 + $0x28] sm:$0xf]
  %v406 = vld [vmem:[#allocation2 + $0x2c] sm:$0x1]
  %v407 = vld [vmem:[#allocation2 + $0x30] sm:$0xf]
  %v408 = vld [vmem:[#allocation2 + $0x34] sm:$0x1]
  %v409 = vld [vmem:[#allocation2 + $0x38] sm:$0xf]
  %v410 = vld [vmem:[#allocation2 + $0x3c] sm:$0x1]
  %v411 = vld [vmem:[#allocation2 + $0x50] sm:$0xf]
  %v412 = vld [vmem:[#allocation2 + $0x54] sm:$0x1]
  %v413 = vld [vmem:[#allocation2 + $0x58] sm:$0xf]
  %v414 = vld [vmem:[#allocation2 + $0x5c] sm:$0x1]
  %v415 = vld [vmem:[#allocation2 + $0x60] sm:$0xf]
  %v416 = vld [vmem:[#allocation2 + $0x64] sm:$0x1]
  %v417 = vld [vmem:[#allocation2 + $0x68] sm:$0xf]
  %v418 = vld [vmem:[#allocation2 + $0x6c] sm:$0x1]
  %v419 = vld [vmem:[#allocation2 + $0x70] sm:$0xf]
  %v420 = vld [vmem:[#allocation2 + $0x74] sm:$0x1]
  %v421 = vld [vmem:[#allocation2 + $0x78] sm:$0xf]
  %v422 = vld [vmem:[#allocation2 + $0x7c] sm:$0x1]
  %v423 = vld [vmem:[#allocation2 + $0x80] sm:$0xf]
  %v424 = vld [vmem:[#allocation2 + $0x84] sm:$0x1]
  %v425 = vld [vmem:[#allocation2 + $0x88] sm:$0xf]
  %v426 = vld [vmem:[#allocation2 + $0x8c] sm:$0x1]
  %vm427 = vsmask.f32 3328
  %vm428 = vsmask.f32 7440
  %vm429 = vmor %vm427, %vm428
  %v431 = vshrl.u32 %v395, 16
  %v433 = vrot.slane %v431, 4
  %v434 = vshll.u32 %v395, 16
  %v436 = vrot.slane %v434, 5
  %v437 = vor.u32 %v433, %v436
  %v438 = vrot.slane %v437, 4
  %v440 = vshll.u32 %v396, 16
  %v442 = vrot.slane %v440, 5
  %v443 = vsel %vm429, %v438, %v442
  %v445 = vshrl.u32 %v397, 16
  %v447 = vrot.slane %v445, 4
  %v448 = vshll.u32 %v397, 16
  %v450 = vrot.slane %v448, 5
  %v451 = vor.u32 %v447, %v450
  %v452 = vrot.slane %v451, 4
  %v454 = vshll.u32 %v398, 16
  %v456 = vrot.slane %v454, 5
  %v457 = vsel %vm429, %v452, %v456
  %v459 = vshrl.u32 %v399, 16
  %v461 = vrot.slane %v459, 4
  %v462 = vshll.u32 %v399, 16
  %v464 = vrot.slane %v462, 5
  %v465 = vor.u32 %v461, %v464
  %v466 = vrot.slane %v465, 4
  %v468 = vshll.u32 %v400, 16
  %v470 = vrot.slane %v468, 5
  %v471 = vsel %vm429, %v466, %v470
  %v473 = vshrl.u32 %v401, 16
  %v475 = vrot.slane %v473, 4
  %v476 = vshll.u32 %v401, 16
  %v478 = vrot.slane %v476, 5
  %v479 = vor.u32 %v475, %v478
  %v480 = vrot.slane %v479, 4
  %v482 = vshll.u32 %v402, 16
  %v484 = vrot.slane %v482, 5
  %v485 = vsel %vm429, %v480, %v484
  %v487 = vshrl.u32 %v403, 16
  %v489 = vrot.slane %v487, 4
  %v490 = vshll.u32 %v403, 16
  %v492 = vrot.slane %v490, 5
  %v493 = vor.u32 %v489, %v492
  %v494 = vrot.slane %v493, 4
  %v496 = vshll.u32 %v404, 16
  %v498 = vrot.slane %v496, 5
  %v499 = vsel %vm429, %v494, %v498
  %v501 = vshrl.u32 %v405, 16
  %v503 = vrot.slane %v501, 4
  %v504 = vshll.u32 %v405, 16
  %v506 = vrot.slane %v504, 5
  %v507 = vor.u32 %v503, %v506
  %v508 = vrot.slane %v507, 4
  %v510 = vshll.u32 %v406, 16
  %v512 = vrot.slane %v510, 5
  %v513 = vsel %vm429, %v508, %v512
  %v515 = vshrl.u32 %v407, 16
  %v517 = vrot.slane %v515, 4
  %v518 = vshll.u32 %v407, 16
  %v520 = vrot.slane %v518, 5
  %v521 = vor.u32 %v517, %v520
  %v522 = vrot.slane %v521, 4
  %v524 = vshll.u32 %v408, 16
  %v526 = vrot.slane %v524, 5
  %v527 = vsel %vm429, %v522, %v526
  %v529 = vshrl.u32 %v409, 16
  %v531 = vrot.slane %v529, 4
  %v532 = vshll.u32 %v409, 16
  %v534 = vrot.slane %v532, 5
  %v535 = vor.u32 %v531, %v534
  %v536 = vrot.slane %v535, 4
  %v538 = vshll.u32 %v410, 16
  %v540 = vrot.slane %v538, 5
  %v541 = vsel %vm429, %v536, %v540
  %v543 = vshrl.u32 %v411, 16
  %v545 = vrot.slane %v543, 4
  %v546 = vshll.u32 %v411, 16
  %v548 = vrot.slane %v546, 5
  %v549 = vor.u32 %v545, %v548
  %v550 = vrot.slane %v549, 4
  %v552 = vshll.u32 %v412, 16
  %v554 = vrot.slane %v552, 5
  %v555 = vsel %vm429, %v550, %v554
  %v557 = vshrl.u32 %v413, 16
  %v559 = vrot.slane %v557, 4
  %v560 = vshll.u32 %v413, 16
  %v562 = vrot.slane %v560, 5
  %v563 = vor.u32 %v559, %v562
  %v564 = vrot.slane %v563, 4
  %v566 = vshll.u32 %v414, 16
  %v568 = vrot.slane %v566, 5
  %v569 = vsel %vm429, %v564, %v568
  %v571 = vshrl.u32 %v415, 16
  %v573 = vrot.slane %v571, 4
  %v574 = vshll.u32 %v415, 16
  %v576 = vrot.slane %v574, 5
  %v577 = vor.u32 %v573, %v576
  %v578 = vrot.slane %v577, 4
  %v580 = vshll.u32 %v416, 16
  %v582 = vrot.slane %v580, 5
  %v583 = vsel %vm429, %v578, %v582
  %v585 = vshrl.u32 %v417, 16
  %v587 = vrot.slane %v585, 4
  %v588 = vshll.u32 %v417, 16
  %v590 = vrot.slane %v588, 5
  %v591 = vor.u32 %v587, %v590
  %v592 = vrot.slane %v591, 4
  %v594 = vshll.u32 %v418, 16
  %v596 = vrot.slane %v594, 5
  %v597 = vsel %vm429, %v592, %v596
  %v599 = vshrl.u32 %v419, 16
  %v601 = vrot.slane %v599, 4
  %v602 = vshll.u32 %v419, 16
  %v604 = vrot.slane %v602, 5
  %v605 = vor.u32 %v601, %v604
  %v606 = vrot.slane %v605, 4
  %v608 = vshll.u32 %v420, 16
  %v610 = vrot.slane %v608, 5
  %v611 = vsel %vm429, %v606, %v610
  %v613 = vshrl.u32 %v421, 16
  %v615 = vrot.slane %v613, 4
  %v616 = vshll.u32 %v421, 16
  %v618 = vrot.slane %v616, 5
  %v619 = vor.u32 %v615, %v618
  %v620 = vrot.slane %v619, 4
  %v622 = vshll.u32 %v422, 16
  %v624 = vrot.slane %v622, 5
  %v625 = vsel %vm429, %v620, %v624
  %v627 = vshrl.u32 %v423, 16
  %v629 = vrot.slane %v627, 4
  %v630 = vshll.u32 %v423, 16
  %v632 = vrot.slane %v630, 5
  %v633 = vor.u32 %v629, %v632
  %v634 = vrot.slane %v633, 4
  %v636 = vshll.u32 %v424, 16
  %v638 = vrot.slane %v636, 5
  %v639 = vsel %vm429, %v634, %v638
  %v641 = vshrl.u32 %v425, 16
  %v643 = vrot.slane %v641, 4
  %v644 = vshll.u32 %v425, 16
  %v646 = vrot.slane %v644, 5
  %v647 = vor.u32 %v643, %v646
  %v648 = vrot.slane %v647, 4
  %v650 = vshll.u32 %v426, 16
  %v652 = vrot.slane %v650, 5
  %v653 = vsel %vm429, %v648, %v652
  %v654 = vld [vmem:[%s1] sm:$0x3]
  %v655 = vld [vmem:[#allocation2] sm:$0xe]
  %v656 = vld [vmem:[#allocation2 + $0x8] sm:$0xe]
  %v657 = vld [vmem:[#allocation2 + $0x10] sm:$0xe]
  %v658 = vld [vmem:[#allocation2 + $0x18] sm:$0xe]
  %v659 = vld [vmem:[#allocation2 + $0x20] sm:$0xe]
  %v660 = vld [vmem:[#allocation2 + $0x28] sm:$0xe]
  %v661 = vld [vmem:[#allocation2 + $0x30] sm:$0xe]
  %v662 = vld [vmem:[#allocation2 + $0x38] sm:$0xe]
  %v663 = vld [vmem:[#allocation2 + $0x50] sm:$0xe]
  %v664 = vld [vmem:[#allocation2 + $0x58] sm:$0xe]
  %v665 = vld [vmem:[#allocation2 + $0x60] sm:$0xe]
  %v666 = vld [vmem:[#allocation2 + $0x68] sm:$0xe]
  %v667 = vld [vmem:[#allocation2 + $0x70] sm:$0xe]
  %v668 = vld [vmem:[#allocation2 + $0x78] sm:$0xe]
  %v669 = vld [vmem:[#allocation2 + $0x80] sm:$0xe]
  %v670 = vld [vmem:[#allocation2 + $0x88] sm:$0xe]
  %vm703 = vcmask 1042432
  %vm704 = vcmask 1046532
  %vm705 = vmor %vm703, %vm704
  %v706 = vrot.slane %v655, 5
  %v707 = vrot.slane %v706, 4
  %v708 = vrot.slane %v396, 5
  %v709 = vsel %vm705, %v707, %v708
  %v710 = vrot.slane %v656, 5
  %v711 = vrot.slane %v710, 4
  %v712 = vrot.slane %v398, 5
  %v713 = vsel %vm705, %v711, %v712
  %v714 = vrot.slane %v657, 5
  %v715 = vrot.slane %v714, 4
  %v716 = vrot.slane %v400, 5
  %v717 = vsel %vm705, %v715, %v716
  %v718 = vrot.slane %v658, 5
  %v719 = vrot.slane %v718, 4
  %v720 = vrot.slane %v402, 5
  %v721 = vsel %vm705, %v719, %v720
  %v722 = vrot.slane %v659, 5
  %v723 = vrot.slane %v722, 4
  %v724 = vrot.slane %v404, 5
  %v725 = vsel %vm705, %v723, %v724
  %v726 = vrot.slane %v660, 5
  %v727 = vrot.slane %v726, 4
  %v728 = vrot.slane %v406, 5
  %v729 = vsel %vm705, %v727, %v728
  %v730 = vrot.slane %v661, 5
  %v731 = vrot.slane %v730, 4
  %v732 = vrot.slane %v408, 5
  %v733 = vsel %vm705, %v731, %v732
  %v734 = vrot.slane %v662, 5
  %v735 = vrot.slane %v734, 4
  %v736 = vrot.slane %v410, 5
  %v737 = vsel %vm705, %v735, %v736
  %v738 = vrot.slane %v663, 5
  %v739 = vrot.slane %v738, 4
  %v740 = vrot.slane %v412, 5
  %v741 = vsel %vm705, %v739, %v740
  %v742 = vrot.slane %v664, 5
  %v743 = vrot.slane %v742, 4
  %v744 = vrot.slane %v414, 5
  %v745 = vsel %vm705, %v743, %v744
  %v746 = vrot.slane %v665, 5
  %v747 = vrot.slane %v746, 4
  %v748 = vrot.slane %v416, 5
  %v749 = vsel %vm705, %v747, %v748
  %v750 = vrot.slane %v666, 5
  %v751 = vrot.slane %v750, 4
  %v752 = vrot.slane %v418, 5
  %v753 = vsel %vm705, %v751, %v752
  %v754 = vrot.slane %v667, 5
  %v755 = vrot.slane %v754, 4
  %v756 = vrot.slane %v420, 5
  %v757 = vsel %vm705, %v755, %v756
  %v758 = vrot.slane %v668, 5
  %v759 = vrot.slane %v758, 4
  %v760 = vrot.slane %v422, 5
  %v761 = vsel %vm705, %v759, %v760
  %v762 = vrot.slane %v669, 5
  %v763 = vrot.slane %v762, 4
  %v764 = vrot.slane %v424, 5
  %v765 = vsel %vm705, %v763, %v764
  %v766 = vrot.slane %v670, 5
  %v767 = vrot.slane %v766, 4
  %v768 = vrot.slane %v426, 5
  %v769 = vsel %vm705, %v767, %v768
  %s770 = scalar_lea.vmem %s1, 2
  %v771 = vld [vmem:[%s770] sm:$0x3]
  %v772 = vunpack.c.l.b16 %v709
  %v773 = vunpack.c.l.b16 %v713
  %v774 = vunpack.c.l.b16 %v717
  %v775 = vunpack.c.l.b16 %v721
  %v776 = vunpack.c.l.b16 %v725
  %v777 = vunpack.c.l.b16 %v729
  %v778 = vunpack.c.l.b16 %v733
  %v779 = vunpack.c.l.b16 %v737
  %v780 = vunpack.c.l.b16 %v741
  %v781 = vunpack.c.l.b16 %v745
  %v782 = vunpack.c.l.b16 %v749
  %v783 = vunpack.c.l.b16 %v753
  %v784 = vunpack.c.l.b16 %v757
  %v785 = vunpack.c.l.b16 %v761
  %v786 = vunpack.c.l.b16 %v765
  %v787 = vunpack.c.l.b16 %v769
  %v788 = vpack.c.b16 %v773, %v772
  %v789 = vpack.c.b16 %v775, %v774
  %v790 = vpack.c.b16 %v777, %v776
  %v791 = vpack.c.b16 %v779, %v778
  %v792 = vpack.c.b16 %v781, %v780
  %v793 = vpack.c.b16 %v783, %v782
  %v794 = vpack.c.b16 %v785, %v784
  %v795 = vpack.c.b16 %v787, %v786
  %vm796 = vcmask 31744
  %v798 = vsel %vm796, %v788, 0
  %v801 = vsel %vm796, %v789, 0
  %v804 = vsel %vm796, %v790, 0
  %v807 = vsel %vm796, %v791, 0
  %v810 = vsel %vm796, %v792, 0
  %v813 = vsel %vm796, %v793, 0
  %v816 = vsel %vm796, %v794, 0
  %v819 = vsel %vm796, %v795, 0
  %vm821 = vcmask 1041408
  %v823 = vsel %vm821, %v771, 0
  %825 = vmatprep.subr.bf16.mxu0 0
  %826 = vmatpush1.bf16.msra.mxu0 0
  %827 = vmatprep.subr.bf16.mxu0 0
  %828 = vmatpush1.bf16.msra.mxu0 0
  %829 = vmatprep.subr.bf16.mxu0 0
  %830 = vmatpush1.bf16.msra.mxu0 0
  %831 = vmatprep.subr.bf16.mxu0 0
  %832 = vmatpush1.bf16.msra.mxu0 0
  %833 = vmatprep.subr.bf16.mxu0 0
  %834 = vmatpush1.bf16.msra.mxu0 0
  %835 = vmatprep.subr.bf16.mxu0 0
  %836 = vmatpush1.bf16.msra.mxu0 0
  %837 = vmatprep.subr.bf16.mxu0 0
  %838 = vmatpush1.bf16.msra.mxu0 0
  %839 = vmatprep.subr.bf16.mxu0 0
  %840 = vmatpush1.bf16.msra.mxu0 %v823
  %841 = vmatprep.subr.bf16.mxu0 0
  %842 = vmatpush2.bf16.msra.mxu0 0
  %843 = vmatprep.subr.bf16.mxu0 0
  %844 = vmatpush2.bf16.msra.mxu0 0
  %845 = vmatprep.subr.bf16.mxu0 0
  %846 = vmatpush2.bf16.msra.mxu0 0
  %847 = vmatprep.subr.bf16.mxu0 0
  %848 = vmatpush2.bf16.msra.mxu0 0
  %849 = vmatprep.subr.bf16.mxu0 0
  %850 = vmatpush2.bf16.msra.mxu0 0
  %851 = vmatprep.subr.bf16.mxu0 0
  %852 = vmatpush2.bf16.msra.mxu0 0
  %853 = vmatprep.subr.bf16.mxu0 0
  %854 = vmatpush2.bf16.msra.mxu0 0
  %855 = vmatprep.subr.bf16.mxu0 0
  %856 = vmatpush2.bf16.msra.mxu0 0
  %857 = vmatprep.mubr.bf16.mxu0 0
  %858 = vmatmul.mubr.bf16.gmra.mxu0 %v798
  %v859 = vpop.f32.mrf.mxu0
  %v860 = vadd.f32 0.0, %v859
  %v861 = vpop.f32.mrf.mxu0
  %v862 = vpop.f32.mrf.mxu0
  %v863 = vadd.f32 0.0, %v862
  %v864 = vpop.f32.mrf.mxu0
  %865 = vmatprep.mubr.bf16.mxu0 0
  %866 = vmatmul.mubr.bf16.gmra.mxu0 %v801
  %v867 = vpop.f32.mrf.mxu0
  %v868 = vadd.f32 0.0, %v867
  %v869 = vpop.f32.mrf.mxu0
  %v870 = vpop.f32.mrf.mxu0
  %v871 = vadd.f32 0.0, %v870
  %v872 = vpop.f32.mrf.mxu0
  %873 = vmatprep.mubr.bf16.mxu0 0
  %874 = vmatmul.mubr.bf16.gmra.mxu0 %v804
  %v875 = vpop.f32.mrf.mxu0
  %v876 = vadd.f32 0.0, %v875
  %v877 = vpop.f32.mrf.mxu0
  %v878 = vpop.f32.mrf.mxu0
  %v879 = vadd.f32 0.0, %v878
  %v880 = vpop.f32.mrf.mxu0
  %881 = vmatprep.mubr.bf16.mxu0 0
  %882 = vmatmul.mubr.bf16.gmra.mxu0 %v807
  %v883 = vpop.f32.mrf.mxu0
  %v884 = vadd.f32 0.0, %v883
  %v885 = vpop.f32.mrf.mxu0
  %v886 = vpop.f32.mrf.mxu0
  %v887 = vadd.f32 0.0, %v886
  %v888 = vpop.f32.mrf.mxu0
  %889 = vmatprep.mubr.bf16.mxu0 0
  %890 = vmatmul.mubr.bf16.gmra.mxu0 %v810
  %v891 = vpop.f32.mrf.mxu0
  %v892 = vadd.f32 0.0, %v891
  %v893 = vpop.f32.mrf.mxu0
  %v894 = vpop.f32.mrf.mxu0
  %v895 = vadd.f32 0.0, %v894
  %v896 = vpop.f32.mrf.mxu0
  %897 = vmatprep.mubr.bf16.mxu0 0
  %898 = vmatmul.mubr.bf16.gmra.mxu0 %v813
  %v899 = vpop.f32.mrf.mxu0
  %v900 = vadd.f32 0.0, %v899
  %v901 = vpop.f32.mrf.mxu0
  %v902 = vpop.f32.mrf.mxu0
  %v903 = vadd.f32 0.0, %v902
  %v904 = vpop.f32.mrf.mxu0
  %905 = vmatprep.mubr.bf16.mxu0 0
  %906 = vmatmul.mubr.bf16.gmra.mxu0 %v816
  %v907 = vpop.f32.mrf.mxu0
  %v908 = vadd.f32 0.0, %v907
  %v909 = vpop.f32.mrf.mxu0
  %v910 = vpop.f32.mrf.mxu0
  %v911 = vadd.f32 0.0, %v910
  %v912 = vpop.f32.mrf.mxu0
  %913 = vmatprep.mubr.bf16.mxu0 0
  %914 = vmatmul.mubr.bf16.gmra.mxu0 %v819
  %v915 = vpop.f32.mrf.mxu0
  %v916 = vadd.f32 0.0, %v915
  %v917 = vpop.f32.mrf.mxu0
  %v918 = vpop.f32.mrf.mxu0
  %v919 = vadd.f32 0.0, %v918
  %v920 = vpop.f32.mrf.mxu0
  %921 = vdwg.mxu0
  %v922 = vunpack.c.l.b16 %v443
  %v923 = vunpack.c.l.b16 %v457
  %v924 = vunpack.c.l.b16 %v471
  %v925 = vunpack.c.l.b16 %v485
  %v926 = vunpack.c.l.b16 %v499
  %v927 = vunpack.c.l.b16 %v513
  %v928 = vunpack.c.l.b16 %v527
  %v929 = vunpack.c.l.b16 %v541
  %v930 = vunpack.c.l.b16 %v555
  %v931 = vunpack.c.l.b16 %v569
  %v932 = vunpack.c.l.b16 %v583
  %v933 = vunpack.c.l.b16 %v597
  %v934 = vunpack.c.l.b16 %v611
  %v935 = vunpack.c.l.b16 %v625
  %v936 = vunpack.c.l.b16 %v639
  %v937 = vunpack.c.l.b16 %v653
  %v938 = vpack.c.b16 %v923, %v922
  %v939 = vpack.c.b16 %v925, %v924
  %v940 = vpack.c.b16 %v927, %v926
  %v941 = vpack.c.b16 %v929, %v928
  %v942 = vpack.c.b16 %v931, %v930
  %v943 = vpack.c.b16 %v933, %v932
  %v944 = vpack.c.b16 %v935, %v934
  %v945 = vpack.c.b16 %v937, %v936
  %v947 = vsel %vm796, %v938, 0
  %v950 = vsel %vm796, %v939, 0
  %v953 = vsel %vm796, %v940, 0
  %v956 = vsel %vm796, %v941, 0
  %v959 = vsel %vm796, %v942, 0
  %v962 = vsel %vm796, %v943, 0
  %v965 = vsel %vm796, %v944, 0
  %v968 = vsel %vm796, %v945, 0
  %v971 = vsel %vm821, %v654, 0
  %973 = vmatprep.subr.bf16.mxu0 0
  %974 = vmatpush1.bf16.msra.mxu0 0
  %975 = vmatprep.subr.bf16.mxu0 0
  %976 = vmatpush1.bf16.msra.mxu0 0
  %977 = vmatprep.subr.bf16.mxu0 0
  %978 = vmatpush1.bf16.msra.mxu0 0
  %979 = vmatprep.subr.bf16.mxu0 0
  %980 = vmatpush1.bf16.msra.mxu0 0
  %981 = vmatprep.subr.bf16.mxu0 0
  %982 = vmatpush1.bf16.msra.mxu0 0
  %983 = vmatprep.subr.bf16.mxu0 0
  %984 = vmatpush1.bf16.msra.mxu0 0
  %985 = vmatprep.subr.bf16.mxu0 0
  %986 = vmatpush1.bf16.msra.mxu0 0
  %987 = vmatprep.subr.bf16.mxu0 0
  %988 = vmatpush1.bf16.msra.mxu0 %v971
  %989 = vmatprep.subr.bf16.mxu0 0
  %990 = vmatpush2.bf16.msra.mxu0 0
  %991 = vmatprep.subr.bf16.mxu0 0
  %992 = vmatpush2.bf16.msra.mxu0 0
  %993 = vmatprep.subr.bf16.mxu0 0
  %994 = vmatpush2.bf16.msra.mxu0 0
  %995 = vmatprep.subr.bf16.mxu0 0
  %996 = vmatpush2.bf16.msra.mxu0 0
  %997 = vmatprep.subr.bf16.mxu0 0
  %998 = vmatpush2.bf16.msra.mxu0 0
  %999 = vmatprep.subr.bf16.mxu0 0
  %1000 = vmatpush2.bf16.msra.mxu0 0
  %1001 = vmatprep.subr.bf16.mxu0 0
  %1002 = vmatpush2.bf16.msra.mxu0 0
  %1003 = vmatprep.subr.bf16.mxu0 0
  %1004 = vmatpush2.bf16.msra.mxu0 0
  %1005 = vmatprep.mubr.bf16.mxu0 0
  %1006 = vmatmul.mubr.bf16.gmra.mxu0 %v947
  %v1007 = vpop.f32.mrf.mxu0
  %v1008 = vadd.f32 %v860, %v1007
  %v1009 = vpop.f32.mrf.mxu0
  %v1010 = vpop.f32.mrf.mxu0
  %v1011 = vadd.f32 %v863, %v1010
  %v1012 = vpop.f32.mrf.mxu0
  %1013 = vmatprep.mubr.bf16.mxu0 0
  %1014 = vmatmul.mubr.bf16.gmra.mxu0 %v950
  %v1015 = vpop.f32.mrf.mxu0
  %v1016 = vadd.f32 %v868, %v1015
  %v1017 = vpop.f32.mrf.mxu0
  %v1018 = vpop.f32.mrf.mxu0
  %v1019 = vadd.f32 %v871, %v1018
  %v1020 = vpop.f32.mrf.mxu0
  %1021 = vmatprep.mubr.bf16.mxu0 0
  %1022 = vmatmul.mubr.bf16.gmra.mxu0 %v953
  %v1023 = vpop.f32.mrf.mxu0
  %v1024 = vadd.f32 %v876, %v1023
  %v1025 = vpop.f32.mrf.mxu0
  %v1026 = vpop.f32.mrf.mxu0
  %v1027 = vadd.f32 %v879, %v1026
  %v1028 = vpop.f32.mrf.mxu0
  %1029 = vmatprep.mubr.bf16.mxu0 0
  %1030 = vmatmul.mubr.bf16.gmra.mxu0 %v956
  %v1031 = vpop.f32.mrf.mxu0
  %v1032 = vadd.f32 %v884, %v1031
  %v1033 = vpop.f32.mrf.mxu0
  %v1034 = vpop.f32.mrf.mxu0
  %v1035 = vadd.f32 %v887, %v1034
  %v1036 = vpop.f32.mrf.mxu0
  %1037 = vmatprep.mubr.bf16.mxu0 0
  %1038 = vmatmul.mubr.bf16.gmra.mxu0 %v959
  %v1039 = vpop.f32.mrf.mxu0
  %v1040 = vadd.f32 %v892, %v1039
  %v1041 = vpop.f32.mrf.mxu0
  %v1042 = vpop.f32.mrf.mxu0
  %v1043 = vadd.f32 %v895, %v1042
  %v1044 = vpop.f32.mrf.mxu0
  %1045 = vmatprep.mubr.bf16.mxu0 0
  %1046 = vmatmul.mubr.bf16.gmra.mxu0 %v962
  %v1047 = vpop.f32.mrf.mxu0
  %v1048 = vadd.f32 %v900, %v1047
  %v1049 = vpop.f32.mrf.mxu0
  %v1050 = vpop.f32.mrf.mxu0
  %v1051 = vadd.f32 %v903, %v1050
  %v1052 = vpop.f32.mrf.mxu0
  %1053 = vmatprep.mubr.bf16.mxu0 0
  %1054 = vmatmul.mubr.bf16.gmra.mxu0 %v965
  %v1055 = vpop.f32.mrf.mxu0
  %v1056 = vadd.f32 %v908, %v1055
  %v1057 = vpop.f32.mrf.mxu0
  %v1058 = vpop.f32.mrf.mxu0
  %v1059 = vadd.f32 %v911, %v1058
  %v1060 = vpop.f32.mrf.mxu0
  %1061 = vmatprep.mubr.bf16.mxu0 0
  %1062 = vmatmul.mubr.bf16.gmra.mxu0 %v968
  %v1063 = vpop.f32.mrf.mxu0
  %v1064 = vadd.f32 %v916, %v1063
  %v1065 = vpop.f32.mrf.mxu0
  %v1066 = vpop.f32.mrf.mxu0
  %v1067 = vadd.f32 %v919, %v1066
  %v1068 = vpop.f32.mrf.mxu0
  %1069 = vdwg.mxu0
  %v1070 = vld [vmem:[#allocation2 + $0x4] sm:$0x3]
  %v1071 = vld [vmem:[#allocation2 + $0xc] sm:$0x3]
  %v1072 = vld [vmem:[#allocation2 + $0x14] sm:$0x3]
  %v1073 = vld [vmem:[#allocation2 + $0x1c] sm:$0x3]
  %v1074 = vld [vmem:[#allocation2 + $0x24] sm:$0x3]
  %v1075 = vld [vmem:[#allocation2 + $0x2c] sm:$0x3]
  %v1076 = vld [vmem:[#allocation2 + $0x34] sm:$0x3]
  %v1077 = vld [vmem:[#allocation2 + $0x3c] sm:$0x3]
  %v1078 = vld [vmem:[#allocation2 + $0x54] sm:$0x3]
  %v1079 = vld [vmem:[#allocation2 + $0x5c] sm:$0x3]
  %v1080 = vld [vmem:[#allocation2 + $0x64] sm:$0x3]
  %v1081 = vld [vmem:[#allocation2 + $0x6c] sm:$0x3]
  %v1082 = vld [vmem:[#allocation2 + $0x74] sm:$0x3]
  %v1083 = vld [vmem:[#allocation2 + $0x7c] sm:$0x3]
  %v1084 = vld [vmem:[#allocation2 + $0x84] sm:$0x3]
  %v1085 = vld [vmem:[#allocation2 + $0x8c] sm:$0x3]
  %vm1086 = vsmask.f32 2304
  %vm1087 = vsmask.f32 6416
  %vm1088 = vmor %vm1086, %vm1087
  %v1090 = vshrl.u32 %v655, 16
  %v1092 = vrot.slane %v1090, 5
  %v1093 = vshll.u32 %v655, 16
  %v1095 = vrot.slane %v1093, 6
  %v1096 = vor.u32 %v1092, %v1095
  %v1097 = vrot.slane %v1096, 4
  %v1099 = vshrl.u32 %v1070, 16
  %v1101 = vrot.slane %v1099, 5
  %v1102 = vshll.u32 %v1070, 16
  %v1104 = vrot.slane %v1102, 6
  %v1105 = vor.u32 %v1101, %v1104
  %v1106 = vsel %vm1088, %v1097, %v1105
  %v1108 = vshrl.u32 %v656, 16
  %v1110 = vrot.slane %v1108, 5
  %v1111 = vshll.u32 %v656, 16
  %v1113 = vrot.slane %v1111, 6
  %v1114 = vor.u32 %v1110, %v1113
  %v1115 = vrot.slane %v1114, 4
  %v1117 = vshrl.u32 %v1071, 16
  %v1119 = vrot.slane %v1117, 5
  %v1120 = vshll.u32 %v1071, 16
  %v1122 = vrot.slane %v1120, 6
  %v1123 = vor.u32 %v1119, %v1122
  %v1124 = vsel %vm1088, %v1115, %v1123
  %v1126 = vshrl.u32 %v657, 16
  %v1128 = vrot.slane %v1126, 5
  %v1129 = vshll.u32 %v657, 16
  %v1131 = vrot.slane %v1129, 6
  %v1132 = vor.u32 %v1128, %v1131
  %v1133 = vrot.slane %v1132, 4
  %v1135 = vshrl.u32 %v1072, 16
  %v1137 = vrot.slane %v1135, 5
  %v1138 = vshll.u32 %v1072, 16
  %v1140 = vrot.slane %v1138, 6
  %v1141 = vor.u32 %v1137, %v1140
  %v1142 = vsel %vm1088, %v1133, %v1141
  %v1144 = vshrl.u32 %v658, 16
  %v1146 = vrot.slane %v1144, 5
  %v1147 = vshll.u32 %v658, 16
  %v1149 = vrot.slane %v1147, 6
  %v1150 = vor.u32 %v1146, %v1149
  %v1151 = vrot.slane %v1150, 4
  %v1153 = vshrl.u32 %v1073, 16
  %v1155 = vrot.slane %v1153, 5
  %v1156 = vshll.u32 %v1073, 16
  %v1158 = vrot.slane %v1156, 6
  %v1159 = vor.u32 %v1155, %v1158
  %v1160 = vsel %vm1088, %v1151, %v1159
  %v1162 = vshrl.u32 %v659, 16
  %v1164 = vrot.slane %v1162, 5
  %v1165 = vshll.u32 %v659, 16
  %v1167 = vrot.slane %v1165, 6
  %v1168 = vor.u32 %v1164, %v1167
  %v1169 = vrot.slane %v1168, 4
  %v1171 = vshrl.u32 %v1074, 16
  %v1173 = vrot.slane %v1171, 5
  %v1174 = vshll.u32 %v1074, 16
  %v1176 = vrot.slane %v1174, 6
  %v1177 = vor.u32 %v1173, %v1176
  %v1178 = vsel %vm1088, %v1169, %v1177
  %v1180 = vshrl.u32 %v660, 16
  %v1182 = vrot.slane %v1180, 5
  %v1183 = vshll.u32 %v660, 16
  %v1185 = vrot.slane %v1183, 6
  %v1186 = vor.u32 %v1182, %v1185
  %v1187 = vrot.slane %v1186, 4
  %v1189 = vshrl.u32 %v1075, 16
  %v1191 = vrot.slane %v1189, 5
  %v1192 = vshll.u32 %v1075, 16
  %v1194 = vrot.slane %v1192, 6
  %v1195 = vor.u32 %v1191, %v1194
  %v1196 = vsel %vm1088, %v1187, %v1195
  %v1198 = vshrl.u32 %v661, 16
  %v1200 = vrot.slane %v1198, 5
  %v1201 = vshll.u32 %v661, 16
  %v1203 = vrot.slane %v1201, 6
  %v1204 = vor.u32 %v1200, %v1203
  %v1205 = vrot.slane %v1204, 4
  %v1207 = vshrl.u32 %v1076, 16
  %v1209 = vrot.slane %v1207, 5
  %v1210 = vshll.u32 %v1076, 16
  %v1212 = vrot.slane %v1210, 6
  %v1213 = vor.u32 %v1209, %v1212
  %v1214 = vsel %vm1088, %v1205, %v1213
  %v1216 = vshrl.u32 %v662, 16
  %v1218 = vrot.slane %v1216, 5
  %v1219 = vshll.u32 %v662, 16
  %v1221 = vrot.slane %v1219, 6
  %v1222 = vor.u32 %v1218, %v1221
  %v1223 = vrot.slane %v1222, 4
  %v1225 = vshrl.u32 %v1077, 16
  %v1227 = vrot.slane %v1225, 5
  %v1228 = vshll.u32 %v1077, 16
  %v1230 = vrot.slane %v1228, 6
  %v1231 = vor.u32 %v1227, %v1230
  %v1232 = vsel %vm1088, %v1223, %v1231
  %v1234 = vshrl.u32 %v663, 16
  %v1236 = vrot.slane %v1234, 5
  %v1237 = vshll.u32 %v663, 16
  %v1239 = vrot.slane %v1237, 6
  %v1240 = vor.u32 %v1236, %v1239
  %v1241 = vrot.slane %v1240, 4
  %v1243 = vshrl.u32 %v1078, 16
  %v1245 = vrot.slane %v1243, 5
  %v1246 = vshll.u32 %v1078, 16
  %v1248 = vrot.slane %v1246, 6
  %v1249 = vor.u32 %v1245, %v1248
  %v1250 = vsel %vm1088, %v1241, %v1249
  %v1252 = vshrl.u32 %v664, 16
  %v1254 = vrot.slane %v1252, 5
  %v1255 = vshll.u32 %v664, 16
  %v1257 = vrot.slane %v1255, 6
  %v1258 = vor.u32 %v1254, %v1257
  %v1259 = vrot.slane %v1258, 4
  %v1261 = vshrl.u32 %v1079, 16
  %v1263 = vrot.slane %v1261, 5
  %v1264 = vshll.u32 %v1079, 16
  %v1266 = vrot.slane %v1264, 6
  %v1267 = vor.u32 %v1263, %v1266
  %v1268 = vsel %vm1088, %v1259, %v1267
  %v1270 = vshrl.u32 %v665, 16
  %v1272 = vrot.slane %v1270, 5
  %v1273 = vshll.u32 %v665, 16
  %v1275 = vrot.slane %v1273, 6
  %v1276 = vor.u32 %v1272, %v1275
  %v1277 = vrot.slane %v1276, 4
  %v1279 = vshrl.u32 %v1080, 16
  %v1281 = vrot.slane %v1279, 5
  %v1282 = vshll.u32 %v1080, 16
  %v1284 = vrot.slane %v1282, 6
  %v1285 = vor.u32 %v1281, %v1284
  %v1286 = vsel %vm1088, %v1277, %v1285
  %v1288 = vshrl.u32 %v666, 16
  %v1290 = vrot.slane %v1288, 5
  %v1291 = vshll.u32 %v666, 16
  %v1293 = vrot.slane %v1291, 6
  %v1294 = vor.u32 %v1290, %v1293
  %v1295 = vrot.slane %v1294, 4
  %v1297 = vshrl.u32 %v1081, 16
  %v1299 = vrot.slane %v1297, 5
  %v1300 = vshll.u32 %v1081, 16
  %v1302 = vrot.slane %v1300, 6
  %v1303 = vor.u32 %v1299, %v1302
  %v1304 = vsel %vm1088, %v1295, %v1303
  %v1306 = vshrl.u32 %v667, 16
  %v1308 = vrot.slane %v1306, 5
  %v1309 = vshll.u32 %v667, 16
  %v1311 = vrot.slane %v1309, 6
  %v1312 = vor.u32 %v1308, %v1311
  %v1313 = vrot.slane %v1312, 4
  %v1315 = vshrl.u32 %v1082, 16
  %v1317 = vrot.slane %v1315, 5
  %v1318 = vshll.u32 %v1082, 16
  %v1320 = vrot.slane %v1318, 6
  %v1321 = vor.u32 %v1317, %v1320
  %v1322 = vsel %vm1088, %v1313, %v1321
  %v1324 = vshrl.u32 %v668, 16
  %v1326 = vrot.slane %v1324, 5
  %v1327 = vshll.u32 %v668, 16
  %v1329 = vrot.slane %v1327, 6
  %v1330 = vor.u32 %v1326, %v1329
  %v1331 = vrot.slane %v1330, 4
  %v1333 = vshrl.u32 %v1083, 16
  %v1335 = vrot.slane %v1333, 5
  %v1336 = vshll.u32 %v1083, 16
  %v1338 = vrot.slane %v1336, 6
  %v1339 = vor.u32 %v1335, %v1338
  %v1340 = vsel %vm1088, %v1331, %v1339
  %v1342 = vshrl.u32 %v669, 16
  %v1344 = vrot.slane %v1342, 5
  %v1345 = vshll.u32 %v669, 16
  %v1347 = vrot.slane %v1345, 6
  %v1348 = vor.u32 %v1344, %v1347
  %v1349 = vrot.slane %v1348, 4
  %v1351 = vshrl.u32 %v1084, 16
  %v1353 = vrot.slane %v1351, 5
  %v1354 = vshll.u32 %v1084, 16
  %v1356 = vrot.slane %v1354, 6
  %v1357 = vor.u32 %v1353, %v1356
  %v1358 = vsel %vm1088, %v1349, %v1357
  %v1360 = vshrl.u32 %v670, 16
  %v1362 = vrot.slane %v1360, 5
  %v1363 = vshll.u32 %v670, 16
  %v1365 = vrot.slane %v1363, 6
  %v1366 = vor.u32 %v1362, %v1365
  %v1367 = vrot.slane %v1366, 4
  %v1369 = vshrl.u32 %v1085, 16
  %v1371 = vrot.slane %v1369, 5
  %v1372 = vshll.u32 %v1085, 16
  %v1374 = vrot.slane %v1372, 6
  %v1375 = vor.u32 %v1371, %v1374
  %v1376 = vsel %vm1088, %v1367, %v1375
  %s1377 = scalar_lea.vmem %s1, 4
  %v1378 = vld [vmem:[%s1377] sm:$0x3]
  %v1379 = vunpack.c.l.b16 %v1106
  %v1380 = vunpack.c.l.b16 %v1124
  %v1381 = vunpack.c.l.b16 %v1142
  %v1382 = vunpack.c.l.b16 %v1160
  %v1383 = vunpack.c.l.b16 %v1178
  %v1384 = vunpack.c.l.b16 %v1196
  %v1385 = vunpack.c.l.b16 %v1214
  %v1386 = vunpack.c.l.b16 %v1232
  %v1387 = vunpack.c.l.b16 %v1250
  %v1388 = vunpack.c.l.b16 %v1268
  %v1389 = vunpack.c.l.b16 %v1286
  %v1390 = vunpack.c.l.b16 %v1304
  %v1391 = vunpack.c.l.b16 %v1322
  %v1392 = vunpack.c.l.b16 %v1340
  %v1393 = vunpack.c.l.b16 %v1358
  %v1394 = vunpack.c.l.b16 %v1376
  %v1395 = vpack.c.b16 %v1380, %v1379
  %v1396 = vpack.c.b16 %v1382, %v1381
  %v1397 = vpack.c.b16 %v1384, %v1383
  %v1398 = vpack.c.b16 %v1386, %v1385
  %v1399 = vpack.c.b16 %v1388, %v1387
  %v1400 = vpack.c.b16 %v1390, %v1389
  %v1401 = vpack.c.b16 %v1392, %v1391
  %v1402 = vpack.c.b16 %v1394, %v1393
  %v1404 = vsel %vm796, %v1395, 0
  %v1407 = vsel %vm796, %v1396, 0
  %v1410 = vsel %vm796, %v1397, 0
  %v1413 = vsel %vm796, %v1398, 0
  %v1416 = vsel %vm796, %v1399, 0
  %v1419 = vsel %vm796, %v1400, 0
  %v1422 = vsel %vm796, %v1401, 0
  %v1425 = vsel %vm796, %v1402, 0
  %v1428 = vsel %vm821, %v1378, 0
  %1430 = vmatprep.subr.bf16.mxu0 0
  %1431 = vmatpush1.bf16.msra.mxu0 0
  %1432 = vmatprep.subr.bf16.mxu0 0
  %1433 = vmatpush1.bf16.msra.mxu0 0
  %1434 = vmatprep.subr.bf16.mxu0 0
  %1435 = vmatpush1.bf16.msra.mxu0 0
  %1436 = vmatprep.subr.bf16.mxu0 0
  %1437 = vmatpush1.bf16.msra.mxu0 0
  %1438 = vmatprep.subr.bf16.mxu0 0
  %1439 = vmatpush1.bf16.msra.mxu0 0
  %1440 = vmatprep.subr.bf16.mxu0 0
  %1441 = vmatpush1.bf16.msra.mxu0 0
  %1442 = vmatprep.subr.bf16.mxu0 0
  %1443 = vmatpush1.bf16.msra.mxu0 0
  %1444 = vmatprep.subr.bf16.mxu0 0
  %1445 = vmatpush1.bf16.msra.mxu0 %v1428
  %1446 = vmatprep.subr.bf16.mxu0 0
  %1447 = vmatpush2.bf16.msra.mxu0 0
  %1448 = vmatprep.subr.bf16.mxu0 0
  %1449 = vmatpush2.bf16.msra.mxu0 0
  %1450 = vmatprep.subr.bf16.mxu0 0
  %1451 = vmatpush2.bf16.msra.mxu0 0
  %1452 = vmatprep.subr.bf16.mxu0 0
  %1453 = vmatpush2.bf16.msra.mxu0 0
  %1454 = vmatprep.subr.bf16.mxu0 0
  %1455 = vmatpush2.bf16.msra.mxu0 0
  %1456 = vmatprep.subr.bf16.mxu0 0
  %1457 = vmatpush2.bf16.msra.mxu0 0
  %1458 = vmatprep.subr.bf16.mxu0 0
  %1459 = vmatpush2.bf16.msra.mxu0 0
  %1460 = vmatprep.subr.bf16.mxu0 0
  %1461 = vmatpush2.bf16.msra.mxu0 0
  %1462 = vmatprep.mubr.bf16.mxu0 0
  %1463 = vmatmul.mubr.bf16.gmra.mxu0 %v1404
  %v1464 = vpop.f32.mrf.mxu0
  %v1465 = vadd.f32 0.0, %v1464
  %v1466 = vpop.f32.mrf.mxu0
  %v1467 = vpop.f32.mrf.mxu0
  %v1468 = vadd.f32 0.0, %v1467
  %v1469 = vpop.f32.mrf.mxu0
  %1470 = vmatprep.mubr.bf16.mxu0 0
  %1471 = vmatmul.mubr.bf16.gmra.mxu0 %v1407
  %v1472 = vpop.f32.mrf.mxu0
  %v1473 = vadd.f32 0.0, %v1472
  %v1474 = vpop.f32.mrf.mxu0
  %v1475 = vpop.f32.mrf.mxu0
  %v1476 = vadd.f32 0.0, %v1475
  %v1477 = vpop.f32.mrf.mxu0
  %1478 = vmatprep.mubr.bf16.mxu0 0
  %1479 = vmatmul.mubr.bf16.gmra.mxu0 %v1410
  %v1480 = vpop.f32.mrf.mxu0
  %v1481 = vadd.f32 0.0, %v1480
  %v1482 = vpop.f32.mrf.mxu0
  %v1483 = vpop.f32.mrf.mxu0
  %v1484 = vadd.f32 0.0, %v1483
  %v1485 = vpop.f32.mrf.mxu0
  %1486 = vmatprep.mubr.bf16.mxu0 0
  %1487 = vmatmul.mubr.bf16.gmra.mxu0 %v1413
  %v1488 = vpop.f32.mrf.mxu0
  %v1489 = vadd.f32 0.0, %v1488
  %v1490 = vpop.f32.mrf.mxu0
  %v1491 = vpop.f32.mrf.mxu0
  %v1492 = vadd.f32 0.0, %v1491
  %v1493 = vpop.f32.mrf.mxu0
  %1494 = vmatprep.mubr.bf16.mxu0 0
  %1495 = vmatmul.mubr.bf16.gmra.mxu0 %v1416
  %v1496 = vpop.f32.mrf.mxu0
  %v1497 = vadd.f32 0.0, %v1496
  %v1498 = vpop.f32.mrf.mxu0
  %v1499 = vpop.f32.mrf.mxu0
  %v1500 = vadd.f32 0.0, %v1499
  %v1501 = vpop.f32.mrf.mxu0
  %1502 = vmatprep.mubr.bf16.mxu0 0
  %1503 = vmatmul.mubr.bf16.gmra.mxu0 %v1419
  %v1504 = vpop.f32.mrf.mxu0
  %v1505 = vadd.f32 0.0, %v1504
  %v1506 = vpop.f32.mrf.mxu0
  %v1507 = vpop.f32.mrf.mxu0
  %v1508 = vadd.f32 0.0, %v1507
  %v1509 = vpop.f32.mrf.mxu0
  %1510 = vmatprep.mubr.bf16.mxu0 0
  %1511 = vmatmul.mubr.bf16.gmra.mxu0 %v1422
  %v1512 = vpop.f32.mrf.mxu0
  %v1513 = vadd.f32 0.0, %v1512
  %v1514 = vpop.f32.mrf.mxu0
  %v1515 = vpop.f32.mrf.mxu0
  %v1516 = vadd.f32 0.0, %v1515
  %v1517 = vpop.f32.mrf.mxu0
  %1518 = vmatprep.mubr.bf16.mxu0 0
  %1519 = vmatmul.mubr.bf16.gmra.mxu0 %v1425
  %v1520 = vpop.f32.mrf.mxu0
  %v1521 = vadd.f32 0.0, %v1520
  %v1522 = vpop.f32.mrf.mxu0
  %v1523 = vpop.f32.mrf.mxu0
  %v1524 = vadd.f32 0.0, %v1523
  %v1525 = vpop.f32.mrf.mxu0
  %1526 = vdwg.mxu0
  %v1527 = vadd.f32 %v1008, %v1465
  %v1528 = vadd.f32 %v1011, %v1468
  %v1529 = vadd.f32 %v1016, %v1473
  %v1530 = vadd.f32 %v1019, %v1476
  %v1531 = vadd.f32 %v1024, %v1481
  %v1532 = vadd.f32 %v1027, %v1484
  %v1533 = vadd.f32 %v1032, %v1489
  %v1534 = vadd.f32 %v1035, %v1492
  %v1535 = vadd.f32 %v1040, %v1497
  %v1536 = vadd.f32 %v1043, %v1500
  %v1537 = vadd.f32 %v1048, %v1505
  %v1538 = vadd.f32 %v1051, %v1508
  %v1539 = vadd.f32 %v1056, %v1513
  %v1540 = vadd.f32 %v1059, %v1516
  %v1541 = vadd.f32 %v1064, %v1521
  %v1542 = vadd.f32 %v1067, %v1524
  %v1543 = vld [vmem:[%s360] sm:$0xf]
  %v1544 = vld [vmem:[%s360 + $0x4] sm:$0x1]
  %v1545 = vld [vmem:[%s360 + $0x8] sm:$0xf]
  %v1546 = vld [vmem:[%s360 + $0xc] sm:$0x1]
  %v1547 = vld [vmem:[%s360 + $0x10] sm:$0xf]
  %v1548 = vld [vmem:[%s360 + $0x14] sm:$0x1]
  %v1549 = vld [vmem:[%s360 + $0x18] sm:$0xf]
  %v1550 = vld [vmem:[%s360 + $0x1c] sm:$0x1]
  %v1551 = vld [vmem:[%s360 + $0x20] sm:$0xf]
  %v1552 = vld [vmem:[%s360 + $0x24] sm:$0x1]
  %v1553 = vld [vmem:[%s360 + $0x28] sm:$0xf]
  %v1554 = vld [vmem:[%s360 + $0x2c] sm:$0x1]
  %v1555 = vld [vmem:[%s360 + $0x30] sm:$0xf]
  %v1556 = vld [vmem:[%s360 + $0x34] sm:$0x1]
  %v1557 = vld [vmem:[%s360 + $0x38] sm:$0xf]
  %v1558 = vld [vmem:[%s360 + $0x3c] sm:$0x1]
  %v1559 = vld [vmem:[%s360 + $0x50] sm:$0xf]
  %v1560 = vld [vmem:[%s360 + $0x54] sm:$0x1]
  %v1561 = vld [vmem:[%s360 + $0x58] sm:$0xf]
  %v1562 = vld [vmem:[%s360 + $0x5c] sm:$0x1]
  %v1563 = vld [vmem:[%s360 + $0x60] sm:$0xf]
  %v1564 = vld [vmem:[%s360 + $0x64] sm:$0x1]
  %v1565 = vld [vmem:[%s360 + $0x68] sm:$0xf]
  %v1566 = vld [vmem:[%s360 + $0x6c] sm:$0x1]
  %v1567 = vld [vmem:[%s360 + $0x70] sm:$0xf]
  %v1568 = vld [vmem:[%s360 + $0x74] sm:$0x1]
  %v1569 = vld [vmem:[%s360 + $0x78] sm:$0xf]
  %v1570 = vld [vmem:[%s360 + $0x7c] sm:$0x1]
  %v1571 = vld [vmem:[%s360 + $0x80] sm:$0xf]
  %v1572 = vld [vmem:[%s360 + $0x84] sm:$0x1]
  %v1573 = vld [vmem:[%s360 + $0x88] sm:$0xf]
  %v1574 = vld [vmem:[%s360 + $0x8c] sm:$0x1]
  %v1576 = vshrl.u32 %v1543, 16
  %v1578 = vrot.slane %v1576, 4
  %v1579 = vshll.u32 %v1543, 16
  %v1581 = vrot.slane %v1579, 5
  %v1582 = vor.u32 %v1578, %v1581
  %v1583 = vrot.slane %v1582, 4
  %v1585 = vshll.u32 %v1544, 16
  %v1587 = vrot.slane %v1585, 5
  %v1588 = vsel %vm429, %v1583, %v1587
  %v1590 = vshrl.u32 %v1545, 16
  %v1592 = vrot.slane %v1590, 4
  %v1593 = vshll.u32 %v1545, 16
  %v1595 = vrot.slane %v1593, 5
  %v1596 = vor.u32 %v1592, %v1595
  %v1597 = vrot.slane %v1596, 4
  %v1599 = vshll.u32 %v1546, 16
  %v1601 = vrot.slane %v1599, 5
  %v1602 = vsel %vm429, %v1597, %v1601
  %v1604 = vshrl.u32 %v1547, 16
  %v1606 = vrot.slane %v1604, 4
  %v1607 = vshll.u32 %v1547, 16
  %v1609 = vrot.slane %v1607, 5
  %v1610 = vor.u32 %v1606, %v1609
  %v1611 = vrot.slane %v1610, 4
  %v1613 = vshll.u32 %v1548, 16
  %v1615 = vrot.slane %v1613, 5
  %v1616 = vsel %vm429, %v1611, %v1615
  %v1618 = vshrl.u32 %v1549, 16
  %v1620 = vrot.slane %v1618, 4
  %v1621 = vshll.u32 %v1549, 16
  %v1623 = vrot.slane %v1621, 5
  %v1624 = vor.u32 %v1620, %v1623
  %v1625 = vrot.slane %v1624, 4
  %v1627 = vshll.u32 %v1550, 16
  %v1629 = vrot.slane %v1627, 5
  %v1630 = vsel %vm429, %v1625, %v1629
  %v1632 = vshrl.u32 %v1551, 16
  %v1634 = vrot.slane %v1632, 4
  %v1635 = vshll.u32 %v1551, 16
  %v1637 = vrot.slane %v1635, 5
  %v1638 = vor.u32 %v1634, %v1637
  %v1639 = vrot.slane %v1638, 4
  %v1641 = vshll.u32 %v1552, 16
  %v1643 = vrot.slane %v1641, 5
  %v1644 = vsel %vm429, %v1639, %v1643
  %v1646 = vshrl.u32 %v1553, 16
  %v1648 = vrot.slane %v1646, 4
  %v1649 = vshll.u32 %v1553, 16
  %v1651 = vrot.slane %v1649, 5
  %v1652 = vor.u32 %v1648, %v1651
  %v1653 = vrot.slane %v1652, 4
  %v1655 = vshll.u32 %v1554, 16
  %v1657 = vrot.slane %v1655, 5
  %v1658 = vsel %vm429, %v1653, %v1657
  %v1660 = vshrl.u32 %v1555, 16
  %v1662 = vrot.slane %v1660, 4
  %v1663 = vshll.u32 %v1555, 16
  %v1665 = vrot.slane %v1663, 5
  %v1666 = vor.u32 %v1662, %v1665
  %v1667 = vrot.slane %v1666, 4
  %v1669 = vshll.u32 %v1556, 16
  %v1671 = vrot.slane %v1669, 5
  %v1672 = vsel %vm429, %v1667, %v1671
  %v1674 = vshrl.u32 %v1557, 16
  %v1676 = vrot.slane %v1674, 4
  %v1677 = vshll.u32 %v1557, 16
  %v1679 = vrot.slane %v1677, 5
  %v1680 = vor.u32 %v1676, %v1679
  %v1681 = vrot.slane %v1680, 4
  %v1683 = vshll.u32 %v1558, 16
  %v1685 = vrot.slane %v1683, 5
  %v1686 = vsel %vm429, %v1681, %v1685
  %v1688 = vshrl.u32 %v1559, 16
  %v1690 = vrot.slane %v1688, 4
  %v1691 = vshll.u32 %v1559, 16
  %v1693 = vrot.slane %v1691, 5
  %v1694 = vor.u32 %v1690, %v1693
  %v1695 = vrot.slane %v1694, 4
  %v1697 = vshll.u32 %v1560, 16
  %v1699 = vrot.slane %v1697, 5
  %v1700 = vsel %vm429, %v1695, %v1699
  %v1702 = vshrl.u32 %v1561, 16
  %v1704 = vrot.slane %v1702, 4
  %v1705 = vshll.u32 %v1561, 16
  %v1707 = vrot.slane %v1705, 5
  %v1708 = vor.u32 %v1704, %v1707
  %v1709 = vrot.slane %v1708, 4
  %v1711 = vshll.u32 %v1562, 16
  %v1713 = vrot.slane %v1711, 5
  %v1714 = vsel %vm429, %v1709, %v1713
  %v1716 = vshrl.u32 %v1563, 16
  %v1718 = vrot.slane %v1716, 4
  %v1719 = vshll.u32 %v1563, 16
  %v1721 = vrot.slane %v1719, 5
  %v1722 = vor.u32 %v1718, %v1721
  %v1723 = vrot.slane %v1722, 4
  %v1725 = vshll.u32 %v1564, 16
  %v1727 = vrot.slane %v1725, 5
  %v1728 = vsel %vm429, %v1723, %v1727
  %v1730 = vshrl.u32 %v1565, 16
  %v1732 = vrot.slane %v1730, 4
  %v1733 = vshll.u32 %v1565, 16
  %v1735 = vrot.slane %v1733, 5
  %v1736 = vor.u32 %v1732, %v1735
  %v1737 = vrot.slane %v1736, 4
  %v1739 = vshll.u32 %v1566, 16
  %v1741 = vrot.slane %v1739, 5
  %v1742 = vsel %vm429, %v1737, %v1741
  %v1744 = vshrl.u32 %v1567, 16
  %v1746 = vrot.slane %v1744, 4
  %v1747 = vshll.u32 %v1567, 16
  %v1749 = vrot.slane %v1747, 5
  %v1750 = vor.u32 %v1746, %v1749
  %v1751 = vrot.slane %v1750, 4
  %v1753 = vshll.u32 %v1568, 16
  %v1755 = vrot.slane %v1753, 5
  %v1756 = vsel %vm429, %v1751, %v1755
  %v1758 = vshrl.u32 %v1569, 16
  %v1760 = vrot.slane %v1758, 4
  %v1761 = vshll.u32 %v1569, 16
  %v1763 = vrot.slane %v1761, 5
  %v1764 = vor.u32 %v1760, %v1763
  %v1765 = vrot.slane %v1764, 4
  %v1767 = vshll.u32 %v1570, 16
  %v1769 = vrot.slane %v1767, 5
  %v1770 = vsel %vm429, %v1765, %v1769
  %v1772 = vshrl.u32 %v1571, 16
  %v1774 = vrot.slane %v1772, 4
  %v1775 = vshll.u32 %v1571, 16
  %v1777 = vrot.slane %v1775, 5
  %v1778 = vor.u32 %v1774, %v1777
  %v1779 = vrot.slane %v1778, 4
  %v1781 = vshll.u32 %v1572, 16
  %v1783 = vrot.slane %v1781, 5
  %v1784 = vsel %vm429, %v1779, %v1783
  %v1786 = vshrl.u32 %v1573, 16
  %v1788 = vrot.slane %v1786, 4
  %v1789 = vshll.u32 %v1573, 16
  %v1791 = vrot.slane %v1789, 5
  %v1792 = vor.u32 %v1788, %v1791
  %v1793 = vrot.slane %v1792, 4
  %v1795 = vshll.u32 %v1574, 16
  %v1797 = vrot.slane %v1795, 5
  %v1798 = vsel %vm429, %v1793, %v1797
  %s1799 = scalar_lea.vmem %s1, 6
  %v1800 = vld [vmem:[%s1799] sm:$0x3]
  %v1801 = vunpack.c.l.b16 %v1588
  %v1802 = vunpack.c.l.b16 %v1602
  %v1803 = vunpack.c.l.b16 %v1616
  %v1804 = vunpack.c.l.b16 %v1630
  %v1805 = vunpack.c.l.b16 %v1644
  %v1806 = vunpack.c.l.b16 %v1658
  %v1807 = vunpack.c.l.b16 %v1672
  %v1808 = vunpack.c.l.b16 %v1686
  %v1809 = vunpack.c.l.b16 %v1700
  %v1810 = vunpack.c.l.b16 %v1714
  %v1811 = vunpack.c.l.b16 %v1728
  %v1812 = vunpack.c.l.b16 %v1742
  %v1813 = vunpack.c.l.b16 %v1756
  %v1814 = vunpack.c.l.b16 %v1770
  %v1815 = vunpack.c.l.b16 %v1784
  %v1816 = vunpack.c.l.b16 %v1798
  %v1817 = vpack.c.b16 %v1802, %v1801
  %v1818 = vpack.c.b16 %v1804, %v1803
  %v1819 = vpack.c.b16 %v1806, %v1805
  %v1820 = vpack.c.b16 %v1808, %v1807
  %v1821 = vpack.c.b16 %v1810, %v1809
  %v1822 = vpack.c.b16 %v1812, %v1811
  %v1823 = vpack.c.b16 %v1814, %v1813
  %v1824 = vpack.c.b16 %v1816, %v1815
  %v1826 = vsel %vm796, %v1817, 0
  %v1829 = vsel %vm796, %v1818, 0
  %v1832 = vsel %vm796, %v1819, 0
  %v1835 = vsel %vm796, %v1820, 0
  %v1838 = vsel %vm796, %v1821, 0
  %v1841 = vsel %vm796, %v1822, 0
  %v1844 = vsel %vm796, %v1823, 0
  %v1847 = vsel %vm796, %v1824, 0
  %v1850 = vsel %vm821, %v1800, 0
  %1852 = vmatprep.subr.bf16.mxu0 0
  %1853 = vmatpush1.bf16.msra.mxu0 0
  %1854 = vmatprep.subr.bf16.mxu0 0
  %1855 = vmatpush1.bf16.msra.mxu0 0
  %1856 = vmatprep.subr.bf16.mxu0 0
  %1857 = vmatpush1.bf16.msra.mxu0 0
  %1858 = vmatprep.subr.bf16.mxu0 0
  %1859 = vmatpush1.bf16.msra.mxu0 0
  %1860 = vmatprep.subr.bf16.mxu0 0
  %1861 = vmatpush1.bf16.msra.mxu0 0
  %1862 = vmatprep.subr.bf16.mxu0 0
  %1863 = vmatpush1.bf16.msra.mxu0 0
  %1864 = vmatprep.subr.bf16.mxu0 0
  %1865 = vmatpush1.bf16.msra.mxu0 0
  %1866 = vmatprep.subr.bf16.mxu0 0
  %1867 = vmatpush1.bf16.msra.mxu0 %v1850
  %1868 = vmatprep.subr.bf16.mxu0 0
  %1869 = vmatpush2.bf16.msra.mxu0 0
  %1870 = vmatprep.subr.bf16.mxu0 0
  %1871 = vmatpush2.bf16.msra.mxu0 0
  %1872 = vmatprep.subr.bf16.mxu0 0
  %1873 = vmatpush2.bf16.msra.mxu0 0
  %1874 = vmatprep.subr.bf16.mxu0 0
  %1875 = vmatpush2.bf16.msra.mxu0 0
  %1876 = vmatprep.subr.bf16.mxu0 0
  %1877 = vmatpush2.bf16.msra.mxu0 0
  %1878 = vmatprep.subr.bf16.mxu0 0
  %1879 = vmatpush2.bf16.msra.mxu0 0
  %1880 = vmatprep.subr.bf16.mxu0 0
  %1881 = vmatpush2.bf16.msra.mxu0 0
  %1882 = vmatprep.subr.bf16.mxu0 0
  %1883 = vmatpush2.bf16.msra.mxu0 0
  %1884 = vmatprep.mubr.bf16.mxu0 0
  %1885 = vmatmul.mubr.bf16.gmra.mxu0 %v1826
  %v1886 = vpop.f32.mrf.mxu0
  %v1887 = vadd.f32 0.0, %v1886
  %v1888 = vpop.f32.mrf.mxu0
  %v1889 = vpop.f32.mrf.mxu0
  %v1890 = vadd.f32 0.0, %v1889
  %v1891 = vpop.f32.mrf.mxu0
  %1892 = vmatprep.mubr.bf16.mxu0 0
  %1893 = vmatmul.mubr.bf16.gmra.mxu0 %v1829
  %v1894 = vpop.f32.mrf.mxu0
  %v1895 = vadd.f32 0.0, %v1894
  %v1896 = vpop.f32.mrf.mxu0
  %v1897 = vpop.f32.mrf.mxu0
  %v1898 = vadd.f32 0.0, %v1897
  %v1899 = vpop.f32.mrf.mxu0
  %1900 = vmatprep.mubr.bf16.mxu0 0
  %1901 = vmatmul.mubr.bf16.gmra.mxu0 %v1832
  %v1902 = vpop.f32.mrf.mxu0
  %v1903 = vadd.f32 0.0, %v1902
  %v1904 = vpop.f32.mrf.mxu0
  %v1905 = vpop.f32.mrf.mxu0
  %v1906 = vadd.f32 0.0, %v1905
  %v1907 = vpop.f32.mrf.mxu0
  %1908 = vmatprep.mubr.bf16.mxu0 0
  %1909 = vmatmul.mubr.bf16.gmra.mxu0 %v1835
  %v1910 = vpop.f32.mrf.mxu0
  %v1911 = vadd.f32 0.0, %v1910
  %v1912 = vpop.f32.mrf.mxu0
  %v1913 = vpop.f32.mrf.mxu0
  %v1914 = vadd.f32 0.0, %v1913
  %v1915 = vpop.f32.mrf.mxu0
  %1916 = vmatprep.mubr.bf16.mxu0 0
  %1917 = vmatmul.mubr.bf16.gmra.mxu0 %v1838
  %v1918 = vpop.f32.mrf.mxu0
  %v1919 = vadd.f32 0.0, %v1918
  %v1920 = vpop.f32.mrf.mxu0
  %v1921 = vpop.f32.mrf.mxu0
  %v1922 = vadd.f32 0.0, %v1921
  %v1923 = vpop.f32.mrf.mxu0
  %1924 = vmatprep.mubr.bf16.mxu0 0
  %1925 = vmatmul.mubr.bf16.gmra.mxu0 %v1841
  %v1926 = vpop.f32.mrf.mxu0
  %v1927 = vadd.f32 0.0, %v1926
  %v1928 = vpop.f32.mrf.mxu0
  %v1929 = vpop.f32.mrf.mxu0
  %v1930 = vadd.f32 0.0, %v1929
  %v1931 = vpop.f32.mrf.mxu0
  %1932 = vmatprep.mubr.bf16.mxu0 0
  %1933 = vmatmul.mubr.bf16.gmra.mxu0 %v1844
  %v1934 = vpop.f32.mrf.mxu0
  %v1935 = vadd.f32 0.0, %v1934
  %v1936 = vpop.f32.mrf.mxu0
  %v1937 = vpop.f32.mrf.mxu0
  %v1938 = vadd.f32 0.0, %v1937
  %v1939 = vpop.f32.mrf.mxu0
  %1940 = vmatprep.mubr.bf16.mxu0 0
  %1941 = vmatmul.mubr.bf16.gmra.mxu0 %v1847
  %v1942 = vpop.f32.mrf.mxu0
  %v1943 = vadd.f32 0.0, %v1942
  %v1944 = vpop.f32.mrf.mxu0
  %v1945 = vpop.f32.mrf.mxu0
  %v1946 = vadd.f32 0.0, %v1945
  %v1947 = vpop.f32.mrf.mxu0
  %1948 = vdwg.mxu0
  %v1949 = vadd.f32 %v1527, %v1887
  %v1950 = vadd.f32 %v1528, %v1890
  %v1951 = vadd.f32 %v1529, %v1895
  %v1952 = vadd.f32 %v1530, %v1898
  %v1953 = vadd.f32 %v1531, %v1903
  %v1954 = vadd.f32 %v1532, %v1906
  %v1955 = vadd.f32 %v1533, %v1911
  %v1956 = vadd.f32 %v1534, %v1914
  %v1957 = vadd.f32 %v1535, %v1919
  %v1958 = vadd.f32 %v1536, %v1922
  %v1959 = vadd.f32 %v1537, %v1927
  %v1960 = vadd.f32 %v1538, %v1930
  %v1961 = vadd.f32 %v1539, %v1935
  %v1962 = vadd.f32 %v1540, %v1938
  %v1963 = vadd.f32 %v1541, %v1943
  %v1964 = vadd.f32 %v1542, %v1946
  %v1965 = vld [vmem:[%s360] sm:$0xe]
  %v1966 = vld [vmem:[%s360 + $0x8] sm:$0xe]
  %v1967 = vld [vmem:[%s360 + $0x10] sm:$0xe]
  %v1968 = vld [vmem:[%s360 + $0x18] sm:$0xe]
  %v1969 = vld [vmem:[%s360 + $0x20] sm:$0xe]
  %v1970 = vld [vmem:[%s360 + $0x28] sm:$0xe]
  %v1971 = vld [vmem:[%s360 + $0x30] sm:$0xe]
  %v1972 = vld [vmem:[%s360 + $0x38] sm:$0xe]
  %v1973 = vld [vmem:[%s360 + $0x50] sm:$0xe]
  %v1974 = vld [vmem:[%s360 + $0x58] sm:$0xe]
  %v1975 = vld [vmem:[%s360 + $0x60] sm:$0xe]
  %v1976 = vld [vmem:[%s360 + $0x68] sm:$0xe]
  %v1977 = vld [vmem:[%s360 + $0x70] sm:$0xe]
  %v1978 = vld [vmem:[%s360 + $0x78] sm:$0xe]
  %v1979 = vld [vmem:[%s360 + $0x80] sm:$0xe]
  %v1980 = vld [vmem:[%s360 + $0x88] sm:$0xe]
  %v2013 = vrot.slane %v1965, 5
  %v2014 = vrot.slane %v2013, 4
  %v2015 = vrot.slane %v1544, 5
  %v2016 = vsel %vm705, %v2014, %v2015
  %v2017 = vrot.slane %v1966, 5
  %v2018 = vrot.slane %v2017, 4
  %v2019 = vrot.slane %v1546, 5
  %v2020 = vsel %vm705, %v2018, %v2019
  %v2021 = vrot.slane %v1967, 5
  %v2022 = vrot.slane %v2021, 4
  %v2023 = vrot.slane %v1548, 5
  %v2024 = vsel %vm705, %v2022, %v2023
  %v2025 = vrot.slane %v1968, 5
  %v2026 = vrot.slane %v2025, 4
  %v2027 = vrot.slane %v1550, 5
  %v2028 = vsel %vm705, %v2026, %v2027
  %v2029 = vrot.slane %v1969, 5
  %v2030 = vrot.slane %v2029, 4
  %v2031 = vrot.slane %v1552, 5
  %v2032 = vsel %vm705, %v2030, %v2031
  %v2033 = vrot.slane %v1970, 5
  %v2034 = vrot.slane %v2033, 4
  %v2035 = vrot.slane %v1554, 5
  %v2036 = vsel %vm705, %v2034, %v2035
  %v2037 = vrot.slane %v1971, 5
  %v2038 = vrot.slane %v2037, 4
  %v2039 = vrot.slane %v1556, 5
  %v2040 = vsel %vm705, %v2038, %v2039
  %v2041 = vrot.slane %v1972, 5
  %v2042 = vrot.slane %v2041, 4
  %v2043 = vrot.slane %v1558, 5
  %v2044 = vsel %vm705, %v2042, %v2043
  %v2045 = vrot.slane %v1973, 5
  %v2046 = vrot.slane %v2045, 4
  %v2047 = vrot.slane %v1560, 5
  %v2048 = vsel %vm705, %v2046, %v2047
  %v2049 = vrot.slane %v1974, 5
  %v2050 = vrot.slane %v2049, 4
  %v2051 = vrot.slane %v1562, 5
  %v2052 = vsel %vm705, %v2050, %v2051
  %v2053 = vrot.slane %v1975, 5
  %v2054 = vrot.slane %v2053, 4
  %v2055 = vrot.slane %v1564, 5
  %v2056 = vsel %vm705, %v2054, %v2055
  %v2057 = vrot.slane %v1976, 5
  %v2058 = vrot.slane %v2057, 4
  %v2059 = vrot.slane %v1566, 5
  %v2060 = vsel %vm705, %v2058, %v2059
  %v2061 = vrot.slane %v1977, 5
  %v2062 = vrot.slane %v2061, 4
  %v2063 = vrot.slane %v1568, 5
  %v2064 = vsel %vm705, %v2062, %v2063
  %v2065 = vrot.slane %v1978, 5
  %v2066 = vrot.slane %v2065, 4
  %v2067 = vrot.slane %v1570, 5
  %v2068 = vsel %vm705, %v2066, %v2067
  %v2069 = vrot.slane %v1979, 5
  %v2070 = vrot.slane %v2069, 4
  %v2071 = vrot.slane %v1572, 5
  %v2072 = vsel %vm705, %v2070, %v2071
  %v2073 = vrot.slane %v1980, 5
  %v2074 = vrot.slane %v2073, 4
  %v2075 = vrot.slane %v1574, 5
  %v2076 = vsel %vm705, %v2074, %v2075
  %s2077 = scalar_lea.vmem %s1, 8
  %v2078 = vld [vmem:[%s2077] sm:$0x3]
  %v2079 = vunpack.c.l.b16 %v2016
  %v2080 = vunpack.c.l.b16 %v2020
  %v2081 = vunpack.c.l.b16 %v2024
  %v2082 = vunpack.c.l.b16 %v2028
  %v2083 = vunpack.c.l.b16 %v2032
  %v2084 = vunpack.c.l.b16 %v2036
  %v2085 = vunpack.c.l.b16 %v2040
  %v2086 = vunpack.c.l.b16 %v2044
  %v2087 = vunpack.c.l.b16 %v2048
  %v2088 = vunpack.c.l.b16 %v2052
  %v2089 = vunpack.c.l.b16 %v2056
  %v2090 = vunpack.c.l.b16 %v2060
  %v2091 = vunpack.c.l.b16 %v2064
  %v2092 = vunpack.c.l.b16 %v2068
  %v2093 = vunpack.c.l.b16 %v2072
  %v2094 = vunpack.c.l.b16 %v2076
  %v2095 = vpack.c.b16 %v2080, %v2079
  %v2096 = vpack.c.b16 %v2082, %v2081
  %v2097 = vpack.c.b16 %v2084, %v2083
  %v2098 = vpack.c.b16 %v2086, %v2085
  %v2099 = vpack.c.b16 %v2088, %v2087
  %v2100 = vpack.c.b16 %v2090, %v2089
  %v2101 = vpack.c.b16 %v2092, %v2091
  %v2102 = vpack.c.b16 %v2094, %v2093
  %v2104 = vsel %vm796, %v2095, 0
  %v2107 = vsel %vm796, %v2096, 0
  %v2110 = vsel %vm796, %v2097, 0
  %v2113 = vsel %vm796, %v2098, 0
  %v2116 = vsel %vm796, %v2099, 0
  %v2119 = vsel %vm796, %v2100, 0
  %v2122 = vsel %vm796, %v2101, 0
  %v2125 = vsel %vm796, %v2102, 0
  %v2128 = vsel %vm821, %v2078, 0
  %2130 = vmatprep.subr.bf16.mxu0 0
  %2131 = vmatpush1.bf16.msra.mxu0 0
  %2132 = vmatprep.subr.bf16.mxu0 0
  %2133 = vmatpush1.bf16.msra.mxu0 0
  %2134 = vmatprep.subr.bf16.mxu0 0
  %2135 = vmatpush1.bf16.msra.mxu0 0
  %2136 = vmatprep.subr.bf16.mxu0 0
  %2137 = vmatpush1.bf16.msra.mxu0 0
  %2138 = vmatprep.subr.bf16.mxu0 0
  %2139 = vmatpush1.bf16.msra.mxu0 0
  %2140 = vmatprep.subr.bf16.mxu0 0
  %2141 = vmatpush1.bf16.msra.mxu0 0
  %2142 = vmatprep.subr.bf16.mxu0 0
  %2143 = vmatpush1.bf16.msra.mxu0 0
  %2144 = vmatprep.subr.bf16.mxu0 0
  %2145 = vmatpush1.bf16.msra.mxu0 %v2128
  %2146 = vmatprep.subr.bf16.mxu0 0
  %2147 = vmatpush2.bf16.msra.mxu0 0
  %2148 = vmatprep.subr.bf16.mxu0 0
  %2149 = vmatpush2.bf16.msra.mxu0 0
  %2150 = vmatprep.subr.bf16.mxu0 0
  %2151 = vmatpush2.bf16.msra.mxu0 0
  %2152 = vmatprep.subr.bf16.mxu0 0
  %2153 = vmatpush2.bf16.msra.mxu0 0
  %2154 = vmatprep.subr.bf16.mxu0 0
  %2155 = vmatpush2.bf16.msra.mxu0 0
  %2156 = vmatprep.subr.bf16.mxu0 0
  %2157 = vmatpush2.bf16.msra.mxu0 0
  %2158 = vmatprep.subr.bf16.mxu0 0
  %2159 = vmatpush2.bf16.msra.mxu0 0
  %2160 = vmatprep.subr.bf16.mxu0 0
  %2161 = vmatpush2.bf16.msra.mxu0 0
  %2162 = vmatprep.mubr.bf16.mxu0 0
  %2163 = vmatmul.mubr.bf16.gmra.mxu0 %v2104
  %v2164 = vpop.f32.mrf.mxu0
  %v2165 = vadd.f32 0.0, %v2164
  %v2166 = vpop.f32.mrf.mxu0
  %v2167 = vpop.f32.mrf.mxu0
  %v2168 = vadd.f32 0.0, %v2167
  %v2169 = vpop.f32.mrf.mxu0
  %2170 = vmatprep.mubr.bf16.mxu0 0
  %2171 = vmatmul.mubr.bf16.gmra.mxu0 %v2107
  %v2172 = vpop.f32.mrf.mxu0
  %v2173 = vadd.f32 0.0, %v2172
  %v2174 = vpop.f32.mrf.mxu0
  %v2175 = vpop.f32.mrf.mxu0
  %v2176 = vadd.f32 0.0, %v2175
  %v2177 = vpop.f32.mrf.mxu0
  %2178 = vmatprep.mubr.bf16.mxu0 0
  %2179 = vmatmul.mubr.bf16.gmra.mxu0 %v2110
  %v2180 = vpop.f32.mrf.mxu0
  %v2181 = vadd.f32 0.0, %v2180
  %v2182 = vpop.f32.mrf.mxu0
  %v2183 = vpop.f32.mrf.mxu0
  %v2184 = vadd.f32 0.0, %v2183
  %v2185 = vpop.f32.mrf.mxu0
  %2186 = vmatprep.mubr.bf16.mxu0 0
  %2187 = vmatmul.mubr.bf16.gmra.mxu0 %v2113
  %v2188 = vpop.f32.mrf.mxu0
  %v2189 = vadd.f32 0.0, %v2188
  %v2190 = vpop.f32.mrf.mxu0
  %v2191 = vpop.f32.mrf.mxu0
  %v2192 = vadd.f32 0.0, %v2191
  %v2193 = vpop.f32.mrf.mxu0
  %2194 = vmatprep.mubr.bf16.mxu0 0
  %2195 = vmatmul.mubr.bf16.gmra.mxu0 %v2116
  %v2196 = vpop.f32.mrf.mxu0
  %v2197 = vadd.f32 0.0, %v2196
  %v2198 = vpop.f32.mrf.mxu0
  %v2199 = vpop.f32.mrf.mxu0
  %v2200 = vadd.f32 0.0, %v2199
  %v2201 = vpop.f32.mrf.mxu0
  %2202 = vmatprep.mubr.bf16.mxu0 0
  %2203 = vmatmul.mubr.bf16.gmra.mxu0 %v2119
  %v2204 = vpop.f32.mrf.mxu0
  %v2205 = vadd.f32 0.0, %v2204
  %v2206 = vpop.f32.mrf.mxu0
  %v2207 = vpop.f32.mrf.mxu0
  %v2208 = vadd.f32 0.0, %v2207
  %v2209 = vpop.f32.mrf.mxu0
  %2210 = vmatprep.mubr.bf16.mxu0 0
  %2211 = vmatmul.mubr.bf16.gmra.mxu0 %v2122
  %v2212 = vpop.f32.mrf.mxu0
  %v2213 = vadd.f32 0.0, %v2212
  %v2214 = vpop.f32.mrf.mxu0
  %v2215 = vpop.f32.mrf.mxu0
  %v2216 = vadd.f32 0.0, %v2215
  %v2217 = vpop.f32.mrf.mxu0
  %2218 = vmatprep.mubr.bf16.mxu0 0
  %2219 = vmatmul.mubr.bf16.gmra.mxu0 %v2125
  %v2220 = vpop.f32.mrf.mxu0
  %v2221 = vadd.f32 0.0, %v2220
  %v2222 = vpop.f32.mrf.mxu0
  %v2223 = vpop.f32.mrf.mxu0
  %v2224 = vadd.f32 0.0, %v2223
  %v2225 = vpop.f32.mrf.mxu0
  %2226 = vdwg.mxu0
  %v2227 = vadd.f32 %v1949, %v2165
  %v2228 = vadd.f32 %v1950, %v2168
  %v2229 = vadd.f32 %v1951, %v2173
  %v2230 = vadd.f32 %v1952, %v2176
  %v2231 = vadd.f32 %v1953, %v2181
  %v2232 = vadd.f32 %v1954, %v2184
  %v2233 = vadd.f32 %v1955, %v2189
  %v2234 = vadd.f32 %v1956, %v2192
  %v2235 = vadd.f32 %v1957, %v2197
  %v2236 = vadd.f32 %v1958, %v2200
  %v2237 = vadd.f32 %v1959, %v2205
  %v2238 = vadd.f32 %v1960, %v2208
  %v2239 = vadd.f32 %v1961, %v2213
  %v2240 = vadd.f32 %v1962, %v2216
  %v2241 = vadd.f32 %v1963, %v2221
  %v2242 = vadd.f32 %v1964, %v2224
  %v2243 = vld [vmem:[%s360 + $0x4] sm:$0x3]
  %v2244 = vld [vmem:[%s360 + $0xc] sm:$0x3]
  %v2245 = vld [vmem:[%s360 + $0x14] sm:$0x3]
  %v2246 = vld [vmem:[%s360 + $0x1c] sm:$0x3]
  %v2247 = vld [vmem:[%s360 + $0x24] sm:$0x3]
  %v2248 = vld [vmem:[%s360 + $0x2c] sm:$0x3]
  %v2249 = vld [vmem:[%s360 + $0x34] sm:$0x3]
  %v2250 = vld [vmem:[%s360 + $0x3c] sm:$0x3]
  %v2251 = vld [vmem:[%s360 + $0x54] sm:$0x3]
  %v2252 = vld [vmem:[%s360 + $0x5c] sm:$0x3]
  %v2253 = vld [vmem:[%s360 + $0x64] sm:$0x3]
  %v2254 = vld [vmem:[%s360 + $0x6c] sm:$0x3]
  %v2255 = vld [vmem:[%s360 + $0x74] sm:$0x3]
  %v2256 = vld [vmem:[%s360 + $0x7c] sm:$0x3]
  %v2257 = vld [vmem:[%s360 + $0x84] sm:$0x3]
  %v2258 = vld [vmem:[%s360 + $0x8c] sm:$0x3]
  %v2260 = vshrl.u32 %v1965, 16
  %v2262 = vrot.slane %v2260, 5
  %v2263 = vshll.u32 %v1965, 16
  %v2265 = vrot.slane %v2263, 6
  %v2266 = vor.u32 %v2262, %v2265
  %v2267 = vrot.slane %v2266, 4
  %v2269 = vshrl.u32 %v2243, 16
  %v2271 = vrot.slane %v2269, 5
  %v2272 = vshll.u32 %v2243, 16
  %v2274 = vrot.slane %v2272, 6
  %v2275 = vor.u32 %v2271, %v2274
  %v2276 = vsel %vm1088, %v2267, %v2275
  %v2278 = vshrl.u32 %v1966, 16
  %v2280 = vrot.slane %v2278, 5
  %v2281 = vshll.u32 %v1966, 16
  %v2283 = vrot.slane %v2281, 6
  %v2284 = vor.u32 %v2280, %v2283
  %v2285 = vrot.slane %v2284, 4
  %v2287 = vshrl.u32 %v2244, 16
  %v2289 = vrot.slane %v2287, 5
  %v2290 = vshll.u32 %v2244, 16
  %v2292 = vrot.slane %v2290, 6
  %v2293 = vor.u32 %v2289, %v2292
  %v2294 = vsel %vm1088, %v2285, %v2293
  %v2296 = vshrl.u32 %v1967, 16
  %v2298 = vrot.slane %v2296, 5
  %v2299 = vshll.u32 %v1967, 16
  %v2301 = vrot.slane %v2299, 6
  %v2302 = vor.u32 %v2298, %v2301
  %v2303 = vrot.slane %v2302, 4
  %v2305 = vshrl.u32 %v2245, 16
  %v2307 = vrot.slane %v2305, 5
  %v2308 = vshll.u32 %v2245, 16
  %v2310 = vrot.slane %v2308, 6
  %v2311 = vor.u32 %v2307, %v2310
  %v2312 = vsel %vm1088, %v2303, %v2311
  %v2314 = vshrl.u32 %v1968, 16
  %v2316 = vrot.slane %v2314, 5
  %v2317 = vshll.u32 %v1968, 16
  %v2319 = vrot.slane %v2317, 6
  %v2320 = vor.u32 %v2316, %v2319
  %v2321 = vrot.slane %v2320, 4
  %v2323 = vshrl.u32 %v2246, 16
  %v2325 = vrot.slane %v2323, 5
  %v2326 = vshll.u32 %v2246, 16
  %v2328 = vrot.slane %v2326, 6
  %v2329 = vor.u32 %v2325, %v2328
  %v2330 = vsel %vm1088, %v2321, %v2329
  %v2332 = vshrl.u32 %v1969, 16
  %v2334 = vrot.slane %v2332, 5
  %v2335 = vshll.u32 %v1969, 16
  %v2337 = vrot.slane %v2335, 6
  %v2338 = vor.u32 %v2334, %v2337
  %v2339 = vrot.slane %v2338, 4
  %v2341 = vshrl.u32 %v2247, 16
  %v2343 = vrot.slane %v2341, 5
  %v2344 = vshll.u32 %v2247, 16
  %v2346 = vrot.slane %v2344, 6
  %v2347 = vor.u32 %v2343, %v2346
  %v2348 = vsel %vm1088, %v2339, %v2347
  %v2350 = vshrl.u32 %v1970, 16
  %v2352 = vrot.slane %v2350, 5
  %v2353 = vshll.u32 %v1970, 16
  %v2355 = vrot.slane %v2353, 6
  %v2356 = vor.u32 %v2352, %v2355
  %v2357 = vrot.slane %v2356, 4
  %v2359 = vshrl.u32 %v2248, 16
  %v2361 = vrot.slane %v2359, 5
  %v2362 = vshll.u32 %v2248, 16
  %v2364 = vrot.slane %v2362, 6
  %v2365 = vor.u32 %v2361, %v2364
  %v2366 = vsel %vm1088, %v2357, %v2365
  %v2368 = vshrl.u32 %v1971, 16
  %v2370 = vrot.slane %v2368, 5
  %v2371 = vshll.u32 %v1971, 16
  %v2373 = vrot.slane %v2371, 6
  %v2374 = vor.u32 %v2370, %v2373
  %v2375 = vrot.slane %v2374, 4
  %v2377 = vshrl.u32 %v2249, 16
  %v2379 = vrot.slane %v2377, 5
  %v2380 = vshll.u32 %v2249, 16
  %v2382 = vrot.slane %v2380, 6
  %v2383 = vor.u32 %v2379, %v2382
  %v2384 = vsel %vm1088, %v2375, %v2383
  %v2386 = vshrl.u32 %v1972, 16
  %v2388 = vrot.slane %v2386, 5
  %v2389 = vshll.u32 %v1972, 16
  %v2391 = vrot.slane %v2389, 6
  %v2392 = vor.u32 %v2388, %v2391
  %v2393 = vrot.slane %v2392, 4
  %v2395 = vshrl.u32 %v2250, 16
  %v2397 = vrot.slane %v2395, 5
  %v2398 = vshll.u32 %v2250, 16
  %v2400 = vrot.slane %v2398, 6
  %v2401 = vor.u32 %v2397, %v2400
  %v2402 = vsel %vm1088, %v2393, %v2401
  %v2404 = vshrl.u32 %v1973, 16
  %v2406 = vrot.slane %v2404, 5
  %v2407 = vshll.u32 %v1973, 16
  %v2409 = vrot.slane %v2407, 6
  %v2410 = vor.u32 %v2406, %v2409
  %v2411 = vrot.slane %v2410, 4
  %v2413 = vshrl.u32 %v2251, 16
  %v2415 = vrot.slane %v2413, 5
  %v2416 = vshll.u32 %v2251, 16
  %v2418 = vrot.slane %v2416, 6
  %v2419 = vor.u32 %v2415, %v2418
  %v2420 = vsel %vm1088, %v2411, %v2419
  %v2422 = vshrl.u32 %v1974, 16
  %v2424 = vrot.slane %v2422, 5
  %v2425 = vshll.u32 %v1974, 16
  %v2427 = vrot.slane %v2425, 6
  %v2428 = vor.u32 %v2424, %v2427
  %v2429 = vrot.slane %v2428, 4
  %v2431 = vshrl.u32 %v2252, 16
  %v2433 = vrot.slane %v2431, 5
  %v2434 = vshll.u32 %v2252, 16
  %v2436 = vrot.slane %v2434, 6
  %v2437 = vor.u32 %v2433, %v2436
  %v2438 = vsel %vm1088, %v2429, %v2437
  %v2440 = vshrl.u32 %v1975, 16
  %v2442 = vrot.slane %v2440, 5
  %v2443 = vshll.u32 %v1975, 16
  %v2445 = vrot.slane %v2443, 6
  %v2446 = vor.u32 %v2442, %v2445
  %v2447 = vrot.slane %v2446, 4
  %v2449 = vshrl.u32 %v2253, 16
  %v2451 = vrot.slane %v2449, 5
  %v2452 = vshll.u32 %v2253, 16
  %v2454 = vrot.slane %v2452, 6
  %v2455 = vor.u32 %v2451, %v2454
  %v2456 = vsel %vm1088, %v2447, %v2455
  %v2458 = vshrl.u32 %v1976, 16
  %v2460 = vrot.slane %v2458, 5
  %v2461 = vshll.u32 %v1976, 16
  %v2463 = vrot.slane %v2461, 6
  %v2464 = vor.u32 %v2460, %v2463
  %v2465 = vrot.slane %v2464, 4
  %v2467 = vshrl.u32 %v2254, 16
  %v2469 = vrot.slane %v2467, 5
  %v2470 = vshll.u32 %v2254, 16
  %v2472 = vrot.slane %v2470, 6
  %v2473 = vor.u32 %v2469, %v2472
  %v2474 = vsel %vm1088, %v2465, %v2473
  %v2476 = vshrl.u32 %v1977, 16
  %v2478 = vrot.slane %v2476, 5
  %v2479 = vshll.u32 %v1977, 16
  %v2481 = vrot.slane %v2479, 6
  %v2482 = vor.u32 %v2478, %v2481
  %v2483 = vrot.slane %v2482, 4
  %v2485 = vshrl.u32 %v2255, 16
  %v2487 = vrot.slane %v2485, 5
  %v2488 = vshll.u32 %v2255, 16
  %v2490 = vrot.slane %v2488, 6
  %v2491 = vor.u32 %v2487, %v2490
  %v2492 = vsel %vm1088, %v2483, %v2491
  %v2494 = vshrl.u32 %v1978, 16
  %v2496 = vrot.slane %v2494, 5
  %v2497 = vshll.u32 %v1978, 16
  %v2499 = vrot.slane %v2497, 6
  %v2500 = vor.u32 %v2496, %v2499
  %v2501 = vrot.slane %v2500, 4
  %v2503 = vshrl.u32 %v2256, 16
  %v2505 = vrot.slane %v2503, 5
  %v2506 = vshll.u32 %v2256, 16
  %v2508 = vrot.slane %v2506, 6
  %v2509 = vor.u32 %v2505, %v2508
  %v2510 = vsel %vm1088, %v2501, %v2509
  %v2512 = vshrl.u32 %v1979, 16
  %v2514 = vrot.slane %v2512, 5
  %v2515 = vshll.u32 %v1979, 16
  %v2517 = vrot.slane %v2515, 6
  %v2518 = vor.u32 %v2514, %v2517
  %v2519 = vrot.slane %v2518, 4
  %v2521 = vshrl.u32 %v2257, 16
  %v2523 = vrot.slane %v2521, 5
  %v2524 = vshll.u32 %v2257, 16
  %v2526 = vrot.slane %v2524, 6
  %v2527 = vor.u32 %v2523, %v2526
  %v2528 = vsel %vm1088, %v2519, %v2527
  %v2530 = vshrl.u32 %v1980, 16
  %v2532 = vrot.slane %v2530, 5
  %v2533 = vshll.u32 %v1980, 16
  %v2535 = vrot.slane %v2533, 6
  %v2536 = vor.u32 %v2532, %v2535
  %v2537 = vrot.slane %v2536, 4
  %v2539 = vshrl.u32 %v2258, 16
  %v2541 = vrot.slane %v2539, 5
  %v2542 = vshll.u32 %v2258, 16
  %v2544 = vrot.slane %v2542, 6
  %v2545 = vor.u32 %v2541, %v2544
  %v2546 = vsel %vm1088, %v2537, %v2545
  %s2547 = scalar_lea.vmem %s1, 10
  %v2548 = vld [vmem:[%s2547] sm:$0x3]
  %v2549 = vunpack.c.l.b16 %v2276
  %v2550 = vunpack.c.l.b16 %v2294
  %v2551 = vunpack.c.l.b16 %v2312
  %v2552 = vunpack.c.l.b16 %v2330
  %v2553 = vunpack.c.l.b16 %v2348
  %v2554 = vunpack.c.l.b16 %v2366
  %v2555 = vunpack.c.l.b16 %v2384
  %v2556 = vunpack.c.l.b16 %v2402
  %v2557 = vunpack.c.l.b16 %v2420
  %v2558 = vunpack.c.l.b16 %v2438
  %v2559 = vunpack.c.l.b16 %v2456
  %v2560 = vunpack.c.l.b16 %v2474
  %v2561 = vunpack.c.l.b16 %v2492
  %v2562 = vunpack.c.l.b16 %v2510
  %v2563 = vunpack.c.l.b16 %v2528
  %v2564 = vunpack.c.l.b16 %v2546
  %v2565 = vpack.c.b16 %v2550, %v2549
  %v2566 = vpack.c.b16 %v2552, %v2551
  %v2567 = vpack.c.b16 %v2554, %v2553
  %v2568 = vpack.c.b16 %v2556, %v2555
  %v2569 = vpack.c.b16 %v2558, %v2557
  %v2570 = vpack.c.b16 %v2560, %v2559
  %v2571 = vpack.c.b16 %v2562, %v2561
  %v2572 = vpack.c.b16 %v2564, %v2563
  %v2574 = vsel %vm796, %v2565, 0
  %v2577 = vsel %vm796, %v2566, 0
  %v2580 = vsel %vm796, %v2567, 0
  %v2583 = vsel %vm796, %v2568, 0
  %v2586 = vsel %vm796, %v2569, 0
  %v2589 = vsel %vm796, %v2570, 0
  %v2592 = vsel %vm796, %v2571, 0
  %v2595 = vsel %vm796, %v2572, 0
  %v2598 = vsel %vm821, %v2548, 0
  %2600 = vmatprep.subr.bf16.mxu0 0
  %2601 = vmatpush1.bf16.msra.mxu0 0
  %2602 = vmatprep.subr.bf16.mxu0 0
  %2603 = vmatpush1.bf16.msra.mxu0 0
  %2604 = vmatprep.subr.bf16.mxu0 0
  %2605 = vmatpush1.bf16.msra.mxu0 0
  %2606 = vmatprep.subr.bf16.mxu0 0
  %2607 = vmatpush1.bf16.msra.mxu0 0
  %2608 = vmatprep.subr.bf16.mxu0 0
  %2609 = vmatpush1.bf16.msra.mxu0 0
  %2610 = vmatprep.subr.bf16.mxu0 0
  %2611 = vmatpush1.bf16.msra.mxu0 0
  %2612 = vmatprep.subr.bf16.mxu0 0
  %2613 = vmatpush1.bf16.msra.mxu0 0
  %2614 = vmatprep.subr.bf16.mxu0 0
  %2615 = vmatpush1.bf16.msra.mxu0 %v2598
  %2616 = vmatprep.subr.bf16.mxu0 0
  %2617 = vmatpush2.bf16.msra.mxu0 0
  %2618 = vmatprep.subr.bf16.mxu0 0
  %2619 = vmatpush2.bf16.msra.mxu0 0
  %2620 = vmatprep.subr.bf16.mxu0 0
  %2621 = vmatpush2.bf16.msra.mxu0 0
  %2622 = vmatprep.subr.bf16.mxu0 0
  %2623 = vmatpush2.bf16.msra.mxu0 0
  %2624 = vmatprep.subr.bf16.mxu0 0
  %2625 = vmatpush2.bf16.msra.mxu0 0
  %2626 = vmatprep.subr.bf16.mxu0 0
  %2627 = vmatpush2.bf16.msra.mxu0 0
  %2628 = vmatprep.subr.bf16.mxu0 0
  %2629 = vmatpush2.bf16.msra.mxu0 0
  %2630 = vmatprep.subr.bf16.mxu0 0
  %2631 = vmatpush2.bf16.msra.mxu0 0
  %2632 = vmatprep.mubr.bf16.mxu0 0
  %2633 = vmatmul.mubr.bf16.gmra.mxu0 %v2574
  %v2634 = vpop.f32.mrf.mxu0
  %v2635 = vadd.f32 0.0, %v2634
  %v2636 = vpop.f32.mrf.mxu0
  %v2637 = vpop.f32.mrf.mxu0
  %v2638 = vadd.f32 0.0, %v2637
  %v2639 = vpop.f32.mrf.mxu0
  %2640 = vmatprep.mubr.bf16.mxu0 0
  %2641 = vmatmul.mubr.bf16.gmra.mxu0 %v2577
  %v2642 = vpop.f32.mrf.mxu0
  %v2643 = vadd.f32 0.0, %v2642
  %v2644 = vpop.f32.mrf.mxu0
  %v2645 = vpop.f32.mrf.mxu0
  %v2646 = vadd.f32 0.0, %v2645
  %v2647 = vpop.f32.mrf.mxu0
  %2648 = vmatprep.mubr.bf16.mxu0 0
  %2649 = vmatmul.mubr.bf16.gmra.mxu0 %v2580
  %v2650 = vpop.f32.mrf.mxu0
  %v2651 = vadd.f32 0.0, %v2650
  %v2652 = vpop.f32.mrf.mxu0
  %v2653 = vpop.f32.mrf.mxu0
  %v2654 = vadd.f32 0.0, %v2653
  %v2655 = vpop.f32.mrf.mxu0
  %2656 = vmatprep.mubr.bf16.mxu0 0
  %2657 = vmatmul.mubr.bf16.gmra.mxu0 %v2583
  %v2658 = vpop.f32.mrf.mxu0
  %v2659 = vadd.f32 0.0, %v2658
  %v2660 = vpop.f32.mrf.mxu0
  %v2661 = vpop.f32.mrf.mxu0
  %v2662 = vadd.f32 0.0, %v2661
  %v2663 = vpop.f32.mrf.mxu0
  %2664 = vmatprep.mubr.bf16.mxu0 0
  %2665 = vmatmul.mubr.bf16.gmra.mxu0 %v2586
  %v2666 = vpop.f32.mrf.mxu0
  %v2667 = vadd.f32 0.0, %v2666
  %v2668 = vpop.f32.mrf.mxu0
  %v2669 = vpop.f32.mrf.mxu0
  %v2670 = vadd.f32 0.0, %v2669
  %v2671 = vpop.f32.mrf.mxu0
  %2672 = vmatprep.mubr.bf16.mxu0 0
  %2673 = vmatmul.mubr.bf16.gmra.mxu0 %v2589
  %v2674 = vpop.f32.mrf.mxu0
  %v2675 = vadd.f32 0.0, %v2674
  %v2676 = vpop.f32.mrf.mxu0
  %v2677 = vpop.f32.mrf.mxu0
  %v2678 = vadd.f32 0.0, %v2677
  %v2679 = vpop.f32.mrf.mxu0
  %2680 = vmatprep.mubr.bf16.mxu0 0
  %2681 = vmatmul.mubr.bf16.gmra.mxu0 %v2592
  %v2682 = vpop.f32.mrf.mxu0
  %v2683 = vadd.f32 0.0, %v2682
  %v2684 = vpop.f32.mrf.mxu0
  %v2685 = vpop.f32.mrf.mxu0
  %v2686 = vadd.f32 0.0, %v2685
  %v2687 = vpop.f32.mrf.mxu0
  %2688 = vmatprep.mubr.bf16.mxu0 0
  %2689 = vmatmul.mubr.bf16.gmra.mxu0 %v2595
  %v2690 = vpop.f32.mrf.mxu0
  %v2691 = vadd.f32 0.0, %v2690
  %v2692 = vpop.f32.mrf.mxu0
  %v2693 = vpop.f32.mrf.mxu0
  %v2694 = vadd.f32 0.0, %v2693
  %v2695 = vpop.f32.mrf.mxu0
  %2696 = vdwg.mxu0
  %v2697 = vadd.f32 %v2227, %v2635
  %v2698 = vadd.f32 %v2228, %v2638
  %v2699 = vadd.f32 %v2229, %v2643
  %v2700 = vadd.f32 %v2230, %v2646
  %v2701 = vadd.f32 %v2231, %v2651
  %v2702 = vadd.f32 %v2232, %v2654
  %v2703 = vadd.f32 %v2233, %v2659
  %v2704 = vadd.f32 %v2234, %v2662
  %v2705 = vadd.f32 %v2235, %v2667
  %v2706 = vadd.f32 %v2236, %v2670
  %v2707 = vadd.f32 %v2237, %v2675
  %v2708 = vadd.f32 %v2238, %v2678
  %v2709 = vadd.f32 %v2239, %v2683
  %v2710 = vadd.f32 %v2240, %v2686
  %v2711 = vadd.f32 %v2241, %v2691
  %v2712 = vadd.f32 %v2242, %v2694
  %s2713 = scalar_lea.vmem [#allocation2], 16
  %v2714 = vld [vmem:[%s2713] sm:$0xf]
  %v2715 = vld [vmem:[%s2713 + $0x4] sm:$0x1]
  %v2716 = vld [vmem:[%s2713 + $0x8] sm:$0xf]
  %v2717 = vld [vmem:[%s2713 + $0xc] sm:$0x1]
  %v2718 = vld [vmem:[%s2713 + $0x10] sm:$0xf]
  %v2719 = vld [vmem:[%s2713 + $0x14] sm:$0x1]
  %v2720 = vld [vmem:[%s2713 + $0x18] sm:$0xf]
  %v2721 = vld [vmem:[%s2713 + $0x1c] sm:$0x1]
  %v2722 = vld [vmem:[%s2713 + $0x20] sm:$0xf]
  %v2723 = vld [vmem:[%s2713 + $0x24] sm:$0x1]
  %v2724 = vld [vmem:[%s2713 + $0x28] sm:$0xf]
  %v2725 = vld [vmem:[%s2713 + $0x2c] sm:$0x1]
  %v2726 = vld [vmem:[%s2713 + $0x30] sm:$0xf]
  %v2727 = vld [vmem:[%s2713 + $0x34] sm:$0x1]
  %v2728 = vld [vmem:[%s2713 + $0x38] sm:$0xf]
  %v2729 = vld [vmem:[%s2713 + $0x3c] sm:$0x1]
  %v2730 = vld [vmem:[%s2713 + $0x50] sm:$0xf]
  %v2731 = vld [vmem:[%s2713 + $0x54] sm:$0x1]
  %v2732 = vld [vmem:[%s2713 + $0x58] sm:$0xf]
  %v2733 = vld [vmem:[%s2713 + $0x5c] sm:$0x1]
  %v2734 = vld [vmem:[%s2713 + $0x60] sm:$0xf]
  %v2735 = vld [vmem:[%s2713 + $0x64] sm:$0x1]
  %v2736 = vld [vmem:[%s2713 + $0x68] sm:$0xf]
  %v2737 = vld [vmem:[%s2713 + $0x6c] sm:$0x1]
  %v2738 = vld [vmem:[%s2713 + $0x70] sm:$0xf]
  %v2739 = vld [vmem:[%s2713 + $0x74] sm:$0x1]
  %v2740 = vld [vmem:[%s2713 + $0x78] sm:$0xf]
  %v2741 = vld [vmem:[%s2713 + $0x7c] sm:$0x1]
  %v2742 = vld [vmem:[%s2713 + $0x80] sm:$0xf]
  %v2743 = vld [vmem:[%s2713 + $0x84] sm:$0x1]
  %v2744 = vld [vmem:[%s2713 + $0x88] sm:$0xf]
  %v2745 = vld [vmem:[%s2713 + $0x8c] sm:$0x1]
  %v2747 = vshrl.u32 %v2714, 16
  %v2749 = vrot.slane %v2747, 4
  %v2750 = vshll.u32 %v2714, 16
  %v2752 = vrot.slane %v2750, 5
  %v2753 = vor.u32 %v2749, %v2752
  %v2754 = vrot.slane %v2753, 4
  %v2756 = vshll.u32 %v2715, 16
  %v2758 = vrot.slane %v2756, 5
  %v2759 = vsel %vm429, %v2754, %v2758
  %v2761 = vshrl.u32 %v2716, 16
  %v2763 = vrot.slane %v2761, 4
  %v2764 = vshll.u32 %v2716, 16
  %v2766 = vrot.slane %v2764, 5
  %v2767 = vor.u32 %v2763, %v2766
  %v2768 = vrot.slane %v2767, 4
  %v2770 = vshll.u32 %v2717, 16
  %v2772 = vrot.slane %v2770, 5
  %v2773 = vsel %vm429, %v2768, %v2772
  %v2775 = vshrl.u32 %v2718, 16
  %v2777 = vrot.slane %v2775, 4
  %v2778 = vshll.u32 %v2718, 16
  %v2780 = vrot.slane %v2778, 5
  %v2781 = vor.u32 %v2777, %v2780
  %v2782 = vrot.slane %v2781, 4
  %v2784 = vshll.u32 %v2719, 16
  %v2786 = vrot.slane %v2784, 5
  %v2787 = vsel %vm429, %v2782, %v2786
  %v2789 = vshrl.u32 %v2720, 16
  %v2791 = vrot.slane %v2789, 4
  %v2792 = vshll.u32 %v2720, 16
  %v2794 = vrot.slane %v2792, 5
  %v2795 = vor.u32 %v2791, %v2794
  %v2796 = vrot.slane %v2795, 4
  %v2798 = vshll.u32 %v2721, 16
  %v2800 = vrot.slane %v2798, 5
  %v2801 = vsel %vm429, %v2796, %v2800
  %v2803 = vshrl.u32 %v2722, 16
  %v2805 = vrot.slane %v2803, 4
  %v2806 = vshll.u32 %v2722, 16
  %v2808 = vrot.slane %v2806, 5
  %v2809 = vor.u32 %v2805, %v2808
  %v2810 = vrot.slane %v2809, 4
  %v2812 = vshll.u32 %v2723, 16
  %v2814 = vrot.slane %v2812, 5
  %v2815 = vsel %vm429, %v2810, %v2814
  %v2817 = vshrl.u32 %v2724, 16
  %v2819 = vrot.slane %v2817, 4
  %v2820 = vshll.u32 %v2724, 16
  %v2822 = vrot.slane %v2820, 5
  %v2823 = vor.u32 %v2819, %v2822
  %v2824 = vrot.slane %v2823, 4
  %v2826 = vshll.u32 %v2725, 16
  %v2828 = vrot.slane %v2826, 5
  %v2829 = vsel %vm429, %v2824, %v2828
  %v2831 = vshrl.u32 %v2726, 16
  %v2833 = vrot.slane %v2831, 4
  %v2834 = vshll.u32 %v2726, 16
  %v2836 = vrot.slane %v2834, 5
  %v2837 = vor.u32 %v2833, %v2836
  %v2838 = vrot.slane %v2837, 4
  %v2840 = vshll.u32 %v2727, 16
  %v2842 = vrot.slane %v2840, 5
  %v2843 = vsel %vm429, %v2838, %v2842
  %v2845 = vshrl.u32 %v2728, 16
  %v2847 = vrot.slane %v2845, 4
  %v2848 = vshll.u32 %v2728, 16
  %v2850 = vrot.slane %v2848, 5
  %v2851 = vor.u32 %v2847, %v2850
  %v2852 = vrot.slane %v2851, 4
  %v2854 = vshll.u32 %v2729, 16
  %v2856 = vrot.slane %v2854, 5
  %v2857 = vsel %vm429, %v2852, %v2856
  %v2859 = vshrl.u32 %v2730, 16
  %v2861 = vrot.slane %v2859, 4
  %v2862 = vshll.u32 %v2730, 16
  %v2864 = vrot.slane %v2862, 5
  %v2865 = vor.u32 %v2861, %v2864
  %v2866 = vrot.slane %v2865, 4
  %v2868 = vshll.u32 %v2731, 16
  %v2870 = vrot.slane %v2868, 5
  %v2871 = vsel %vm429, %v2866, %v2870
  %v2873 = vshrl.u32 %v2732, 16
  %v2875 = vrot.slane %v2873, 4
  %v2876 = vshll.u32 %v2732, 16
  %v2878 = vrot.slane %v2876, 5
  %v2879 = vor.u32 %v2875, %v2878
  %v2880 = vrot.slane %v2879, 4
  %v2882 = vshll.u32 %v2733, 16
  %v2884 = vrot.slane %v2882, 5
  %v2885 = vsel %vm429, %v2880, %v2884
  %v2887 = vshrl.u32 %v2734, 16
  %v2889 = vrot.slane %v2887, 4
  %v2890 = vshll.u32 %v2734, 16
  %v2892 = vrot.slane %v2890, 5
  %v2893 = vor.u32 %v2889, %v2892
  %v2894 = vrot.slane %v2893, 4
  %v2896 = vshll.u32 %v2735, 16
  %v2898 = vrot.slane %v2896, 5
  %v2899 = vsel %vm429, %v2894, %v2898
  %v2901 = vshrl.u32 %v2736, 16
  %v2903 = vrot.slane %v2901, 4
  %v2904 = vshll.u32 %v2736, 16
  %v2906 = vrot.slane %v2904, 5
  %v2907 = vor.u32 %v2903, %v2906
  %v2908 = vrot.slane %v2907, 4
  %v2910 = vshll.u32 %v2737, 16
  %v2912 = vrot.slane %v2910, 5
  %v2913 = vsel %vm429, %v2908, %v2912
  %v2915 = vshrl.u32 %v2738, 16
  %v2917 = vrot.slane %v2915, 4
  %v2918 = vshll.u32 %v2738, 16
  %v2920 = vrot.slane %v2918, 5
  %v2921 = vor.u32 %v2917, %v2920
  %v2922 = vrot.slane %v2921, 4
  %v2924 = vshll.u32 %v2739, 16
  %v2926 = vrot.slane %v2924, 5
  %v2927 = vsel %vm429, %v2922, %v2926
  %v2929 = vshrl.u32 %v2740, 16
  %v2931 = vrot.slane %v2929, 4
  %v2932 = vshll.u32 %v2740, 16
  %v2934 = vrot.slane %v2932, 5
  %v2935 = vor.u32 %v2931, %v2934
  %v2936 = vrot.slane %v2935, 4
  %v2938 = vshll.u32 %v2741, 16
  %v2940 = vrot.slane %v2938, 5
  %v2941 = vsel %vm429, %v2936, %v2940
  %v2943 = vshrl.u32 %v2742, 16
  %v2945 = vrot.slane %v2943, 4
  %v2946 = vshll.u32 %v2742, 16
  %v2948 = vrot.slane %v2946, 5
  %v2949 = vor.u32 %v2945, %v2948
  %v2950 = vrot.slane %v2949, 4
  %v2952 = vshll.u32 %v2743, 16
  %v2954 = vrot.slane %v2952, 5
  %v2955 = vsel %vm429, %v2950, %v2954
  %v2957 = vshrl.u32 %v2744, 16
  %v2959 = vrot.slane %v2957, 4
  %v2960 = vshll.u32 %v2744, 16
  %v2962 = vrot.slane %v2960, 5
  %v2963 = vor.u32 %v2959, %v2962
  %v2964 = vrot.slane %v2963, 4
  %v2966 = vshll.u32 %v2745, 16
  %v2968 = vrot.slane %v2966, 5
  %v2969 = vsel %vm429, %v2964, %v2968
  %s2970 = scalar_lea.vmem %s1, 12
  %v2971 = vld [vmem:[%s2970] sm:$0x3]
  %v2972 = vunpack.c.l.b16 %v2759
  %v2973 = vunpack.c.l.b16 %v2773
  %v2974 = vunpack.c.l.b16 %v2787
  %v2975 = vunpack.c.l.b16 %v2801
  %v2976 = vunpack.c.l.b16 %v2815
  %v2977 = vunpack.c.l.b16 %v2829
  %v2978 = vunpack.c.l.b16 %v2843
  %v2979 = vunpack.c.l.b16 %v2857
  %v2980 = vunpack.c.l.b16 %v2871
  %v2981 = vunpack.c.l.b16 %v2885
  %v2982 = vunpack.c.l.b16 %v2899
  %v2983 = vunpack.c.l.b16 %v2913
  %v2984 = vunpack.c.l.b16 %v2927
  %v2985 = vunpack.c.l.b16 %v2941
  %v2986 = vunpack.c.l.b16 %v2955
  %v2987 = vunpack.c.l.b16 %v2969
  %v2988 = vpack.c.b16 %v2973, %v2972
  %v2989 = vpack.c.b16 %v2975, %v2974
  %v2990 = vpack.c.b16 %v2977, %v2976
  %v2991 = vpack.c.b16 %v2979, %v2978
  %v2992 = vpack.c.b16 %v2981, %v2980
  %v2993 = vpack.c.b16 %v2983, %v2982
  %v2994 = vpack.c.b16 %v2985, %v2984
  %v2995 = vpack.c.b16 %v2987, %v2986
  %v2997 = vsel %vm796, %v2988, 0
  %v3000 = vsel %vm796, %v2989, 0
  %v3003 = vsel %vm796, %v2990, 0
  %v3006 = vsel %vm796, %v2991, 0
  %v3009 = vsel %vm796, %v2992, 0
  %v3012 = vsel %vm796, %v2993, 0
  %v3015 = vsel %vm796, %v2994, 0
  %v3018 = vsel %vm796, %v2995, 0
  %v3021 = vsel %vm821, %v2971, 0
  %3023 = vmatprep.subr.bf16.mxu0 0
  %3024 = vmatpush1.bf16.msra.mxu0 0
  %3025 = vmatprep.subr.bf16.mxu0 0
  %3026 = vmatpush1.bf16.msra.mxu0 0
  %3027 = vmatprep.subr.bf16.mxu0 0
  %3028 = vmatpush1.bf16.msra.mxu0 0
  %3029 = vmatprep.subr.bf16.mxu0 0
  %3030 = vmatpush1.bf16.msra.mxu0 0
  %3031 = vmatprep.subr.bf16.mxu0 0
  %3032 = vmatpush1.bf16.msra.mxu0 0
  %3033 = vmatprep.subr.bf16.mxu0 0
  %3034 = vmatpush1.bf16.msra.mxu0 0
  %3035 = vmatprep.subr.bf16.mxu0 0
  %3036 = vmatpush1.bf16.msra.mxu0 0
  %3037 = vmatprep.subr.bf16.mxu0 0
  %3038 = vmatpush1.bf16.msra.mxu0 %v3021
  %3039 = vmatprep.subr.bf16.mxu0 0
  %3040 = vmatpush2.bf16.msra.mxu0 0
  %3041 = vmatprep.subr.bf16.mxu0 0
  %3042 = vmatpush2.bf16.msra.mxu0 0
  %3043 = vmatprep.subr.bf16.mxu0 0
  %3044 = vmatpush2.bf16.msra.mxu0 0
  %3045 = vmatprep.subr.bf16.mxu0 0
  %3046 = vmatpush2.bf16.msra.mxu0 0
  %3047 = vmatprep.subr.bf16.mxu0 0
  %3048 = vmatpush2.bf16.msra.mxu0 0
  %3049 = vmatprep.subr.bf16.mxu0 0
  %3050 = vmatpush2.bf16.msra.mxu0 0
  %3051 = vmatprep.subr.bf16.mxu0 0
  %3052 = vmatpush2.bf16.msra.mxu0 0
  %3053 = vmatprep.subr.bf16.mxu0 0
  %3054 = vmatpush2.bf16.msra.mxu0 0
  %3055 = vmatprep.mubr.bf16.mxu0 0
  %3056 = vmatmul.mubr.bf16.gmra.mxu0 %v2997
  %v3057 = vpop.f32.mrf.mxu0
  %v3058 = vadd.f32 0.0, %v3057
  %v3059 = vpop.f32.mrf.mxu0
  %v3060 = vpop.f32.mrf.mxu0
  %v3061 = vadd.f32 0.0, %v3060
  %v3062 = vpop.f32.mrf.mxu0
  %3063 = vmatprep.mubr.bf16.mxu0 0
  %3064 = vmatmul.mubr.bf16.gmra.mxu0 %v3000
  %v3065 = vpop.f32.mrf.mxu0
  %v3066 = vadd.f32 0.0, %v3065
  %v3067 = vpop.f32.mrf.mxu0
  %v3068 = vpop.f32.mrf.mxu0
  %v3069 = vadd.f32 0.0, %v3068
  %v3070 = vpop.f32.mrf.mxu0
  %3071 = vmatprep.mubr.bf16.mxu0 0
  %3072 = vmatmul.mubr.bf16.gmra.mxu0 %v3003
  %v3073 = vpop.f32.mrf.mxu0
  %v3074 = vadd.f32 0.0, %v3073
  %v3075 = vpop.f32.mrf.mxu0
  %v3076 = vpop.f32.mrf.mxu0
  %v3077 = vadd.f32 0.0, %v3076
  %v3078 = vpop.f32.mrf.mxu0
  %3079 = vmatprep.mubr.bf16.mxu0 0
  %3080 = vmatmul.mubr.bf16.gmra.mxu0 %v3006
  %v3081 = vpop.f32.mrf.mxu0
  %v3082 = vadd.f32 0.0, %v3081
  %v3083 = vpop.f32.mrf.mxu0
  %v3084 = vpop.f32.mrf.mxu0
  %v3085 = vadd.f32 0.0, %v3084
  %v3086 = vpop.f32.mrf.mxu0
  %3087 = vmatprep.mubr.bf16.mxu0 0
  %3088 = vmatmul.mubr.bf16.gmra.mxu0 %v3009
  %v3089 = vpop.f32.mrf.mxu0
  %v3090 = vadd.f32 0.0, %v3089
  %v3091 = vpop.f32.mrf.mxu0
  %v3092 = vpop.f32.mrf.mxu0
  %v3093 = vadd.f32 0.0, %v3092
  %v3094 = vpop.f32.mrf.mxu0
  %3095 = vmatprep.mubr.bf16.mxu0 0
  %3096 = vmatmul.mubr.bf16.gmra.mxu0 %v3012
  %v3097 = vpop.f32.mrf.mxu0
  %v3098 = vadd.f32 0.0, %v3097
  %v3099 = vpop.f32.mrf.mxu0
  %v3100 = vpop.f32.mrf.mxu0
  %v3101 = vadd.f32 0.0, %v3100
  %v3102 = vpop.f32.mrf.mxu0
  %3103 = vmatprep.mubr.bf16.mxu0 0
  %3104 = vmatmul.mubr.bf16.gmra.mxu0 %v3015
  %v3105 = vpop.f32.mrf.mxu0
  %v3106 = vadd.f32 0.0, %v3105
  %v3107 = vpop.f32.mrf.mxu0
  %v3108 = vpop.f32.mrf.mxu0
  %v3109 = vadd.f32 0.0, %v3108
  %v3110 = vpop.f32.mrf.mxu0
  %3111 = vmatprep.mubr.bf16.mxu0 0
  %3112 = vmatmul.mubr.bf16.gmra.mxu0 %v3018
  %v3113 = vpop.f32.mrf.mxu0
  %v3114 = vadd.f32 0.0, %v3113
  %v3115 = vpop.f32.mrf.mxu0
  %v3116 = vpop.f32.mrf.mxu0
  %v3117 = vadd.f32 0.0, %v3116
  %v3118 = vpop.f32.mrf.mxu0
  %3119 = vdwg.mxu0
  %v3120 = vadd.f32 %v2697, %v3058
  %v3121 = vadd.f32 %v2698, %v3061
  %v3122 = vadd.f32 %v2699, %v3066
  %v3123 = vadd.f32 %v2700, %v3069
  %v3124 = vadd.f32 %v2701, %v3074
  %v3125 = vadd.f32 %v2702, %v3077
  %v3126 = vadd.f32 %v2703, %v3082
  %v3127 = vadd.f32 %v2704, %v3085
  %v3128 = vadd.f32 %v2705, %v3090
  %v3129 = vadd.f32 %v2706, %v3093
  %v3130 = vadd.f32 %v2707, %v3098
  %v3131 = vadd.f32 %v2708, %v3101
  %v3132 = vadd.f32 %v2709, %v3106
  %v3133 = vadd.f32 %v2710, %v3109
  %v3134 = vadd.f32 %v2711, %v3114
  %v3135 = vadd.f32 %v2712, %v3117
  %v3136 = vld [vmem:[%s2713] sm:$0xe]
  %v3137 = vld [vmem:[%s2713 + $0x8] sm:$0xe]
  %v3138 = vld [vmem:[%s2713 + $0x10] sm:$0xe]
  %v3139 = vld [vmem:[%s2713 + $0x18] sm:$0xe]
  %v3140 = vld [vmem:[%s2713 + $0x20] sm:$0xe]
  %v3141 = vld [vmem:[%s2713 + $0x28] sm:$0xe]
  %v3142 = vld [vmem:[%s2713 + $0x30] sm:$0xe]
  %v3143 = vld [vmem:[%s2713 + $0x38] sm:$0xe]
  %v3144 = vld [vmem:[%s2713 + $0x50] sm:$0xe]
  %v3145 = vld [vmem:[%s2713 + $0x58] sm:$0xe]
  %v3146 = vld [vmem:[%s2713 + $0x60] sm:$0xe]
  %v3147 = vld [vmem:[%s2713 + $0x68] sm:$0xe]
  %v3148 = vld [vmem:[%s2713 + $0x70] sm:$0xe]
  %v3149 = vld [vmem:[%s2713 + $0x78] sm:$0xe]
  %v3150 = vld [vmem:[%s2713 + $0x80] sm:$0xe]
  %v3151 = vld [vmem:[%s2713 + $0x88] sm:$0xe]
  %v3184 = vrot.slane %v3136, 5
  %v3185 = vrot.slane %v3184, 4
  %v3186 = vrot.slane %v2715, 5
  %v3187 = vsel %vm705, %v3185, %v3186
  %v3188 = vrot.slane %v3137, 5
  %v3189 = vrot.slane %v3188, 4
  %v3190 = vrot.slane %v2717, 5
  %v3191 = vsel %vm705, %v3189, %v3190
  %v3192 = vrot.slane %v3138, 5
  %v3193 = vrot.slane %v3192, 4
  %v3194 = vrot.slane %v2719, 5
  %v3195 = vsel %vm705, %v3193, %v3194
  %v3196 = vrot.slane %v3139, 5
  %v3197 = vrot.slane %v3196, 4
  %v3198 = vrot.slane %v2721, 5
  %v3199 = vsel %vm705, %v3197, %v3198
  %v3200 = vrot.slane %v3140, 5
  %v3201 = vrot.slane %v3200, 4
  %v3202 = vrot.slane %v2723, 5
  %v3203 = vsel %vm705, %v3201, %v3202
  %v3204 = vrot.slane %v3141, 5
  %v3205 = vrot.slane %v3204, 4
  %v3206 = vrot.slane %v2725, 5
  %v3207 = vsel %vm705, %v3205, %v3206
  %v3208 = vrot.slane %v3142, 5
  %v3209 = vrot.slane %v3208, 4
  %v3210 = vrot.slane %v2727, 5
  %v3211 = vsel %vm705, %v3209, %v3210
  %v3212 = vrot.slane %v3143, 5
  %v3213 = vrot.slane %v3212, 4
  %v3214 = vrot.slane %v2729, 5
  %v3215 = vsel %vm705, %v3213, %v3214
  %v3216 = vrot.slane %v3144, 5
  %v3217 = vrot.slane %v3216, 4
  %v3218 = vrot.slane %v2731, 5
  %v3219 = vsel %vm705, %v3217, %v3218
  %v3220 = vrot.slane %v3145, 5
  %v3221 = vrot.slane %v3220, 4
  %v3222 = vrot.slane %v2733, 5
  %v3223 = vsel %vm705, %v3221, %v3222
  %v3224 = vrot.slane %v3146, 5
  %v3225 = vrot.slane %v3224, 4
  %v3226 = vrot.slane %v2735, 5
  %v3227 = vsel %vm705, %v3225, %v3226
  %v3228 = vrot.slane %v3147, 5
  %v3229 = vrot.slane %v3228, 4
  %v3230 = vrot.slane %v2737, 5
  %v3231 = vsel %vm705, %v3229, %v3230
  %v3232 = vrot.slane %v3148, 5
  %v3233 = vrot.slane %v3232, 4
  %v3234 = vrot.slane %v2739, 5
  %v3235 = vsel %vm705, %v3233, %v3234
  %v3236 = vrot.slane %v3149, 5
  %v3237 = vrot.slane %v3236, 4
  %v3238 = vrot.slane %v2741, 5
  %v3239 = vsel %vm705, %v3237, %v3238
  %v3240 = vrot.slane %v3150, 5
  %v3241 = vrot.slane %v3240, 4
  %v3242 = vrot.slane %v2743, 5
  %v3243 = vsel %vm705, %v3241, %v3242
  %v3244 = vrot.slane %v3151, 5
  %v3245 = vrot.slane %v3244, 4
  %v3246 = vrot.slane %v2745, 5
  %v3247 = vsel %vm705, %v3245, %v3246
  %s3248 = scalar_lea.vmem %s1, 14
  %v3249 = vld [vmem:[%s3248] sm:$0x3]
  %v3250 = vunpack.c.l.b16 %v3187
  %v3251 = vunpack.c.l.b16 %v3191
  %v3252 = vunpack.c.l.b16 %v3195
  %v3253 = vunpack.c.l.b16 %v3199
  %v3254 = vunpack.c.l.b16 %v3203
  %v3255 = vunpack.c.l.b16 %v3207
  %v3256 = vunpack.c.l.b16 %v3211
  %v3257 = vunpack.c.l.b16 %v3215
  %v3258 = vunpack.c.l.b16 %v3219
  %v3259 = vunpack.c.l.b16 %v3223
  %v3260 = vunpack.c.l.b16 %v3227
  %v3261 = vunpack.c.l.b16 %v3231
  %v3262 = vunpack.c.l.b16 %v3235
  %v3263 = vunpack.c.l.b16 %v3239
  %v3264 = vunpack.c.l.b16 %v3243
  %v3265 = vunpack.c.l.b16 %v3247
  %v3266 = vpack.c.b16 %v3251, %v3250
  %v3267 = vpack.c.b16 %v3253, %v3252
  %v3268 = vpack.c.b16 %v3255, %v3254
  %v3269 = vpack.c.b16 %v3257, %v3256
  %v3270 = vpack.c.b16 %v3259, %v3258
  %v3271 = vpack.c.b16 %v3261, %v3260
  %v3272 = vpack.c.b16 %v3263, %v3262
  %v3273 = vpack.c.b16 %v3265, %v3264
  %v3275 = vsel %vm796, %v3266, 0
  %v3278 = vsel %vm796, %v3267, 0
  %v3281 = vsel %vm796, %v3268, 0
  %v3284 = vsel %vm796, %v3269, 0
  %v3287 = vsel %vm796, %v3270, 0
  %v3290 = vsel %vm796, %v3271, 0
  %v3293 = vsel %vm796, %v3272, 0
  %v3296 = vsel %vm796, %v3273, 0
  %v3299 = vsel %vm821, %v3249, 0
  %3301 = vmatprep.subr.bf16.mxu0 0
  %3302 = vmatpush1.bf16.msra.mxu0 0
  %3303 = vmatprep.subr.bf16.mxu0 0
  %3304 = vmatpush1.bf16.msra.mxu0 0
  %3305 = vmatprep.subr.bf16.mxu0 0
  %3306 = vmatpush1.bf16.msra.mxu0 0
  %3307 = vmatprep.subr.bf16.mxu0 0
  %3308 = vmatpush1.bf16.msra.mxu0 0
  %3309 = vmatprep.subr.bf16.mxu0 0
  %3310 = vmatpush1.bf16.msra.mxu0 0
  %3311 = vmatprep.subr.bf16.mxu0 0
  %3312 = vmatpush1.bf16.msra.mxu0 0
  %3313 = vmatprep.subr.bf16.mxu0 0
  %3314 = vmatpush1.bf16.msra.mxu0 0
  %3315 = vmatprep.subr.bf16.mxu0 0
  %3316 = vmatpush1.bf16.msra.mxu0 %v3299
  %3317 = vmatprep.subr.bf16.mxu0 0
  %3318 = vmatpush2.bf16.msra.mxu0 0
  %3319 = vmatprep.subr.bf16.mxu0 0
  %3320 = vmatpush2.bf16.msra.mxu0 0
  %3321 = vmatprep.subr.bf16.mxu0 0
  %3322 = vmatpush2.bf16.msra.mxu0 0
  %3323 = vmatprep.subr.bf16.mxu0 0
  %3324 = vmatpush2.bf16.msra.mxu0 0
  %3325 = vmatprep.subr.bf16.mxu0 0
  %3326 = vmatpush2.bf16.msra.mxu0 0
  %3327 = vmatprep.subr.bf16.mxu0 0
  %3328 = vmatpush2.bf16.msra.mxu0 0
  %3329 = vmatprep.subr.bf16.mxu0 0
  %3330 = vmatpush2.bf16.msra.mxu0 0
  %3331 = vmatprep.subr.bf16.mxu0 0
  %3332 = vmatpush2.bf16.msra.mxu0 0
  %3333 = vmatprep.mubr.bf16.mxu0 0
  %3334 = vmatmul.mubr.bf16.gmra.mxu0 %v3275
  %v3335 = vpop.f32.mrf.mxu0
  %v3336 = vadd.f32 0.0, %v3335
  %v3337 = vpop.f32.mrf.mxu0
  %v3338 = vpop.f32.mrf.mxu0
  %v3339 = vadd.f32 0.0, %v3338
  %v3340 = vpop.f32.mrf.mxu0
  %3341 = vmatprep.mubr.bf16.mxu0 0
  %3342 = vmatmul.mubr.bf16.gmra.mxu0 %v3278
  %v3343 = vpop.f32.mrf.mxu0
  %v3344 = vadd.f32 0.0, %v3343
  %v3345 = vpop.f32.mrf.mxu0
  %v3346 = vpop.f32.mrf.mxu0
  %v3347 = vadd.f32 0.0, %v3346
  %v3348 = vpop.f32.mrf.mxu0
  %3349 = vmatprep.mubr.bf16.mxu0 0
  %3350 = vmatmul.mubr.bf16.gmra.mxu0 %v3281
  %v3351 = vpop.f32.mrf.mxu0
  %v3352 = vadd.f32 0.0, %v3351
  %v3353 = vpop.f32.mrf.mxu0
  %v3354 = vpop.f32.mrf.mxu0
  %v3355 = vadd.f32 0.0, %v3354
  %v3356 = vpop.f32.mrf.mxu0
  %3357 = vmatprep.mubr.bf16.mxu0 0
  %3358 = vmatmul.mubr.bf16.gmra.mxu0 %v3284
  %v3359 = vpop.f32.mrf.mxu0
  %v3360 = vadd.f32 0.0, %v3359
  %v3361 = vpop.f32.mrf.mxu0
  %v3362 = vpop.f32.mrf.mxu0
  %v3363 = vadd.f32 0.0, %v3362
  %v3364 = vpop.f32.mrf.mxu0
  %3365 = vmatprep.mubr.bf16.mxu0 0
  %3366 = vmatmul.mubr.bf16.gmra.mxu0 %v3287
  %v3367 = vpop.f32.mrf.mxu0
  %v3368 = vadd.f32 0.0, %v3367
  %v3369 = vpop.f32.mrf.mxu0
  %v3370 = vpop.f32.mrf.mxu0
  %v3371 = vadd.f32 0.0, %v3370
  %v3372 = vpop.f32.mrf.mxu0
  %3373 = vmatprep.mubr.bf16.mxu0 0
  %3374 = vmatmul.mubr.bf16.gmra.mxu0 %v3290
  %v3375 = vpop.f32.mrf.mxu0
  %v3376 = vadd.f32 0.0, %v3375
  %v3377 = vpop.f32.mrf.mxu0
  %v3378 = vpop.f32.mrf.mxu0
  %v3379 = vadd.f32 0.0, %v3378
  %v3380 = vpop.f32.mrf.mxu0
  %3381 = vmatprep.mubr.bf16.mxu0 0
  %3382 = vmatmul.mubr.bf16.gmra.mxu0 %v3293
  %v3383 = vpop.f32.mrf.mxu0
  %v3384 = vadd.f32 0.0, %v3383
  %v3385 = vpop.f32.mrf.mxu0
  %v3386 = vpop.f32.mrf.mxu0
  %v3387 = vadd.f32 0.0, %v3386
  %v3388 = vpop.f32.mrf.mxu0
  %3389 = vmatprep.mubr.bf16.mxu0 0
  %3390 = vmatmul.mubr.bf16.gmra.mxu0 %v3296
  %v3391 = vpop.f32.mrf.mxu0
  %v3392 = vadd.f32 0.0, %v3391
  %v3393 = vpop.f32.mrf.mxu0
  %v3394 = vpop.f32.mrf.mxu0
  %v3395 = vadd.f32 0.0, %v3394
  %v3396 = vpop.f32.mrf.mxu0
  %3397 = vdwg.mxu0
  %v3398 = vadd.f32 %v3120, %v3336
  %v3399 = vadd.f32 %v3121, %v3339
  %v3400 = vadd.f32 %v3122, %v3344
  %v3401 = vadd.f32 %v3123, %v3347
  %v3402 = vadd.f32 %v3124, %v3352
  %v3403 = vadd.f32 %v3125, %v3355
  %v3404 = vadd.f32 %v3126, %v3360
  %v3405 = vadd.f32 %v3127, %v3363
  %v3406 = vadd.f32 %v3128, %v3368
  %v3407 = vadd.f32 %v3129, %v3371
  %v3408 = vadd.f32 %v3130, %v3376
  %v3409 = vadd.f32 %v3131, %v3379
  %v3410 = vadd.f32 %v3132, %v3384
  %v3411 = vadd.f32 %v3133, %v3387
  %v3412 = vadd.f32 %v3134, %v3392
  %v3413 = vadd.f32 %v3135, %v3395
  %v3414 = vld [vmem:[%s2713 + $0x4] sm:$0x3]
  %v3415 = vld [vmem:[%s2713 + $0xc] sm:$0x3]
  %v3416 = vld [vmem:[%s2713 + $0x14] sm:$0x3]
  %v3417 = vld [vmem:[%s2713 + $0x1c] sm:$0x3]
  %v3418 = vld [vmem:[%s2713 + $0x24] sm:$0x3]
  %v3419 = vld [vmem:[%s2713 + $0x2c] sm:$0x3]
  %v3420 = vld [vmem:[%s2713 + $0x34] sm:$0x3]
  %v3421 = vld [vmem:[%s2713 + $0x3c] sm:$0x3]
  %v3422 = vld [vmem:[%s2713 + $0x54] sm:$0x3]
  %v3423 = vld [vmem:[%s2713 + $0x5c] sm:$0x3]
  %v3424 = vld [vmem:[%s2713 + $0x64] sm:$0x3]
  %v3425 = vld [vmem:[%s2713 + $0x6c] sm:$0x3]
  %v3426 = vld [vmem:[%s2713 + $0x74] sm:$0x3]
  %v3427 = vld [vmem:[%s2713 + $0x7c] sm:$0x3]
  %v3428 = vld [vmem:[%s2713 + $0x84] sm:$0x3]
  %v3429 = vld [vmem:[%s2713 + $0x8c] sm:$0x3]
  %v3431 = vshrl.u32 %v3136, 16
  %v3433 = vrot.slane %v3431, 5
  %v3434 = vshll.u32 %v3136, 16
  %v3436 = vrot.slane %v3434, 6
  %v3437 = vor.u32 %v3433, %v3436
  %v3438 = vrot.slane %v3437, 4
  %v3440 = vshrl.u32 %v3414, 16
  %v3442 = vrot.slane %v3440, 5
  %v3443 = vshll.u32 %v3414, 16
  %v3445 = vrot.slane %v3443, 6
  %v3446 = vor.u32 %v3442, %v3445
  %v3447 = vsel %vm1088, %v3438, %v3446
  %v3449 = vshrl.u32 %v3137, 16
  %v3451 = vrot.slane %v3449, 5
  %v3452 = vshll.u32 %v3137, 16
  %v3454 = vrot.slane %v3452, 6
  %v3455 = vor.u32 %v3451, %v3454
  %v3456 = vrot.slane %v3455, 4
  %v3458 = vshrl.u32 %v3415, 16
  %v3460 = vrot.slane %v3458, 5
  %v3461 = vshll.u32 %v3415, 16
  %v3463 = vrot.slane %v3461, 6
  %v3464 = vor.u32 %v3460, %v3463
  %v3465 = vsel %vm1088, %v3456, %v3464
  %v3467 = vshrl.u32 %v3138, 16
  %v3469 = vrot.slane %v3467, 5
  %v3470 = vshll.u32 %v3138, 16
  %v3472 = vrot.slane %v3470, 6
  %v3473 = vor.u32 %v3469, %v3472
  %v3474 = vrot.slane %v3473, 4
  %v3476 = vshrl.u32 %v3416, 16
  %v3478 = vrot.slane %v3476, 5
  %v3479 = vshll.u32 %v3416, 16
  %v3481 = vrot.slane %v3479, 6
  %v3482 = vor.u32 %v3478, %v3481
  %v3483 = vsel %vm1088, %v3474, %v3482
  %v3485 = vshrl.u32 %v3139, 16
  %v3487 = vrot.slane %v3485, 5
  %v3488 = vshll.u32 %v3139, 16
  %v3490 = vrot.slane %v3488, 6
  %v3491 = vor.u32 %v3487, %v3490
  %v3492 = vrot.slane %v3491, 4
  %v3494 = vshrl.u32 %v3417, 16
  %v3496 = vrot.slane %v3494, 5
  %v3497 = vshll.u32 %v3417, 16
  %v3499 = vrot.slane %v3497, 6
  %v3500 = vor.u32 %v3496, %v3499
  %v3501 = vsel %vm1088, %v3492, %v3500
  %v3503 = vshrl.u32 %v3140, 16
  %v3505 = vrot.slane %v3503, 5
  %v3506 = vshll.u32 %v3140, 16
  %v3508 = vrot.slane %v3506, 6
  %v3509 = vor.u32 %v3505, %v3508
  %v3510 = vrot.slane %v3509, 4
  %v3512 = vshrl.u32 %v3418, 16
  %v3514 = vrot.slane %v3512, 5
  %v3515 = vshll.u32 %v3418, 16
  %v3517 = vrot.slane %v3515, 6
  %v3518 = vor.u32 %v3514, %v3517
  %v3519 = vsel %vm1088, %v3510, %v3518
  %v3521 = vshrl.u32 %v3141, 16
  %v3523 = vrot.slane %v3521, 5
  %v3524 = vshll.u32 %v3141, 16
  %v3526 = vrot.slane %v3524, 6
  %v3527 = vor.u32 %v3523, %v3526
  %v3528 = vrot.slane %v3527, 4
  %v3530 = vshrl.u32 %v3419, 16
  %v3532 = vrot.slane %v3530, 5
  %v3533 = vshll.u32 %v3419, 16
  %v3535 = vrot.slane %v3533, 6
  %v3536 = vor.u32 %v3532, %v3535
  %v3537 = vsel %vm1088, %v3528, %v3536
  %v3539 = vshrl.u32 %v3142, 16
  %v3541 = vrot.slane %v3539, 5
  %v3542 = vshll.u32 %v3142, 16
  %v3544 = vrot.slane %v3542, 6
  %v3545 = vor.u32 %v3541, %v3544
  %v3546 = vrot.slane %v3545, 4
  %v3548 = vshrl.u32 %v3420, 16
  %v3550 = vrot.slane %v3548, 5
  %v3551 = vshll.u32 %v3420, 16
  %v3553 = vrot.slane %v3551, 6
  %v3554 = vor.u32 %v3550, %v3553
  %v3555 = vsel %vm1088, %v3546, %v3554
  %v3557 = vshrl.u32 %v3143, 16
  %v3559 = vrot.slane %v3557, 5
  %v3560 = vshll.u32 %v3143, 16
  %v3562 = vrot.slane %v3560, 6
  %v3563 = vor.u32 %v3559, %v3562
  %v3564 = vrot.slane %v3563, 4
  %v3566 = vshrl.u32 %v3421, 16
  %v3568 = vrot.slane %v3566, 5
  %v3569 = vshll.u32 %v3421, 16
  %v3571 = vrot.slane %v3569, 6
  %v3572 = vor.u32 %v3568, %v3571
  %v3573 = vsel %vm1088, %v3564, %v3572
  %v3575 = vshrl.u32 %v3144, 16
  %v3577 = vrot.slane %v3575, 5
  %v3578 = vshll.u32 %v3144, 16
  %v3580 = vrot.slane %v3578, 6
  %v3581 = vor.u32 %v3577, %v3580
  %v3582 = vrot.slane %v3581, 4
  %v3584 = vshrl.u32 %v3422, 16
  %v3586 = vrot.slane %v3584, 5
  %v3587 = vshll.u32 %v3422, 16
  %v3589 = vrot.slane %v3587, 6
  %v3590 = vor.u32 %v3586, %v3589
  %v3591 = vsel %vm1088, %v3582, %v3590
  %v3593 = vshrl.u32 %v3145, 16
  %v3595 = vrot.slane %v3593, 5
  %v3596 = vshll.u32 %v3145, 16
  %v3598 = vrot.slane %v3596, 6
  %v3599 = vor.u32 %v3595, %v3598
  %v3600 = vrot.slane %v3599, 4
  %v3602 = vshrl.u32 %v3423, 16
  %v3604 = vrot.slane %v3602, 5
  %v3605 = vshll.u32 %v3423, 16
  %v3607 = vrot.slane %v3605, 6
  %v3608 = vor.u32 %v3604, %v3607
  %v3609 = vsel %vm1088, %v3600, %v3608
  %v3611 = vshrl.u32 %v3146, 16
  %v3613 = vrot.slane %v3611, 5
  %v3614 = vshll.u32 %v3146, 16
  %v3616 = vrot.slane %v3614, 6
  %v3617 = vor.u32 %v3613, %v3616
  %v3618 = vrot.slane %v3617, 4
  %v3620 = vshrl.u32 %v3424, 16
  %v3622 = vrot.slane %v3620, 5
  %v3623 = vshll.u32 %v3424, 16
  %v3625 = vrot.slane %v3623, 6
  %v3626 = vor.u32 %v3622, %v3625
  %v3627 = vsel %vm1088, %v3618, %v3626
  %v3629 = vshrl.u32 %v3147, 16
  %v3631 = vrot.slane %v3629, 5
  %v3632 = vshll.u32 %v3147, 16
  %v3634 = vrot.slane %v3632, 6
  %v3635 = vor.u32 %v3631, %v3634
  %v3636 = vrot.slane %v3635, 4
  %v3638 = vshrl.u32 %v3425, 16
  %v3640 = vrot.slane %v3638, 5
  %v3641 = vshll.u32 %v3425, 16
  %v3643 = vrot.slane %v3641, 6
  %v3644 = vor.u32 %v3640, %v3643
  %v3645 = vsel %vm1088, %v3636, %v3644
  %v3647 = vshrl.u32 %v3148, 16
  %v3649 = vrot.slane %v3647, 5
  %v3650 = vshll.u32 %v3148, 16
  %v3652 = vrot.slane %v3650, 6
  %v3653 = vor.u32 %v3649, %v3652
  %v3654 = vrot.slane %v3653, 4
  %v3656 = vshrl.u32 %v3426, 16
  %v3658 = vrot.slane %v3656, 5
  %v3659 = vshll.u32 %v3426, 16
  %v3661 = vrot.slane %v3659, 6
  %v3662 = vor.u32 %v3658, %v3661
  %v3663 = vsel %vm1088, %v3654, %v3662
  %v3665 = vshrl.u32 %v3149, 16
  %v3667 = vrot.slane %v3665, 5
  %v3668 = vshll.u32 %v3149, 16
  %v3670 = vrot.slane %v3668, 6
  %v3671 = vor.u32 %v3667, %v3670
  %v3672 = vrot.slane %v3671, 4
  %v3674 = vshrl.u32 %v3427, 16
  %v3676 = vrot.slane %v3674, 5
  %v3677 = vshll.u32 %v3427, 16
  %v3679 = vrot.slane %v3677, 6
  %v3680 = vor.u32 %v3676, %v3679
  %v3681 = vsel %vm1088, %v3672, %v3680
  %v3683 = vshrl.u32 %v3150, 16
  %v3685 = vrot.slane %v3683, 5
  %v3686 = vshll.u32 %v3150, 16
  %v3688 = vrot.slane %v3686, 6
  %v3689 = vor.u32 %v3685, %v3688
  %v3690 = vrot.slane %v3689, 4
  %v3692 = vshrl.u32 %v3428, 16
  %v3694 = vrot.slane %v3692, 5
  %v3695 = vshll.u32 %v3428, 16
  %v3697 = vrot.slane %v3695, 6
  %v3698 = vor.u32 %v3694, %v3697
  %v3699 = vsel %vm1088, %v3690, %v3698
  %v3701 = vshrl.u32 %v3151, 16
  %v3703 = vrot.slane %v3701, 5
  %v3704 = vshll.u32 %v3151, 16
  %v3706 = vrot.slane %v3704, 6
  %v3707 = vor.u32 %v3703, %v3706
  %v3708 = vrot.slane %v3707, 4
  %v3710 = vshrl.u32 %v3429, 16
  %v3712 = vrot.slane %v3710, 5
  %v3713 = vshll.u32 %v3429, 16
  %v3715 = vrot.slane %v3713, 6
  %v3716 = vor.u32 %v3712, %v3715
  %v3717 = vsel %vm1088, %v3708, %v3716
  %s3718 = scalar_lea.vmem %s1, 16
  %v3719 = vld [vmem:[%s3718] sm:$0x3]
  %v3720 = vunpack.c.l.b16 %v3447
  %v3721 = vunpack.c.l.b16 %v3465
  %v3722 = vunpack.c.l.b16 %v3483
  %v3723 = vunpack.c.l.b16 %v3501
  %v3724 = vunpack.c.l.b16 %v3519
  %v3725 = vunpack.c.l.b16 %v3537
  %v3726 = vunpack.c.l.b16 %v3555
  %v3727 = vunpack.c.l.b16 %v3573
  %v3728 = vunpack.c.l.b16 %v3591
  %v3729 = vunpack.c.l.b16 %v3609
  %v3730 = vunpack.c.l.b16 %v3627
  %v3731 = vunpack.c.l.b16 %v3645
  %v3732 = vunpack.c.l.b16 %v3663
  %v3733 = vunpack.c.l.b16 %v3681
  %v3734 = vunpack.c.l.b16 %v3699
  %v3735 = vunpack.c.l.b16 %v3717
  %v3736 = vpack.c.b16 %v3721, %v3720
  %v3737 = vpack.c.b16 %v3723, %v3722
  %v3738 = vpack.c.b16 %v3725, %v3724
  %v3739 = vpack.c.b16 %v3727, %v3726
  %v3740 = vpack.c.b16 %v3729, %v3728
  %v3741 = vpack.c.b16 %v3731, %v3730
  %v3742 = vpack.c.b16 %v3733, %v3732
  %v3743 = vpack.c.b16 %v3735, %v3734
  %v3745 = vsel %vm796, %v3736, 0
  %v3748 = vsel %vm796, %v3737, 0
  %v3751 = vsel %vm796, %v3738, 0
  %v3754 = vsel %vm796, %v3739, 0
  %v3757 = vsel %vm796, %v3740, 0
  %v3760 = vsel %vm796, %v3741, 0
  %v3763 = vsel %vm796, %v3742, 0
  %v3766 = vsel %vm796, %v3743, 0
  %v3769 = vsel %vm821, %v3719, 0
  %3771 = vmatprep.subr.bf16.mxu0 0
  %3772 = vmatpush1.bf16.msra.mxu0 0
  %3773 = vmatprep.subr.bf16.mxu0 0
  %3774 = vmatpush1.bf16.msra.mxu0 0
  %3775 = vmatprep.subr.bf16.mxu0 0
  %3776 = vmatpush1.bf16.msra.mxu0 0
  %3777 = vmatprep.subr.bf16.mxu0 0
  %3778 = vmatpush1.bf16.msra.mxu0 0
  %3779 = vmatprep.subr.bf16.mxu0 0
  %3780 = vmatpush1.bf16.msra.mxu0 0
  %3781 = vmatprep.subr.bf16.mxu0 0
  %3782 = vmatpush1.bf16.msra.mxu0 0
  %3783 = vmatprep.subr.bf16.mxu0 0
  %3784 = vmatpush1.bf16.msra.mxu0 0
  %3785 = vmatprep.subr.bf16.mxu0 0
  %3786 = vmatpush1.bf16.msra.mxu0 %v3769
  %3787 = vmatprep.subr.bf16.mxu0 0
  %3788 = vmatpush2.bf16.msra.mxu0 0
  %3789 = vmatprep.subr.bf16.mxu0 0
  %3790 = vmatpush2.bf16.msra.mxu0 0
  %3791 = vmatprep.subr.bf16.mxu0 0
  %3792 = vmatpush2.bf16.msra.mxu0 0
  %3793 = vmatprep.subr.bf16.mxu0 0
  %3794 = vmatpush2.bf16.msra.mxu0 0
  %3795 = vmatprep.subr.bf16.mxu0 0
  %3796 = vmatpush2.bf16.msra.mxu0 0
  %3797 = vmatprep.subr.bf16.mxu0 0
  %3798 = vmatpush2.bf16.msra.mxu0 0
  %3799 = vmatprep.subr.bf16.mxu0 0
  %3800 = vmatpush2.bf16.msra.mxu0 0
  %3801 = vmatprep.subr.bf16.mxu0 0
  %3802 = vmatpush2.bf16.msra.mxu0 0
  %3803 = vmatprep.mubr.bf16.mxu0 0
  %3804 = vmatmul.mubr.bf16.gmra.mxu0 %v3745
  %v3805 = vpop.f32.mrf.mxu0
  %v3806 = vadd.f32 0.0, %v3805
  %v3807 = vpop.f32.mrf.mxu0
  %v3808 = vpop.f32.mrf.mxu0
  %v3809 = vadd.f32 0.0, %v3808
  %v3810 = vpop.f32.mrf.mxu0
  %3811 = vmatprep.mubr.bf16.mxu0 0
  %3812 = vmatmul.mubr.bf16.gmra.mxu0 %v3748
  %v3813 = vpop.f32.mrf.mxu0
  %v3814 = vadd.f32 0.0, %v3813
  %v3815 = vpop.f32.mrf.mxu0
  %v3816 = vpop.f32.mrf.mxu0
  %v3817 = vadd.f32 0.0, %v3816
  %v3818 = vpop.f32.mrf.mxu0
  %3819 = vmatprep.mubr.bf16.mxu0 0
  %3820 = vmatmul.mubr.bf16.gmra.mxu0 %v3751
  %v3821 = vpop.f32.mrf.mxu0
  %v3822 = vadd.f32 0.0, %v3821
  %v3823 = vpop.f32.mrf.mxu0
  %v3824 = vpop.f32.mrf.mxu0
  %v3825 = vadd.f32 0.0, %v3824
  %v3826 = vpop.f32.mrf.mxu0
  %3827 = vmatprep.mubr.bf16.mxu0 0
  %3828 = vmatmul.mubr.bf16.gmra.mxu0 %v3754
  %v3829 = vpop.f32.mrf.mxu0
  %v3830 = vadd.f32 0.0, %v3829
  %v3831 = vpop.f32.mrf.mxu0
  %v3832 = vpop.f32.mrf.mxu0
  %v3833 = vadd.f32 0.0, %v3832
  %v3834 = vpop.f32.mrf.mxu0
  %3835 = vmatprep.mubr.bf16.mxu0 0
  %3836 = vmatmul.mubr.bf16.gmra.mxu0 %v3757
  %v3837 = vpop.f32.mrf.mxu0
  %v3838 = vadd.f32 0.0, %v3837
  %v3839 = vpop.f32.mrf.mxu0
  %v3840 = vpop.f32.mrf.mxu0
  %v3841 = vadd.f32 0.0, %v3840
  %v3842 = vpop.f32.mrf.mxu0
  %3843 = vmatprep.mubr.bf16.mxu0 0
  %3844 = vmatmul.mubr.bf16.gmra.mxu0 %v3760
  %v3845 = vpop.f32.mrf.mxu0
  %v3846 = vadd.f32 0.0, %v3845
  %v3847 = vpop.f32.mrf.mxu0
  %v3848 = vpop.f32.mrf.mxu0
  %v3849 = vadd.f32 0.0, %v3848
  %v3850 = vpop.f32.mrf.mxu0
  %3851 = vmatprep.mubr.bf16.mxu0 0
  %3852 = vmatmul.mubr.bf16.gmra.mxu0 %v3763
  %v3853 = vpop.f32.mrf.mxu0
  %v3854 = vadd.f32 0.0, %v3853
  %v3855 = vpop.f32.mrf.mxu0
  %v3856 = vpop.f32.mrf.mxu0
  %v3857 = vadd.f32 0.0, %v3856
  %v3858 = vpop.f32.mrf.mxu0
  %3859 = vmatprep.mubr.bf16.mxu0 0
  %3860 = vmatmul.mubr.bf16.gmra.mxu0 %v3766
  %v3861 = vpop.f32.mrf.mxu0
  %v3862 = vadd.f32 0.0, %v3861
  %v3863 = vpop.f32.mrf.mxu0
  %v3864 = vpop.f32.mrf.mxu0
  %v3865 = vadd.f32 0.0, %v3864
  %v3866 = vpop.f32.mrf.mxu0
  %3867 = vdwg.mxu0
  %v3868 = vadd.f32 %v3398, %v3806
  %v3869 = vadd.f32 %v3399, %v3809
  %v3870 = vadd.f32 %v3400, %v3814
  %v3871 = vadd.f32 %v3401, %v3817
  %v3872 = vadd.f32 %v3402, %v3822
  %v3873 = vadd.f32 %v3403, %v3825
  %v3874 = vadd.f32 %v3404, %v3830
  %v3875 = vadd.f32 %v3405, %v3833
  %v3876 = vadd.f32 %v3406, %v3838
  %v3877 = vadd.f32 %v3407, %v3841
  %v3878 = vadd.f32 %v3408, %v3846
  %v3879 = vadd.f32 %v3409, %v3849
  %v3880 = vadd.f32 %v3410, %v3854
  %v3881 = vadd.f32 %v3411, %v3857
  %v3882 = vadd.f32 %v3412, %v3862
  %v3883 = vadd.f32 %v3413, %v3865
  %v3884 = vpack.c.bf16 %v3869, %v3868
  %v3885 = vpack.c.bf16 %v3871, %v3870
  %v3886 = vpack.c.bf16 %v3873, %v3872
  %v3887 = vpack.c.bf16 %v3875, %v3874
  %v3888 = vpack.c.bf16 %v3877, %v3876
  %v3889 = vpack.c.bf16 %v3879, %v3878
  %v3890 = vpack.c.bf16 %v3881, %v3880
  %v3891 = vpack.c.bf16 %v3883, %v3882
  %v3900 = vunpack.c.l.b16 %v3884
  %v3901 = vunpack.c.h.b16 %v3884
  %v3902 = vunpack.c.l.b16 %v3885
  %v3903 = vunpack.c.h.b16 %v3885
  %v3904 = vunpack.c.l.b16 %v3886
  %v3905 = vunpack.c.h.b16 %v3886
  %v3906 = vunpack.c.l.b16 %v3887
  %v3907 = vunpack.c.h.b16 %v3887
  %v3908 = vunpack.c.l.b16 %v3888
  %v3909 = vunpack.c.h.b16 %v3888
  %v3910 = vunpack.c.l.b16 %v3889
  %v3911 = vunpack.c.h.b16 %v3889
  %v3912 = vunpack.c.l.b16 %v3890
  %v3913 = vunpack.c.h.b16 %v3890
  %v3914 = vunpack.c.l.b16 %v3891
  %v3915 = vunpack.c.h.b16 %v3891
  %v3916 = vpack.c.b16 %v3900, %v3900
  %v3917 = vpack.c.b16 %v3901, %v3901
  %v3918 = vpack.c.b16 %v3902, %v3902
  %v3919 = vpack.c.b16 %v3903, %v3903
  %v3920 = vpack.c.b16 %v3904, %v3904
  %v3921 = vpack.c.b16 %v3905, %v3905
  %v3922 = vpack.c.b16 %v3906, %v3906
  %v3923 = vpack.c.b16 %v3907, %v3907
  %v3924 = vpack.c.b16 %v3908, %v3908
  %v3925 = vpack.c.b16 %v3909, %v3909
  %v3926 = vpack.c.b16 %v3910, %v3910
  %v3927 = vpack.c.b16 %v3911, %v3911
  %v3928 = vpack.c.b16 %v3912, %v3912
  %v3929 = vpack.c.b16 %v3913, %v3913
  %v3930 = vpack.c.b16 %v3914, %v3914
  %v3931 = vpack.c.b16 %v3915, %v3915
  %3948 = vst [vmem:[%s2] sm:$0xf] %v3916
  %3949 = vst [vmem:[%s2 + $0x4] sm:$0xf] %v3917
  %3950 = vst [vmem:[%s2 + $0x8] sm:$0xf] %v3918
  %3951 = vst [vmem:[%s2 + $0xc] sm:$0xf] %v3919
  %3952 = vst [vmem:[%s2 + $0x10] sm:$0xf] %v3920
  %3953 = vst [vmem:[%s2 + $0x14] sm:$0xf] %v3921
  %3954 = vst [vmem:[%s2 + $0x18] sm:$0xf] %v3922
  %3955 = vst [vmem:[%s2 + $0x1c] sm:$0xf] %v3923
  %3956 = vst [vmem:[%s2 + $0x20] sm:$0xf] %v3924
  %3957 = vst [vmem:[%s2 + $0x24] sm:$0xf] %v3925
  %3958 = vst [vmem:[%s2 + $0x28] sm:$0xf] %v3926
  %3959 = vst [vmem:[%s2 + $0x2c] sm:$0xf] %v3927
  %3960 = vst [vmem:[%s2 + $0x30] sm:$0xf] %v3928
  %3961 = vst [vmem:[%s2 + $0x34] sm:$0xf] %v3929
  %3962 = vst [vmem:[%s2 + $0x38] sm:$0xf] %v3930
  %3963 = vst [vmem:[%s2 + $0x3c] sm:$0xf] %v3931
  %v3964 = vld [vmem:[%s3] sm:$0x3]
  %v3965 = vadd.f32 %v3868, %v3869
  %v3966 = vadd.f32 %v3965, %v3870
  %v3967 = vadd.f32 %v3966, %v3871
  %v3968 = vadd.f32 %v3967, %v3872
  %v3969 = vadd.f32 %v3968, %v3873
  %v3970 = vadd.f32 %v3969, %v3874
  %v3971 = vadd.f32 %v3970, %v3875
  %v3972 = vadd.f32 %v3971, %v3876
  %v3973 = vadd.f32 %v3972, %v3877
  %v3974 = vadd.f32 %v3973, %v3878
  %v3975 = vadd.f32 %v3974, %v3879
  %v3976 = vadd.f32 %v3975, %v3880
  %v3977 = vadd.f32 %v3976, %v3881
  %v3978 = vadd.f32 %v3977, %v3882
  %v3979 = vadd.f32 %v3978, %v3883
  %v3980 = vrot.slane %v3979, 4
  %v3981 = vadd.f32 %v3979, %v3980
  %v3982 = vrot.slane %v3981, 2
  %v3983 = vadd.f32 %v3981, %v3982
  %v3984 = vrot.slane %v3983, 1
  %v3985 = vadd.f32 %v3983, %v3984
  %v3986 = vmul.f32 %v3868, %v3868
  %v3987 = vmul.f32 %v3869, %v3869
  %v3988 = vmul.f32 %v3870, %v3870
  %v3989 = vmul.f32 %v3871, %v3871
  %v3990 = vmul.f32 %v3872, %v3872
  %v3991 = vmul.f32 %v3873, %v3873
  %v3992 = vmul.f32 %v3874, %v3874
  %v3993 = vmul.f32 %v3875, %v3875
  %v3994 = vmul.f32 %v3876, %v3876
  %v3995 = vmul.f32 %v3877, %v3877
  %v3996 = vmul.f32 %v3878, %v3878
  %v3997 = vmul.f32 %v3879, %v3879
  %v3998 = vmul.f32 %v3880, %v3880
  %v3999 = vmul.f32 %v3881, %v3881
  %v4000 = vmul.f32 %v3882, %v3882
  %v4001 = vmul.f32 %v3883, %v3883
  %v4002 = vadd.f32 %v3986, %v3987
  %v4003 = vadd.f32 %v4002, %v3988
  %v4004 = vadd.f32 %v4003, %v3989
  %v4005 = vadd.f32 %v4004, %v3990
  %v4006 = vadd.f32 %v4005, %v3991
  %v4007 = vadd.f32 %v4006, %v3992
  %v4008 = vadd.f32 %v4007, %v3993
  %v4009 = vadd.f32 %v4008, %v3994
  %v4010 = vadd.f32 %v4009, %v3995
  %v4011 = vadd.f32 %v4010, %v3996
  %v4012 = vadd.f32 %v4011, %v3997
  %v4013 = vadd.f32 %v4012, %v3998
  %v4014 = vadd.f32 %v4013, %v3999
  %v4015 = vadd.f32 %v4014, %v4000
  %v4016 = vadd.f32 %v4015, %v4001
  %v4017 = vrot.slane %v4016, 4
  %v4018 = vadd.f32 %v4016, %v4017
  %v4019 = vrot.slane %v4018, 2
  %v4020 = vadd.f32 %v4018, %v4019
  %v4021 = vrot.slane %v4020, 1
  %v4022 = vadd.f32 %v4020, %v4021
  %vm4023 = vcmask 1040384
  %v4024 = vsel %vm4023, %v3985, %v4022
  %v4025 = vadd.f32 %v3964, %v4024
  %4026 = vst [vmem:[%s3] sm:$0x3] %v4025
  // Predicated region
  $region14: #{down_forward.3} parent=0 // pred_check
    _
  $region15: #{down_forward.3} parent=0 // pred_check_branch
    %4028 = sbr.rel (0) target = $region17
  $region16: #{down_forward.3} parent=0 // pred_region
    _
  $region17: #{down_forward.3} parent=0 // pred_fallthru
    _
  // Predicated region
  $region18: #{down_forward.3} parent=0 // pred_check
    _
  $region19: #{down_forward.3} parent=0 // pred_check_branch
    %4030 = sbr.rel (0) target = $region21
  $region20: #{down_forward.3} parent=0 // pred_region
    _
  $region21: #{down_forward.3} parent=0 // pred_fallthru
    _
  // Predicated region
  $region22: #{down_forward.3} parent=0 // pred_check
    _
  $region23: #{down_forward.3} parent=0 // pred_check_branch
    %4032 = sbr.rel (0) target = $region25
  $region24: #{down_forward.3} parent=0 // pred_region
    _
  $region25: #{down_forward.3} parent=0 // pred_fallthru
    _
  // Predicated region
  $region26: #{down_forward.3} parent=0 // pred_check
    _
  $region27: #{down_forward.3} parent=0 // pred_check_branch
    %4034 = sbr.rel (0) target = $region29
  $region28: #{down_forward.3} parent=0 // pred_region
    _
  $region29: #{down_forward.3} parent=0 // pred_fallthru
    _

// kernel: down_forward.4
$region0: #{down_forward.4}
  #allocation0 [shape = 'u32[]', space=smem, size = 0x4, offset = 0x4, fixed_abs, tag = 'smem constant byte address 0x4 - core index']
  #allocation1 [shape = 'u32[144,128]{1,0:T(1,128)}', space=vmem, size = 0x12000, scoped, tag = 'internal scratch']
  #allocation2 [shape = 'bf16[2,10,11,128]{3,2,1,0:T(8,128)(2,1)}', space=vmem, size = 0x14000, scoped, tag = 'scratch operand']
  %s0 = inlined_call_operand.vmem [shape: bf16[128,128], index: 0, kind: input, shape index: {}]
  %s1 = inlined_call_operand.vmem [shape: f32[2,128], index: 1, kind: input, shape index: {}]
  %s2 = inlined_call_operand.vmem [shape: f32[1,128], index: 2, kind: input, shape index: {}]
  %s3 = inlined_call_operand.vmem [shape: f32[1,128], index: 3, kind: input, shape index: {}]
  %s4 = inlined_call_operand.vmem [shape: bf16[9,128,128], index: 4, kind: input, shape index: {}]
  %s5 = inlined_call_operand.vmem [shape: bf16[128,128], index: 5, kind: output, shape index: {0}]
  %s6 = inlined_call_operand.vmem [shape: f32[2,128], index: 6, kind: output, shape index: {1}]
  %7 = xla_tuple %s5, %s6
  %s8 = sld [smem:[#allocation0]]
  $region42: #{down_forward.4} parent=0
    _
  %s10 = ssub.s32 1, %s8
  %s11 = scalar_select 0, %s10, %s8
  // Predicated region
  $region2: #{down_forward.4} parent=0 // pred_check
    _
  $region3: #{down_forward.4} parent=0 // pred_check_branch
    %13 = sbr.rel (0) target = $region5
  $region4: #{down_forward.4} parent=0 // pred_region
    _
  $region5: #{down_forward.4} parent=0 // pred_fallthru
    _
  // Predicated region
  $region6: #{down_forward.4} parent=0 // pred_check
    _
  $region7: #{down_forward.4} parent=0 // pred_check_branch
    %15 = sbr.rel (0) target = $region9
  $region8: #{down_forward.4} parent=0 // pred_region
    _
  $region9: #{down_forward.4} parent=0 // pred_fallthru
    _
  // Predicated region
  $region10: #{down_forward.4} parent=0 // pred_check
    _
  $region11: #{down_forward.4} parent=0 // pred_check_branch
    %17 = sbr.rel (0) target = $region13
  $region12: #{down_forward.4} parent=0 // pred_region
    _
  $region13: #{down_forward.4} parent=0 // pred_fallthru
    _
  // Predicated region
  $region14: #{down_forward.4} parent=0 // pred_check
    _
  $region15: #{down_forward.4} parent=0 // pred_check_branch
    %19 = sbr.rel (0) target = $region17
  $region16: #{down_forward.4} parent=0 // pred_region
    _
  $region17: #{down_forward.4} parent=0 // pred_fallthru
    _
  // Predicated region
  $region18: #{down_forward.4} parent=0 // pred_check
    _
  $region19: #{down_forward.4} parent=0 // pred_check_branch
    %21 = sbr.rel (0) target = $region21
  $region20: #{down_forward.4} parent=0 // pred_region
    _
  $region21: #{down_forward.4} parent=0 // pred_fallthru
    _
  %p23 = scmp.eq.s32.totalorder 0, 0
  // Predicated region
  $region22: #{down_forward.4} parent=0 // pred_check
    %p24 = pneg %p23
  $region23: #{down_forward.4} parent=0 // pred_check_branch
    %26 = sbr.rel (%p24) target = $region25
  $region24: #{down_forward.4} parent=0 // pred_region
    %27 = vst [vmem:[#allocation2] sm:$0xf] 0
    %vm28 = vcmask 1041408
    %vm29 = vsmask.f32 1280
    %vm30 = vmand %vm28, %vm29
    %v31 = vld [vmem:[#allocation2 + $0x4] sm:$0x3]
    %v32 = vsel %vm30, 0, %v31
    %33 = vst [vmem:[#allocation2 + $0x4] sm:$0x3] %v32
    %34 = vst [vmem:[#allocation2 + $0x8] sm:$0xf] 0
    %v35 = vld [vmem:[#allocation2 + $0xc] sm:$0x3]
    %v36 = vsel %vm30, 0, %v35
    %37 = vst [vmem:[#allocation2 + $0xc] sm:$0x3] %v36
    %38 = vst [vmem:[#allocation2 + $0x10] sm:$0xf] 0
    %v39 = vld [vmem:[#allocation2 + $0x14] sm:$0x3]
    %v40 = vsel %vm30, 0, %v39
    %41 = vst [vmem:[#allocation2 + $0x14] sm:$0x3] %v40
    %42 = vst [vmem:[#allocation2 + $0x18] sm:$0xf] 0
    %v43 = vld [vmem:[#allocation2 + $0x1c] sm:$0x3]
    %v44 = vsel %vm30, 0, %v43
    %45 = vst [vmem:[#allocation2 + $0x1c] sm:$0x3] %v44
    %46 = vst [vmem:[#allocation2 + $0x20] sm:$0xf] 0
    %v47 = vld [vmem:[#allocation2 + $0x24] sm:$0x3]
    %v48 = vsel %vm30, 0, %v47
    %49 = vst [vmem:[#allocation2 + $0x24] sm:$0x3] %v48
    %50 = vst [vmem:[#allocation2 + $0x28] sm:$0xf] 0
    %v51 = vld [vmem:[#allocation2 + $0x2c] sm:$0x3]
    %v52 = vsel %vm30, 0, %v51
    %53 = vst [vmem:[#allocation2 + $0x2c] sm:$0x3] %v52
    %54 = vst [vmem:[#allocation2 + $0x30] sm:$0xf] 0
    %v55 = vld [vmem:[#allocation2 + $0x34] sm:$0x3]
    %v56 = vsel %vm30, 0, %v55
    %57 = vst [vmem:[#allocation2 + $0x34] sm:$0x3] %v56
    %58 = vst [vmem:[#allocation2 + $0x38] sm:$0xf] 0
    %v59 = vld [vmem:[#allocation2 + $0x3c] sm:$0x3]
    %v60 = vsel %vm30, 0, %v59
    %61 = vst [vmem:[#allocation2 + $0x3c] sm:$0x3] %v60
    %62 = vst [vmem:[#allocation2 + $0x40] sm:$0xf] 0
    %v63 = vld [vmem:[#allocation2 + $0x44] sm:$0x3]
    %v64 = vsel %vm30, 0, %v63
    %65 = vst [vmem:[#allocation2 + $0x44] sm:$0x3] %v64
    %66 = vst [vmem:[#allocation2 + $0x48] sm:$0xf] 0
    %v67 = vld [vmem:[#allocation2 + $0x4c] sm:$0x3]
    %v68 = vsel %vm30, 0, %v67
    %69 = vst [vmem:[#allocation2 + $0x4c] sm:$0x3] %v68
    %70 = vst [vmem:[#allocation2 + $0x50] sm:$0xf] 0
    %v71 = vld [vmem:[#allocation2 + $0x54] sm:$0x3]
    %v72 = vsel %vm30, 0, %v71
    %73 = vst [vmem:[#allocation2 + $0x54] sm:$0x3] %v72
    %74 = vst [vmem:[#allocation2 + $0x58] sm:$0xf] 0
    %v75 = vld [vmem:[#allocation2 + $0x5c] sm:$0x3]
    %v76 = vsel %vm30, 0, %v75
    %77 = vst [vmem:[#allocation2 + $0x5c] sm:$0x3] %v76
    %78 = vst [vmem:[#allocation2 + $0x60] sm:$0xf] 0
    %v79 = vld [vmem:[#allocation2 + $0x64] sm:$0x3]
    %v80 = vsel %vm30, 0, %v79
    %81 = vst [vmem:[#allocation2 + $0x64] sm:$0x3] %v80
    %82 = vst [vmem:[#allocation2 + $0x68] sm:$0xf] 0
    %v83 = vld [vmem:[#allocation2 + $0x6c] sm:$0x3]
    %v84 = vsel %vm30, 0, %v83
    %85 = vst [vmem:[#allocation2 + $0x6c] sm:$0x3] %v84
    %86 = vst [vmem:[#allocation2 + $0x70] sm:$0xf] 0
    %v87 = vld [vmem:[#allocation2 + $0x74] sm:$0x3]
    %v88 = vsel %vm30, 0, %v87
    %89 = vst [vmem:[#allocation2 + $0x74] sm:$0x3] %v88
    %90 = vst [vmem:[#allocation2 + $0x78] sm:$0xf] 0
    %v91 = vld [vmem:[#allocation2 + $0x7c] sm:$0x3]
    %v92 = vsel %vm30, 0, %v91
    %93 = vst [vmem:[#allocation2 + $0x7c] sm:$0x3] %v92
    %94 = vst [vmem:[#allocation2 + $0x80] sm:$0xf] 0
    %v95 = vld [vmem:[#allocation2 + $0x84] sm:$0x3]
    %v96 = vsel %vm30, 0, %v95
    %97 = vst [vmem:[#allocation2 + $0x84] sm:$0x3] %v96
    %98 = vst [vmem:[#allocation2 + $0x88] sm:$0xf] 0
    %v99 = vld [vmem:[#allocation2 + $0x8c] sm:$0x3]
    %v100 = vsel %vm30, 0, %v99
    %101 = vst [vmem:[#allocation2 + $0x8c] sm:$0x3] %v100
    %102 = vst [vmem:[#allocation2 + $0x90] sm:$0xf] 0
    %v103 = vld [vmem:[#allocation2 + $0x94] sm:$0x3]
    %v104 = vsel %vm30, 0, %v103
    %105 = vst [vmem:[#allocation2 + $0x94] sm:$0x3] %v104
    %106 = vst [vmem:[#allocation2 + $0x98] sm:$0xf] 0
    %v107 = vld [vmem:[#allocation2 + $0x9c] sm:$0x3]
    %v108 = vsel %vm30, 0, %v107
    %109 = vst [vmem:[#allocation2 + $0x9c] sm:$0x3] %v108
    %110 = vst [vmem:[%s6] sm:$0x3] 0.0
  $region25: #{down_forward.4} parent=0 // pred_fallthru
    _
  %v111 = vld [vmem:[%s1] sm:$0x1]
  %v112 = vmul.f32 %v111, 0.0078125
  %v113 = vld [vmem:[%s1 + $0x1] sm:$0x1]
  %v114 = vmul.f32 %v113, 0.0078125
  %v115 = vmul.f32 %v112, %v112
  %v116 = vsub.f32 %v114, %v115
  %v117 = vld [vmem:[%s2] sm:$0x1]
  %v118 = vadd.f32 %v116, 1e-05
  %v119 = vrsqrt.pop %v118
  %v120 = vmul.f32 %v117, %v119
  %v121 = vld [vmem:[%s3] sm:$0x1]
  %v122 = vmul.f32 %v112, %v120
  %v123 = vsub.f32 %v121, %v122
  %v124 = vld [vmem:[%s0] sm:$0xf]
  %v125 = vld [vmem:[%s0 + $0x4] sm:$0xf]
  %v126 = vld [vmem:[%s0 + $0x8] sm:$0xf]
  %v127 = vld [vmem:[%s0 + $0xc] sm:$0xf]
  %v128 = vld [vmem:[%s0 + $0x10] sm:$0xf]
  %v129 = vld [vmem:[%s0 + $0x14] sm:$0xf]
  %v130 = vld [vmem:[%s0 + $0x18] sm:$0xf]
  %v131 = vld [vmem:[%s0 + $0x1c] sm:$0xf]
  %v132 = vld [vmem:[%s0 + $0x20] sm:$0xf]
  %v133 = vld [vmem:[%s0 + $0x24] sm:$0xf]
  %v134 = vld [vmem:[%s0 + $0x28] sm:$0xf]
  %v135 = vld [vmem:[%s0 + $0x2c] sm:$0xf]
  %v136 = vld [vmem:[%s0 + $0x30] sm:$0xf]
  %v137 = vld [vmem:[%s0 + $0x34] sm:$0xf]
  %v138 = vld [vmem:[%s0 + $0x38] sm:$0xf]
  %v139 = vld [vmem:[%s0 + $0x3c] sm:$0xf]
  %v140 = vunpack.c.l.bf16 %v124
  %v141 = vunpack.c.l.bf16 %v125
  %v142 = vunpack.c.l.bf16 %v126
  %v143 = vunpack.c.l.bf16 %v127
  %v144 = vunpack.c.l.bf16 %v128
  %v145 = vunpack.c.l.bf16 %v129
  %v146 = vunpack.c.l.bf16 %v130
  %v147 = vunpack.c.l.bf16 %v131
  %v148 = vunpack.c.l.bf16 %v132
  %v149 = vunpack.c.l.bf16 %v133
  %v150 = vunpack.c.l.bf16 %v134
  %v151 = vunpack.c.l.bf16 %v135
  %v152 = vunpack.c.l.bf16 %v136
  %v153 = vunpack.c.l.bf16 %v137
  %v154 = vunpack.c.l.bf16 %v138
  %v155 = vunpack.c.l.bf16 %v139
  %v157 = vlaneseq
  %v158 = vshrl.u32 %v157, 7
  %v159 = vsub.s32 0, %v158
  %v160 = vrot.slane %v120, %v159
  %v162 = vmul.f32 %v140, %v160
  %v163 = vmul.f32 %v141, %v160
  %v164 = vmul.f32 %v142, %v160
  %v165 = vmul.f32 %v143, %v160
  %v166 = vmul.f32 %v144, %v160
  %v167 = vmul.f32 %v145, %v160
  %v168 = vmul.f32 %v146, %v160
  %v169 = vmul.f32 %v147, %v160
  %v170 = vmul.f32 %v148, %v160
  %v171 = vmul.f32 %v149, %v160
  %v172 = vmul.f32 %v150, %v160
  %v173 = vmul.f32 %v151, %v160
  %v174 = vmul.f32 %v152, %v160
  %v175 = vmul.f32 %v153, %v160
  %v176 = vmul.f32 %v154, %v160
  %v177 = vmul.f32 %v155, %v160
  %v179 = vlaneseq
  %v180 = vshrl.u32 %v179, 7
  %v181 = vsub.s32 0, %v180
  %v182 = vrot.slane %v123, %v181
  %v184 = vadd.f32 %v162, %v182
  %v185 = vadd.f32 %v163, %v182
  %v186 = vadd.f32 %v164, %v182
  %v187 = vadd.f32 %v165, %v182
  %v188 = vadd.f32 %v166, %v182
  %v189 = vadd.f32 %v167, %v182
  %v190 = vadd.f32 %v168, %v182
  %v191 = vadd.f32 %v169, %v182
  %v192 = vadd.f32 %v170, %v182
  %v193 = vadd.f32 %v171, %v182
  %v194 = vadd.f32 %v172, %v182
  %v195 = vadd.f32 %v173, %v182
  %v196 = vadd.f32 %v174, %v182
  %v197 = vadd.f32 %v175, %v182
  %v198 = vadd.f32 %v176, %v182
  %v199 = vadd.f32 %v177, %v182
  %v200 = vmax.f32 %v184, 0.0
  %v201 = vmax.f32 %v185, 0.0
  %v202 = vmax.f32 %v186, 0.0
  %v203 = vmax.f32 %v187, 0.0
  %v204 = vmax.f32 %v188, 0.0
  %v205 = vmax.f32 %v189, 0.0
  %v206 = vmax.f32 %v190, 0.0
  %v207 = vmax.f32 %v191, 0.0
  %v208 = vmax.f32 %v192, 0.0
  %v209 = vmax.f32 %v193, 0.0
  %v210 = vmax.f32 %v194, 0.0
  %v211 = vmax.f32 %v195, 0.0
  %v212 = vmax.f32 %v196, 0.0
  %v213 = vmax.f32 %v197, 0.0
  %v214 = vmax.f32 %v198, 0.0
  %v215 = vmax.f32 %v199, 0.0
  %v216 = vpack.c.bf16 %v200, %v200
  %v217 = vpack.c.bf16 %v201, %v201
  %v218 = vpack.c.bf16 %v202, %v202
  %v219 = vpack.c.bf16 %v203, %v203
  %v220 = vpack.c.bf16 %v204, %v204
  %v221 = vpack.c.bf16 %v205, %v205
  %v222 = vpack.c.bf16 %v206, %v206
  %v223 = vpack.c.bf16 %v207, %v207
  %v224 = vpack.c.bf16 %v208, %v208
  %v225 = vpack.c.bf16 %v209, %v209
  %v226 = vpack.c.bf16 %v210, %v210
  %v227 = vpack.c.bf16 %v211, %v211
  %v228 = vpack.c.bf16 %v212, %v212
  %v229 = vpack.c.bf16 %v213, %v213
  %v230 = vpack.c.bf16 %v214, %v214
  %v231 = vpack.c.bf16 %v215, %v215
  %v248 = vunpack.c.l.b16 %v216
  %v249 = vunpack.c.l.b16 %v217
  %v250 = vunpack.c.l.b16 %v218
  %v251 = vunpack.c.l.b16 %v219
  %v252 = vunpack.c.l.b16 %v220
  %v253 = vunpack.c.l.b16 %v221
  %v254 = vunpack.c.l.b16 %v222
  %v255 = vunpack.c.l.b16 %v223
  %v256 = vunpack.c.l.b16 %v224
  %v257 = vunpack.c.l.b16 %v225
  %v258 = vunpack.c.l.b16 %v226
  %v259 = vunpack.c.l.b16 %v227
  %v260 = vunpack.c.l.b16 %v228
  %v261 = vunpack.c.l.b16 %v229
  %v262 = vunpack.c.l.b16 %v230
  %v263 = vunpack.c.l.b16 %v231
  %v264 = vpack.c.b16 %v248, %v248
  %v265 = vpack.c.b16 %v249, %v249
  %v266 = vpack.c.b16 %v250, %v250
  %v267 = vpack.c.b16 %v251, %v251
  %v268 = vpack.c.b16 %v252, %v252
  %v269 = vpack.c.b16 %v253, %v253
  %v270 = vpack.c.b16 %v254, %v254
  %v271 = vpack.c.b16 %v255, %v255
  %v272 = vpack.c.b16 %v256, %v256
  %v273 = vpack.c.b16 %v257, %v257
  %v274 = vpack.c.b16 %v258, %v258
  %v275 = vpack.c.b16 %v259, %v259
  %v276 = vpack.c.b16 %v260, %v260
  %v277 = vpack.c.b16 %v261, %v261
  %v278 = vpack.c.b16 %v262, %v262
  %v279 = vpack.c.b16 %v263, %v263
  %v280 = vrot.slane %v264, 7
  %v281 = vrot.slane %v280, 4
  %v282 = vrot.slane %v265, 7
  %v283 = vrot.slane %v282, 4
  %v284 = vrot.slane %v266, 7
  %v285 = vrot.slane %v284, 4
  %v286 = vrot.slane %v267, 7
  %v287 = vrot.slane %v286, 4
  %v288 = vrot.slane %v268, 7
  %v289 = vrot.slane %v288, 4
  %v290 = vrot.slane %v269, 7
  %v291 = vrot.slane %v290, 4
  %v292 = vrot.slane %v270, 7
  %v293 = vrot.slane %v292, 4
  %v294 = vrot.slane %v271, 7
  %v295 = vrot.slane %v294, 4
  %v296 = vrot.slane %v272, 7
  %v297 = vrot.slane %v296, 4
  %v298 = vrot.slane %v273, 7
  %v299 = vrot.slane %v298, 4
  %v300 = vrot.slane %v274, 7
  %v301 = vrot.slane %v300, 4
  %v302 = vrot.slane %v275, 7
  %v303 = vrot.slane %v302, 4
  %v304 = vrot.slane %v276, 7
  %v305 = vrot.slane %v304, 4
  %v306 = vrot.slane %v277, 7
  %v307 = vrot.slane %v306, 4
  %v308 = vrot.slane %v278, 7
  %v309 = vrot.slane %v308, 4
  %v310 = vrot.slane %v279, 7
  %v311 = vrot.slane %v310, 4
  %s344 = scalar_lea.vmem [#allocation2], 8
  %345 = vst [vmem:[%s344] sm:$0xe] %v280
  %346 = vst [vmem:[%s344 + $0x4] sm:$0x1] %v281
  %347 = vst [vmem:[%s344 + $0x8] sm:$0xe] %v282
  %348 = vst [vmem:[%s344 + $0xc] sm:$0x1] %v283
  %349 = vst [vmem:[%s344 + $0x10] sm:$0xe] %v284
  %350 = vst [vmem:[%s344 + $0x14] sm:$0x1] %v285
  %351 = vst [vmem:[%s344 + $0x18] sm:$0xe] %v286
  %352 = vst [vmem:[%s344 + $0x1c] sm:$0x1] %v287
  %353 = vst [vmem:[%s344 + $0x20] sm:$0xe] %v288
  %354 = vst [vmem:[%s344 + $0x24] sm:$0x1] %v289
  %355 = vst [vmem:[%s344 + $0x28] sm:$0xe] %v290
  %356 = vst [vmem:[%s344 + $0x2c] sm:$0x1] %v291
  %357 = vst [vmem:[%s344 + $0x30] sm:$0xe] %v292
  %358 = vst [vmem:[%s344 + $0x34] sm:$0x1] %v293
  %359 = vst [vmem:[%s344 + $0x38] sm:$0xe] %v294
  %360 = vst [vmem:[%s344 + $0x3c] sm:$0x1] %v295
  %361 = vst [vmem:[%s344 + $0x50] sm:$0xe] %v296
  %362 = vst [vmem:[%s344 + $0x54] sm:$0x1] %v297
  %363 = vst [vmem:[%s344 + $0x58] sm:$0xe] %v298
  %364 = vst [vmem:[%s344 + $0x5c] sm:$0x1] %v299
  %365 = vst [vmem:[%s344 + $0x60] sm:$0xe] %v300
  %366 = vst [vmem:[%s344 + $0x64] sm:$0x1] %v301
  %367 = vst [vmem:[%s344 + $0x68] sm:$0xe] %v302
  %368 = vst [vmem:[%s344 + $0x6c] sm:$0x1] %v303
  %369 = vst [vmem:[%s344 + $0x70] sm:$0xe] %v304
  %370 = vst [vmem:[%s344 + $0x74] sm:$0x1] %v305
  %371 = vst [vmem:[%s344 + $0x78] sm:$0xe] %v306
  %372 = vst [vmem:[%s344 + $0x7c] sm:$0x1] %v307
  %373 = vst [vmem:[%s344 + $0x80] sm:$0xe] %v308
  %374 = vst [vmem:[%s344 + $0x84] sm:$0x1] %v309
  %375 = vst [vmem:[%s344 + $0x88] sm:$0xe] %v310
  %376 = vst [vmem:[%s344 + $0x8c] sm:$0x1] %v311
  %v377 = vld [vmem:[#allocation2] sm:$0xf]
  %v378 = vld [vmem:[#allocation2 + $0x4] sm:$0x1]
  %v379 = vld [vmem:[#allocation2 + $0x8] sm:$0xf]
  %v380 = vld [vmem:[#allocation2 + $0xc] sm:$0x1]
  %v381 = vld [vmem:[#allocation2 + $0x10] sm:$0xf]
  %v382 = vld [vmem:[#allocation2 + $0x14] sm:$0x1]
  %v383 = vld [vmem:[#allocation2 + $0x18] sm:$0xf]
  %v384 = vld [vmem:[#allocation2 + $0x1c] sm:$0x1]
  %v385 = vld [vmem:[#allocation2 + $0x20] sm:$0xf]
  %v386 = vld [vmem:[#allocation2 + $0x24] sm:$0x1]
  %v387 = vld [vmem:[#allocation2 + $0x28] sm:$0xf]
  %v388 = vld [vmem:[#allocation2 + $0x2c] sm:$0x1]
  %v389 = vld [vmem:[#allocation2 + $0x30] sm:$0xf]
  %v390 = vld [vmem:[#allocation2 + $0x34] sm:$0x1]
  %v391 = vld [vmem:[#allocation2 + $0x38] sm:$0xf]
  %v392 = vld [vmem:[#allocation2 + $0x3c] sm:$0x1]
  %v393 = vld [vmem:[#allocation2 + $0x50] sm:$0xf]
  %v394 = vld [vmem:[#allocation2 + $0x54] sm:$0x1]
  %v395 = vld [vmem:[#allocation2 + $0x58] sm:$0xf]
  %v396 = vld [vmem:[#allocation2 + $0x5c] sm:$0x1]
  %v397 = vld [vmem:[#allocation2 + $0x60] sm:$0xf]
  %v398 = vld [vmem:[#allocation2 + $0x64] sm:$0x1]
  %v399 = vld [vmem:[#allocation2 + $0x68] sm:$0xf]
  %v400 = vld [vmem:[#allocation2 + $0x6c] sm:$0x1]
  %v401 = vld [vmem:[#allocation2 + $0x70] sm:$0xf]
  %v402 = vld [vmem:[#allocation2 + $0x74] sm:$0x1]
  %v403 = vld [vmem:[#allocation2 + $0x78] sm:$0xf]
  %v404 = vld [vmem:[#allocation2 + $0x7c] sm:$0x1]
  %v405 = vld [vmem:[#allocation2 + $0x80] sm:$0xf]
  %v406 = vld [vmem:[#allocation2 + $0x84] sm:$0x1]
  %v407 = vld [vmem:[#allocation2 + $0x88] sm:$0xf]
  %v408 = vld [vmem:[#allocation2 + $0x8c] sm:$0x1]
  %vm409 = vsmask.f32 3328
  %vm410 = vsmask.f32 7440
  %vm411 = vmor %vm409, %vm410
  %v413 = vshrl.u32 %v377, 16
  %v415 = vrot.slane %v413, 4
  %v416 = vshll.u32 %v377, 16
  %v418 = vrot.slane %v416, 5
  %v419 = vor.u32 %v415, %v418
  %v420 = vrot.slane %v419, 4
  %v422 = vshll.u32 %v378, 16
  %v424 = vrot.slane %v422, 5
  %v425 = vsel %vm411, %v420, %v424
  %v427 = vshrl.u32 %v379, 16
  %v429 = vrot.slane %v427, 4
  %v430 = vshll.u32 %v379, 16
  %v432 = vrot.slane %v430, 5
  %v433 = vor.u32 %v429, %v432
  %v434 = vrot.slane %v433, 4
  %v436 = vshll.u32 %v380, 16
  %v438 = vrot.slane %v436, 5
  %v439 = vsel %vm411, %v434, %v438
  %v441 = vshrl.u32 %v381, 16
  %v443 = vrot.slane %v441, 4
  %v444 = vshll.u32 %v381, 16
  %v446 = vrot.slane %v444, 5
  %v447 = vor.u32 %v443, %v446
  %v448 = vrot.slane %v447, 4
  %v450 = vshll.u32 %v382, 16
  %v452 = vrot.slane %v450, 5
  %v453 = vsel %vm411, %v448, %v452
  %v455 = vshrl.u32 %v383, 16
  %v457 = vrot.slane %v455, 4
  %v458 = vshll.u32 %v383, 16
  %v460 = vrot.slane %v458, 5
  %v461 = vor.u32 %v457, %v460
  %v462 = vrot.slane %v461, 4
  %v464 = vshll.u32 %v384, 16
  %v466 = vrot.slane %v464, 5
  %v467 = vsel %vm411, %v462, %v466
  %v469 = vshrl.u32 %v385, 16
  %v471 = vrot.slane %v469, 4
  %v472 = vshll.u32 %v385, 16
  %v474 = vrot.slane %v472, 5
  %v475 = vor.u32 %v471, %v474
  %v476 = vrot.slane %v475, 4
  %v478 = vshll.u32 %v386, 16
  %v480 = vrot.slane %v478, 5
  %v481 = vsel %vm411, %v476, %v480
  %v483 = vshrl.u32 %v387, 16
  %v485 = vrot.slane %v483, 4
  %v486 = vshll.u32 %v387, 16
  %v488 = vrot.slane %v486, 5
  %v489 = vor.u32 %v485, %v488
  %v490 = vrot.slane %v489, 4
  %v492 = vshll.u32 %v388, 16
  %v494 = vrot.slane %v492, 5
  %v495 = vsel %vm411, %v490, %v494
  %v497 = vshrl.u32 %v389, 16
  %v499 = vrot.slane %v497, 4
  %v500 = vshll.u32 %v389, 16
  %v502 = vrot.slane %v500, 5
  %v503 = vor.u32 %v499, %v502
  %v504 = vrot.slane %v503, 4
  %v506 = vshll.u32 %v390, 16
  %v508 = vrot.slane %v506, 5
  %v509 = vsel %vm411, %v504, %v508
  %v511 = vshrl.u32 %v391, 16
  %v513 = vrot.slane %v511, 4
  %v514 = vshll.u32 %v391, 16
  %v516 = vrot.slane %v514, 5
  %v517 = vor.u32 %v513, %v516
  %v518 = vrot.slane %v517, 4
  %v520 = vshll.u32 %v392, 16
  %v522 = vrot.slane %v520, 5
  %v523 = vsel %vm411, %v518, %v522
  %v525 = vshrl.u32 %v393, 16
  %v527 = vrot.slane %v525, 4
  %v528 = vshll.u32 %v393, 16
  %v530 = vrot.slane %v528, 5
  %v531 = vor.u32 %v527, %v530
  %v532 = vrot.slane %v531, 4
  %v534 = vshll.u32 %v394, 16
  %v536 = vrot.slane %v534, 5
  %v537 = vsel %vm411, %v532, %v536
  %v539 = vshrl.u32 %v395, 16
  %v541 = vrot.slane %v539, 4
  %v542 = vshll.u32 %v395, 16
  %v544 = vrot.slane %v542, 5
  %v545 = vor.u32 %v541, %v544
  %v546 = vrot.slane %v545, 4
  %v548 = vshll.u32 %v396, 16
  %v550 = vrot.slane %v548, 5
  %v551 = vsel %vm411, %v546, %v550
  %v553 = vshrl.u32 %v397, 16
  %v555 = vrot.slane %v553, 4
  %v556 = vshll.u32 %v397, 16
  %v558 = vrot.slane %v556, 5
  %v559 = vor.u32 %v555, %v558
  %v560 = vrot.slane %v559, 4
  %v562 = vshll.u32 %v398, 16
  %v564 = vrot.slane %v562, 5
  %v565 = vsel %vm411, %v560, %v564
  %v567 = vshrl.u32 %v399, 16
  %v569 = vrot.slane %v567, 4
  %v570 = vshll.u32 %v399, 16
  %v572 = vrot.slane %v570, 5
  %v573 = vor.u32 %v569, %v572
  %v574 = vrot.slane %v573, 4
  %v576 = vshll.u32 %v400, 16
  %v578 = vrot.slane %v576, 5
  %v579 = vsel %vm411, %v574, %v578
  %v581 = vshrl.u32 %v401, 16
  %v583 = vrot.slane %v581, 4
  %v584 = vshll.u32 %v401, 16
  %v586 = vrot.slane %v584, 5
  %v587 = vor.u32 %v583, %v586
  %v588 = vrot.slane %v587, 4
  %v590 = vshll.u32 %v402, 16
  %v592 = vrot.slane %v590, 5
  %v593 = vsel %vm411, %v588, %v592
  %v595 = vshrl.u32 %v403, 16
  %v597 = vrot.slane %v595, 4
  %v598 = vshll.u32 %v403, 16
  %v600 = vrot.slane %v598, 5
  %v601 = vor.u32 %v597, %v600
  %v602 = vrot.slane %v601, 4
  %v604 = vshll.u32 %v404, 16
  %v606 = vrot.slane %v604, 5
  %v607 = vsel %vm411, %v602, %v606
  %v609 = vshrl.u32 %v405, 16
  %v611 = vrot.slane %v609, 4
  %v612 = vshll.u32 %v405, 16
  %v614 = vrot.slane %v612, 5
  %v615 = vor.u32 %v611, %v614
  %v616 = vrot.slane %v615, 4
  %v618 = vshll.u32 %v406, 16
  %v620 = vrot.slane %v618, 5
  %v621 = vsel %vm411, %v616, %v620
  %v623 = vshrl.u32 %v407, 16
  %v625 = vrot.slane %v623, 4
  %v626 = vshll.u32 %v407, 16
  %v628 = vrot.slane %v626, 5
  %v629 = vor.u32 %v625, %v628
  %v630 = vrot.slane %v629, 4
  %v632 = vshll.u32 %v408, 16
  %v634 = vrot.slane %v632, 5
  %v635 = vsel %vm411, %v630, %v634
  %v636 = vld [vmem:[%s4] sm:$0xf]
  %v637 = vld [vmem:[%s4 + $0x4] sm:$0xf]
  %v638 = vld [vmem:[%s4 + $0x8] sm:$0xf]
  %v639 = vld [vmem:[%s4 + $0xc] sm:$0xf]
  %v640 = vld [vmem:[%s4 + $0x10] sm:$0xf]
  %v641 = vld [vmem:[%s4 + $0x14] sm:$0xf]
  %v642 = vld [vmem:[%s4 + $0x18] sm:$0xf]
  %v643 = vld [vmem:[%s4 + $0x1c] sm:$0xf]
  %v644 = vld [vmem:[%s4 + $0x20] sm:$0xf]
  %v645 = vld [vmem:[%s4 + $0x24] sm:$0xf]
  %v646 = vld [vmem:[%s4 + $0x28] sm:$0xf]
  %v647 = vld [vmem:[%s4 + $0x2c] sm:$0xf]
  %v648 = vld [vmem:[%s4 + $0x30] sm:$0xf]
  %v649 = vld [vmem:[%s4 + $0x34] sm:$0xf]
  %v650 = vld [vmem:[%s4 + $0x38] sm:$0xf]
  %v651 = vld [vmem:[%s4 + $0x3c] sm:$0xf]
  %v652 = vld [vmem:[#allocation2] sm:$0xe]
  %v653 = vld [vmem:[#allocation2 + $0x8] sm:$0xe]
  %v654 = vld [vmem:[#allocation2 + $0x10] sm:$0xe]
  %v655 = vld [vmem:[#allocation2 + $0x18] sm:$0xe]
  %v656 = vld [vmem:[#allocation2 + $0x20] sm:$0xe]
  %v657 = vld [vmem:[#allocation2 + $0x28] sm:$0xe]
  %v658 = vld [vmem:[#allocation2 + $0x30] sm:$0xe]
  %v659 = vld [vmem:[#allocation2 + $0x38] sm:$0xe]
  %v660 = vld [vmem:[#allocation2 + $0x50] sm:$0xe]
  %v661 = vld [vmem:[#allocation2 + $0x58] sm:$0xe]
  %v662 = vld [vmem:[#allocation2 + $0x60] sm:$0xe]
  %v663 = vld [vmem:[#allocation2 + $0x68] sm:$0xe]
  %v664 = vld [vmem:[#allocation2 + $0x70] sm:$0xe]
  %v665 = vld [vmem:[#allocation2 + $0x78] sm:$0xe]
  %v666 = vld [vmem:[#allocation2 + $0x80] sm:$0xe]
  %v667 = vld [vmem:[#allocation2 + $0x88] sm:$0xe]
  %vm700 = vcmask 1042432
  %vm701 = vcmask 1046532
  %vm702 = vmor %vm700, %vm701
  %v703 = vrot.slane %v652, 5
  %v704 = vrot.slane %v703, 4
  %v705 = vrot.slane %v378, 5
  %v706 = vsel %vm702, %v704, %v705
  %v707 = vrot.slane %v653, 5
  %v708 = vrot.slane %v707, 4
  %v709 = vrot.slane %v380, 5
  %v710 = vsel %vm702, %v708, %v709
  %v711 = vrot.slane %v654, 5
  %v712 = vrot.slane %v711, 4
  %v713 = vrot.slane %v382, 5
  %v714 = vsel %vm702, %v712, %v713
  %v715 = vrot.slane %v655, 5
  %v716 = vrot.slane %v715, 4
  %v717 = vrot.slane %v384, 5
  %v718 = vsel %vm702, %v716, %v717
  %v719 = vrot.slane %v656, 5
  %v720 = vrot.slane %v719, 4
  %v721 = vrot.slane %v386, 5
  %v722 = vsel %vm702, %v720, %v721
  %v723 = vrot.slane %v657, 5
  %v724 = vrot.slane %v723, 4
  %v725 = vrot.slane %v388, 5
  %v726 = vsel %vm702, %v724, %v725
  %v727 = vrot.slane %v658, 5
  %v728 = vrot.slane %v727, 4
  %v729 = vrot.slane %v390, 5
  %v730 = vsel %vm702, %v728, %v729
  %v731 = vrot.slane %v659, 5
  %v732 = vrot.slane %v731, 4
  %v733 = vrot.slane %v392, 5
  %v734 = vsel %vm702, %v732, %v733
  %v735 = vrot.slane %v660, 5
  %v736 = vrot.slane %v735, 4
  %v737 = vrot.slane %v394, 5
  %v738 = vsel %vm702, %v736, %v737
  %v739 = vrot.slane %v661, 5
  %v740 = vrot.slane %v739, 4
  %v741 = vrot.slane %v396, 5
  %v742 = vsel %vm702, %v740, %v741
  %v743 = vrot.slane %v662, 5
  %v744 = vrot.slane %v743, 4
  %v745 = vrot.slane %v398, 5
  %v746 = vsel %vm702, %v744, %v745
  %v747 = vrot.slane %v663, 5
  %v748 = vrot.slane %v747, 4
  %v749 = vrot.slane %v400, 5
  %v750 = vsel %vm702, %v748, %v749
  %v751 = vrot.slane %v664, 5
  %v752 = vrot.slane %v751, 4
  %v753 = vrot.slane %v402, 5
  %v754 = vsel %vm702, %v752, %v753
  %v755 = vrot.slane %v665, 5
  %v756 = vrot.slane %v755, 4
  %v757 = vrot.slane %v404, 5
  %v758 = vsel %vm702, %v756, %v757
  %v759 = vrot.slane %v666, 5
  %v760 = vrot.slane %v759, 4
  %v761 = vrot.slane %v406, 5
  %v762 = vsel %vm702, %v760, %v761
  %v763 = vrot.slane %v667, 5
  %v764 = vrot.slane %v763, 4
  %v765 = vrot.slane %v408, 5
  %v766 = vsel %vm702, %v764, %v765
  %s767 = scalar_lea.vmem %s4, 64
  %v768 = vld [vmem:[%s767] sm:$0xf]
  %v769 = vld [vmem:[%s767 + $0x4] sm:$0xf]
  %v770 = vld [vmem:[%s767 + $0x8] sm:$0xf]
  %v771 = vld [vmem:[%s767 + $0xc] sm:$0xf]
  %v772 = vld [vmem:[%s767 + $0x10] sm:$0xf]
  %v773 = vld [vmem:[%s767 + $0x14] sm:$0xf]
  %v774 = vld [vmem:[%s767 + $0x18] sm:$0xf]
  %v775 = vld [vmem:[%s767 + $0x1c] sm:$0xf]
  %v776 = vld [vmem:[%s767 + $0x20] sm:$0xf]
  %v777 = vld [vmem:[%s767 + $0x24] sm:$0xf]
  %v778 = vld [vmem:[%s767 + $0x28] sm:$0xf]
  %v779 = vld [vmem:[%s767 + $0x2c] sm:$0xf]
  %v780 = vld [vmem:[%s767 + $0x30] sm:$0xf]
  %v781 = vld [vmem:[%s767 + $0x34] sm:$0xf]
  %v782 = vld [vmem:[%s767 + $0x38] sm:$0xf]
  %v783 = vld [vmem:[%s767 + $0x3c] sm:$0xf]
  %v784 = vunpack.c.l.b16 %v706
  %v785 = vunpack.c.l.b16 %v710
  %v786 = vunpack.c.l.b16 %v714
  %v787 = vunpack.c.l.b16 %v718
  %v788 = vunpack.c.l.b16 %v722
  %v789 = vunpack.c.l.b16 %v726
  %v790 = vunpack.c.l.b16 %v730
  %v791 = vunpack.c.l.b16 %v734
  %v792 = vunpack.c.l.b16 %v738
  %v793 = vunpack.c.l.b16 %v742
  %v794 = vunpack.c.l.b16 %v746
  %v795 = vunpack.c.l.b16 %v750
  %v796 = vunpack.c.l.b16 %v754
  %v797 = vunpack.c.l.b16 %v758
  %v798 = vunpack.c.l.b16 %v762
  %v799 = vunpack.c.l.b16 %v766
  %v800 = vpack.c.b16 %v785, %v784
  %v801 = vpack.c.b16 %v787, %v786
  %v802 = vpack.c.b16 %v789, %v788
  %v803 = vpack.c.b16 %v791, %v790
  %v804 = vpack.c.b16 %v793, %v792
  %v805 = vpack.c.b16 %v795, %v794
  %v806 = vpack.c.b16 %v797, %v796
  %v807 = vpack.c.b16 %v799, %v798
  %v832 = vunpack.c.l.b16 %v768
  %v833 = vunpack.c.l.b16 %v769
  %v834 = vunpack.c.l.b16 %v770
  %v835 = vunpack.c.l.b16 %v771
  %v836 = vunpack.c.l.b16 %v772
  %v837 = vunpack.c.l.b16 %v773
  %v838 = vunpack.c.l.b16 %v774
  %v839 = vunpack.c.l.b16 %v775
  %v840 = vunpack.c.l.b16 %v776
  %v841 = vunpack.c.l.b16 %v777
  %v842 = vunpack.c.l.b16 %v778
  %v843 = vunpack.c.l.b16 %v779
  %v844 = vunpack.c.l.b16 %v780
  %v845 = vunpack.c.l.b16 %v781
  %v846 = vunpack.c.l.b16 %v782
  %v847 = vunpack.c.l.b16 %v783
  %v848 = vpack.c.b16 %v833, %v832
  %v849 = vpack.c.b16 %v835, %v834
  %v850 = vpack.c.b16 %v837, %v836
  %v851 = vpack.c.b16 %v839, %v838
  %v852 = vpack.c.b16 %v841, %v840
  %v853 = vpack.c.b16 %v843, %v842
  %v854 = vpack.c.b16 %v845, %v844
  %v855 = vpack.c.b16 %v847, %v846
  %864 = vmatprep.subr.bf16.mxu0 0
  %865 = vmatpush1.bf16.msra.mxu0 %v855
  %866 = vmatprep.subr.bf16.mxu0 0
  %867 = vmatpush1.bf16.msra.mxu0 %v854
  %868 = vmatprep.subr.bf16.mxu0 0
  %869 = vmatpush1.bf16.msra.mxu0 %v853
  %870 = vmatprep.subr.bf16.mxu0 0
  %871 = vmatpush1.bf16.msra.mxu0 %v852
  %872 = vmatprep.subr.bf16.mxu0 0
  %873 = vmatpush1.bf16.msra.mxu0 %v851
  %874 = vmatprep.subr.bf16.mxu0 0
  %875 = vmatpush1.bf16.msra.mxu0 %v850
  %876 = vmatprep.subr.bf16.mxu0 0
  %877 = vmatpush1.bf16.msra.mxu0 %v849
  %878 = vmatprep.subr.bf16.mxu0 0
  %879 = vmatpush1.bf16.msra.mxu0 %v848
  %880 = vmatprep.subr.bf16.mxu0 0
  %881 = vmatpush2.bf16.msra.mxu0 0
  %882 = vmatprep.subr.bf16.mxu0 0
  %883 = vmatpush2.bf16.msra.mxu0 0
  %884 = vmatprep.subr.bf16.mxu0 0
  %885 = vmatpush2.bf16.msra.mxu0 0
  %886 = vmatprep.subr.bf16.mxu0 0
  %887 = vmatpush2.bf16.msra.mxu0 0
  %888 = vmatprep.subr.bf16.mxu0 0
  %889 = vmatpush2.bf16.msra.mxu0 0
  %890 = vmatprep.subr.bf16.mxu0 0
  %891 = vmatpush2.bf16.msra.mxu0 0
  %892 = vmatprep.subr.bf16.mxu0 0
  %893 = vmatpush2.bf16.msra.mxu0 0
  %894 = vmatprep.subr.bf16.mxu0 0
  %895 = vmatpush2.bf16.msra.mxu0 0
  %896 = vmatprep.mubr.bf16.mxu0 0
  %897 = vmatmul.mubr.bf16.gmra.mxu0 %v800
  %v898 = vpop.f32.mrf.mxu0
  %v899 = vadd.f32 0.0, %v898
  %v900 = vpop.f32.mrf.mxu0
  %v901 = vpop.f32.mrf.mxu0
  %v902 = vadd.f32 0.0, %v901
  %v903 = vpop.f32.mrf.mxu0
  %904 = vmatprep.mubr.bf16.mxu0 0
  %905 = vmatmul.mubr.bf16.gmra.mxu0 %v801
  %v906 = vpop.f32.mrf.mxu0
  %v907 = vadd.f32 0.0, %v906
  %v908 = vpop.f32.mrf.mxu0
  %v909 = vpop.f32.mrf.mxu0
  %v910 = vadd.f32 0.0, %v909
  %v911 = vpop.f32.mrf.mxu0
  %912 = vmatprep.mubr.bf16.mxu0 0
  %913 = vmatmul.mubr.bf16.gmra.mxu0 %v802
  %v914 = vpop.f32.mrf.mxu0
  %v915 = vadd.f32 0.0, %v914
  %v916 = vpop.f32.mrf.mxu0
  %v917 = vpop.f32.mrf.mxu0
  %v918 = vadd.f32 0.0, %v917
  %v919 = vpop.f32.mrf.mxu0
  %920 = vmatprep.mubr.bf16.mxu0 0
  %921 = vmatmul.mubr.bf16.gmra.mxu0 %v803
  %v922 = vpop.f32.mrf.mxu0
  %v923 = vadd.f32 0.0, %v922
  %v924 = vpop.f32.mrf.mxu0
  %v925 = vpop.f32.mrf.mxu0
  %v926 = vadd.f32 0.0, %v925
  %v927 = vpop.f32.mrf.mxu0
  %928 = vmatprep.mubr.bf16.mxu0 0
  %929 = vmatmul.mubr.bf16.gmra.mxu0 %v804
  %v930 = vpop.f32.mrf.mxu0
  %v931 = vadd.f32 0.0, %v930
  %v932 = vpop.f32.mrf.mxu0
  %v933 = vpop.f32.mrf.mxu0
  %v934 = vadd.f32 0.0, %v933
  %v935 = vpop.f32.mrf.mxu0
  %936 = vmatprep.mubr.bf16.mxu0 0
  %937 = vmatmul.mubr.bf16.gmra.mxu0 %v805
  %v938 = vpop.f32.mrf.mxu0
  %v939 = vadd.f32 0.0, %v938
  %v940 = vpop.f32.mrf.mxu0
  %v941 = vpop.f32.mrf.mxu0
  %v942 = vadd.f32 0.0, %v941
  %v943 = vpop.f32.mrf.mxu0
  %944 = vmatprep.mubr.bf16.mxu0 0
  %945 = vmatmul.mubr.bf16.gmra.mxu0 %v806
  %v946 = vpop.f32.mrf.mxu0
  %v947 = vadd.f32 0.0, %v946
  %v948 = vpop.f32.mrf.mxu0
  %v949 = vpop.f32.mrf.mxu0
  %v950 = vadd.f32 0.0, %v949
  %v951 = vpop.f32.mrf.mxu0
  %952 = vmatprep.mubr.bf16.mxu0 0
  %953 = vmatmul.mubr.bf16.gmra.mxu0 %v807
  %v954 = vpop.f32.mrf.mxu0
  %v955 = vadd.f32 0.0, %v954
  %v956 = vpop.f32.mrf.mxu0
  %v957 = vpop.f32.mrf.mxu0
  %v958 = vadd.f32 0.0, %v957
  %v959 = vpop.f32.mrf.mxu0
  %960 = vdwg.mxu0
  %v961 = vunpack.c.l.b16 %v425
  %v962 = vunpack.c.l.b16 %v439
  %v963 = vunpack.c.l.b16 %v453
  %v964 = vunpack.c.l.b16 %v467
  %v965 = vunpack.c.l.b16 %v481
  %v966 = vunpack.c.l.b16 %v495
  %v967 = vunpack.c.l.b16 %v509
  %v968 = vunpack.c.l.b16 %v523
  %v969 = vunpack.c.l.b16 %v537
  %v970 = vunpack.c.l.b16 %v551
  %v971 = vunpack.c.l.b16 %v565
  %v972 = vunpack.c.l.b16 %v579
  %v973 = vunpack.c.l.b16 %v593
  %v974 = vunpack.c.l.b16 %v607
  %v975 = vunpack.c.l.b16 %v621
  %v976 = vunpack.c.l.b16 %v635
  %v977 = vpack.c.b16 %v962, %v961
  %v978 = vpack.c.b16 %v964, %v963
  %v979 = vpack.c.b16 %v966, %v965
  %v980 = vpack.c.b16 %v968, %v967
  %v981 = vpack.c.b16 %v970, %v969
  %v982 = vpack.c.b16 %v972, %v971
  %v983 = vpack.c.b16 %v974, %v973
  %v984 = vpack.c.b16 %v976, %v975
  %v1009 = vunpack.c.l.b16 %v636
  %v1010 = vunpack.c.l.b16 %v637
  %v1011 = vunpack.c.l.b16 %v638
  %v1012 = vunpack.c.l.b16 %v639
  %v1013 = vunpack.c.l.b16 %v640
  %v1014 = vunpack.c.l.b16 %v641
  %v1015 = vunpack.c.l.b16 %v642
  %v1016 = vunpack.c.l.b16 %v643
  %v1017 = vunpack.c.l.b16 %v644
  %v1018 = vunpack.c.l.b16 %v645
  %v1019 = vunpack.c.l.b16 %v646
  %v1020 = vunpack.c.l.b16 %v647
  %v1021 = vunpack.c.l.b16 %v648
  %v1022 = vunpack.c.l.b16 %v649
  %v1023 = vunpack.c.l.b16 %v650
  %v1024 = vunpack.c.l.b16 %v651
  %v1025 = vpack.c.b16 %v1010, %v1009
  %v1026 = vpack.c.b16 %v1012, %v1011
  %v1027 = vpack.c.b16 %v1014, %v1013
  %v1028 = vpack.c.b16 %v1016, %v1015
  %v1029 = vpack.c.b16 %v1018, %v1017
  %v1030 = vpack.c.b16 %v1020, %v1019
  %v1031 = vpack.c.b16 %v1022, %v1021
  %v1032 = vpack.c.b16 %v1024, %v1023
  %1041 = vmatprep.subr.bf16.mxu0 0
  %1042 = vmatpush1.bf16.msra.mxu0 %v1032
  %1043 = vmatprep.subr.bf16.mxu0 0
  %1044 = vmatpush1.bf16.msra.mxu0 %v1031
  %1045 = vmatprep.subr.bf16.mxu0 0
  %1046 = vmatpush1.bf16.msra.mxu0 %v1030
  %1047 = vmatprep.subr.bf16.mxu0 0
  %1048 = vmatpush1.bf16.msra.mxu0 %v1029
  %1049 = vmatprep.subr.bf16.mxu0 0
  %1050 = vmatpush1.bf16.msra.mxu0 %v1028
  %1051 = vmatprep.subr.bf16.mxu0 0
  %1052 = vmatpush1.bf16.msra.mxu0 %v1027
  %1053 = vmatprep.subr.bf16.mxu0 0
  %1054 = vmatpush1.bf16.msra.mxu0 %v1026
  %1055 = vmatprep.subr.bf16.mxu0 0
  %1056 = vmatpush1.bf16.msra.mxu0 %v1025
  %1057 = vmatprep.subr.bf16.mxu0 0
  %1058 = vmatpush2.bf16.msra.mxu0 0
  %1059 = vmatprep.subr.bf16.mxu0 0
  %1060 = vmatpush2.bf16.msra.mxu0 0
  %1061 = vmatprep.subr.bf16.mxu0 0
  %1062 = vmatpush2.bf16.msra.mxu0 0
  %1063 = vmatprep.subr.bf16.mxu0 0
  %1064 = vmatpush2.bf16.msra.mxu0 0
  %1065 = vmatprep.subr.bf16.mxu0 0
  %1066 = vmatpush2.bf16.msra.mxu0 0
  %1067 = vmatprep.subr.bf16.mxu0 0
  %1068 = vmatpush2.bf16.msra.mxu0 0
  %1069 = vmatprep.subr.bf16.mxu0 0
  %1070 = vmatpush2.bf16.msra.mxu0 0
  %1071 = vmatprep.subr.bf16.mxu0 0
  %1072 = vmatpush2.bf16.msra.mxu0 0
  %1073 = vmatprep.mubr.bf16.mxu0 0
  %1074 = vmatmul.mubr.bf16.gmra.mxu0 %v977
  %v1075 = vpop.f32.mrf.mxu0
  %v1076 = vadd.f32 %v899, %v1075
  %v1077 = vpop.f32.mrf.mxu0
  %v1078 = vpop.f32.mrf.mxu0
  %v1079 = vadd.f32 %v902, %v1078
  %v1080 = vpop.f32.mrf.mxu0
  %1081 = vmatprep.mubr.bf16.mxu0 0
  %1082 = vmatmul.mubr.bf16.gmra.mxu0 %v978
  %v1083 = vpop.f32.mrf.mxu0
  %v1084 = vadd.f32 %v907, %v1083
  %v1085 = vpop.f32.mrf.mxu0
  %v1086 = vpop.f32.mrf.mxu0
  %v1087 = vadd.f32 %v910, %v1086
  %v1088 = vpop.f32.mrf.mxu0
  %1089 = vmatprep.mubr.bf16.mxu0 0
  %1090 = vmatmul.mubr.bf16.gmra.mxu0 %v979
  %v1091 = vpop.f32.mrf.mxu0
  %v1092 = vadd.f32 %v915, %v1091
  %v1093 = vpop.f32.mrf.mxu0
  %v1094 = vpop.f32.mrf.mxu0
  %v1095 = vadd.f32 %v918, %v1094
  %v1096 = vpop.f32.mrf.mxu0
  %1097 = vmatprep.mubr.bf16.mxu0 0
  %1098 = vmatmul.mubr.bf16.gmra.mxu0 %v980
  %v1099 = vpop.f32.mrf.mxu0
  %v1100 = vadd.f32 %v923, %v1099
  %v1101 = vpop.f32.mrf.mxu0
  %v1102 = vpop.f32.mrf.mxu0
  %v1103 = vadd.f32 %v926, %v1102
  %v1104 = vpop.f32.mrf.mxu0
  %1105 = vmatprep.mubr.bf16.mxu0 0
  %1106 = vmatmul.mubr.bf16.gmra.mxu0 %v981
  %v1107 = vpop.f32.mrf.mxu0
  %v1108 = vadd.f32 %v931, %v1107
  %v1109 = vpop.f32.mrf.mxu0
  %v1110 = vpop.f32.mrf.mxu0
  %v1111 = vadd.f32 %v934, %v1110
  %v1112 = vpop.f32.mrf.mxu0
  %1113 = vmatprep.mubr.bf16.mxu0 0
  %1114 = vmatmul.mubr.bf16.gmra.mxu0 %v982
  %v1115 = vpop.f32.mrf.mxu0
  %v1116 = vadd.f32 %v939, %v1115
  %v1117 = vpop.f32.mrf.mxu0
  %v1118 = vpop.f32.mrf.mxu0
  %v1119 = vadd.f32 %v942, %v1118
  %v1120 = vpop.f32.mrf.mxu0
  %1121 = vmatprep.mubr.bf16.mxu0 0
  %1122 = vmatmul.mubr.bf16.gmra.mxu0 %v983
  %v1123 = vpop.f32.mrf.mxu0
  %v1124 = vadd.f32 %v947, %v1123
  %v1125 = vpop.f32.mrf.mxu0
  %v1126 = vpop.f32.mrf.mxu0
  %v1127 = vadd.f32 %v950, %v1126
  %v1128 = vpop.f32.mrf.mxu0
  %1129 = vmatprep.mubr.bf16.mxu0 0
  %1130 = vmatmul.mubr.bf16.gmra.mxu0 %v984
  %v1131 = vpop.f32.mrf.mxu0
  %v1132 = vadd.f32 %v955, %v1131
  %v1133 = vpop.f32.mrf.mxu0
  %v1134 = vpop.f32.mrf.mxu0
  %v1135 = vadd.f32 %v958, %v1134
  %v1136 = vpop.f32.mrf.mxu0
  %1137 = vdwg.mxu0
  %v1138 = vld [vmem:[#allocation2 + $0x4] sm:$0x3]
  %v1139 = vld [vmem:[#allocation2 + $0xc] sm:$0x3]
  %v1140 = vld [vmem:[#allocation2 + $0x14] sm:$0x3]
  %v1141 = vld [vmem:[#allocation2 + $0x1c] sm:$0x3]
  %v1142 = vld [vmem:[#allocation2 + $0x24] sm:$0x3]
  %v1143 = vld [vmem:[#allocation2 + $0x2c] sm:$0x3]
  %v1144 = vld [vmem:[#allocation2 + $0x34] sm:$0x3]
  %v1145 = vld [vmem:[#allocation2 + $0x3c] sm:$0x3]
  %v1146 = vld [vmem:[#allocation2 + $0x54] sm:$0x3]
  %v1147 = vld [vmem:[#allocation2 + $0x5c] sm:$0x3]
  %v1148 = vld [vmem:[#allocation2 + $0x64] sm:$0x3]
  %v1149 = vld [vmem:[#allocation2 + $0x6c] sm:$0x3]
  %v1150 = vld [vmem:[#allocation2 + $0x74] sm:$0x3]
  %v1151 = vld [vmem:[#allocation2 + $0x7c] sm:$0x3]
  %v1152 = vld [vmem:[#allocation2 + $0x84] sm:$0x3]
  %v1153 = vld [vmem:[#allocation2 + $0x8c] sm:$0x3]
  %vm1154 = vsmask.f32 2304
  %vm1155 = vsmask.f32 6416
  %vm1156 = vmor %vm1154, %vm1155
  %v1158 = vshrl.u32 %v652, 16
  %v1160 = vrot.slane %v1158, 5
  %v1161 = vshll.u32 %v652, 16
  %v1163 = vrot.slane %v1161, 6
  %v1164 = vor.u32 %v1160, %v1163
  %v1165 = vrot.slane %v1164, 4
  %v1167 = vshrl.u32 %v1138, 16
  %v1169 = vrot.slane %v1167, 5
  %v1170 = vshll.u32 %v1138, 16
  %v1172 = vrot.slane %v1170, 6
  %v1173 = vor.u32 %v1169, %v1172
  %v1174 = vsel %vm1156, %v1165, %v1173
  %v1176 = vshrl.u32 %v653, 16
  %v1178 = vrot.slane %v1176, 5
  %v1179 = vshll.u32 %v653, 16
  %v1181 = vrot.slane %v1179, 6
  %v1182 = vor.u32 %v1178, %v1181
  %v1183 = vrot.slane %v1182, 4
  %v1185 = vshrl.u32 %v1139, 16
  %v1187 = vrot.slane %v1185, 5
  %v1188 = vshll.u32 %v1139, 16
  %v1190 = vrot.slane %v1188, 6
  %v1191 = vor.u32 %v1187, %v1190
  %v1192 = vsel %vm1156, %v1183, %v1191
  %v1194 = vshrl.u32 %v654, 16
  %v1196 = vrot.slane %v1194, 5
  %v1197 = vshll.u32 %v654, 16
  %v1199 = vrot.slane %v1197, 6
  %v1200 = vor.u32 %v1196, %v1199
  %v1201 = vrot.slane %v1200, 4
  %v1203 = vshrl.u32 %v1140, 16
  %v1205 = vrot.slane %v1203, 5
  %v1206 = vshll.u32 %v1140, 16
  %v1208 = vrot.slane %v1206, 6
  %v1209 = vor.u32 %v1205, %v1208
  %v1210 = vsel %vm1156, %v1201, %v1209
  %v1212 = vshrl.u32 %v655, 16
  %v1214 = vrot.slane %v1212, 5
  %v1215 = vshll.u32 %v655, 16
  %v1217 = vrot.slane %v1215, 6
  %v1218 = vor.u32 %v1214, %v1217
  %v1219 = vrot.slane %v1218, 4
  %v1221 = vshrl.u32 %v1141, 16
  %v1223 = vrot.slane %v1221, 5
  %v1224 = vshll.u32 %v1141, 16
  %v1226 = vrot.slane %v1224, 6
  %v1227 = vor.u32 %v1223, %v1226
  %v1228 = vsel %vm1156, %v1219, %v1227
  %v1230 = vshrl.u32 %v656, 16
  %v1232 = vrot.slane %v1230, 5
  %v1233 = vshll.u32 %v656, 16
  %v1235 = vrot.slane %v1233, 6
  %v1236 = vor.u32 %v1232, %v1235
  %v1237 = vrot.slane %v1236, 4
  %v1239 = vshrl.u32 %v1142, 16
  %v1241 = vrot.slane %v1239, 5
  %v1242 = vshll.u32 %v1142, 16
  %v1244 = vrot.slane %v1242, 6
  %v1245 = vor.u32 %v1241, %v1244
  %v1246 = vsel %vm1156, %v1237, %v1245
  %v1248 = vshrl.u32 %v657, 16
  %v1250 = vrot.slane %v1248, 5
  %v1251 = vshll.u32 %v657, 16
  %v1253 = vrot.slane %v1251, 6
  %v1254 = vor.u32 %v1250, %v1253
  %v1255 = vrot.slane %v1254, 4
  %v1257 = vshrl.u32 %v1143, 16
  %v1259 = vrot.slane %v1257, 5
  %v1260 = vshll.u32 %v1143, 16
  %v1262 = vrot.slane %v1260, 6
  %v1263 = vor.u32 %v1259, %v1262
  %v1264 = vsel %vm1156, %v1255, %v1263
  %v1266 = vshrl.u32 %v658, 16
  %v1268 = vrot.slane %v1266, 5
  %v1269 = vshll.u32 %v658, 16
  %v1271 = vrot.slane %v1269, 6
  %v1272 = vor.u32 %v1268, %v1271
  %v1273 = vrot.slane %v1272, 4
  %v1275 = vshrl.u32 %v1144, 16
  %v1277 = vrot.slane %v1275, 5
  %v1278 = vshll.u32 %v1144, 16
  %v1280 = vrot.slane %v1278, 6
  %v1281 = vor.u32 %v1277, %v1280
  %v1282 = vsel %vm1156, %v1273, %v1281
  %v1284 = vshrl.u32 %v659, 16
  %v1286 = vrot.slane %v1284, 5
  %v1287 = vshll.u32 %v659, 16
  %v1289 = vrot.slane %v1287, 6
  %v1290 = vor.u32 %v1286, %v1289
  %v1291 = vrot.slane %v1290, 4
  %v1293 = vshrl.u32 %v1145, 16
  %v1295 = vrot.slane %v1293, 5
  %v1296 = vshll.u32 %v1145, 16
  %v1298 = vrot.slane %v1296, 6
  %v1299 = vor.u32 %v1295, %v1298
  %v1300 = vsel %vm1156, %v1291, %v1299
  %v1302 = vshrl.u32 %v660, 16
  %v1304 = vrot.slane %v1302, 5
  %v1305 = vshll.u32 %v660, 16
  %v1307 = vrot.slane %v1305, 6
  %v1308 = vor.u32 %v1304, %v1307
  %v1309 = vrot.slane %v1308, 4
  %v1311 = vshrl.u32 %v1146, 16
  %v1313 = vrot.slane %v1311, 5
  %v1314 = vshll.u32 %v1146, 16
  %v1316 = vrot.slane %v1314, 6
  %v1317 = vor.u32 %v1313, %v1316
  %v1318 = vsel %vm1156, %v1309, %v1317
  %v1320 = vshrl.u32 %v661, 16
  %v1322 = vrot.slane %v1320, 5
  %v1323 = vshll.u32 %v661, 16
  %v1325 = vrot.slane %v1323, 6
  %v1326 = vor.u32 %v1322, %v1325
  %v1327 = vrot.slane %v1326, 4
  %v1329 = vshrl.u32 %v1147, 16
  %v1331 = vrot.slane %v1329, 5
  %v1332 = vshll.u32 %v1147, 16
  %v1334 = vrot.slane %v1332, 6
  %v1335 = vor.u32 %v1331, %v1334
  %v1336 = vsel %vm1156, %v1327, %v1335
  %v1338 = vshrl.u32 %v662, 16
  %v1340 = vrot.slane %v1338, 5
  %v1341 = vshll.u32 %v662, 16
  %v1343 = vrot.slane %v1341, 6
  %v1344 = vor.u32 %v1340, %v1343
  %v1345 = vrot.slane %v1344, 4
  %v1347 = vshrl.u32 %v1148, 16
  %v1349 = vrot.slane %v1347, 5
  %v1350 = vshll.u32 %v1148, 16
  %v1352 = vrot.slane %v1350, 6
  %v1353 = vor.u32 %v1349, %v1352
  %v1354 = vsel %vm1156, %v1345, %v1353
  %v1356 = vshrl.u32 %v663, 16
  %v1358 = vrot.slane %v1356, 5
  %v1359 = vshll.u32 %v663, 16
  %v1361 = vrot.slane %v1359, 6
  %v1362 = vor.u32 %v1358, %v1361
  %v1363 = vrot.slane %v1362, 4
  %v1365 = vshrl.u32 %v1149, 16
  %v1367 = vrot.slane %v1365, 5
  %v1368 = vshll.u32 %v1149, 16
  %v1370 = vrot.slane %v1368, 6
  %v1371 = vor.u32 %v1367, %v1370
  %v1372 = vsel %vm1156, %v1363, %v1371
  %v1374 = vshrl.u32 %v664, 16
  %v1376 = vrot.slane %v1374, 5
  %v1377 = vshll.u32 %v664, 16
  %v1379 = vrot.slane %v1377, 6
  %v1380 = vor.u32 %v1376, %v1379
  %v1381 = vrot.slane %v1380, 4
  %v1383 = vshrl.u32 %v1150, 16
  %v1385 = vrot.slane %v1383, 5
  %v1386 = vshll.u32 %v1150, 16
  %v1388 = vrot.slane %v1386, 6
  %v1389 = vor.u32 %v1385, %v1388
  %v1390 = vsel %vm1156, %v1381, %v1389
  %v1392 = vshrl.u32 %v665, 16
  %v1394 = vrot.slane %v1392, 5
  %v1395 = vshll.u32 %v665, 16
  %v1397 = vrot.slane %v1395, 6
  %v1398 = vor.u32 %v1394, %v1397
  %v1399 = vrot.slane %v1398, 4
  %v1401 = vshrl.u32 %v1151, 16
  %v1403 = vrot.slane %v1401, 5
  %v1404 = vshll.u32 %v1151, 16
  %v1406 = vrot.slane %v1404, 6
  %v1407 = vor.u32 %v1403, %v1406
  %v1408 = vsel %vm1156, %v1399, %v1407
  %v1410 = vshrl.u32 %v666, 16
  %v1412 = vrot.slane %v1410, 5
  %v1413 = vshll.u32 %v666, 16
  %v1415 = vrot.slane %v1413, 6
  %v1416 = vor.u32 %v1412, %v1415
  %v1417 = vrot.slane %v1416, 4
  %v1419 = vshrl.u32 %v1152, 16
  %v1421 = vrot.slane %v1419, 5
  %v1422 = vshll.u32 %v1152, 16
  %v1424 = vrot.slane %v1422, 6
  %v1425 = vor.u32 %v1421, %v1424
  %v1426 = vsel %vm1156, %v1417, %v1425
  %v1428 = vshrl.u32 %v667, 16
  %v1430 = vrot.slane %v1428, 5
  %v1431 = vshll.u32 %v667, 16
  %v1433 = vrot.slane %v1431, 6
  %v1434 = vor.u32 %v1430, %v1433
  %v1435 = vrot.slane %v1434, 4
  %v1437 = vshrl.u32 %v1153, 16
  %v1439 = vrot.slane %v1437, 5
  %v1440 = vshll.u32 %v1153, 16
  %v1442 = vrot.slane %v1440, 6
  %v1443 = vor.u32 %v1439, %v1442
  %v1444 = vsel %vm1156, %v1435, %v1443
  %s1445 = scalar_lea.vmem %s4, 128
  %v1446 = vld [vmem:[%s1445] sm:$0xf]
  %v1447 = vld [vmem:[%s1445 + $0x4] sm:$0xf]
  %v1448 = vld [vmem:[%s1445 + $0x8] sm:$0xf]
  %v1449 = vld [vmem:[%s1445 + $0xc] sm:$0xf]
  %v1450 = vld [vmem:[%s1445 + $0x10] sm:$0xf]
  %v1451 = vld [vmem:[%s1445 + $0x14] sm:$0xf]
  %v1452 = vld [vmem:[%s1445 + $0x18] sm:$0xf]
  %v1453 = vld [vmem:[%s1445 + $0x1c] sm:$0xf]
  %v1454 = vld [vmem:[%s1445 + $0x20] sm:$0xf]
  %v1455 = vld [vmem:[%s1445 + $0x24] sm:$0xf]
  %v1456 = vld [vmem:[%s1445 + $0x28] sm:$0xf]
  %v1457 = vld [vmem:[%s1445 + $0x2c] sm:$0xf]
  %v1458 = vld [vmem:[%s1445 + $0x30] sm:$0xf]
  %v1459 = vld [vmem:[%s1445 + $0x34] sm:$0xf]
  %v1460 = vld [vmem:[%s1445 + $0x38] sm:$0xf]
  %v1461 = vld [vmem:[%s1445 + $0x3c] sm:$0xf]
  %v1462 = vunpack.c.l.b16 %v1174
  %v1463 = vunpack.c.l.b16 %v1192
  %v1464 = vunpack.c.l.b16 %v1210
  %v1465 = vunpack.c.l.b16 %v1228
  %v1466 = vunpack.c.l.b16 %v1246
  %v1467 = vunpack.c.l.b16 %v1264
  %v1468 = vunpack.c.l.b16 %v1282
  %v1469 = vunpack.c.l.b16 %v1300
  %v1470 = vunpack.c.l.b16 %v1318
  %v1471 = vunpack.c.l.b16 %v1336
  %v1472 = vunpack.c.l.b16 %v1354
  %v1473 = vunpack.c.l.b16 %v1372
  %v1474 = vunpack.c.l.b16 %v1390
  %v1475 = vunpack.c.l.b16 %v1408
  %v1476 = vunpack.c.l.b16 %v1426
  %v1477 = vunpack.c.l.b16 %v1444
  %v1478 = vpack.c.b16 %v1463, %v1462
  %v1479 = vpack.c.b16 %v1465, %v1464
  %v1480 = vpack.c.b16 %v1467, %v1466
  %v1481 = vpack.c.b16 %v1469, %v1468
  %v1482 = vpack.c.b16 %v1471, %v1470
  %v1483 = vpack.c.b16 %v1473, %v1472
  %v1484 = vpack.c.b16 %v1475, %v1474
  %v1485 = vpack.c.b16 %v1477, %v1476
  %v1510 = vunpack.c.l.b16 %v1446
  %v1511 = vunpack.c.l.b16 %v1447
  %v1512 = vunpack.c.l.b16 %v1448
  %v1513 = vunpack.c.l.b16 %v1449
  %v1514 = vunpack.c.l.b16 %v1450
  %v1515 = vunpack.c.l.b16 %v1451
  %v1516 = vunpack.c.l.b16 %v1452
  %v1517 = vunpack.c.l.b16 %v1453
  %v1518 = vunpack.c.l.b16 %v1454
  %v1519 = vunpack.c.l.b16 %v1455
  %v1520 = vunpack.c.l.b16 %v1456
  %v1521 = vunpack.c.l.b16 %v1457
  %v1522 = vunpack.c.l.b16 %v1458
  %v1523 = vunpack.c.l.b16 %v1459
  %v1524 = vunpack.c.l.b16 %v1460
  %v1525 = vunpack.c.l.b16 %v1461
  %v1526 = vpack.c.b16 %v1511, %v1510
  %v1527 = vpack.c.b16 %v1513, %v1512
  %v1528 = vpack.c.b16 %v1515, %v1514
  %v1529 = vpack.c.b16 %v1517, %v1516
  %v1530 = vpack.c.b16 %v1519, %v1518
  %v1531 = vpack.c.b16 %v1521, %v1520
  %v1532 = vpack.c.b16 %v1523, %v1522
  %v1533 = vpack.c.b16 %v1525, %v1524
  %1542 = vmatprep.subr.bf16.mxu0 0
  %1543 = vmatpush1.bf16.msra.mxu0 %v1533
  %1544 = vmatprep.subr.bf16.mxu0 0
  %1545 = vmatpush1.bf16.msra.mxu0 %v1532
  %1546 = vmatprep.subr.bf16.mxu0 0
  %1547 = vmatpush1.bf16.msra.mxu0 %v1531
  %1548 = vmatprep.subr.bf16.mxu0 0
  %1549 = vmatpush1.bf16.msra.mxu0 %v1530
  %1550 = vmatprep.subr.bf16.mxu0 0
  %1551 = vmatpush1.bf16.msra.mxu0 %v1529
  %1552 = vmatprep.subr.bf16.mxu0 0
  %1553 = vmatpush1.bf16.msra.mxu0 %v1528
  %1554 = vmatprep.subr.bf16.mxu0 0
  %1555 = vmatpush1.bf16.msra.mxu0 %v1527
  %1556 = vmatprep.subr.bf16.mxu0 0
  %1557 = vmatpush1.bf16.msra.mxu0 %v1526
  %1558 = vmatprep.subr.bf16.mxu0 0
  %1559 = vmatpush2.bf16.msra.mxu0 0
  %1560 = vmatprep.subr.bf16.mxu0 0
  %1561 = vmatpush2.bf16.msra.mxu0 0
  %1562 = vmatprep.subr.bf16.mxu0 0
  %1563 = vmatpush2.bf16.msra.mxu0 0
  %1564 = vmatprep.subr.bf16.mxu0 0
  %1565 = vmatpush2.bf16.msra.mxu0 0
  %1566 = vmatprep.subr.bf16.mxu0 0
  %1567 = vmatpush2.bf16.msra.mxu0 0
  %1568 = vmatprep.subr.bf16.mxu0 0
  %1569 = vmatpush2.bf16.msra.mxu0 0
  %1570 = vmatprep.subr.bf16.mxu0 0
  %1571 = vmatpush2.bf16.msra.mxu0 0
  %1572 = vmatprep.subr.bf16.mxu0 0
  %1573 = vmatpush2.bf16.msra.mxu0 0
  %1574 = vmatprep.mubr.bf16.mxu0 0
  %1575 = vmatmul.mubr.bf16.gmra.mxu0 %v1478
  %v1576 = vpop.f32.mrf.mxu0
  %v1577 = vadd.f32 0.0, %v1576
  %v1578 = vpop.f32.mrf.mxu0
  %v1579 = vpop.f32.mrf.mxu0
  %v1580 = vadd.f32 0.0, %v1579
  %v1581 = vpop.f32.mrf.mxu0
  %1582 = vmatprep.mubr.bf16.mxu0 0
  %1583 = vmatmul.mubr.bf16.gmra.mxu0 %v1479
  %v1584 = vpop.f32.mrf.mxu0
  %v1585 = vadd.f32 0.0, %v1584
  %v1586 = vpop.f32.mrf.mxu0
  %v1587 = vpop.f32.mrf.mxu0
  %v1588 = vadd.f32 0.0, %v1587
  %v1589 = vpop.f32.mrf.mxu0
  %1590 = vmatprep.mubr.bf16.mxu0 0
  %1591 = vmatmul.mubr.bf16.gmra.mxu0 %v1480
  %v1592 = vpop.f32.mrf.mxu0
  %v1593 = vadd.f32 0.0, %v1592
  %v1594 = vpop.f32.mrf.mxu0
  %v1595 = vpop.f32.mrf.mxu0
  %v1596 = vadd.f32 0.0, %v1595
  %v1597 = vpop.f32.mrf.mxu0
  %1598 = vmatprep.mubr.bf16.mxu0 0
  %1599 = vmatmul.mubr.bf16.gmra.mxu0 %v1481
  %v1600 = vpop.f32.mrf.mxu0
  %v1601 = vadd.f32 0.0, %v1600
  %v1602 = vpop.f32.mrf.mxu0
  %v1603 = vpop.f32.mrf.mxu0
  %v1604 = vadd.f32 0.0, %v1603
  %v1605 = vpop.f32.mrf.mxu0
  %1606 = vmatprep.mubr.bf16.mxu0 0
  %1607 = vmatmul.mubr.bf16.gmra.mxu0 %v1482
  %v1608 = vpop.f32.mrf.mxu0
  %v1609 = vadd.f32 0.0, %v1608
  %v1610 = vpop.f32.mrf.mxu0
  %v1611 = vpop.f32.mrf.mxu0
  %v1612 = vadd.f32 0.0, %v1611
  %v1613 = vpop.f32.mrf.mxu0
  %1614 = vmatprep.mubr.bf16.mxu0 0
  %1615 = vmatmul.mubr.bf16.gmra.mxu0 %v1483
  %v1616 = vpop.f32.mrf.mxu0
  %v1617 = vadd.f32 0.0, %v1616
  %v1618 = vpop.f32.mrf.mxu0
  %v1619 = vpop.f32.mrf.mxu0
  %v1620 = vadd.f32 0.0, %v1619
  %v1621 = vpop.f32.mrf.mxu0
  %1622 = vmatprep.mubr.bf16.mxu0 0
  %1623 = vmatmul.mubr.bf16.gmra.mxu0 %v1484
  %v1624 = vpop.f32.mrf.mxu0
  %v1625 = vadd.f32 0.0, %v1624
  %v1626 = vpop.f32.mrf.mxu0
  %v1627 = vpop.f32.mrf.mxu0
  %v1628 = vadd.f32 0.0, %v1627
  %v1629 = vpop.f32.mrf.mxu0
  %1630 = vmatprep.mubr.bf16.mxu0 0
  %1631 = vmatmul.mubr.bf16.gmra.mxu0 %v1485
  %v1632 = vpop.f32.mrf.mxu0
  %v1633 = vadd.f32 0.0, %v1632
  %v1634 = vpop.f32.mrf.mxu0
  %v1635 = vpop.f32.mrf.mxu0
  %v1636 = vadd.f32 0.0, %v1635
  %v1637 = vpop.f32.mrf.mxu0
  %1638 = vdwg.mxu0
  %v1639 = vadd.f32 %v1076, %v1577
  %v1640 = vadd.f32 %v1079, %v1580
  %v1641 = vadd.f32 %v1084, %v1585
  %v1642 = vadd.f32 %v1087, %v1588
  %v1643 = vadd.f32 %v1092, %v1593
  %v1644 = vadd.f32 %v1095, %v1596
  %v1645 = vadd.f32 %v1100, %v1601
  %v1646 = vadd.f32 %v1103, %v1604
  %v1647 = vadd.f32 %v1108, %v1609
  %v1648 = vadd.f32 %v1111, %v1612
  %v1649 = vadd.f32 %v1116, %v1617
  %v1650 = vadd.f32 %v1119, %v1620
  %v1651 = vadd.f32 %v1124, %v1625
  %v1652 = vadd.f32 %v1127, %v1628
  %v1653 = vadd.f32 %v1132, %v1633
  %v1654 = vadd.f32 %v1135, %v1636
  %v1655 = vld [vmem:[%s344] sm:$0xf]
  %v1656 = vld [vmem:[%s344 + $0x4] sm:$0x1]
  %v1657 = vld [vmem:[%s344 + $0x8] sm:$0xf]
  %v1658 = vld [vmem:[%s344 + $0xc] sm:$0x1]
  %v1659 = vld [vmem:[%s344 + $0x10] sm:$0xf]
  %v1660 = vld [vmem:[%s344 + $0x14] sm:$0x1]
  %v1661 = vld [vmem:[%s344 + $0x18] sm:$0xf]
  %v1662 = vld [vmem:[%s344 + $0x1c] sm:$0x1]
  %v1663 = vld [vmem:[%s344 + $0x20] sm:$0xf]
  %v1664 = vld [vmem:[%s344 + $0x24] sm:$0x1]
  %v1665 = vld [vmem:[%s344 + $0x28] sm:$0xf]
  %v1666 = vld [vmem:[%s344 + $0x2c] sm:$0x1]
  %v1667 = vld [vmem:[%s344 + $0x30] sm:$0xf]
  %v1668 = vld [vmem:[%s344 + $0x34] sm:$0x1]
  %v1669 = vld [vmem:[%s344 + $0x38] sm:$0xf]
  %v1670 = vld [vmem:[%s344 + $0x3c] sm:$0x1]
  %v1671 = vld [vmem:[%s344 + $0x50] sm:$0xf]
  %v1672 = vld [vmem:[%s344 + $0x54] sm:$0x1]
  %v1673 = vld [vmem:[%s344 + $0x58] sm:$0xf]
  %v1674 = vld [vmem:[%s344 + $0x5c] sm:$0x1]
  %v1675 = vld [vmem:[%s344 + $0x60] sm:$0xf]
  %v1676 = vld [vmem:[%s344 + $0x64] sm:$0x1]
  %v1677 = vld [vmem:[%s344 + $0x68] sm:$0xf]
  %v1678 = vld [vmem:[%s344 + $0x6c] sm:$0x1]
  %v1679 = vld [vmem:[%s344 + $0x70] sm:$0xf]
  %v1680 = vld [vmem:[%s344 + $0x74] sm:$0x1]
  %v1681 = vld [vmem:[%s344 + $0x78] sm:$0xf]
  %v1682 = vld [vmem:[%s344 + $0x7c] sm:$0x1]
  %v1683 = vld [vmem:[%s344 + $0x80] sm:$0xf]
  %v1684 = vld [vmem:[%s344 + $0x84] sm:$0x1]
  %v1685 = vld [vmem:[%s344 + $0x88] sm:$0xf]
  %v1686 = vld [vmem:[%s344 + $0x8c] sm:$0x1]
  %v1688 = vshrl.u32 %v1655, 16
  %v1690 = vrot.slane %v1688, 4
  %v1691 = vshll.u32 %v1655, 16
  %v1693 = vrot.slane %v1691, 5
  %v1694 = vor.u32 %v1690, %v1693
  %v1695 = vrot.slane %v1694, 4
  %v1697 = vshll.u32 %v1656, 16
  %v1699 = vrot.slane %v1697, 5
  %v1700 = vsel %vm411, %v1695, %v1699
  %v1702 = vshrl.u32 %v1657, 16
  %v1704 = vrot.slane %v1702, 4
  %v1705 = vshll.u32 %v1657, 16
  %v1707 = vrot.slane %v1705, 5
  %v1708 = vor.u32 %v1704, %v1707
  %v1709 = vrot.slane %v1708, 4
  %v1711 = vshll.u32 %v1658, 16
  %v1713 = vrot.slane %v1711, 5
  %v1714 = vsel %vm411, %v1709, %v1713
  %v1716 = vshrl.u32 %v1659, 16
  %v1718 = vrot.slane %v1716, 4
  %v1719 = vshll.u32 %v1659, 16
  %v1721 = vrot.slane %v1719, 5
  %v1722 = vor.u32 %v1718, %v1721
  %v1723 = vrot.slane %v1722, 4
  %v1725 = vshll.u32 %v1660, 16
  %v1727 = vrot.slane %v1725, 5
  %v1728 = vsel %vm411, %v1723, %v1727
  %v1730 = vshrl.u32 %v1661, 16
  %v1732 = vrot.slane %v1730, 4
  %v1733 = vshll.u32 %v1661, 16
  %v1735 = vrot.slane %v1733, 5
  %v1736 = vor.u32 %v1732, %v1735
  %v1737 = vrot.slane %v1736, 4
  %v1739 = vshll.u32 %v1662, 16
  %v1741 = vrot.slane %v1739, 5
  %v1742 = vsel %vm411, %v1737, %v1741
  %v1744 = vshrl.u32 %v1663, 16
  %v1746 = vrot.slane %v1744, 4
  %v1747 = vshll.u32 %v1663, 16
  %v1749 = vrot.slane %v1747, 5
  %v1750 = vor.u32 %v1746, %v1749
  %v1751 = vrot.slane %v1750, 4
  %v1753 = vshll.u32 %v1664, 16
  %v1755 = vrot.slane %v1753, 5
  %v1756 = vsel %vm411, %v1751, %v1755
  %v1758 = vshrl.u32 %v1665, 16
  %v1760 = vrot.slane %v1758, 4
  %v1761 = vshll.u32 %v1665, 16
  %v1763 = vrot.slane %v1761, 5
  %v1764 = vor.u32 %v1760, %v1763
  %v1765 = vrot.slane %v1764, 4
  %v1767 = vshll.u32 %v1666, 16
  %v1769 = vrot.slane %v1767, 5
  %v1770 = vsel %vm411, %v1765, %v1769
  %v1772 = vshrl.u32 %v1667, 16
  %v1774 = vrot.slane %v1772, 4
  %v1775 = vshll.u32 %v1667, 16
  %v1777 = vrot.slane %v1775, 5
  %v1778 = vor.u32 %v1774, %v1777
  %v1779 = vrot.slane %v1778, 4
  %v1781 = vshll.u32 %v1668, 16
  %v1783 = vrot.slane %v1781, 5
  %v1784 = vsel %vm411, %v1779, %v1783
  %v1786 = vshrl.u32 %v1669, 16
  %v1788 = vrot.slane %v1786, 4
  %v1789 = vshll.u32 %v1669, 16
  %v1791 = vrot.slane %v1789, 5
  %v1792 = vor.u32 %v1788, %v1791
  %v1793 = vrot.slane %v1792, 4
  %v1795 = vshll.u32 %v1670, 16
  %v1797 = vrot.slane %v1795, 5
  %v1798 = vsel %vm411, %v1793, %v1797
  %v1800 = vshrl.u32 %v1671, 16
  %v1802 = vrot.slane %v1800, 4
  %v1803 = vshll.u32 %v1671, 16
  %v1805 = vrot.slane %v1803, 5
  %v1806 = vor.u32 %v1802, %v1805
  %v1807 = vrot.slane %v1806, 4
  %v1809 = vshll.u32 %v1672, 16
  %v1811 = vrot.slane %v1809, 5
  %v1812 = vsel %vm411, %v1807, %v1811
  %v1814 = vshrl.u32 %v1673, 16
  %v1816 = vrot.slane %v1814, 4
  %v1817 = vshll.u32 %v1673, 16
  %v1819 = vrot.slane %v1817, 5
  %v1820 = vor.u32 %v1816, %v1819
  %v1821 = vrot.slane %v1820, 4
  %v1823 = vshll.u32 %v1674, 16
  %v1825 = vrot.slane %v1823, 5
  %v1826 = vsel %vm411, %v1821, %v1825
  %v1828 = vshrl.u32 %v1675, 16
  %v1830 = vrot.slane %v1828, 4
  %v1831 = vshll.u32 %v1675, 16
  %v1833 = vrot.slane %v1831, 5
  %v1834 = vor.u32 %v1830, %v1833
  %v1835 = vrot.slane %v1834, 4
  %v1837 = vshll.u32 %v1676, 16
  %v1839 = vrot.slane %v1837, 5
  %v1840 = vsel %vm411, %v1835, %v1839
  %v1842 = vshrl.u32 %v1677, 16
  %v1844 = vrot.slane %v1842, 4
  %v1845 = vshll.u32 %v1677, 16
  %v1847 = vrot.slane %v1845, 5
  %v1848 = vor.u32 %v1844, %v1847
  %v1849 = vrot.slane %v1848, 4
  %v1851 = vshll.u32 %v1678, 16
  %v1853 = vrot.slane %v1851, 5
  %v1854 = vsel %vm411, %v1849, %v1853
  %v1856 = vshrl.u32 %v1679, 16
  %v1858 = vrot.slane %v1856, 4
  %v1859 = vshll.u32 %v1679, 16
  %v1861 = vrot.slane %v1859, 5
  %v1862 = vor.u32 %v1858, %v1861
  %v1863 = vrot.slane %v1862, 4
  %v1865 = vshll.u32 %v1680, 16
  %v1867 = vrot.slane %v1865, 5
  %v1868 = vsel %vm411, %v1863, %v1867
  %v1870 = vshrl.u32 %v1681, 16
  %v1872 = vrot.slane %v1870, 4
  %v1873 = vshll.u32 %v1681, 16
  %v1875 = vrot.slane %v1873, 5
  %v1876 = vor.u32 %v1872, %v1875
  %v1877 = vrot.slane %v1876, 4
  %v1879 = vshll.u32 %v1682, 16
  %v1881 = vrot.slane %v1879, 5
  %v1882 = vsel %vm411, %v1877, %v1881
  %v1884 = vshrl.u32 %v1683, 16
  %v1886 = vrot.slane %v1884, 4
  %v1887 = vshll.u32 %v1683, 16
  %v1889 = vrot.slane %v1887, 5
  %v1890 = vor.u32 %v1886, %v1889
  %v1891 = vrot.slane %v1890, 4
  %v1893 = vshll.u32 %v1684, 16
  %v1895 = vrot.slane %v1893, 5
  %v1896 = vsel %vm411, %v1891, %v1895
  %v1898 = vshrl.u32 %v1685, 16
  %v1900 = vrot.slane %v1898, 4
  %v1901 = vshll.u32 %v1685, 16
  %v1903 = vrot.slane %v1901, 5
  %v1904 = vor.u32 %v1900, %v1903
  %v1905 = vrot.slane %v1904, 4
  %v1907 = vshll.u32 %v1686, 16
  %v1909 = vrot.slane %v1907, 5
  %v1910 = vsel %vm411, %v1905, %v1909
  %s1911 = scalar_lea.vmem %s4, 192
  %v1912 = vld [vmem:[%s1911] sm:$0xf]
  %v1913 = vld [vmem:[%s1911 + $0x4] sm:$0xf]
  %v1914 = vld [vmem:[%s1911 + $0x8] sm:$0xf]
  %v1915 = vld [vmem:[%s1911 + $0xc] sm:$0xf]
  %v1916 = vld [vmem:[%s1911 + $0x10] sm:$0xf]
  %v1917 = vld [vmem:[%s1911 + $0x14] sm:$0xf]
  %v1918 = vld [vmem:[%s1911 + $0x18] sm:$0xf]
  %v1919 = vld [vmem:[%s1911 + $0x1c] sm:$0xf]
  %v1920 = vld [vmem:[%s1911 + $0x20] sm:$0xf]
  %v1921 = vld [vmem:[%s1911 + $0x24] sm:$0xf]
  %v1922 = vld [vmem:[%s1911 + $0x28] sm:$0xf]
  %v1923 = vld [vmem:[%s1911 + $0x2c] sm:$0xf]
  %v1924 = vld [vmem:[%s1911 + $0x30] sm:$0xf]
  %v1925 = vld [vmem:[%s1911 + $0x34] sm:$0xf]
  %v1926 = vld [vmem:[%s1911 + $0x38] sm:$0xf]
  %v1927 = vld [vmem:[%s1911 + $0x3c] sm:$0xf]
  %v1928 = vunpack.c.l.b16 %v1700
  %v1929 = vunpack.c.l.b16 %v1714
  %v1930 = vunpack.c.l.b16 %v1728
  %v1931 = vunpack.c.l.b16 %v1742
  %v1932 = vunpack.c.l.b16 %v1756
  %v1933 = vunpack.c.l.b16 %v1770
  %v1934 = vunpack.c.l.b16 %v1784
  %v1935 = vunpack.c.l.b16 %v1798
  %v1936 = vunpack.c.l.b16 %v1812
  %v1937 = vunpack.c.l.b16 %v1826
  %v1938 = vunpack.c.l.b16 %v1840
  %v1939 = vunpack.c.l.b16 %v1854
  %v1940 = vunpack.c.l.b16 %v1868
  %v1941 = vunpack.c.l.b16 %v1882
  %v1942 = vunpack.c.l.b16 %v1896
  %v1943 = vunpack.c.l.b16 %v1910
  %v1944 = vpack.c.b16 %v1929, %v1928
  %v1945 = vpack.c.b16 %v1931, %v1930
  %v1946 = vpack.c.b16 %v1933, %v1932
  %v1947 = vpack.c.b16 %v1935, %v1934
  %v1948 = vpack.c.b16 %v1937, %v1936
  %v1949 = vpack.c.b16 %v1939, %v1938
  %v1950 = vpack.c.b16 %v1941, %v1940
  %v1951 = vpack.c.b16 %v1943, %v1942
  %v1976 = vunpack.c.l.b16 %v1912
  %v1977 = vunpack.c.l.b16 %v1913
  %v1978 = vunpack.c.l.b16 %v1914
  %v1979 = vunpack.c.l.b16 %v1915
  %v1980 = vunpack.c.l.b16 %v1916
  %v1981 = vunpack.c.l.b16 %v1917
  %v1982 = vunpack.c.l.b16 %v1918
  %v1983 = vunpack.c.l.b16 %v1919
  %v1984 = vunpack.c.l.b16 %v1920
  %v1985 = vunpack.c.l.b16 %v1921
  %v1986 = vunpack.c.l.b16 %v1922
  %v1987 = vunpack.c.l.b16 %v1923
  %v1988 = vunpack.c.l.b16 %v1924
  %v1989 = vunpack.c.l.b16 %v1925
  %v1990 = vunpack.c.l.b16 %v1926
  %v1991 = vunpack.c.l.b16 %v1927
  %v1992 = vpack.c.b16 %v1977, %v1976
  %v1993 = vpack.c.b16 %v1979, %v1978
  %v1994 = vpack.c.b16 %v1981, %v1980
  %v1995 = vpack.c.b16 %v1983, %v1982
  %v1996 = vpack.c.b16 %v1985, %v1984
  %v1997 = vpack.c.b16 %v1987, %v1986
  %v1998 = vpack.c.b16 %v1989, %v1988
  %v1999 = vpack.c.b16 %v1991, %v1990
  %2008 = vmatprep.subr.bf16.mxu0 0
  %2009 = vmatpush1.bf16.msra.mxu0 %v1999
  %2010 = vmatprep.subr.bf16.mxu0 0
  %2011 = vmatpush1.bf16.msra.mxu0 %v1998
  %2012 = vmatprep.subr.bf16.mxu0 0
  %2013 = vmatpush1.bf16.msra.mxu0 %v1997
  %2014 = vmatprep.subr.bf16.mxu0 0
  %2015 = vmatpush1.bf16.msra.mxu0 %v1996
  %2016 = vmatprep.subr.bf16.mxu0 0
  %2017 = vmatpush1.bf16.msra.mxu0 %v1995
  %2018 = vmatprep.subr.bf16.mxu0 0
  %2019 = vmatpush1.bf16.msra.mxu0 %v1994
  %2020 = vmatprep.subr.bf16.mxu0 0
  %2021 = vmatpush1.bf16.msra.mxu0 %v1993
  %2022 = vmatprep.subr.bf16.mxu0 0
  %2023 = vmatpush1.bf16.msra.mxu0 %v1992
  %2024 = vmatprep.subr.bf16.mxu0 0
  %2025 = vmatpush2.bf16.msra.mxu0 0
  %2026 = vmatprep.subr.bf16.mxu0 0
  %2027 = vmatpush2.bf16.msra.mxu0 0
  %2028 = vmatprep.subr.bf16.mxu0 0
  %2029 = vmatpush2.bf16.msra.mxu0 0
  %2030 = vmatprep.subr.bf16.mxu0 0
  %2031 = vmatpush2.bf16.msra.mxu0 0
  %2032 = vmatprep.subr.bf16.mxu0 0
  %2033 = vmatpush2.bf16.msra.mxu0 0
  %2034 = vmatprep.subr.bf16.mxu0 0
  %2035 = vmatpush2.bf16.msra.mxu0 0
  %2036 = vmatprep.subr.bf16.mxu0 0
  %2037 = vmatpush2.bf16.msra.mxu0 0
  %2038 = vmatprep.subr.bf16.mxu0 0
  %2039 = vmatpush2.bf16.msra.mxu0 0
  %2040 = vmatprep.mubr.bf16.mxu0 0
  %2041 = vmatmul.mubr.bf16.gmra.mxu0 %v1944
  %v2042 = vpop.f32.mrf.mxu0
  %v2043 = vadd.f32 0.0, %v2042
  %v2044 = vpop.f32.mrf.mxu0
  %v2045 = vpop.f32.mrf.mxu0
  %v2046 = vadd.f32 0.0, %v2045
  %v2047 = vpop.f32.mrf.mxu0
  %2048 = vmatprep.mubr.bf16.mxu0 0
  %2049 = vmatmul.mubr.bf16.gmra.mxu0 %v1945
  %v2050 = vpop.f32.mrf.mxu0
  %v2051 = vadd.f32 0.0, %v2050
  %v2052 = vpop.f32.mrf.mxu0
  %v2053 = vpop.f32.mrf.mxu0
  %v2054 = vadd.f32 0.0, %v2053
  %v2055 = vpop.f32.mrf.mxu0
  %2056 = vmatprep.mubr.bf16.mxu0 0
  %2057 = vmatmul.mubr.bf16.gmra.mxu0 %v1946
  %v2058 = vpop.f32.mrf.mxu0
  %v2059 = vadd.f32 0.0, %v2058
  %v2060 = vpop.f32.mrf.mxu0
  %v2061 = vpop.f32.mrf.mxu0
  %v2062 = vadd.f32 0.0, %v2061
  %v2063 = vpop.f32.mrf.mxu0
  %2064 = vmatprep.mubr.bf16.mxu0 0
  %2065 = vmatmul.mubr.bf16.gmra.mxu0 %v1947
  %v2066 = vpop.f32.mrf.mxu0
  %v2067 = vadd.f32 0.0, %v2066
  %v2068 = vpop.f32.mrf.mxu0
  %v2069 = vpop.f32.mrf.mxu0
  %v2070 = vadd.f32 0.0, %v2069
  %v2071 = vpop.f32.mrf.mxu0
  %2072 = vmatprep.mubr.bf16.mxu0 0
  %2073 = vmatmul.mubr.bf16.gmra.mxu0 %v1948
  %v2074 = vpop.f32.mrf.mxu0
  %v2075 = vadd.f32 0.0, %v2074
  %v2076 = vpop.f32.mrf.mxu0
  %v2077 = vpop.f32.mrf.mxu0
  %v2078 = vadd.f32 0.0, %v2077
  %v2079 = vpop.f32.mrf.mxu0
  %2080 = vmatprep.mubr.bf16.mxu0 0
  %2081 = vmatmul.mubr.bf16.gmra.mxu0 %v1949
  %v2082 = vpop.f32.mrf.mxu0
  %v2083 = vadd.f32 0.0, %v2082
  %v2084 = vpop.f32.mrf.mxu0
  %v2085 = vpop.f32.mrf.mxu0
  %v2086 = vadd.f32 0.0, %v2085
  %v2087 = vpop.f32.mrf.mxu0
  %2088 = vmatprep.mubr.bf16.mxu0 0
  %2089 = vmatmul.mubr.bf16.gmra.mxu0 %v1950
  %v2090 = vpop.f32.mrf.mxu0
  %v2091 = vadd.f32 0.0, %v2090
  %v2092 = vpop.f32.mrf.mxu0
  %v2093 = vpop.f32.mrf.mxu0
  %v2094 = vadd.f32 0.0, %v2093
  %v2095 = vpop.f32.mrf.mxu0
  %2096 = vmatprep.mubr.bf16.mxu0 0
  %2097 = vmatmul.mubr.bf16.gmra.mxu0 %v1951
  %v2098 = vpop.f32.mrf.mxu0
  %v2099 = vadd.f32 0.0, %v2098
  %v2100 = vpop.f32.mrf.mxu0
  %v2101 = vpop.f32.mrf.mxu0
  %v2102 = vadd.f32 0.0, %v2101
  %v2103 = vpop.f32.mrf.mxu0
  %2104 = vdwg.mxu0
  %v2105 = vadd.f32 %v1639, %v2043
  %v2106 = vadd.f32 %v1640, %v2046
  %v2107 = vadd.f32 %v1641, %v2051
  %v2108 = vadd.f32 %v1642, %v2054
  %v2109 = vadd.f32 %v1643, %v2059
  %v2110 = vadd.f32 %v1644, %v2062
  %v2111 = vadd.f32 %v1645, %v2067
  %v2112 = vadd.f32 %v1646, %v2070
  %v2113 = vadd.f32 %v1647, %v2075
  %v2114 = vadd.f32 %v1648, %v2078
  %v2115 = vadd.f32 %v1649, %v2083
  %v2116 = vadd.f32 %v1650, %v2086
  %v2117 = vadd.f32 %v1651, %v2091
  %v2118 = vadd.f32 %v1652, %v2094
  %v2119 = vadd.f32 %v1653, %v2099
  %v2120 = vadd.f32 %v1654, %v2102
  %v2121 = vld [vmem:[%s344] sm:$0xe]
  %v2122 = vld [vmem:[%s344 + $0x8] sm:$0xe]
  %v2123 = vld [vmem:[%s344 + $0x10] sm:$0xe]
  %v2124 = vld [vmem:[%s344 + $0x18] sm:$0xe]
  %v2125 = vld [vmem:[%s344 + $0x20] sm:$0xe]
  %v2126 = vld [vmem:[%s344 + $0x28] sm:$0xe]
  %v2127 = vld [vmem:[%s344 + $0x30] sm:$0xe]
  %v2128 = vld [vmem:[%s344 + $0x38] sm:$0xe]
  %v2129 = vld [vmem:[%s344 + $0x50] sm:$0xe]
  %v2130 = vld [vmem:[%s344 + $0x58] sm:$0xe]
  %v2131 = vld [vmem:[%s344 + $0x60] sm:$0xe]
  %v2132 = vld [vmem:[%s344 + $0x68] sm:$0xe]
  %v2133 = vld [vmem:[%s344 + $0x70] sm:$0xe]
  %v2134 = vld [vmem:[%s344 + $0x78] sm:$0xe]
  %v2135 = vld [vmem:[%s344 + $0x80] sm:$0xe]
  %v2136 = vld [vmem:[%s344 + $0x88] sm:$0xe]
  %v2169 = vrot.slane %v2121, 5
  %v2170 = vrot.slane %v2169, 4
  %v2171 = vrot.slane %v1656, 5
  %v2172 = vsel %vm702, %v2170, %v2171
  %v2173 = vrot.slane %v2122, 5
  %v2174 = vrot.slane %v2173, 4
  %v2175 = vrot.slane %v1658, 5
  %v2176 = vsel %vm702, %v2174, %v2175
  %v2177 = vrot.slane %v2123, 5
  %v2178 = vrot.slane %v2177, 4
  %v2179 = vrot.slane %v1660, 5
  %v2180 = vsel %vm702, %v2178, %v2179
  %v2181 = vrot.slane %v2124, 5
  %v2182 = vrot.slane %v2181, 4
  %v2183 = vrot.slane %v1662, 5
  %v2184 = vsel %vm702, %v2182, %v2183
  %v2185 = vrot.slane %v2125, 5
  %v2186 = vrot.slane %v2185, 4
  %v2187 = vrot.slane %v1664, 5
  %v2188 = vsel %vm702, %v2186, %v2187
  %v2189 = vrot.slane %v2126, 5
  %v2190 = vrot.slane %v2189, 4
  %v2191 = vrot.slane %v1666, 5
  %v2192 = vsel %vm702, %v2190, %v2191
  %v2193 = vrot.slane %v2127, 5
  %v2194 = vrot.slane %v2193, 4
  %v2195 = vrot.slane %v1668, 5
  %v2196 = vsel %vm702, %v2194, %v2195
  %v2197 = vrot.slane %v2128, 5
  %v2198 = vrot.slane %v2197, 4
  %v2199 = vrot.slane %v1670, 5
  %v2200 = vsel %vm702, %v2198, %v2199
  %v2201 = vrot.slane %v2129, 5
  %v2202 = vrot.slane %v2201, 4
  %v2203 = vrot.slane %v1672, 5
  %v2204 = vsel %vm702, %v2202, %v2203
  %v2205 = vrot.slane %v2130, 5
  %v2206 = vrot.slane %v2205, 4
  %v2207 = vrot.slane %v1674, 5
  %v2208 = vsel %vm702, %v2206, %v2207
  %v2209 = vrot.slane %v2131, 5
  %v2210 = vrot.slane %v2209, 4
  %v2211 = vrot.slane %v1676, 5
  %v2212 = vsel %vm702, %v2210, %v2211
  %v2213 = vrot.slane %v2132, 5
  %v2214 = vrot.slane %v2213, 4
  %v2215 = vrot.slane %v1678, 5
  %v2216 = vsel %vm702, %v2214, %v2215
  %v2217 = vrot.slane %v2133, 5
  %v2218 = vrot.slane %v2217, 4
  %v2219 = vrot.slane %v1680, 5
  %v2220 = vsel %vm702, %v2218, %v2219
  %v2221 = vrot.slane %v2134, 5
  %v2222 = vrot.slane %v2221, 4
  %v2223 = vrot.slane %v1682, 5
  %v2224 = vsel %vm702, %v2222, %v2223
  %v2225 = vrot.slane %v2135, 5
  %v2226 = vrot.slane %v2225, 4
  %v2227 = vrot.slane %v1684, 5
  %v2228 = vsel %vm702, %v2226, %v2227
  %v2229 = vrot.slane %v2136, 5
  %v2230 = vrot.slane %v2229, 4
  %v2231 = vrot.slane %v1686, 5
  %v2232 = vsel %vm702, %v2230, %v2231
  %s2233 = scalar_lea.vmem %s4, 256
  %v2234 = vld [vmem:[%s2233] sm:$0xf]
  %v2235 = vld [vmem:[%s2233 + $0x4] sm:$0xf]
  %v2236 = vld [vmem:[%s2233 + $0x8] sm:$0xf]
  %v2237 = vld [vmem:[%s2233 + $0xc] sm:$0xf]
  %v2238 = vld [vmem:[%s2233 + $0x10] sm:$0xf]
  %v2239 = vld [vmem:[%s2233 + $0x14] sm:$0xf]
  %v2240 = vld [vmem:[%s2233 + $0x18] sm:$0xf]
  %v2241 = vld [vmem:[%s2233 + $0x1c] sm:$0xf]
  %v2242 = vld [vmem:[%s2233 + $0x20] sm:$0xf]
  %v2243 = vld [vmem:[%s2233 + $0x24] sm:$0xf]
  %v2244 = vld [vmem:[%s2233 + $0x28] sm:$0xf]
  %v2245 = vld [vmem:[%s2233 + $0x2c] sm:$0xf]
  %v2246 = vld [vmem:[%s2233 + $0x30] sm:$0xf]
  %v2247 = vld [vmem:[%s2233 + $0x34] sm:$0xf]
  %v2248 = vld [vmem:[%s2233 + $0x38] sm:$0xf]
  %v2249 = vld [vmem:[%s2233 + $0x3c] sm:$0xf]
  %v2250 = vunpack.c.l.b16 %v2172
  %v2251 = vunpack.c.l.b16 %v2176
  %v2252 = vunpack.c.l.b16 %v2180
  %v2253 = vunpack.c.l.b16 %v2184
  %v2254 = vunpack.c.l.b16 %v2188
  %v2255 = vunpack.c.l.b16 %v2192
  %v2256 = vunpack.c.l.b16 %v2196
  %v2257 = vunpack.c.l.b16 %v2200
  %v2258 = vunpack.c.l.b16 %v2204
  %v2259 = vunpack.c.l.b16 %v2208
  %v2260 = vunpack.c.l.b16 %v2212
  %v2261 = vunpack.c.l.b16 %v2216
  %v2262 = vunpack.c.l.b16 %v2220
  %v2263 = vunpack.c.l.b16 %v2224
  %v2264 = vunpack.c.l.b16 %v2228
  %v2265 = vunpack.c.l.b16 %v2232
  %v2266 = vpack.c.b16 %v2251, %v2250
  %v2267 = vpack.c.b16 %v2253, %v2252
  %v2268 = vpack.c.b16 %v2255, %v2254
  %v2269 = vpack.c.b16 %v2257, %v2256
  %v2270 = vpack.c.b16 %v2259, %v2258
  %v2271 = vpack.c.b16 %v2261, %v2260
  %v2272 = vpack.c.b16 %v2263, %v2262
  %v2273 = vpack.c.b16 %v2265, %v2264
  %v2298 = vunpack.c.l.b16 %v2234
  %v2299 = vunpack.c.l.b16 %v2235
  %v2300 = vunpack.c.l.b16 %v2236
  %v2301 = vunpack.c.l.b16 %v2237
  %v2302 = vunpack.c.l.b16 %v2238
  %v2303 = vunpack.c.l.b16 %v2239
  %v2304 = vunpack.c.l.b16 %v2240
  %v2305 = vunpack.c.l.b16 %v2241
  %v2306 = vunpack.c.l.b16 %v2242
  %v2307 = vunpack.c.l.b16 %v2243
  %v2308 = vunpack.c.l.b16 %v2244
  %v2309 = vunpack.c.l.b16 %v2245
  %v2310 = vunpack.c.l.b16 %v2246
  %v2311 = vunpack.c.l.b16 %v2247
  %v2312 = vunpack.c.l.b16 %v2248
  %v2313 = vunpack.c.l.b16 %v2249
  %v2314 = vpack.c.b16 %v2299, %v2298
  %v2315 = vpack.c.b16 %v2301, %v2300
  %v2316 = vpack.c.b16 %v2303, %v2302
  %v2317 = vpack.c.b16 %v2305, %v2304
  %v2318 = vpack.c.b16 %v2307, %v2306
  %v2319 = vpack.c.b16 %v2309, %v2308
  %v2320 = vpack.c.b16 %v2311, %v2310
  %v2321 = vpack.c.b16 %v2313, %v2312
  %2330 = vmatprep.subr.bf16.mxu0 0
  %2331 = vmatpush1.bf16.msra.mxu0 %v2321
  %2332 = vmatprep.subr.bf16.mxu0 0
  %2333 = vmatpush1.bf16.msra.mxu0 %v2320
  %2334 = vmatprep.subr.bf16.mxu0 0
  %2335 = vmatpush1.bf16.msra.mxu0 %v2319
  %2336 = vmatprep.subr.bf16.mxu0 0
  %2337 = vmatpush1.bf16.msra.mxu0 %v2318
  %2338 = vmatprep.subr.bf16.mxu0 0
  %2339 = vmatpush1.bf16.msra.mxu0 %v2317
  %2340 = vmatprep.subr.bf16.mxu0 0
  %2341 = vmatpush1.bf16.msra.mxu0 %v2316
  %2342 = vmatprep.subr.bf16.mxu0 0
  %2343 = vmatpush1.bf16.msra.mxu0 %v2315
  %2344 = vmatprep.subr.bf16.mxu0 0
  %2345 = vmatpush1.bf16.msra.mxu0 %v2314
  %2346 = vmatprep.subr.bf16.mxu0 0
  %2347 = vmatpush2.bf16.msra.mxu0 0
  %2348 = vmatprep.subr.bf16.mxu0 0
  %2349 = vmatpush2.bf16.msra.mxu0 0
  %2350 = vmatprep.subr.bf16.mxu0 0
  %2351 = vmatpush2.bf16.msra.mxu0 0
  %2352 = vmatprep.subr.bf16.mxu0 0
  %2353 = vmatpush2.bf16.msra.mxu0 0
  %2354 = vmatprep.subr.bf16.mxu0 0
  %2355 = vmatpush2.bf16.msra.mxu0 0
  %2356 = vmatprep.subr.bf16.mxu0 0
  %2357 = vmatpush2.bf16.msra.mxu0 0
  %2358 = vmatprep.subr.bf16.mxu0 0
  %2359 = vmatpush2.bf16.msra.mxu0 0
  %2360 = vmatprep.subr.bf16.mxu0 0
  %2361 = vmatpush2.bf16.msra.mxu0 0
  %2362 = vmatprep.mubr.bf16.mxu0 0
  %2363 = vmatmul.mubr.bf16.gmra.mxu0 %v2266
  %v2364 = vpop.f32.mrf.mxu0
  %v2365 = vadd.f32 0.0, %v2364
  %v2366 = vpop.f32.mrf.mxu0
  %v2367 = vpop.f32.mrf.mxu0
  %v2368 = vadd.f32 0.0, %v2367
  %v2369 = vpop.f32.mrf.mxu0
  %2370 = vmatprep.mubr.bf16.mxu0 0
  %2371 = vmatmul.mubr.bf16.gmra.mxu0 %v2267
  %v2372 = vpop.f32.mrf.mxu0
  %v2373 = vadd.f32 0.0, %v2372
  %v2374 = vpop.f32.mrf.mxu0
  %v2375 = vpop.f32.mrf.mxu0
  %v2376 = vadd.f32 0.0, %v2375
  %v2377 = vpop.f32.mrf.mxu0
  %2378 = vmatprep.mubr.bf16.mxu0 0
  %2379 = vmatmul.mubr.bf16.gmra.mxu0 %v2268
  %v2380 = vpop.f32.mrf.mxu0
  %v2381 = vadd.f32 0.0, %v2380
  %v2382 = vpop.f32.mrf.mxu0
  %v2383 = vpop.f32.mrf.mxu0
  %v2384 = vadd.f32 0.0, %v2383
  %v2385 = vpop.f32.mrf.mxu0
  %2386 = vmatprep.mubr.bf16.mxu0 0
  %2387 = vmatmul.mubr.bf16.gmra.mxu0 %v2269
  %v2388 = vpop.f32.mrf.mxu0
  %v2389 = vadd.f32 0.0, %v2388
  %v2390 = vpop.f32.mrf.mxu0
  %v2391 = vpop.f32.mrf.mxu0
  %v2392 = vadd.f32 0.0, %v2391
  %v2393 = vpop.f32.mrf.mxu0
  %2394 = vmatprep.mubr.bf16.mxu0 0
  %2395 = vmatmul.mubr.bf16.gmra.mxu0 %v2270
  %v2396 = vpop.f32.mrf.mxu0
  %v2397 = vadd.f32 0.0, %v2396
  %v2398 = vpop.f32.mrf.mxu0
  %v2399 = vpop.f32.mrf.mxu0
  %v2400 = vadd.f32 0.0, %v2399
  %v2401 = vpop.f32.mrf.mxu0
  %2402 = vmatprep.mubr.bf16.mxu0 0
  %2403 = vmatmul.mubr.bf16.gmra.mxu0 %v2271
  %v2404 = vpop.f32.mrf.mxu0
  %v2405 = vadd.f32 0.0, %v2404
  %v2406 = vpop.f32.mrf.mxu0
  %v2407 = vpop.f32.mrf.mxu0
  %v2408 = vadd.f32 0.0, %v2407
  %v2409 = vpop.f32.mrf.mxu0
  %2410 = vmatprep.mubr.bf16.mxu0 0
  %2411 = vmatmul.mubr.bf16.gmra.mxu0 %v2272
  %v2412 = vpop.f32.mrf.mxu0
  %v2413 = vadd.f32 0.0, %v2412
  %v2414 = vpop.f32.mrf.mxu0
  %v2415 = vpop.f32.mrf.mxu0
  %v2416 = vadd.f32 0.0, %v2415
  %v2417 = vpop.f32.mrf.mxu0
  %2418 = vmatprep.mubr.bf16.mxu0 0
  %2419 = vmatmul.mubr.bf16.gmra.mxu0 %v2273
  %v2420 = vpop.f32.mrf.mxu0
  %v2421 = vadd.f32 0.0, %v2420
  %v2422 = vpop.f32.mrf.mxu0
  %v2423 = vpop.f32.mrf.mxu0
  %v2424 = vadd.f32 0.0, %v2423
  %v2425 = vpop.f32.mrf.mxu0
  %2426 = vdwg.mxu0
  %v2427 = vadd.f32 %v2105, %v2365
  %v2428 = vadd.f32 %v2106, %v2368
  %v2429 = vadd.f32 %v2107, %v2373
  %v2430 = vadd.f32 %v2108, %v2376
  %v2431 = vadd.f32 %v2109, %v2381
  %v2432 = vadd.f32 %v2110, %v2384
  %v2433 = vadd.f32 %v2111, %v2389
  %v2434 = vadd.f32 %v2112, %v2392
  %v2435 = vadd.f32 %v2113, %v2397
  %v2436 = vadd.f32 %v2114, %v2400
  %v2437 = vadd.f32 %v2115, %v2405
  %v2438 = vadd.f32 %v2116, %v2408
  %v2439 = vadd.f32 %v2117, %v2413
  %v2440 = vadd.f32 %v2118, %v2416
  %v2441 = vadd.f32 %v2119, %v2421
  %v2442 = vadd.f32 %v2120, %v2424
  %v2443 = vld [vmem:[%s344 + $0x4] sm:$0x3]
  %v2444 = vld [vmem:[%s344 + $0xc] sm:$0x3]
  %v2445 = vld [vmem:[%s344 + $0x14] sm:$0x3]
  %v2446 = vld [vmem:[%s344 + $0x1c] sm:$0x3]
  %v2447 = vld [vmem:[%s344 + $0x24] sm:$0x3]
  %v2448 = vld [vmem:[%s344 + $0x2c] sm:$0x3]
  %v2449 = vld [vmem:[%s344 + $0x34] sm:$0x3]
  %v2450 = vld [vmem:[%s344 + $0x3c] sm:$0x3]
  %v2451 = vld [vmem:[%s344 + $0x54] sm:$0x3]
  %v2452 = vld [vmem:[%s344 + $0x5c] sm:$0x3]
  %v2453 = vld [vmem:[%s344 + $0x64] sm:$0x3]
  %v2454 = vld [vmem:[%s344 + $0x6c] sm:$0x3]
  %v2455 = vld [vmem:[%s344 + $0x74] sm:$0x3]
  %v2456 = vld [vmem:[%s344 + $0x7c] sm:$0x3]
  %v2457 = vld [vmem:[%s344 + $0x84] sm:$0x3]
  %v2458 = vld [vmem:[%s344 + $0x8c] sm:$0x3]
  %v2460 = vshrl.u32 %v2121, 16
  %v2462 = vrot.slane %v2460, 5
  %v2463 = vshll.u32 %v2121, 16
  %v2465 = vrot.slane %v2463, 6
  %v2466 = vor.u32 %v2462, %v2465
  %v2467 = vrot.slane %v2466, 4
  %v2469 = vshrl.u32 %v2443, 16
  %v2471 = vrot.slane %v2469, 5
  %v2472 = vshll.u32 %v2443, 16
  %v2474 = vrot.slane %v2472, 6
  %v2475 = vor.u32 %v2471, %v2474
  %v2476 = vsel %vm1156, %v2467, %v2475
  %v2478 = vshrl.u32 %v2122, 16
  %v2480 = vrot.slane %v2478, 5
  %v2481 = vshll.u32 %v2122, 16
  %v2483 = vrot.slane %v2481, 6
  %v2484 = vor.u32 %v2480, %v2483
  %v2485 = vrot.slane %v2484, 4
  %v2487 = vshrl.u32 %v2444, 16
  %v2489 = vrot.slane %v2487, 5
  %v2490 = vshll.u32 %v2444, 16
  %v2492 = vrot.slane %v2490, 6
  %v2493 = vor.u32 %v2489, %v2492
  %v2494 = vsel %vm1156, %v2485, %v2493
  %v2496 = vshrl.u32 %v2123, 16
  %v2498 = vrot.slane %v2496, 5
  %v2499 = vshll.u32 %v2123, 16
  %v2501 = vrot.slane %v2499, 6
  %v2502 = vor.u32 %v2498, %v2501
  %v2503 = vrot.slane %v2502, 4
  %v2505 = vshrl.u32 %v2445, 16
  %v2507 = vrot.slane %v2505, 5
  %v2508 = vshll.u32 %v2445, 16
  %v2510 = vrot.slane %v2508, 6
  %v2511 = vor.u32 %v2507, %v2510
  %v2512 = vsel %vm1156, %v2503, %v2511
  %v2514 = vshrl.u32 %v2124, 16
  %v2516 = vrot.slane %v2514, 5
  %v2517 = vshll.u32 %v2124, 16
  %v2519 = vrot.slane %v2517, 6
  %v2520 = vor.u32 %v2516, %v2519
  %v2521 = vrot.slane %v2520, 4
  %v2523 = vshrl.u32 %v2446, 16
  %v2525 = vrot.slane %v2523, 5
  %v2526 = vshll.u32 %v2446, 16
  %v2528 = vrot.slane %v2526, 6
  %v2529 = vor.u32 %v2525, %v2528
  %v2530 = vsel %vm1156, %v2521, %v2529
  %v2532 = vshrl.u32 %v2125, 16
  %v2534 = vrot.slane %v2532, 5
  %v2535 = vshll.u32 %v2125, 16
  %v2537 = vrot.slane %v2535, 6
  %v2538 = vor.u32 %v2534, %v2537
  %v2539 = vrot.slane %v2538, 4
  %v2541 = vshrl.u32 %v2447, 16
  %v2543 = vrot.slane %v2541, 5
  %v2544 = vshll.u32 %v2447, 16
  %v2546 = vrot.slane %v2544, 6
  %v2547 = vor.u32 %v2543, %v2546
  %v2548 = vsel %vm1156, %v2539, %v2547
  %v2550 = vshrl.u32 %v2126, 16
  %v2552 = vrot.slane %v2550, 5
  %v2553 = vshll.u32 %v2126, 16
  %v2555 = vrot.slane %v2553, 6
  %v2556 = vor.u32 %v2552, %v2555
  %v2557 = vrot.slane %v2556, 4
  %v2559 = vshrl.u32 %v2448, 16
  %v2561 = vrot.slane %v2559, 5
  %v2562 = vshll.u32 %v2448, 16
  %v2564 = vrot.slane %v2562, 6
  %v2565 = vor.u32 %v2561, %v2564
  %v2566 = vsel %vm1156, %v2557, %v2565
  %v2568 = vshrl.u32 %v2127, 16
  %v2570 = vrot.slane %v2568, 5
  %v2571 = vshll.u32 %v2127, 16
  %v2573 = vrot.slane %v2571, 6
  %v2574 = vor.u32 %v2570, %v2573
  %v2575 = vrot.slane %v2574, 4
  %v2577 = vshrl.u32 %v2449, 16
  %v2579 = vrot.slane %v2577, 5
  %v2580 = vshll.u32 %v2449, 16
  %v2582 = vrot.slane %v2580, 6
  %v2583 = vor.u32 %v2579, %v2582
  %v2584 = vsel %vm1156, %v2575, %v2583
  %v2586 = vshrl.u32 %v2128, 16
  %v2588 = vrot.slane %v2586, 5
  %v2589 = vshll.u32 %v2128, 16
  %v2591 = vrot.slane %v2589, 6
  %v2592 = vor.u32 %v2588, %v2591
  %v2593 = vrot.slane %v2592, 4
  %v2595 = vshrl.u32 %v2450, 16
  %v2597 = vrot.slane %v2595, 5
  %v2598 = vshll.u32 %v2450, 16
  %v2600 = vrot.slane %v2598, 6
  %v2601 = vor.u32 %v2597, %v2600
  %v2602 = vsel %vm1156, %v2593, %v2601
  %v2604 = vshrl.u32 %v2129, 16
  %v2606 = vrot.slane %v2604, 5
  %v2607 = vshll.u32 %v2129, 16
  %v2609 = vrot.slane %v2607, 6
  %v2610 = vor.u32 %v2606, %v2609
  %v2611 = vrot.slane %v2610, 4
  %v2613 = vshrl.u32 %v2451, 16
  %v2615 = vrot.slane %v2613, 5
  %v2616 = vshll.u32 %v2451, 16
  %v2618 = vrot.slane %v2616, 6
  %v2619 = vor.u32 %v2615, %v2618
  %v2620 = vsel %vm1156, %v2611, %v2619
  %v2622 = vshrl.u32 %v2130, 16
  %v2624 = vrot.slane %v2622, 5
  %v2625 = vshll.u32 %v2130, 16
  %v2627 = vrot.slane %v2625, 6
  %v2628 = vor.u32 %v2624, %v2627
  %v2629 = vrot.slane %v2628, 4
  %v2631 = vshrl.u32 %v2452, 16
  %v2633 = vrot.slane %v2631, 5
  %v2634 = vshll.u32 %v2452, 16
  %v2636 = vrot.slane %v2634, 6
  %v2637 = vor.u32 %v2633, %v2636
  %v2638 = vsel %vm1156, %v2629, %v2637
  %v2640 = vshrl.u32 %v2131, 16
  %v2642 = vrot.slane %v2640, 5
  %v2643 = vshll.u32 %v2131, 16
  %v2645 = vrot.slane %v2643, 6
  %v2646 = vor.u32 %v2642, %v2645
  %v2647 = vrot.slane %v2646, 4
  %v2649 = vshrl.u32 %v2453, 16
  %v2651 = vrot.slane %v2649, 5
  %v2652 = vshll.u32 %v2453, 16
  %v2654 = vrot.slane %v2652, 6
  %v2655 = vor.u32 %v2651, %v2654
  %v2656 = vsel %vm1156, %v2647, %v2655
  %v2658 = vshrl.u32 %v2132, 16
  %v2660 = vrot.slane %v2658, 5
  %v2661 = vshll.u32 %v2132, 16
  %v2663 = vrot.slane %v2661, 6
  %v2664 = vor.u32 %v2660, %v2663
  %v2665 = vrot.slane %v2664, 4
  %v2667 = vshrl.u32 %v2454, 16
  %v2669 = vrot.slane %v2667, 5
  %v2670 = vshll.u32 %v2454, 16
  %v2672 = vrot.slane %v2670, 6
  %v2673 = vor.u32 %v2669, %v2672
  %v2674 = vsel %vm1156, %v2665, %v2673
  %v2676 = vshrl.u32 %v2133, 16
  %v2678 = vrot.slane %v2676, 5
  %v2679 = vshll.u32 %v2133, 16
  %v2681 = vrot.slane %v2679, 6
  %v2682 = vor.u32 %v2678, %v2681
  %v2683 = vrot.slane %v2682, 4
  %v2685 = vshrl.u32 %v2455, 16
  %v2687 = vrot.slane %v2685, 5
  %v2688 = vshll.u32 %v2455, 16
  %v2690 = vrot.slane %v2688, 6
  %v2691 = vor.u32 %v2687, %v2690
  %v2692 = vsel %vm1156, %v2683, %v2691
  %v2694 = vshrl.u32 %v2134, 16
  %v2696 = vrot.slane %v2694, 5
  %v2697 = vshll.u32 %v2134, 16
  %v2699 = vrot.slane %v2697, 6
  %v2700 = vor.u32 %v2696, %v2699
  %v2701 = vrot.slane %v2700, 4
  %v2703 = vshrl.u32 %v2456, 16
  %v2705 = vrot.slane %v2703, 5
  %v2706 = vshll.u32 %v2456, 16
  %v2708 = vrot.slane %v2706, 6
  %v2709 = vor.u32 %v2705, %v2708
  %v2710 = vsel %vm1156, %v2701, %v2709
  %v2712 = vshrl.u32 %v2135, 16
  %v2714 = vrot.slane %v2712, 5
  %v2715 = vshll.u32 %v2135, 16
  %v2717 = vrot.slane %v2715, 6
  %v2718 = vor.u32 %v2714, %v2717
  %v2719 = vrot.slane %v2718, 4
  %v2721 = vshrl.u32 %v2457, 16
  %v2723 = vrot.slane %v2721, 5
  %v2724 = vshll.u32 %v2457, 16
  %v2726 = vrot.slane %v2724, 6
  %v2727 = vor.u32 %v2723, %v2726
  %v2728 = vsel %vm1156, %v2719, %v2727
  %v2730 = vshrl.u32 %v2136, 16
  %v2732 = vrot.slane %v2730, 5
  %v2733 = vshll.u32 %v2136, 16
  %v2735 = vrot.slane %v2733, 6
  %v2736 = vor.u32 %v2732, %v2735
  %v2737 = vrot.slane %v2736, 4
  %v2739 = vshrl.u32 %v2458, 16
  %v2741 = vrot.slane %v2739, 5
  %v2742 = vshll.u32 %v2458, 16
  %v2744 = vrot.slane %v2742, 6
  %v2745 = vor.u32 %v2741, %v2744
  %v2746 = vsel %vm1156, %v2737, %v2745
  %s2747 = scalar_lea.vmem %s4, 320
  %v2748 = vld [vmem:[%s2747] sm:$0xf]
  %v2749 = vld [vmem:[%s2747 + $0x4] sm:$0xf]
  %v2750 = vld [vmem:[%s2747 + $0x8] sm:$0xf]
  %v2751 = vld [vmem:[%s2747 + $0xc] sm:$0xf]
  %v2752 = vld [vmem:[%s2747 + $0x10] sm:$0xf]
  %v2753 = vld [vmem:[%s2747 + $0x14] sm:$0xf]
  %v2754 = vld [vmem:[%s2747 + $0x18] sm:$0xf]
  %v2755 = vld [vmem:[%s2747 + $0x1c] sm:$0xf]
  %v2756 = vld [vmem:[%s2747 + $0x20] sm:$0xf]
  %v2757 = vld [vmem:[%s2747 + $0x24] sm:$0xf]
  %v2758 = vld [vmem:[%s2747 + $0x28] sm:$0xf]
  %v2759 = vld [vmem:[%s2747 + $0x2c] sm:$0xf]
  %v2760 = vld [vmem:[%s2747 + $0x30] sm:$0xf]
  %v2761 = vld [vmem:[%s2747 + $0x34] sm:$0xf]
  %v2762 = vld [vmem:[%s2747 + $0x38] sm:$0xf]
  %v2763 = vld [vmem:[%s2747 + $0x3c] sm:$0xf]
  %v2764 = vunpack.c.l.b16 %v2476
  %v2765 = vunpack.c.l.b16 %v2494
  %v2766 = vunpack.c.l.b16 %v2512
  %v2767 = vunpack.c.l.b16 %v2530
  %v2768 = vunpack.c.l.b16 %v2548
  %v2769 = vunpack.c.l.b16 %v2566
  %v2770 = vunpack.c.l.b16 %v2584
  %v2771 = vunpack.c.l.b16 %v2602
  %v2772 = vunpack.c.l.b16 %v2620
  %v2773 = vunpack.c.l.b16 %v2638
  %v2774 = vunpack.c.l.b16 %v2656
  %v2775 = vunpack.c.l.b16 %v2674
  %v2776 = vunpack.c.l.b16 %v2692
  %v2777 = vunpack.c.l.b16 %v2710
  %v2778 = vunpack.c.l.b16 %v2728
  %v2779 = vunpack.c.l.b16 %v2746
  %v2780 = vpack.c.b16 %v2765, %v2764
  %v2781 = vpack.c.b16 %v2767, %v2766
  %v2782 = vpack.c.b16 %v2769, %v2768
  %v2783 = vpack.c.b16 %v2771, %v2770
  %v2784 = vpack.c.b16 %v2773, %v2772
  %v2785 = vpack.c.b16 %v2775, %v2774
  %v2786 = vpack.c.b16 %v2777, %v2776
  %v2787 = vpack.c.b16 %v2779, %v2778
  %v2812 = vunpack.c.l.b16 %v2748
  %v2813 = vunpack.c.l.b16 %v2749
  %v2814 = vunpack.c.l.b16 %v2750
  %v2815 = vunpack.c.l.b16 %v2751
  %v2816 = vunpack.c.l.b16 %v2752
  %v2817 = vunpack.c.l.b16 %v2753
  %v2818 = vunpack.c.l.b16 %v2754
  %v2819 = vunpack.c.l.b16 %v2755
  %v2820 = vunpack.c.l.b16 %v2756
  %v2821 = vunpack.c.l.b16 %v2757
  %v2822 = vunpack.c.l.b16 %v2758
  %v2823 = vunpack.c.l.b16 %v2759
  %v2824 = vunpack.c.l.b16 %v2760
  %v2825 = vunpack.c.l.b16 %v2761
  %v2826 = vunpack.c.l.b16 %v2762
  %v2827 = vunpack.c.l.b16 %v2763
  %v2828 = vpack.c.b16 %v2813, %v2812
  %v2829 = vpack.c.b16 %v2815, %v2814
  %v2830 = vpack.c.b16 %v2817, %v2816
  %v2831 = vpack.c.b16 %v2819, %v2818
  %v2832 = vpack.c.b16 %v2821, %v2820
  %v2833 = vpack.c.b16 %v2823, %v2822
  %v2834 = vpack.c.b16 %v2825, %v2824
  %v2835 = vpack.c.b16 %v2827, %v2826
  %2844 = vmatprep.subr.bf16.mxu0 0
  %2845 = vmatpush1.bf16.msra.mxu0 %v2835
  %2846 = vmatprep.subr.bf16.mxu0 0
  %2847 = vmatpush1.bf16.msra.mxu0 %v2834
  %2848 = vmatprep.subr.bf16.mxu0 0
  %2849 = vmatpush1.bf16.msra.mxu0 %v2833
  %2850 = vmatprep.subr.bf16.mxu0 0
  %2851 = vmatpush1.bf16.msra.mxu0 %v2832
  %2852 = vmatprep.subr.bf16.mxu0 0
  %2853 = vmatpush1.bf16.msra.mxu0 %v2831
  %2854 = vmatprep.subr.bf16.mxu0 0
  %2855 = vmatpush1.bf16.msra.mxu0 %v2830
  %2856 = vmatprep.subr.bf16.mxu0 0
  %2857 = vmatpush1.bf16.msra.mxu0 %v2829
  %2858 = vmatprep.subr.bf16.mxu0 0
  %2859 = vmatpush1.bf16.msra.mxu0 %v2828
  %2860 = vmatprep.subr.bf16.mxu0 0
  %2861 = vmatpush2.bf16.msra.mxu0 0
  %2862 = vmatprep.subr.bf16.mxu0 0
  %2863 = vmatpush2.bf16.msra.mxu0 0
  %2864 = vmatprep.subr.bf16.mxu0 0
  %2865 = vmatpush2.bf16.msra.mxu0 0
  %2866 = vmatprep.subr.bf16.mxu0 0
  %2867 = vmatpush2.bf16.msra.mxu0 0
  %2868 = vmatprep.subr.bf16.mxu0 0
  %2869 = vmatpush2.bf16.msra.mxu0 0
  %2870 = vmatprep.subr.bf16.mxu0 0
  %2871 = vmatpush2.bf16.msra.mxu0 0
  %2872 = vmatprep.subr.bf16.mxu0 0
  %2873 = vmatpush2.bf16.msra.mxu0 0
  %2874 = vmatprep.subr.bf16.mxu0 0
  %2875 = vmatpush2.bf16.msra.mxu0 0
  %2876 = vmatprep.mubr.bf16.mxu0 0
  %2877 = vmatmul.mubr.bf16.gmra.mxu0 %v2780
  %v2878 = vpop.f32.mrf.mxu0
  %v2879 = vadd.f32 0.0, %v2878
  %v2880 = vpop.f32.mrf.mxu0
  %v2881 = vpop.f32.mrf.mxu0
  %v2882 = vadd.f32 0.0, %v2881
  %v2883 = vpop.f32.mrf.mxu0
  %2884 = vmatprep.mubr.bf16.mxu0 0
  %2885 = vmatmul.mubr.bf16.gmra.mxu0 %v2781
  %v2886 = vpop.f32.mrf.mxu0
  %v2887 = vadd.f32 0.0, %v2886
  %v2888 = vpop.f32.mrf.mxu0
  %v2889 = vpop.f32.mrf.mxu0
  %v2890 = vadd.f32 0.0, %v2889
  %v2891 = vpop.f32.mrf.mxu0
  %2892 = vmatprep.mubr.bf16.mxu0 0
  %2893 = vmatmul.mubr.bf16.gmra.mxu0 %v2782
  %v2894 = vpop.f32.mrf.mxu0
  %v2895 = vadd.f32 0.0, %v2894
  %v2896 = vpop.f32.mrf.mxu0
  %v2897 = vpop.f32.mrf.mxu0
  %v2898 = vadd.f32 0.0, %v2897
  %v2899 = vpop.f32.mrf.mxu0
  %2900 = vmatprep.mubr.bf16.mxu0 0
  %2901 = vmatmul.mubr.bf16.gmra.mxu0 %v2783
  %v2902 = vpop.f32.mrf.mxu0
  %v2903 = vadd.f32 0.0, %v2902
  %v2904 = vpop.f32.mrf.mxu0
  %v2905 = vpop.f32.mrf.mxu0
  %v2906 = vadd.f32 0.0, %v2905
  %v2907 = vpop.f32.mrf.mxu0
  %2908 = vmatprep.mubr.bf16.mxu0 0
  %2909 = vmatmul.mubr.bf16.gmra.mxu0 %v2784
  %v2910 = vpop.f32.mrf.mxu0
  %v2911 = vadd.f32 0.0, %v2910
  %v2912 = vpop.f32.mrf.mxu0
  %v2913 = vpop.f32.mrf.mxu0
  %v2914 = vadd.f32 0.0, %v2913
  %v2915 = vpop.f32.mrf.mxu0
  %2916 = vmatprep.mubr.bf16.mxu0 0
  %2917 = vmatmul.mubr.bf16.gmra.mxu0 %v2785
  %v2918 = vpop.f32.mrf.mxu0
  %v2919 = vadd.f32 0.0, %v2918
  %v2920 = vpop.f32.mrf.mxu0
  %v2921 = vpop.f32.mrf.mxu0
  %v2922 = vadd.f32 0.0, %v2921
  %v2923 = vpop.f32.mrf.mxu0
  %2924 = vmatprep.mubr.bf16.mxu0 0
  %2925 = vmatmul.mubr.bf16.gmra.mxu0 %v2786
  %v2926 = vpop.f32.mrf.mxu0
  %v2927 = vadd.f32 0.0, %v2926
  %v2928 = vpop.f32.mrf.mxu0
  %v2929 = vpop.f32.mrf.mxu0
  %v2930 = vadd.f32 0.0, %v2929
  %v2931 = vpop.f32.mrf.mxu0
  %2932 = vmatprep.mubr.bf16.mxu0 0
  %2933 = vmatmul.mubr.bf16.gmra.mxu0 %v2787
  %v2934 = vpop.f32.mrf.mxu0
  %v2935 = vadd.f32 0.0, %v2934
  %v2936 = vpop.f32.mrf.mxu0
  %v2937 = vpop.f32.mrf.mxu0
  %v2938 = vadd.f32 0.0, %v2937
  %v2939 = vpop.f32.mrf.mxu0
  %2940 = vdwg.mxu0
  %v2941 = vadd.f32 %v2427, %v2879
  %v2942 = vadd.f32 %v2428, %v2882
  %v2943 = vadd.f32 %v2429, %v2887
  %v2944 = vadd.f32 %v2430, %v2890
  %v2945 = vadd.f32 %v2431, %v2895
  %v2946 = vadd.f32 %v2432, %v2898
  %v2947 = vadd.f32 %v2433, %v2903
  %v2948 = vadd.f32 %v2434, %v2906
  %v2949 = vadd.f32 %v2435, %v2911
  %v2950 = vadd.f32 %v2436, %v2914
  %v2951 = vadd.f32 %v2437, %v2919
  %v2952 = vadd.f32 %v2438, %v2922
  %v2953 = vadd.f32 %v2439, %v2927
  %v2954 = vadd.f32 %v2440, %v2930
  %v2955 = vadd.f32 %v2441, %v2935
  %v2956 = vadd.f32 %v2442, %v2938
  %s2957 = scalar_lea.vmem [#allocation2], 16
  %v2958 = vld [vmem:[%s2957] sm:$0xf]
  %v2959 = vld [vmem:[%s2957 + $0x4] sm:$0x1]
  %v2960 = vld [vmem:[%s2957 + $0x8] sm:$0xf]
  %v2961 = vld [vmem:[%s2957 + $0xc] sm:$0x1]
  %v2962 = vld [vmem:[%s2957 + $0x10] sm:$0xf]
  %v2963 = vld [vmem:[%s2957 + $0x14] sm:$0x1]
  %v2964 = vld [vmem:[%s2957 + $0x18] sm:$0xf]
  %v2965 = vld [vmem:[%s2957 + $0x1c] sm:$0x1]
  %v2966 = vld [vmem:[%s2957 + $0x20] sm:$0xf]
  %v2967 = vld [vmem:[%s2957 + $0x24] sm:$0x1]
  %v2968 = vld [vmem:[%s2957 + $0x28] sm:$0xf]
  %v2969 = vld [vmem:[%s2957 + $0x2c] sm:$0x1]
  %v2970 = vld [vmem:[%s2957 + $0x30] sm:$0xf]
  %v2971 = vld [vmem:[%s2957 + $0x34] sm:$0x1]
  %v2972 = vld [vmem:[%s2957 + $0x38] sm:$0xf]
  %v2973 = vld [vmem:[%s2957 + $0x3c] sm:$0x1]
  %v2974 = vld [vmem:[%s2957 + $0x50] sm:$0xf]
  %v2975 = vld [vmem:[%s2957 + $0x54] sm:$0x1]
  %v2976 = vld [vmem:[%s2957 + $0x58] sm:$0xf]
  %v2977 = vld [vmem:[%s2957 + $0x5c] sm:$0x1]
  %v2978 = vld [vmem:[%s2957 + $0x60] sm:$0xf]
  %v2979 = vld [vmem:[%s2957 + $0x64] sm:$0x1]
  %v2980 = vld [vmem:[%s2957 + $0x68] sm:$0xf]
  %v2981 = vld [vmem:[%s2957 + $0x6c] sm:$0x1]
  %v2982 = vld [vmem:[%s2957 + $0x70] sm:$0xf]
  %v2983 = vld [vmem:[%s2957 + $0x74] sm:$0x1]
  %v2984 = vld [vmem:[%s2957 + $0x78] sm:$0xf]
  %v2985 = vld [vmem:[%s2957 + $0x7c] sm:$0x1]
  %v2986 = vld [vmem:[%s2957 + $0x80] sm:$0xf]
  %v2987 = vld [vmem:[%s2957 + $0x84] sm:$0x1]
  %v2988 = vld [vmem:[%s2957 + $0x88] sm:$0xf]
  %v2989 = vld [vmem:[%s2957 + $0x8c] sm:$0x1]
  %v2991 = vshrl.u32 %v2958, 16
  %v2993 = vrot.slane %v2991, 4
  %v2994 = vshll.u32 %v2958, 16
  %v2996 = vrot.slane %v2994, 5
  %v2997 = vor.u32 %v2993, %v2996
  %v2998 = vrot.slane %v2997, 4
  %v3000 = vshll.u32 %v2959, 16
  %v3002 = vrot.slane %v3000, 5
  %v3003 = vsel %vm411, %v2998, %v3002
  %v3005 = vshrl.u32 %v2960, 16
  %v3007 = vrot.slane %v3005, 4
  %v3008 = vshll.u32 %v2960, 16
  %v3010 = vrot.slane %v3008, 5
  %v3011 = vor.u32 %v3007, %v3010
  %v3012 = vrot.slane %v3011, 4
  %v3014 = vshll.u32 %v2961, 16
  %v3016 = vrot.slane %v3014, 5
  %v3017 = vsel %vm411, %v3012, %v3016
  %v3019 = vshrl.u32 %v2962, 16
  %v3021 = vrot.slane %v3019, 4
  %v3022 = vshll.u32 %v2962, 16
  %v3024 = vrot.slane %v3022, 5
  %v3025 = vor.u32 %v3021, %v3024
  %v3026 = vrot.slane %v3025, 4
  %v3028 = vshll.u32 %v2963, 16
  %v3030 = vrot.slane %v3028, 5
  %v3031 = vsel %vm411, %v3026, %v3030
  %v3033 = vshrl.u32 %v2964, 16
  %v3035 = vrot.slane %v3033, 4
  %v3036 = vshll.u32 %v2964, 16
  %v3038 = vrot.slane %v3036, 5
  %v3039 = vor.u32 %v3035, %v3038
  %v3040 = vrot.slane %v3039, 4
  %v3042 = vshll.u32 %v2965, 16
  %v3044 = vrot.slane %v3042, 5
  %v3045 = vsel %vm411, %v3040, %v3044
  %v3047 = vshrl.u32 %v2966, 16
  %v3049 = vrot.slane %v3047, 4
  %v3050 = vshll.u32 %v2966, 16
  %v3052 = vrot.slane %v3050, 5
  %v3053 = vor.u32 %v3049, %v3052
  %v3054 = vrot.slane %v3053, 4
  %v3056 = vshll.u32 %v2967, 16
  %v3058 = vrot.slane %v3056, 5
  %v3059 = vsel %vm411, %v3054, %v3058
  %v3061 = vshrl.u32 %v2968, 16
  %v3063 = vrot.slane %v3061, 4
  %v3064 = vshll.u32 %v2968, 16
  %v3066 = vrot.slane %v3064, 5
  %v3067 = vor.u32 %v3063, %v3066
  %v3068 = vrot.slane %v3067, 4
  %v3070 = vshll.u32 %v2969, 16
  %v3072 = vrot.slane %v3070, 5
  %v3073 = vsel %vm411, %v3068, %v3072
  %v3075 = vshrl.u32 %v2970, 16
  %v3077 = vrot.slane %v3075, 4
  %v3078 = vshll.u32 %v2970, 16
  %v3080 = vrot.slane %v3078, 5
  %v3081 = vor.u32 %v3077, %v3080
  %v3082 = vrot.slane %v3081, 4
  %v3084 = vshll.u32 %v2971, 16
  %v3086 = vrot.slane %v3084, 5
  %v3087 = vsel %vm411, %v3082, %v3086
  %v3089 = vshrl.u32 %v2972, 16
  %v3091 = vrot.slane %v3089, 4
  %v3092 = vshll.u32 %v2972, 16
  %v3094 = vrot.slane %v3092, 5
  %v3095 = vor.u32 %v3091, %v3094
  %v3096 = vrot.slane %v3095, 4
  %v3098 = vshll.u32 %v2973, 16
  %v3100 = vrot.slane %v3098, 5
  %v3101 = vsel %vm411, %v3096, %v3100
  %v3103 = vshrl.u32 %v2974, 16
  %v3105 = vrot.slane %v3103, 4
  %v3106 = vshll.u32 %v2974, 16
  %v3108 = vrot.slane %v3106, 5
  %v3109 = vor.u32 %v3105, %v3108
  %v3110 = vrot.slane %v3109, 4
  %v3112 = vshll.u32 %v2975, 16
  %v3114 = vrot.slane %v3112, 5
  %v3115 = vsel %vm411, %v3110, %v3114
  %v3117 = vshrl.u32 %v2976, 16
  %v3119 = vrot.slane %v3117, 4
  %v3120 = vshll.u32 %v2976, 16
  %v3122 = vrot.slane %v3120, 5
  %v3123 = vor.u32 %v3119, %v3122
  %v3124 = vrot.slane %v3123, 4
  %v3126 = vshll.u32 %v2977, 16
  %v3128 = vrot.slane %v3126, 5
  %v3129 = vsel %vm411, %v3124, %v3128
  %v3131 = vshrl.u32 %v2978, 16
  %v3133 = vrot.slane %v3131, 4
  %v3134 = vshll.u32 %v2978, 16
  %v3136 = vrot.slane %v3134, 5
  %v3137 = vor.u32 %v3133, %v3136
  %v3138 = vrot.slane %v3137, 4
  %v3140 = vshll.u32 %v2979, 16
  %v3142 = vrot.slane %v3140, 5
  %v3143 = vsel %vm411, %v3138, %v3142
  %v3145 = vshrl.u32 %v2980, 16
  %v3147 = vrot.slane %v3145, 4
  %v3148 = vshll.u32 %v2980, 16
  %v3150 = vrot.slane %v3148, 5
  %v3151 = vor.u32 %v3147, %v3150
  %v3152 = vrot.slane %v3151, 4
  %v3154 = vshll.u32 %v2981, 16
  %v3156 = vrot.slane %v3154, 5
  %v3157 = vsel %vm411, %v3152, %v3156
  %v3159 = vshrl.u32 %v2982, 16
  %v3161 = vrot.slane %v3159, 4
  %v3162 = vshll.u32 %v2982, 16
  %v3164 = vrot.slane %v3162, 5
  %v3165 = vor.u32 %v3161, %v3164
  %v3166 = vrot.slane %v3165, 4
  %v3168 = vshll.u32 %v2983, 16
  %v3170 = vrot.slane %v3168, 5
  %v3171 = vsel %vm411, %v3166, %v3170
  %v3173 = vshrl.u32 %v2984, 16
  %v3175 = vrot.slane %v3173, 4
  %v3176 = vshll.u32 %v2984, 16
  %v3178 = vrot.slane %v3176, 5
  %v3179 = vor.u32 %v3175, %v3178
  %v3180 = vrot.slane %v3179, 4
  %v3182 = vshll.u32 %v2985, 16
  %v3184 = vrot.slane %v3182, 5
  %v3185 = vsel %vm411, %v3180, %v3184
  %v3187 = vshrl.u32 %v2986, 16
  %v3189 = vrot.slane %v3187, 4
  %v3190 = vshll.u32 %v2986, 16
  %v3192 = vrot.slane %v3190, 5
  %v3193 = vor.u32 %v3189, %v3192
  %v3194 = vrot.slane %v3193, 4
  %v3196 = vshll.u32 %v2987, 16
  %v3198 = vrot.slane %v3196, 5
  %v3199 = vsel %vm411, %v3194, %v3198
  %v3201 = vshrl.u32 %v2988, 16
  %v3203 = vrot.slane %v3201, 4
  %v3204 = vshll.u32 %v2988, 16
  %v3206 = vrot.slane %v3204, 5
  %v3207 = vor.u32 %v3203, %v3206
  %v3208 = vrot.slane %v3207, 4
  %v3210 = vshll.u32 %v2989, 16
  %v3212 = vrot.slane %v3210, 5
  %v3213 = vsel %vm411, %v3208, %v3212
  %s3214 = scalar_lea.vmem %s4, 384
  %v3215 = vld [vmem:[%s3214] sm:$0xf]
  %v3216 = vld [vmem:[%s3214 + $0x4] sm:$0xf]
  %v3217 = vld [vmem:[%s3214 + $0x8] sm:$0xf]
  %v3218 = vld [vmem:[%s3214 + $0xc] sm:$0xf]
  %v3219 = vld [vmem:[%s3214 + $0x10] sm:$0xf]
  %v3220 = vld [vmem:[%s3214 + $0x14] sm:$0xf]
  %v3221 = vld [vmem:[%s3214 + $0x18] sm:$0xf]
  %v3222 = vld [vmem:[%s3214 + $0x1c] sm:$0xf]
  %v3223 = vld [vmem:[%s3214 + $0x20] sm:$0xf]
  %v3224 = vld [vmem:[%s3214 + $0x24] sm:$0xf]
  %v3225 = vld [vmem:[%s3214 + $0x28] sm:$0xf]
  %v3226 = vld [vmem:[%s3214 + $0x2c] sm:$0xf]
  %v3227 = vld [vmem:[%s3214 + $0x30] sm:$0xf]
  %v3228 = vld [vmem:[%s3214 + $0x34] sm:$0xf]
  %v3229 = vld [vmem:[%s3214 + $0x38] sm:$0xf]
  %v3230 = vld [vmem:[%s3214 + $0x3c] sm:$0xf]
  %v3231 = vunpack.c.l.b16 %v3003
  %v3232 = vunpack.c.l.b16 %v3017
  %v3233 = vunpack.c.l.b16 %v3031
  %v3234 = vunpack.c.l.b16 %v3045
  %v3235 = vunpack.c.l.b16 %v3059
  %v3236 = vunpack.c.l.b16 %v3073
  %v3237 = vunpack.c.l.b16 %v3087
  %v3238 = vunpack.c.l.b16 %v3101
  %v3239 = vunpack.c.l.b16 %v3115
  %v3240 = vunpack.c.l.b16 %v3129
  %v3241 = vunpack.c.l.b16 %v3143
  %v3242 = vunpack.c.l.b16 %v3157
  %v3243 = vunpack.c.l.b16 %v3171
  %v3244 = vunpack.c.l.b16 %v3185
  %v3245 = vunpack.c.l.b16 %v3199
  %v3246 = vunpack.c.l.b16 %v3213
  %v3247 = vpack.c.b16 %v3232, %v3231
  %v3248 = vpack.c.b16 %v3234, %v3233
  %v3249 = vpack.c.b16 %v3236, %v3235
  %v3250 = vpack.c.b16 %v3238, %v3237
  %v3251 = vpack.c.b16 %v3240, %v3239
  %v3252 = vpack.c.b16 %v3242, %v3241
  %v3253 = vpack.c.b16 %v3244, %v3243
  %v3254 = vpack.c.b16 %v3246, %v3245
  %v3279 = vunpack.c.l.b16 %v3215
  %v3280 = vunpack.c.l.b16 %v3216
  %v3281 = vunpack.c.l.b16 %v3217
  %v3282 = vunpack.c.l.b16 %v3218
  %v3283 = vunpack.c.l.b16 %v3219
  %v3284 = vunpack.c.l.b16 %v3220
  %v3285 = vunpack.c.l.b16 %v3221
  %v3286 = vunpack.c.l.b16 %v3222
  %v3287 = vunpack.c.l.b16 %v3223
  %v3288 = vunpack.c.l.b16 %v3224
  %v3289 = vunpack.c.l.b16 %v3225
  %v3290 = vunpack.c.l.b16 %v3226
  %v3291 = vunpack.c.l.b16 %v3227
  %v3292 = vunpack.c.l.b16 %v3228
  %v3293 = vunpack.c.l.b16 %v3229
  %v3294 = vunpack.c.l.b16 %v3230
  %v3295 = vpack.c.b16 %v3280, %v3279
  %v3296 = vpack.c.b16 %v3282, %v3281
  %v3297 = vpack.c.b16 %v3284, %v3283
  %v3298 = vpack.c.b16 %v3286, %v3285
  %v3299 = vpack.c.b16 %v3288, %v3287
  %v3300 = vpack.c.b16 %v3290, %v3289
  %v3301 = vpack.c.b16 %v3292, %v3291
  %v3302 = vpack.c.b16 %v3294, %v3293
  %3311 = vmatprep.subr.bf16.mxu0 0
  %3312 = vmatpush1.bf16.msra.mxu0 %v3302
  %3313 = vmatprep.subr.bf16.mxu0 0
  %3314 = vmatpush1.bf16.msra.mxu0 %v3301
  %3315 = vmatprep.subr.bf16.mxu0 0
  %3316 = vmatpush1.bf16.msra.mxu0 %v3300
  %3317 = vmatprep.subr.bf16.mxu0 0
  %3318 = vmatpush1.bf16.msra.mxu0 %v3299
  %3319 = vmatprep.subr.bf16.mxu0 0
  %3320 = vmatpush1.bf16.msra.mxu0 %v3298
  %3321 = vmatprep.subr.bf16.mxu0 0
  %3322 = vmatpush1.bf16.msra.mxu0 %v3297
  %3323 = vmatprep.subr.bf16.mxu0 0
  %3324 = vmatpush1.bf16.msra.mxu0 %v3296
  %3325 = vmatprep.subr.bf16.mxu0 0
  %3326 = vmatpush1.bf16.msra.mxu0 %v3295
  %3327 = vmatprep.subr.bf16.mxu0 0
  %3328 = vmatpush2.bf16.msra.mxu0 0
  %3329 = vmatprep.subr.bf16.mxu0 0
  %3330 = vmatpush2.bf16.msra.mxu0 0
  %3331 = vmatprep.subr.bf16.mxu0 0
  %3332 = vmatpush2.bf16.msra.mxu0 0
  %3333 = vmatprep.subr.bf16.mxu0 0
  %3334 = vmatpush2.bf16.msra.mxu0 0
  %3335 = vmatprep.subr.bf16.mxu0 0
  %3336 = vmatpush2.bf16.msra.mxu0 0
  %3337 = vmatprep.subr.bf16.mxu0 0
  %3338 = vmatpush2.bf16.msra.mxu0 0
  %3339 = vmatprep.subr.bf16.mxu0 0
  %3340 = vmatpush2.bf16.msra.mxu0 0
  %3341 = vmatprep.subr.bf16.mxu0 0
  %3342 = vmatpush2.bf16.msra.mxu0 0
  %3343 = vmatprep.mubr.bf16.mxu0 0
  %3344 = vmatmul.mubr.bf16.gmra.mxu0 %v3247
  %v3345 = vpop.f32.mrf.mxu0
  %v3346 = vadd.f32 0.0, %v3345
  %v3347 = vpop.f32.mrf.mxu0
  %v3348 = vpop.f32.mrf.mxu0
  %v3349 = vadd.f32 0.0, %v3348
  %v3350 = vpop.f32.mrf.mxu0
  %3351 = vmatprep.mubr.bf16.mxu0 0
  %3352 = vmatmul.mubr.bf16.gmra.mxu0 %v3248
  %v3353 = vpop.f32.mrf.mxu0
  %v3354 = vadd.f32 0.0, %v3353
  %v3355 = vpop.f32.mrf.mxu0
  %v3356 = vpop.f32.mrf.mxu0
  %v3357 = vadd.f32 0.0, %v3356
  %v3358 = vpop.f32.mrf.mxu0
  %3359 = vmatprep.mubr.bf16.mxu0 0
  %3360 = vmatmul.mubr.bf16.gmra.mxu0 %v3249
  %v3361 = vpop.f32.mrf.mxu0
  %v3362 = vadd.f32 0.0, %v3361
  %v3363 = vpop.f32.mrf.mxu0
  %v3364 = vpop.f32.mrf.mxu0
  %v3365 = vadd.f32 0.0, %v3364
  %v3366 = vpop.f32.mrf.mxu0
  %3367 = vmatprep.mubr.bf16.mxu0 0
  %3368 = vmatmul.mubr.bf16.gmra.mxu0 %v3250
  %v3369 = vpop.f32.mrf.mxu0
  %v3370 = vadd.f32 0.0, %v3369
  %v3371 = vpop.f32.mrf.mxu0
  %v3372 = vpop.f32.mrf.mxu0
  %v3373 = vadd.f32 0.0, %v3372
  %v3374 = vpop.f32.mrf.mxu0
  %3375 = vmatprep.mubr.bf16.mxu0 0
  %3376 = vmatmul.mubr.bf16.gmra.mxu0 %v3251
  %v3377 = vpop.f32.mrf.mxu0
  %v3378 = vadd.f32 0.0, %v3377
  %v3379 = vpop.f32.mrf.mxu0
  %v3380 = vpop.f32.mrf.mxu0
  %v3381 = vadd.f32 0.0, %v3380
  %v3382 = vpop.f32.mrf.mxu0
  %3383 = vmatprep.mubr.bf16.mxu0 0
  %3384 = vmatmul.mubr.bf16.gmra.mxu0 %v3252
  %v3385 = vpop.f32.mrf.mxu0
  %v3386 = vadd.f32 0.0, %v3385
  %v3387 = vpop.f32.mrf.mxu0
  %v3388 = vpop.f32.mrf.mxu0
  %v3389 = vadd.f32 0.0, %v3388
  %v3390 = vpop.f32.mrf.mxu0
  %3391 = vmatprep.mubr.bf16.mxu0 0
  %3392 = vmatmul.mubr.bf16.gmra.mxu0 %v3253
  %v3393 = vpop.f32.mrf.mxu0
  %v3394 = vadd.f32 0.0, %v3393
  %v3395 = vpop.f32.mrf.mxu0
  %v3396 = vpop.f32.mrf.mxu0
  %v3397 = vadd.f32 0.0, %v3396
  %v3398 = vpop.f32.mrf.mxu0
  %3399 = vmatprep.mubr.bf16.mxu0 0
  %3400 = vmatmul.mubr.bf16.gmra.mxu0 %v3254
  %v3401 = vpop.f32.mrf.mxu0
  %v3402 = vadd.f32 0.0, %v3401
  %v3403 = vpop.f32.mrf.mxu0
  %v3404 = vpop.f32.mrf.mxu0
  %v3405 = vadd.f32 0.0, %v3404
  %v3406 = vpop.f32.mrf.mxu0
  %3407 = vdwg.mxu0
  %v3408 = vadd.f32 %v2941, %v3346
  %v3409 = vadd.f32 %v2942, %v3349
  %v3410 = vadd.f32 %v2943, %v3354
  %v3411 = vadd.f32 %v2944, %v3357
  %v3412 = vadd.f32 %v2945, %v3362
  %v3413 = vadd.f32 %v2946, %v3365
  %v3414 = vadd.f32 %v2947, %v3370
  %v3415 = vadd.f32 %v2948, %v3373
  %v3416 = vadd.f32 %v2949, %v3378
  %v3417 = vadd.f32 %v2950, %v3381
  %v3418 = vadd.f32 %v2951, %v3386
  %v3419 = vadd.f32 %v2952, %v3389
  %v3420 = vadd.f32 %v2953, %v3394
  %v3421 = vadd.f32 %v2954, %v3397
  %v3422 = vadd.f32 %v2955, %v3402
  %v3423 = vadd.f32 %v2956, %v3405
  %v3424 = vld [vmem:[%s2957] sm:$0xe]
  %v3425 = vld [vmem:[%s2957 + $0x8] sm:$0xe]
  %v3426 = vld [vmem:[%s2957 + $0x10] sm:$0xe]
  %v3427 = vld [vmem:[%s2957 + $0x18] sm:$0xe]
  %v3428 = vld [vmem:[%s2957 + $0x20] sm:$0xe]
  %v3429 = vld [vmem:[%s2957 + $0x28] sm:$0xe]
  %v3430 = vld [vmem:[%s2957 + $0x30] sm:$0xe]
  %v3431 = vld [vmem:[%s2957 + $0x38] sm:$0xe]
  %v3432 = vld [vmem:[%s2957 + $0x50] sm:$0xe]
  %v3433 = vld [vmem:[%s2957 + $0x58] sm:$0xe]
  %v3434 = vld [vmem:[%s2957 + $0x60] sm:$0xe]
  %v3435 = vld [vmem:[%s2957 + $0x68] sm:$0xe]
  %v3436 = vld [vmem:[%s2957 + $0x70] sm:$0xe]
  %v3437 = vld [vmem:[%s2957 + $0x78] sm:$0xe]
  %v3438 = vld [vmem:[%s2957 + $0x80] sm:$0xe]
  %v3439 = vld [vmem:[%s2957 + $0x88] sm:$0xe]
  %v3472 = vrot.slane %v3424, 5
  %v3473 = vrot.slane %v3472, 4
  %v3474 = vrot.slane %v2959, 5
  %v3475 = vsel %vm702, %v3473, %v3474
  %v3476 = vrot.slane %v3425, 5
  %v3477 = vrot.slane %v3476, 4
  %v3478 = vrot.slane %v2961, 5
  %v3479 = vsel %vm702, %v3477, %v3478
  %v3480 = vrot.slane %v3426, 5
  %v3481 = vrot.slane %v3480, 4
  %v3482 = vrot.slane %v2963, 5
  %v3483 = vsel %vm702, %v3481, %v3482
  %v3484 = vrot.slane %v3427, 5
  %v3485 = vrot.slane %v3484, 4
  %v3486 = vrot.slane %v2965, 5
  %v3487 = vsel %vm702, %v3485, %v3486
  %v3488 = vrot.slane %v3428, 5
  %v3489 = vrot.slane %v3488, 4
  %v3490 = vrot.slane %v2967, 5
  %v3491 = vsel %vm702, %v3489, %v3490
  %v3492 = vrot.slane %v3429, 5
  %v3493 = vrot.slane %v3492, 4
  %v3494 = vrot.slane %v2969, 5
  %v3495 = vsel %vm702, %v3493, %v3494
  %v3496 = vrot.slane %v3430, 5
  %v3497 = vrot.slane %v3496, 4
  %v3498 = vrot.slane %v2971, 5
  %v3499 = vsel %vm702, %v3497, %v3498
  %v3500 = vrot.slane %v3431, 5
  %v3501 = vrot.slane %v3500, 4
  %v3502 = vrot.slane %v2973, 5
  %v3503 = vsel %vm702, %v3501, %v3502
  %v3504 = vrot.slane %v3432, 5
  %v3505 = vrot.slane %v3504, 4
  %v3506 = vrot.slane %v2975, 5
  %v3507 = vsel %vm702, %v3505, %v3506
  %v3508 = vrot.slane %v3433, 5
  %v3509 = vrot.slane %v3508, 4
  %v3510 = vrot.slane %v2977, 5
  %v3511 = vsel %vm702, %v3509, %v3510
  %v3512 = vrot.slane %v3434, 5
  %v3513 = vrot.slane %v3512, 4
  %v3514 = vrot.slane %v2979, 5
  %v3515 = vsel %vm702, %v3513, %v3514
  %v3516 = vrot.slane %v3435, 5
  %v3517 = vrot.slane %v3516, 4
  %v3518 = vrot.slane %v2981, 5
  %v3519 = vsel %vm702, %v3517, %v3518
  %v3520 = vrot.slane %v3436, 5
  %v3521 = vrot.slane %v3520, 4
  %v3522 = vrot.slane %v2983, 5
  %v3523 = vsel %vm702, %v3521, %v3522
  %v3524 = vrot.slane %v3437, 5
  %v3525 = vrot.slane %v3524, 4
  %v3526 = vrot.slane %v2985, 5
  %v3527 = vsel %vm702, %v3525, %v3526
  %v3528 = vrot.slane %v3438, 5
  %v3529 = vrot.slane %v3528, 4
  %v3530 = vrot.slane %v2987, 5
  %v3531 = vsel %vm702, %v3529, %v3530
  %v3532 = vrot.slane %v3439, 5
  %v3533 = vrot.slane %v3532, 4
  %v3534 = vrot.slane %v2989, 5
  %v3535 = vsel %vm702, %v3533, %v3534
  %s3536 = scalar_lea.vmem %s4, 448
  %v3537 = vld [vmem:[%s3536] sm:$0xf]
  %v3538 = vld [vmem:[%s3536 + $0x4] sm:$0xf]
  %v3539 = vld [vmem:[%s3536 + $0x8] sm:$0xf]
  %v3540 = vld [vmem:[%s3536 + $0xc] sm:$0xf]
  %v3541 = vld [vmem:[%s3536 + $0x10] sm:$0xf]
  %v3542 = vld [vmem:[%s3536 + $0x14] sm:$0xf]
  %v3543 = vld [vmem:[%s3536 + $0x18] sm:$0xf]
  %v3544 = vld [vmem:[%s3536 + $0x1c] sm:$0xf]
  %v3545 = vld [vmem:[%s3536 + $0x20] sm:$0xf]
  %v3546 = vld [vmem:[%s3536 + $0x24] sm:$0xf]
  %v3547 = vld [vmem:[%s3536 + $0x28] sm:$0xf]
  %v3548 = vld [vmem:[%s3536 + $0x2c] sm:$0xf]
  %v3549 = vld [vmem:[%s3536 + $0x30] sm:$0xf]
  %v3550 = vld [vmem:[%s3536 + $0x34] sm:$0xf]
  %v3551 = vld [vmem:[%s3536 + $0x38] sm:$0xf]
  %v3552 = vld [vmem:[%s3536 + $0x3c] sm:$0xf]
  %v3553 = vunpack.c.l.b16 %v3475
  %v3554 = vunpack.c.l.b16 %v3479
  %v3555 = vunpack.c.l.b16 %v3483
  %v3556 = vunpack.c.l.b16 %v3487
  %v3557 = vunpack.c.l.b16 %v3491
  %v3558 = vunpack.c.l.b16 %v3495
  %v3559 = vunpack.c.l.b16 %v3499
  %v3560 = vunpack.c.l.b16 %v3503
  %v3561 = vunpack.c.l.b16 %v3507
  %v3562 = vunpack.c.l.b16 %v3511
  %v3563 = vunpack.c.l.b16 %v3515
  %v3564 = vunpack.c.l.b16 %v3519
  %v3565 = vunpack.c.l.b16 %v3523
  %v3566 = vunpack.c.l.b16 %v3527
  %v3567 = vunpack.c.l.b16 %v3531
  %v3568 = vunpack.c.l.b16 %v3535
  %v3569 = vpack.c.b16 %v3554, %v3553
  %v3570 = vpack.c.b16 %v3556, %v3555
  %v3571 = vpack.c.b16 %v3558, %v3557
  %v3572 = vpack.c.b16 %v3560, %v3559
  %v3573 = vpack.c.b16 %v3562, %v3561
  %v3574 = vpack.c.b16 %v3564, %v3563
  %v3575 = vpack.c.b16 %v3566, %v3565
  %v3576 = vpack.c.b16 %v3568, %v3567
  %v3601 = vunpack.c.l.b16 %v3537
  %v3602 = vunpack.c.l.b16 %v3538
  %v3603 = vunpack.c.l.b16 %v3539
  %v3604 = vunpack.c.l.b16 %v3540
  %v3605 = vunpack.c.l.b16 %v3541
  %v3606 = vunpack.c.l.b16 %v3542
  %v3607 = vunpack.c.l.b16 %v3543
  %v3608 = vunpack.c.l.b16 %v3544
  %v3609 = vunpack.c.l.b16 %v3545
  %v3610 = vunpack.c.l.b16 %v3546
  %v3611 = vunpack.c.l.b16 %v3547
  %v3612 = vunpack.c.l.b16 %v3548
  %v3613 = vunpack.c.l.b16 %v3549
  %v3614 = vunpack.c.l.b16 %v3550
  %v3615 = vunpack.c.l.b16 %v3551
  %v3616 = vunpack.c.l.b16 %v3552
  %v3617 = vpack.c.b16 %v3602, %v3601
  %v3618 = vpack.c.b16 %v3604, %v3603
  %v3619 = vpack.c.b16 %v3606, %v3605
  %v3620 = vpack.c.b16 %v3608, %v3607
  %v3621 = vpack.c.b16 %v3610, %v3609
  %v3622 = vpack.c.b16 %v3612, %v3611
  %v3623 = vpack.c.b16 %v3614, %v3613
  %v3624 = vpack.c.b16 %v3616, %v3615
  %3633 = vmatprep.subr.bf16.mxu0 0
  %3634 = vmatpush1.bf16.msra.mxu0 %v3624
  %3635 = vmatprep.subr.bf16.mxu0 0
  %3636 = vmatpush1.bf16.msra.mxu0 %v3623
  %3637 = vmatprep.subr.bf16.mxu0 0
  %3638 = vmatpush1.bf16.msra.mxu0 %v3622
  %3639 = vmatprep.subr.bf16.mxu0 0
  %3640 = vmatpush1.bf16.msra.mxu0 %v3621
  %3641 = vmatprep.subr.bf16.mxu0 0
  %3642 = vmatpush1.bf16.msra.mxu0 %v3620
  %3643 = vmatprep.subr.bf16.mxu0 0
  %3644 = vmatpush1.bf16.msra.mxu0 %v3619
  %3645 = vmatprep.subr.bf16.mxu0 0
  %3646 = vmatpush1.bf16.msra.mxu0 %v3618
  %3647 = vmatprep.subr.bf16.mxu0 0
  %3648 = vmatpush1.bf16.msra.mxu0 %v3617
  %3649 = vmatprep.subr.bf16.mxu0 0
  %3650 = vmatpush2.bf16.msra.mxu0 0
  %3651 = vmatprep.subr.bf16.mxu0 0
  %3652 = vmatpush2.bf16.msra.mxu0 0
  %3653 = vmatprep.subr.bf16.mxu0 0
  %3654 = vmatpush2.bf16.msra.mxu0 0
  %3655 = vmatprep.subr.bf16.mxu0 0
  %3656 = vmatpush2.bf16.msra.mxu0 0
  %3657 = vmatprep.subr.bf16.mxu0 0
  %3658 = vmatpush2.bf16.msra.mxu0 0
  %3659 = vmatprep.subr.bf16.mxu0 0
  %3660 = vmatpush2.bf16.msra.mxu0 0
  %3661 = vmatprep.subr.bf16.mxu0 0
  %3662 = vmatpush2.bf16.msra.mxu0 0
  %3663 = vmatprep.subr.bf16.mxu0 0
  %3664 = vmatpush2.bf16.msra.mxu0 0
  %3665 = vmatprep.mubr.bf16.mxu0 0
  %3666 = vmatmul.mubr.bf16.gmra.mxu0 %v3569
  %v3667 = vpop.f32.mrf.mxu0
  %v3668 = vadd.f32 0.0, %v3667
  %v3669 = vpop.f32.mrf.mxu0
  %v3670 = vpop.f32.mrf.mxu0
  %v3671 = vadd.f32 0.0, %v3670
  %v3672 = vpop.f32.mrf.mxu0
  %3673 = vmatprep.mubr.bf16.mxu0 0
  %3674 = vmatmul.mubr.bf16.gmra.mxu0 %v3570
  %v3675 = vpop.f32.mrf.mxu0
  %v3676 = vadd.f32 0.0, %v3675
  %v3677 = vpop.f32.mrf.mxu0
  %v3678 = vpop.f32.mrf.mxu0
  %v3679 = vadd.f32 0.0, %v3678
  %v3680 = vpop.f32.mrf.mxu0
  %3681 = vmatprep.mubr.bf16.mxu0 0
  %3682 = vmatmul.mubr.bf16.gmra.mxu0 %v3571
  %v3683 = vpop.f32.mrf.mxu0
  %v3684 = vadd.f32 0.0, %v3683
  %v3685 = vpop.f32.mrf.mxu0
  %v3686 = vpop.f32.mrf.mxu0
  %v3687 = vadd.f32 0.0, %v3686
  %v3688 = vpop.f32.mrf.mxu0
  %3689 = vmatprep.mubr.bf16.mxu0 0
  %3690 = vmatmul.mubr.bf16.gmra.mxu0 %v3572
  %v3691 = vpop.f32.mrf.mxu0
  %v3692 = vadd.f32 0.0, %v3691
  %v3693 = vpop.f32.mrf.mxu0
  %v3694 = vpop.f32.mrf.mxu0
  %v3695 = vadd.f32 0.0, %v3694
  %v3696 = vpop.f32.mrf.mxu0
  %3697 = vmatprep.mubr.bf16.mxu0 0
  %3698 = vmatmul.mubr.bf16.gmra.mxu0 %v3573
  %v3699 = vpop.f32.mrf.mxu0
  %v3700 = vadd.f32 0.0, %v3699
  %v3701 = vpop.f32.mrf.mxu0
  %v3702 = vpop.f32.mrf.mxu0
  %v3703 = vadd.f32 0.0, %v3702
  %v3704 = vpop.f32.mrf.mxu0
  %3705 = vmatprep.mubr.bf16.mxu0 0
  %3706 = vmatmul.mubr.bf16.gmra.mxu0 %v3574
  %v3707 = vpop.f32.mrf.mxu0
  %v3708 = vadd.f32 0.0, %v3707
  %v3709 = vpop.f32.mrf.mxu0
  %v3710 = vpop.f32.mrf.mxu0
  %v3711 = vadd.f32 0.0, %v3710
  %v3712 = vpop.f32.mrf.mxu0
  %3713 = vmatprep.mubr.bf16.mxu0 0
  %3714 = vmatmul.mubr.bf16.gmra.mxu0 %v3575
  %v3715 = vpop.f32.mrf.mxu0
  %v3716 = vadd.f32 0.0, %v3715
  %v3717 = vpop.f32.mrf.mxu0
  %v3718 = vpop.f32.mrf.mxu0
  %v3719 = vadd.f32 0.0, %v3718
  %v3720 = vpop.f32.mrf.mxu0
  %3721 = vmatprep.mubr.bf16.mxu0 0
  %3722 = vmatmul.mubr.bf16.gmra.mxu0 %v3576
  %v3723 = vpop.f32.mrf.mxu0
  %v3724 = vadd.f32 0.0, %v3723
  %v3725 = vpop.f32.mrf.mxu0
  %v3726 = vpop.f32.mrf.mxu0
  %v3727 = vadd.f32 0.0, %v3726
  %v3728 = vpop.f32.mrf.mxu0
  %3729 = vdwg.mxu0
  %v3730 = vadd.f32 %v3408, %v3668
  %v3731 = vadd.f32 %v3409, %v3671
  %v3732 = vadd.f32 %v3410, %v3676
  %v3733 = vadd.f32 %v3411, %v3679
  %v3734 = vadd.f32 %v3412, %v3684
  %v3735 = vadd.f32 %v3413, %v3687
  %v3736 = vadd.f32 %v3414, %v3692
  %v3737 = vadd.f32 %v3415, %v3695
  %v3738 = vadd.f32 %v3416, %v3700
  %v3739 = vadd.f32 %v3417, %v3703
  %v3740 = vadd.f32 %v3418, %v3708
  %v3741 = vadd.f32 %v3419, %v3711
  %v3742 = vadd.f32 %v3420, %v3716
  %v3743 = vadd.f32 %v3421, %v3719
  %v3744 = vadd.f32 %v3422, %v3724
  %v3745 = vadd.f32 %v3423, %v3727
  %v3746 = vld [vmem:[%s2957 + $0x4] sm:$0x3]
  %v3747 = vld [vmem:[%s2957 + $0xc] sm:$0x3]
  %v3748 = vld [vmem:[%s2957 + $0x14] sm:$0x3]
  %v3749 = vld [vmem:[%s2957 + $0x1c] sm:$0x3]
  %v3750 = vld [vmem:[%s2957 + $0x24] sm:$0x3]
  %v3751 = vld [vmem:[%s2957 + $0x2c] sm:$0x3]
  %v3752 = vld [vmem:[%s2957 + $0x34] sm:$0x3]
  %v3753 = vld [vmem:[%s2957 + $0x3c] sm:$0x3]
  %v3754 = vld [vmem:[%s2957 + $0x54] sm:$0x3]
  %v3755 = vld [vmem:[%s2957 + $0x5c] sm:$0x3]
  %v3756 = vld [vmem:[%s2957 + $0x64] sm:$0x3]
  %v3757 = vld [vmem:[%s2957 + $0x6c] sm:$0x3]
  %v3758 = vld [vmem:[%s2957 + $0x74] sm:$0x3]
  %v3759 = vld [vmem:[%s2957 + $0x7c] sm:$0x3]
  %v3760 = vld [vmem:[%s2957 + $0x84] sm:$0x3]
  %v3761 = vld [vmem:[%s2957 + $0x8c] sm:$0x3]
  %v3763 = vshrl.u32 %v3424, 16
  %v3765 = vrot.slane %v3763, 5
  %v3766 = vshll.u32 %v3424, 16
  %v3768 = vrot.slane %v3766, 6
  %v3769 = vor.u32 %v3765, %v3768
  %v3770 = vrot.slane %v3769, 4
  %v3772 = vshrl.u32 %v3746, 16
  %v3774 = vrot.slane %v3772, 5
  %v3775 = vshll.u32 %v3746, 16
  %v3777 = vrot.slane %v3775, 6
  %v3778 = vor.u32 %v3774, %v3777
  %v3779 = vsel %vm1156, %v3770, %v3778
  %v3781 = vshrl.u32 %v3425, 16
  %v3783 = vrot.slane %v3781, 5
  %v3784 = vshll.u32 %v3425, 16
  %v3786 = vrot.slane %v3784, 6
  %v3787 = vor.u32 %v3783, %v3786
  %v3788 = vrot.slane %v3787, 4
  %v3790 = vshrl.u32 %v3747, 16
  %v3792 = vrot.slane %v3790, 5
  %v3793 = vshll.u32 %v3747, 16
  %v3795 = vrot.slane %v3793, 6
  %v3796 = vor.u32 %v3792, %v3795
  %v3797 = vsel %vm1156, %v3788, %v3796
  %v3799 = vshrl.u32 %v3426, 16
  %v3801 = vrot.slane %v3799, 5
  %v3802 = vshll.u32 %v3426, 16
  %v3804 = vrot.slane %v3802, 6
  %v3805 = vor.u32 %v3801, %v3804
  %v3806 = vrot.slane %v3805, 4
  %v3808 = vshrl.u32 %v3748, 16
  %v3810 = vrot.slane %v3808, 5
  %v3811 = vshll.u32 %v3748, 16
  %v3813 = vrot.slane %v3811, 6
  %v3814 = vor.u32 %v3810, %v3813
  %v3815 = vsel %vm1156, %v3806, %v3814
  %v3817 = vshrl.u32 %v3427, 16
  %v3819 = vrot.slane %v3817, 5
  %v3820 = vshll.u32 %v3427, 16
  %v3822 = vrot.slane %v3820, 6
  %v3823 = vor.u32 %v3819, %v3822
  %v3824 = vrot.slane %v3823, 4
  %v3826 = vshrl.u32 %v3749, 16
  %v3828 = vrot.slane %v3826, 5
  %v3829 = vshll.u32 %v3749, 16
  %v3831 = vrot.slane %v3829, 6
  %v3832 = vor.u32 %v3828, %v3831
  %v3833 = vsel %vm1156, %v3824, %v3832
  %v3835 = vshrl.u32 %v3428, 16
  %v3837 = vrot.slane %v3835, 5
  %v3838 = vshll.u32 %v3428, 16
  %v3840 = vrot.slane %v3838, 6
  %v3841 = vor.u32 %v3837, %v3840
  %v3842 = vrot.slane %v3841, 4
  %v3844 = vshrl.u32 %v3750, 16
  %v3846 = vrot.slane %v3844, 5
  %v3847 = vshll.u32 %v3750, 16
  %v3849 = vrot.slane %v3847, 6
  %v3850 = vor.u32 %v3846, %v3849
  %v3851 = vsel %vm1156, %v3842, %v3850
  %v3853 = vshrl.u32 %v3429, 16
  %v3855 = vrot.slane %v3853, 5
  %v3856 = vshll.u32 %v3429, 16
  %v3858 = vrot.slane %v3856, 6
  %v3859 = vor.u32 %v3855, %v3858
  %v3860 = vrot.slane %v3859, 4
  %v3862 = vshrl.u32 %v3751, 16
  %v3864 = vrot.slane %v3862, 5
  %v3865 = vshll.u32 %v3751, 16
  %v3867 = vrot.slane %v3865, 6
  %v3868 = vor.u32 %v3864, %v3867
  %v3869 = vsel %vm1156, %v3860, %v3868
  %v3871 = vshrl.u32 %v3430, 16
  %v3873 = vrot.slane %v3871, 5
  %v3874 = vshll.u32 %v3430, 16
  %v3876 = vrot.slane %v3874, 6
  %v3877 = vor.u32 %v3873, %v3876
  %v3878 = vrot.slane %v3877, 4
  %v3880 = vshrl.u32 %v3752, 16
  %v3882 = vrot.slane %v3880, 5
  %v3883 = vshll.u32 %v3752, 16
  %v3885 = vrot.slane %v3883, 6
  %v3886 = vor.u32 %v3882, %v3885
  %v3887 = vsel %vm1156, %v3878, %v3886
  %v3889 = vshrl.u32 %v3431, 16
  %v3891 = vrot.slane %v3889, 5
  %v3892 = vshll.u32 %v3431, 16
  %v3894 = vrot.slane %v3892, 6
  %v3895 = vor.u32 %v3891, %v3894
  %v3896 = vrot.slane %v3895, 4
  %v3898 = vshrl.u32 %v3753, 16
  %v3900 = vrot.slane %v3898, 5
  %v3901 = vshll.u32 %v3753, 16
  %v3903 = vrot.slane %v3901, 6
  %v3904 = vor.u32 %v3900, %v3903
  %v3905 = vsel %vm1156, %v3896, %v3904
  %v3907 = vshrl.u32 %v3432, 16
  %v3909 = vrot.slane %v3907, 5
  %v3910 = vshll.u32 %v3432, 16
  %v3912 = vrot.slane %v3910, 6
  %v3913 = vor.u32 %v3909, %v3912
  %v3914 = vrot.slane %v3913, 4
  %v3916 = vshrl.u32 %v3754, 16
  %v3918 = vrot.slane %v3916, 5
  %v3919 = vshll.u32 %v3754, 16
  %v3921 = vrot.slane %v3919, 6
  %v3922 = vor.u32 %v3918, %v3921
  %v3923 = vsel %vm1156, %v3914, %v3922
  %v3925 = vshrl.u32 %v3433, 16
  %v3927 = vrot.slane %v3925, 5
  %v3928 = vshll.u32 %v3433, 16
  %v3930 = vrot.slane %v3928, 6
  %v3931 = vor.u32 %v3927, %v3930
  %v3932 = vrot.slane %v3931, 4
  %v3934 = vshrl.u32 %v3755, 16
  %v3936 = vrot.slane %v3934, 5
  %v3937 = vshll.u32 %v3755, 16
  %v3939 = vrot.slane %v3937, 6
  %v3940 = vor.u32 %v3936, %v3939
  %v3941 = vsel %vm1156, %v3932, %v3940
  %v3943 = vshrl.u32 %v3434, 16
  %v3945 = vrot.slane %v3943, 5
  %v3946 = vshll.u32 %v3434, 16
  %v3948 = vrot.slane %v3946, 6
  %v3949 = vor.u32 %v3945, %v3948
  %v3950 = vrot.slane %v3949, 4
  %v3952 = vshrl.u32 %v3756, 16
  %v3954 = vrot.slane %v3952, 5
  %v3955 = vshll.u32 %v3756, 16
  %v3957 = vrot.slane %v3955, 6
  %v3958 = vor.u32 %v3954, %v3957
  %v3959 = vsel %vm1156, %v3950, %v3958
  %v3961 = vshrl.u32 %v3435, 16
  %v3963 = vrot.slane %v3961, 5
  %v3964 = vshll.u32 %v3435, 16
  %v3966 = vrot.slane %v3964, 6
  %v3967 = vor.u32 %v3963, %v3966
  %v3968 = vrot.slane %v3967, 4
  %v3970 = vshrl.u32 %v3757, 16
  %v3972 = vrot.slane %v3970, 5
  %v3973 = vshll.u32 %v3757, 16
  %v3975 = vrot.slane %v3973, 6
  %v3976 = vor.u32 %v3972, %v3975
  %v3977 = vsel %vm1156, %v3968, %v3976
  %v3979 = vshrl.u32 %v3436, 16
  %v3981 = vrot.slane %v3979, 5
  %v3982 = vshll.u32 %v3436, 16
  %v3984 = vrot.slane %v3982, 6
  %v3985 = vor.u32 %v3981, %v3984
  %v3986 = vrot.slane %v3985, 4
  %v3988 = vshrl.u32 %v3758, 16
  %v3990 = vrot.slane %v3988, 5
  %v3991 = vshll.u32 %v3758, 16
  %v3993 = vrot.slane %v3991, 6
  %v3994 = vor.u32 %v3990, %v3993
  %v3995 = vsel %vm1156, %v3986, %v3994
  %v3997 = vshrl.u32 %v3437, 16
  %v3999 = vrot.slane %v3997, 5
  %v4000 = vshll.u32 %v3437, 16
  %v4002 = vrot.slane %v4000, 6
  %v4003 = vor.u32 %v3999, %v4002
  %v4004 = vrot.slane %v4003, 4
  %v4006 = vshrl.u32 %v3759, 16
  %v4008 = vrot.slane %v4006, 5
  %v4009 = vshll.u32 %v3759, 16
  %v4011 = vrot.slane %v4009, 6
  %v4012 = vor.u32 %v4008, %v4011
  %v4013 = vsel %vm1156, %v4004, %v4012
  %v4015 = vshrl.u32 %v3438, 16
  %v4017 = vrot.slane %v4015, 5
  %v4018 = vshll.u32 %v3438, 16
  %v4020 = vrot.slane %v4018, 6
  %v4021 = vor.u32 %v4017, %v4020
  %v4022 = vrot.slane %v4021, 4
  %v4024 = vshrl.u32 %v3760, 16
  %v4026 = vrot.slane %v4024, 5
  %v4027 = vshll.u32 %v3760, 16
  %v4029 = vrot.slane %v4027, 6
  %v4030 = vor.u32 %v4026, %v4029
  %v4031 = vsel %vm1156, %v4022, %v4030
  %v4033 = vshrl.u32 %v3439, 16
  %v4035 = vrot.slane %v4033, 5
  %v4036 = vshll.u32 %v3439, 16
  %v4038 = vrot.slane %v4036, 6
  %v4039 = vor.u32 %v4035, %v4038
  %v4040 = vrot.slane %v4039, 4
  %v4042 = vshrl.u32 %v3761, 16
  %v4044 = vrot.slane %v4042, 5
  %v4045 = vshll.u32 %v3761, 16
  %v4047 = vrot.slane %v4045, 6
  %v4048 = vor.u32 %v4044, %v4047
  %v4049 = vsel %vm1156, %v4040, %v4048
  %s4050 = scalar_lea.vmem %s4, 512
  %v4051 = vld [vmem:[%s4050] sm:$0xf]
  %v4052 = vld [vmem:[%s4050 + $0x4] sm:$0xf]
  %v4053 = vld [vmem:[%s4050 + $0x8] sm:$0xf]
  %v4054 = vld [vmem:[%s4050 + $0xc] sm:$0xf]
  %v4055 = vld [vmem:[%s4050 + $0x10] sm:$0xf]
  %v4056 = vld [vmem:[%s4050 + $0x14] sm:$0xf]
  %v4057 = vld [vmem:[%s4050 + $0x18] sm:$0xf]
  %v4058 = vld [vmem:[%s4050 + $0x1c] sm:$0xf]
  %v4059 = vld [vmem:[%s4050 + $0x20] sm:$0xf]
  %v4060 = vld [vmem:[%s4050 + $0x24] sm:$0xf]
  %v4061 = vld [vmem:[%s4050 + $0x28] sm:$0xf]
  %v4062 = vld [vmem:[%s4050 + $0x2c] sm:$0xf]
  %v4063 = vld [vmem:[%s4050 + $0x30] sm:$0xf]
  %v4064 = vld [vmem:[%s4050 + $0x34] sm:$0xf]
  %v4065 = vld [vmem:[%s4050 + $0x38] sm:$0xf]
  %v4066 = vld [vmem:[%s4050 + $0x3c] sm:$0xf]
  %v4067 = vunpack.c.l.b16 %v3779
  %v4068 = vunpack.c.l.b16 %v3797
  %v4069 = vunpack.c.l.b16 %v3815
  %v4070 = vunpack.c.l.b16 %v3833
  %v4071 = vunpack.c.l.b16 %v3851
  %v4072 = vunpack.c.l.b16 %v3869
  %v4073 = vunpack.c.l.b16 %v3887
  %v4074 = vunpack.c.l.b16 %v3905
  %v4075 = vunpack.c.l.b16 %v3923
  %v4076 = vunpack.c.l.b16 %v3941
  %v4077 = vunpack.c.l.b16 %v3959
  %v4078 = vunpack.c.l.b16 %v3977
  %v4079 = vunpack.c.l.b16 %v3995
  %v4080 = vunpack.c.l.b16 %v4013
  %v4081 = vunpack.c.l.b16 %v4031
  %v4082 = vunpack.c.l.b16 %v4049
  %v4083 = vpack.c.b16 %v4068, %v4067
  %v4084 = vpack.c.b16 %v4070, %v4069
  %v4085 = vpack.c.b16 %v4072, %v4071
  %v4086 = vpack.c.b16 %v4074, %v4073
  %v4087 = vpack.c.b16 %v4076, %v4075
  %v4088 = vpack.c.b16 %v4078, %v4077
  %v4089 = vpack.c.b16 %v4080, %v4079
  %v4090 = vpack.c.b16 %v4082, %v4081
  %v4115 = vunpack.c.l.b16 %v4051
  %v4116 = vunpack.c.l.b16 %v4052
  %v4117 = vunpack.c.l.b16 %v4053
  %v4118 = vunpack.c.l.b16 %v4054
  %v4119 = vunpack.c.l.b16 %v4055
  %v4120 = vunpack.c.l.b16 %v4056
  %v4121 = vunpack.c.l.b16 %v4057
  %v4122 = vunpack.c.l.b16 %v4058
  %v4123 = vunpack.c.l.b16 %v4059
  %v4124 = vunpack.c.l.b16 %v4060
  %v4125 = vunpack.c.l.b16 %v4061
  %v4126 = vunpack.c.l.b16 %v4062
  %v4127 = vunpack.c.l.b16 %v4063
  %v4128 = vunpack.c.l.b16 %v4064
  %v4129 = vunpack.c.l.b16 %v4065
  %v4130 = vunpack.c.l.b16 %v4066
  %v4131 = vpack.c.b16 %v4116, %v4115
  %v4132 = vpack.c.b16 %v4118, %v4117
  %v4133 = vpack.c.b16 %v4120, %v4119
  %v4134 = vpack.c.b16 %v4122, %v4121
  %v4135 = vpack.c.b16 %v4124, %v4123
  %v4136 = vpack.c.b16 %v4126, %v4125
  %v4137 = vpack.c.b16 %v4128, %v4127
  %v4138 = vpack.c.b16 %v4130, %v4129
  %4147 = vmatprep.subr.bf16.mxu0 0
  %4148 = vmatpush1.bf16.msra.mxu0 %v4138
  %4149 = vmatprep.subr.bf16.mxu0 0
  %4150 = vmatpush1.bf16.msra.mxu0 %v4137
  %4151 = vmatprep.subr.bf16.mxu0 0
  %4152 = vmatpush1.bf16.msra.mxu0 %v4136
  %4153 = vmatprep.subr.bf16.mxu0 0
  %4154 = vmatpush1.bf16.msra.mxu0 %v4135
  %4155 = vmatprep.subr.bf16.mxu0 0
  %4156 = vmatpush1.bf16.msra.mxu0 %v4134
  %4157 = vmatprep.subr.bf16.mxu0 0
  %4158 = vmatpush1.bf16.msra.mxu0 %v4133
  %4159 = vmatprep.subr.bf16.mxu0 0
  %4160 = vmatpush1.bf16.msra.mxu0 %v4132
  %4161 = vmatprep.subr.bf16.mxu0 0
  %4162 = vmatpush1.bf16.msra.mxu0 %v4131
  %4163 = vmatprep.subr.bf16.mxu0 0
  %4164 = vmatpush2.bf16.msra.mxu0 0
  %4165 = vmatprep.subr.bf16.mxu0 0
  %4166 = vmatpush2.bf16.msra.mxu0 0
  %4167 = vmatprep.subr.bf16.mxu0 0
  %4168 = vmatpush2.bf16.msra.mxu0 0
  %4169 = vmatprep.subr.bf16.mxu0 0
  %4170 = vmatpush2.bf16.msra.mxu0 0
  %4171 = vmatprep.subr.bf16.mxu0 0
  %4172 = vmatpush2.bf16.msra.mxu0 0
  %4173 = vmatprep.subr.bf16.mxu0 0
  %4174 = vmatpush2.bf16.msra.mxu0 0
  %4175 = vmatprep.subr.bf16.mxu0 0
  %4176 = vmatpush2.bf16.msra.mxu0 0
  %4177 = vmatprep.subr.bf16.mxu0 0
  %4178 = vmatpush2.bf16.msra.mxu0 0
  %4179 = vmatprep.mubr.bf16.mxu0 0
  %4180 = vmatmul.mubr.bf16.gmra.mxu0 %v4083
  %v4181 = vpop.f32.mrf.mxu0
  %v4182 = vadd.f32 0.0, %v4181
  %v4183 = vpop.f32.mrf.mxu0
  %v4184 = vpop.f32.mrf.mxu0
  %v4185 = vadd.f32 0.0, %v4184
  %v4186 = vpop.f32.mrf.mxu0
  %4187 = vmatprep.mubr.bf16.mxu0 0
  %4188 = vmatmul.mubr.bf16.gmra.mxu0 %v4084
  %v4189 = vpop.f32.mrf.mxu0
  %v4190 = vadd.f32 0.0, %v4189
  %v4191 = vpop.f32.mrf.mxu0
  %v4192 = vpop.f32.mrf.mxu0
  %v4193 = vadd.f32 0.0, %v4192
  %v4194 = vpop.f32.mrf.mxu0
  %4195 = vmatprep.mubr.bf16.mxu0 0
  %4196 = vmatmul.mubr.bf16.gmra.mxu0 %v4085
  %v4197 = vpop.f32.mrf.mxu0
  %v4198 = vadd.f32 0.0, %v4197
  %v4199 = vpop.f32.mrf.mxu0
  %v4200 = vpop.f32.mrf.mxu0
  %v4201 = vadd.f32 0.0, %v4200
  %v4202 = vpop.f32.mrf.mxu0
  %4203 = vmatprep.mubr.bf16.mxu0 0
  %4204 = vmatmul.mubr.bf16.gmra.mxu0 %v4086
  %v4205 = vpop.f32.mrf.mxu0
  %v4206 = vadd.f32 0.0, %v4205
  %v4207 = vpop.f32.mrf.mxu0
  %v4208 = vpop.f32.mrf.mxu0
  %v4209 = vadd.f32 0.0, %v4208
  %v4210 = vpop.f32.mrf.mxu0
  %4211 = vmatprep.mubr.bf16.mxu0 0
  %4212 = vmatmul.mubr.bf16.gmra.mxu0 %v4087
  %v4213 = vpop.f32.mrf.mxu0
  %v4214 = vadd.f32 0.0, %v4213
  %v4215 = vpop.f32.mrf.mxu0
  %v4216 = vpop.f32.mrf.mxu0
  %v4217 = vadd.f32 0.0, %v4216
  %v4218 = vpop.f32.mrf.mxu0
  %4219 = vmatprep.mubr.bf16.mxu0 0
  %4220 = vmatmul.mubr.bf16.gmra.mxu0 %v4088
  %v4221 = vpop.f32.mrf.mxu0
  %v4222 = vadd.f32 0.0, %v4221
  %v4223 = vpop.f32.mrf.mxu0
  %v4224 = vpop.f32.mrf.mxu0
  %v4225 = vadd.f32 0.0, %v4224
  %v4226 = vpop.f32.mrf.mxu0
  %4227 = vmatprep.mubr.bf16.mxu0 0
  %4228 = vmatmul.mubr.bf16.gmra.mxu0 %v4089
  %v4229 = vpop.f32.mrf.mxu0
  %v4230 = vadd.f32 0.0, %v4229
  %v4231 = vpop.f32.mrf.mxu0
  %v4232 = vpop.f32.mrf.mxu0
  %v4233 = vadd.f32 0.0, %v4232
  %v4234 = vpop.f32.mrf.mxu0
  %4235 = vmatprep.mubr.bf16.mxu0 0
  %4236 = vmatmul.mubr.bf16.gmra.mxu0 %v4090
  %v4237 = vpop.f32.mrf.mxu0
  %v4238 = vadd.f32 0.0, %v4237
  %v4239 = vpop.f32.mrf.mxu0
  %v4240 = vpop.f32.mrf.mxu0
  %v4241 = vadd.f32 0.0, %v4240
  %v4242 = vpop.f32.mrf.mxu0
  %4243 = vdwg.mxu0
  %v4244 = vadd.f32 %v3730, %v4182
  %v4245 = vadd.f32 %v3731, %v4185
  %v4246 = vadd.f32 %v3732, %v4190
  %v4247 = vadd.f32 %v3733, %v4193
  %v4248 = vadd.f32 %v3734, %v4198
  %v4249 = vadd.f32 %v3735, %v4201
  %v4250 = vadd.f32 %v3736, %v4206
  %v4251 = vadd.f32 %v3737, %v4209
  %v4252 = vadd.f32 %v3738, %v4214
  %v4253 = vadd.f32 %v3739, %v4217
  %v4254 = vadd.f32 %v3740, %v4222
  %v4255 = vadd.f32 %v3741, %v4225
  %v4256 = vadd.f32 %v3742, %v4230
  %v4257 = vadd.f32 %v3743, %v4233
  %v4258 = vadd.f32 %v3744, %v4238
  %v4259 = vadd.f32 %v3745, %v4241
  %v4260 = vpack.c.bf16 %v4245, %v4244
  %v4261 = vpack.c.bf16 %v4247, %v4246
  %v4262 = vpack.c.bf16 %v4249, %v4248
  %v4263 = vpack.c.bf16 %v4251, %v4250
  %v4264 = vpack.c.bf16 %v4253, %v4252
  %v4265 = vpack.c.bf16 %v4255, %v4254
  %v4266 = vpack.c.bf16 %v4257, %v4256
  %v4267 = vpack.c.bf16 %v4259, %v4258
  %v4276 = vunpack.c.l.b16 %v4260
  %v4277 = vunpack.c.h.b16 %v4260
  %v4278 = vunpack.c.l.b16 %v4261
  %v4279 = vunpack.c.h.b16 %v4261
  %v4280 = vunpack.c.l.b16 %v4262
  %v4281 = vunpack.c.h.b16 %v4262
  %v4282 = vunpack.c.l.b16 %v4263
  %v4283 = vunpack.c.h.b16 %v4263
  %v4284 = vunpack.c.l.b16 %v4264
  %v4285 = vunpack.c.h.b16 %v4264
  %v4286 = vunpack.c.l.b16 %v4265
  %v4287 = vunpack.c.h.b16 %v4265
  %v4288 = vunpack.c.l.b16 %v4266
  %v4289 = vunpack.c.h.b16 %v4266
  %v4290 = vunpack.c.l.b16 %v4267
  %v4291 = vunpack.c.h.b16 %v4267
  %v4292 = vpack.c.b16 %v4276, %v4276
  %v4293 = vpack.c.b16 %v4277, %v4277
  %v4294 = vpack.c.b16 %v4278, %v4278
  %v4295 = vpack.c.b16 %v4279, %v4279
  %v4296 = vpack.c.b16 %v4280, %v4280
  %v4297 = vpack.c.b16 %v4281, %v4281
  %v4298 = vpack.c.b16 %v4282, %v4282
  %v4299 = vpack.c.b16 %v4283, %v4283
  %v4300 = vpack.c.b16 %v4284, %v4284
  %v4301 = vpack.c.b16 %v4285, %v4285
  %v4302 = vpack.c.b16 %v4286, %v4286
  %v4303 = vpack.c.b16 %v4287, %v4287
  %v4304 = vpack.c.b16 %v4288, %v4288
  %v4305 = vpack.c.b16 %v4289, %v4289
  %v4306 = vpack.c.b16 %v4290, %v4290
  %v4307 = vpack.c.b16 %v4291, %v4291
  %4324 = vst [vmem:[%s5] sm:$0xf] %v4292
  %4325 = vst [vmem:[%s5 + $0x4] sm:$0xf] %v4293
  %4326 = vst [vmem:[%s5 + $0x8] sm:$0xf] %v4294
  %4327 = vst [vmem:[%s5 + $0xc] sm:$0xf] %v4295
  %4328 = vst [vmem:[%s5 + $0x10] sm:$0xf] %v4296
  %4329 = vst [vmem:[%s5 + $0x14] sm:$0xf] %v4297
  %4330 = vst [vmem:[%s5 + $0x18] sm:$0xf] %v4298
  %4331 = vst [vmem:[%s5 + $0x1c] sm:$0xf] %v4299
  %4332 = vst [vmem:[%s5 + $0x20] sm:$0xf] %v4300
  %4333 = vst [vmem:[%s5 + $0x24] sm:$0xf] %v4301
  %4334 = vst [vmem:[%s5 + $0x28] sm:$0xf] %v4302
  %4335 = vst [vmem:[%s5 + $0x2c] sm:$0xf] %v4303
  %4336 = vst [vmem:[%s5 + $0x30] sm:$0xf] %v4304
  %4337 = vst [vmem:[%s5 + $0x34] sm:$0xf] %v4305
  %4338 = vst [vmem:[%s5 + $0x38] sm:$0xf] %v4306
  %4339 = vst [vmem:[%s5 + $0x3c] sm:$0xf] %v4307
  %v4340 = vld [vmem:[%s6] sm:$0x3]
  %v4341 = vadd.f32 %v4244, %v4245
  %v4342 = vadd.f32 %v4341, %v4246
  %v4343 = vadd.f32 %v4342, %v4247
  %v4344 = vadd.f32 %v4343, %v4248
  %v4345 = vadd.f32 %v4344, %v4249
  %v4346 = vadd.f32 %v4345, %v4250
  %v4347 = vadd.f32 %v4346, %v4251
  %v4348 = vadd.f32 %v4347, %v4252
  %v4349 = vadd.f32 %v4348, %v4253
  %v4350 = vadd.f32 %v4349, %v4254
  %v4351 = vadd.f32 %v4350, %v4255
  %v4352 = vadd.f32 %v4351, %v4256
  %v4353 = vadd.f32 %v4352, %v4257
  %v4354 = vadd.f32 %v4353, %v4258
  %v4355 = vadd.f32 %v4354, %v4259
  %v4356 = vrot.slane %v4355, 4
  %v4357 = vadd.f32 %v4355, %v4356
  %v4358 = vrot.slane %v4357, 2
  %v4359 = vadd.f32 %v4357, %v4358
  %v4360 = vrot.slane %v4359, 1
  %v4361 = vadd.f32 %v4359, %v4360
  %v4362 = vmul.f32 %v4244, %v4244
  %v4363 = vmul.f32 %v4245, %v4245
  %v4364 = vmul.f32 %v4246, %v4246
  %v4365 = vmul.f32 %v4247, %v4247
  %v4366 = vmul.f32 %v4248, %v4248
  %v4367 = vmul.f32 %v4249, %v4249
  %v4368 = vmul.f32 %v4250, %v4250
  %v4369 = vmul.f32 %v4251, %v4251
  %v4370 = vmul.f32 %v4252, %v4252
  %v4371 = vmul.f32 %v4253, %v4253
  %v4372 = vmul.f32 %v4254, %v4254
  %v4373 = vmul.f32 %v4255, %v4255
  %v4374 = vmul.f32 %v4256, %v4256
  %v4375 = vmul.f32 %v4257, %v4257
  %v4376 = vmul.f32 %v4258, %v4258
  %v4377 = vmul.f32 %v4259, %v4259
  %v4378 = vadd.f32 %v4362, %v4363
  %v4379 = vadd.f32 %v4378, %v4364
  %v4380 = vadd.f32 %v4379, %v4365
  %v4381 = vadd.f32 %v4380, %v4366
  %v4382 = vadd.f32 %v4381, %v4367
  %v4383 = vadd.f32 %v4382, %v4368
  %v4384 = vadd.f32 %v4383, %v4369
  %v4385 = vadd.f32 %v4384, %v4370
  %v4386 = vadd.f32 %v4385, %v4371
  %v4387 = vadd.f32 %v4386, %v4372
  %v4388 = vadd.f32 %v4387, %v4373
  %v4389 = vadd.f32 %v4388, %v4374
  %v4390 = vadd.f32 %v4389, %v4375
  %v4391 = vadd.f32 %v4390, %v4376
  %v4392 = vadd.f32 %v4391, %v4377
  %v4393 = vrot.slane %v4392, 4
  %v4394 = vadd.f32 %v4392, %v4393
  %v4395 = vrot.slane %v4394, 2
  %v4396 = vadd.f32 %v4394, %v4395
  %v4397 = vrot.slane %v4396, 1
  %v4398 = vadd.f32 %v4396, %v4397
  %vm4399 = vcmask 1040384
  %v4400 = vsel %vm4399, %v4361, %v4398
  %v4401 = vadd.f32 %v4340, %v4400
  %4402 = vst [vmem:[%s6] sm:$0x3] %v4401
  // Predicated region
  $region26: #{down_forward.4} parent=0 // pred_check
    _
  $region27: #{down_forward.4} parent=0 // pred_check_branch
    %4404 = sbr.rel (0) target = $region29
  $region28: #{down_forward.4} parent=0 // pred_region
    _
  $region29: #{down_forward.4} parent=0 // pred_fallthru
    _
  // Predicated region
  $region30: #{down_forward.4} parent=0 // pred_check
    _
  $region31: #{down_forward.4} parent=0 // pred_check_branch
    %4406 = sbr.rel (0) target = $region33
  $region32: #{down_forward.4} parent=0 // pred_region
    _
  $region33: #{down_forward.4} parent=0 // pred_fallthru
    _
  // Predicated region
  $region34: #{down_forward.4} parent=0 // pred_check
    _
  $region35: #{down_forward.4} parent=0 // pred_check_branch
    %4408 = sbr.rel (0) target = $region37
  $region36: #{down_forward.4} parent=0 // pred_region
    _
  $region37: #{down_forward.4} parent=0 // pred_fallthru
    _
  // Predicated region
  $region38: #{down_forward.4} parent=0 // pred_check
    _
  $region39: #{down_forward.4} parent=0 // pred_check_branch
    %4410 = sbr.rel (0) target = $region41
  $region40: #{down_forward.4} parent=0 // pred_region
    _
  $region41: #{down_forward.4} parent=0 // pred_fallthru
    _

</llo_original>
